<compile_context>
chip_gen: v6e
topology: v6e:2x2x1
jax: 0.10.0
libtpu: 0.0.40
codegen_flags: <defaults>
</compile_context>

<pallas_src>
import math
from functools import partial

import jax
import jax.numpy as jnp
from jax import lax
from jax.experimental import pallas as pl
from jax.experimental.pallas import tpu as pltpu

# ----------------------------- scaled-down configuration -----------------------------
N_HEADS = 4                              # (Llama-70B: 64)
N_KV_HEADS = 2                           # (Llama-70B: 8)
HEAD_DIM = 128
HIDDEN = N_HEADS * HEAD_DIM              # 512
Q_PER_KV = N_HEADS // N_KV_HEADS         # 2
QKV_COLS = (N_HEADS + 2 * N_KV_HEADS) * HEAD_DIM   # 1024
MAX_BATCH = 16                           # (Llama galaxy: 32)
BATCH_BLOCK = 8                          # sublane-aligned batch tile; grid = MAX_BATCH // 8
MAX_SEQ_LEN = 128
SCALE = 1.0 / math.sqrt(HEAD_DIM)


def nearest_32(x: int) -> int:
    return ((x + 31) // 32) * 32


# ----------------------------------- fused kernel ------------------------------------
def _fused_decode_kernel(
    x_ref, wqkv_ref, wo_ref, rot_ref, kc_ref, vc_ref,        # inputs
    out_ref, kc_out_ref, vc_out_ref,                         # outputs (caches aliased)
    *, start_pos, scale,
):
    f32 = jnp.float32
    bf16 = jnp.bfloat16
    B = x_ref.shape[0]           # batch block
    S = kc_ref.shape[2]          # padded active window = nearest_32(start_pos + 1)

    # ---- fused QKV projection: one MXU matmul for the whole batch block ----
    qkv = jnp.dot(x_ref[...], wqkv_ref[...], preferred_element_type=f32)   # (B, QKV_COLS) f32
    rot = rot_ref[...]                                                     # (D, D) bf16

    # causal decode mask computed in-kernel (no HBM mask tensor, matches prepare_inputs)
    neg = jnp.finfo(f32).min
    kmask = jnp.where(
        lax.broadcasted_iota(jnp.int32, (1, 1, S), 2) <= start_pos, 0.0, neg)   # (1,1,S)
    cur = lax.broadcasted_iota(jnp.int32, (1, S, 1), 1) == start_pos            # (1,S,1)

    o_heads = []   # per-head bf16 attention outputs, concatenated for a single wo matmul

    for j in range(N_KV_HEADS):
        # --- new (rotated) K row and new V row for this kv head at start_pos ---
        k_j = qkv[:, (N_HEADS + j) * HEAD_DIM:(N_HEADS + j + 1) * HEAD_DIM]
        v_j = qkv[:, (N_HEADS + N_KV_HEADS + j) * HEAD_DIM:
                     (N_HEADS + N_KV_HEADS + j + 1) * HEAD_DIM]
        k_rot_j = jnp.dot(k_j.astype(bf16), rot, preferred_element_type=f32)     # (B, D) f32

        # --- splice the new row into the cached window (in VMEM, no HBM copy) ---
        keys_j = jnp.where(cur, k_rot_j[:, None, :].astype(bf16), kc_ref[:, j, :, :])  # (B,S,D)
        vals_j = jnp.where(cur, v_j[:, None, :].astype(bf16), vc_ref[:, j, :, :])      # (B,S,D)

        # in-place cache update (output blocks aliased to the input caches)
        kc_out_ref[:, j, :, :] = keys_j
        vc_out_ref[:, j, :, :] = vals_j

        # --- grouped-query attention for the Q_PER_KV query heads of this kv group ---
        for p in range(Q_PER_KV):
            h = j * Q_PER_KV + p
            q_h = qkv[:, h * HEAD_DIM:(h + 1) * HEAD_DIM]
            q_rot = jnp.dot(q_h.astype(bf16), rot, preferred_element_type=f32)   # (B, D) f32
            q3 = q_rot[:, None, :].astype(bf16)                                  # (B, 1, D)

            s = jnp.einsum("bqd,bsd->bqs", q3, keys_j,
                           preferred_element_type=f32)                           # (B,1,S) f32
            s = s * scale + kmask
            m = jnp.max(s, axis=-1, keepdims=True)
            pexp = jnp.exp(s - m)
            l = jnp.sum(pexp, axis=-1, keepdims=True)
            pexp = pexp * pl.reciprocal(l, approx=True)                          # EUP, ~free

            o3 = jnp.einsum("bqs,bsd->bqd", pexp.astype(bf16), vals_j,
                            preferred_element_type=f32)                          # (B,1,D) f32
            o_heads.append(o3[:, 0, :].astype(bf16))                             # (B, D) bf16

    # ---- single output projection: (B, HIDDEN) x (HIDDEN, HIDDEN) on the MXU ----
    attn_out = jnp.concatenate(o_heads, axis=-1)                                 # (B, HIDDEN)
    out_ref[...] = jnp.dot(attn_out, wo_ref[...],
                           preferred_element_type=f32).astype(out_ref.dtype)


# ------------------------------------ wrapper -----------------------------------------
def llama_attention_galaxy_forward(x, wqkv, wo, rot_mat, k_cache, v_cache, start_pos):
    """x: (batch, 1, hidden) bf16. Returns ((1,1,batch,hidden) f32, (k_cache, v_cache))."""
    batch = x.shape[0]
    assert x.shape[1] == 1, "Only supporting decode mode"
    assert batch % BATCH_BLOCK == 0
    padded = nearest_32(start_pos + 1)

    xq = x.reshape(batch, HIDDEN)
    grid = (batch // BATCH_BLOCK,)

    cache_spec = pl.BlockSpec(
        (BATCH_BLOCK, N_KV_HEADS, padded, HEAD_DIM), lambda i: (i, 0, 0, 0))

    out, kc_new, vc_new = pl.pallas_call(
        partial(_fused_decode_kernel, start_pos=start_pos, scale=SCALE),
        grid=grid,
        in_specs=[
            pl.BlockSpec((BATCH_BLOCK, HIDDEN), lambda i: (i, 0)),      # x
            pl.BlockSpec((HIDDEN, QKV_COLS), lambda i: (0, 0)),         # wqkv (resident)
            pl.BlockSpec((HIDDEN, HIDDEN), lambda i: (0, 0)),           # wo   (resident)
            pl.BlockSpec((HEAD_DIM, HEAD_DIM), lambda i: (0, 0)),       # rot_mat
            cache_spec,                                                 # k_cache window
            cache_spec,                                                 # v_cache window
        ],
        out_specs=[
            pl.BlockSpec((BATCH_BLOCK, HIDDEN), lambda i: (i, 0)),      # attention output
            cache_spec,                                                 # updated k_cache
            cache_spec,                                                 # updated v_cache
        ],
        out_shape=[
            jax.ShapeDtypeStruct((batch, HIDDEN), jnp.float32),
            jax.ShapeDtypeStruct(k_cache.shape, k_cache.dtype),
            jax.ShapeDtypeStruct(v_cache.shape, v_cache.dtype),
        ],
        # in-place KV cache update (at real scale, donate the caches for true aliasing)
        input_output_aliases={4: 1, 5: 2},
        compiler_params=pltpu.CompilerParams(dimension_semantics=("parallel",)),
    )(xq, wqkv, wo, rot_mat, k_cache, v_cache)

    # emulated all-gather: every "device" holds this identical tensor; tt layout (1,1,B,H)
    return out.reshape(1, 1, batch, HIDDEN), (kc_new, vc_new)


# ------------------------------------ rot matrix ---------------------------------------
def build_rot_mat(head_dim, pos):
    """Block-diagonal 2x2 rotation matrix so that RoPE(x, pos) == x @ rot_mat
    (tt generate_rot_emb / gather_rotary_emb matrix-form rotary)."""
    inv_freq = 1.0 / (
        10000.0 ** (jnp.arange(0, head_dim, 2, dtype=jnp.float32) / head_dim))
    angle = pos * inv_freq
    cos, sin = jnp.cos(angle), jnp.sin(angle)
    m = jnp.zeros((head_dim, head_dim), jnp.float32)
    idx = jnp.arange(head_dim // 2)
    m = m.at[2 * idx, 2 * idx].set(cos)
    m = m.at[2 * idx, 2 * idx + 1].set(sin)
    m = m.at[2 * idx + 1, 2 * idx].set(-sin)
    m = m.at[2 * idx + 1, 2 * idx + 1].set(cos)
    return m


# ---------------------------------- pure-JAX reference ---------------------------------
def reference_forward(x, wqkv, wo, rot_mat, k_cache, v_cache, start_pos):
    f = jnp.float32
    x, wqkv, wo, rot_mat = (a.astype(f) for a in (x, wqkv, wo, rot_mat))
    k_cache, v_cache = k_cache.astype(f), v_cache.astype(f)
    with jax.default_matmul_precision("highest"):
        batch = x.shape[0]
        xq = x.reshape(batch, HIDDEN)
        qkv = xq @ wqkv
        q = qkv[:, : N_HEADS * HEAD_DIM].reshape(batch, N_HEADS, HEAD_DIM)
        k = qkv[:, N_HEADS * HEAD_DIM:(N_HEADS + N_KV_HEADS) * HEAD_DIM].reshape(
            batch, N_KV_HEADS, HEAD_DIM)
        v = qkv[:, (N_HEADS + N_KV_HEADS) * HEAD_DIM:].reshape(batch, N_KV_HEADS, HEAD_DIM)
        q_rot = jnp.einsum("bhd,de->bhe", q, rot_mat)
        k_rot = jnp.einsum("bhd,de->bhe", k, rot_mat)
        kc = k_cache.at[:, :, start_pos].set(k_rot)
        vc = v_cache.at[:, :, start_pos].set(v)
        padded = nearest_32(start_pos + 1)
        ka, va = kc[:, :, :padded], vc[:, :, :padded]
        qg = q_rot.reshape(batch, N_KV_HEADS, Q_PER_KV, HEAD_DIM)
        s = jnp.einsum("bhqd,bhsd->bhqs", qg, ka) * SCALE
        mask = jnp.where(jnp.arange(padded) <= start_pos, 0.0, jnp.finfo(f).min)
        p = jax.nn.softmax(s + mask, axis=-1)
        o = jnp.einsum("bhqs,bhsd->bhqd", p, va).reshape(batch, HIDDEN)
        out = (o @ wo).reshape(1, 1, batch, HIDDEN)
    return out, (kc, vc)


# --------------------------------------- main ------------------------------------------
if __name__ == "__main__":
    key = jax.random.PRNGKey(0)
    k1, k2, k3, k4, k5 = jax.random.split(key, 5)

    batch = MAX_BATCH
    start_pos = 40                       # padded_layer_past_len = nearest_32(41) = 64
    bf16 = jnp.bfloat16

    # deterministic synthetic parameters / inputs (no checkpoint load), bf16 storage
    x = (jax.random.normal(k1, (batch, 1, HIDDEN), jnp.float32) * 0.1).astype(bf16)
    wqkv = (jax.random.normal(k2, (HIDDEN, QKV_COLS), jnp.float32) * 0.02).astype(bf16)
    wo = (jax.random.normal(k3, (HIDDEN, HIDDEN), jnp.float32) * 0.02).astype(bf16)
    rot_mat = build_rot_mat(HEAD_DIM, start_pos).astype(bf16)

    k_cache = jnp.zeros((batch, N_KV_HEADS, MAX_SEQ_LEN, HEAD_DIM), bf16)
    v_cache = jnp.zeros((batch, N_KV_HEADS, MAX_SEQ_LEN, HEAD_DIM), bf16)
    past_k = (jax.random.normal(k4, (batch, N_KV_HEADS, start_pos, HEAD_DIM),
                                jnp.float32) * 0.1).astype(bf16)
    past_v = (jax.random.normal(k5, (batch, N_KV_HEADS, start_pos, HEAD_DIM),
                                jnp.float32) * 0.1).astype(bf16)
    k_cache = k_cache.at[:, :, :start_pos].set(past_k)
    v_cache = v_cache.at[:, :, :start_pos].set(past_v)

    out, (kc_new, vc_new) = llama_attention_galaxy_forward(
        x, wqkv, wo, rot_mat, k_cache, v_cache, start_pos)
    out = jax.block_until_ready(out)

    ref_out, (ref_kc, ref_vc) = reference_forward(
        x, wqkv, wo, rot_mat, k_cache, v_cache, start_pos)
    ref_out = jax.block_until_ready(ref_out)

    assert out.shape == (1, 1, batch, HIDDEN), out.shape
    max_err = float(jnp.max(jnp.abs(out - ref_out)))
    assert jnp.allclose(out, ref_out, atol=2e-2, rtol=2e-2), max_err
    assert jnp.allclose(kc_new.astype(jnp.float32), ref_kc, atol=2e-2, rtol=2e-2)
    assert jnp.allclose(vc_new.astype(jnp.float32), ref_vc, atol=2e-2, rtol=2e-2)
    print("KERNEL_OK")
</pallas_src>

<mosaic_0001>
module attributes {stable_mosaic.version = 11 : i64} {
  func.func @_fused_decode_kernel(%arg0: i32, %arg1: memref<8x512xbf16, #tpu.memory_space<vmem>>, %arg2: memref<512x1024xbf16, #tpu.memory_space<vmem>>, %arg3: memref<512x512xbf16, #tpu.memory_space<vmem>>, %arg4: memref<128x128xbf16, #tpu.memory_space<vmem>>, %arg5: memref<8x2x64x128xbf16, #tpu.memory_space<vmem>>, %arg6: memref<8x2x64x128xbf16, #tpu.memory_space<vmem>>, %arg7: memref<8x512xf32, #tpu.memory_space<vmem>>, %arg8: memref<8x2x64x128xbf16, #tpu.memory_space<vmem>>, %arg9: memref<8x2x64x128xbf16, #tpu.memory_space<vmem>>) attributes {dimension_semantics = [#tpu.dimension_semantics<parallel>], iteration_bounds = array<i64: 2>, scalar_prefetch = 0 : i64, scratch_operands = 0 : i64, tpu.core_type = #tpu.core_type<tc>, window_params = [{transform_indices = @transform_0, window_bounds = array<i64: 8, 512>}, {pipeline_mode = #tpu.pipeline_mode<synchronous>, transform_indices = @transform_1, window_bounds = array<i64: 512, 1024>}, {pipeline_mode = #tpu.pipeline_mode<synchronous>, transform_indices = @transform_2, window_bounds = array<i64: 512, 512>}, {pipeline_mode = #tpu.pipeline_mode<synchronous>, transform_indices = @transform_3, window_bounds = array<i64: 128, 128>}, {transform_indices = @transform_4, window_bounds = array<i64: 8, 2, 64, 128>}, {transform_indices = @transform_5, window_bounds = array<i64: 8, 2, 64, 128>}, {transform_indices = @transform_6, window_bounds = array<i64: 8, 512>}, {transform_indices = @transform_7, window_bounds = array<i64: 8, 2, 64, 128>}, {transform_indices = @transform_8, window_bounds = array<i64: 8, 2, 64, 128>}]} {
    %c0 = arith.constant 0 : index
    %c0_0 = arith.constant 0 : index
    %0 = vector.load %arg1[%c0, %c0_0] : memref<8x512xbf16, #tpu.memory_space<vmem>>, vector<8x512xbf16>
    %c0_1 = arith.constant 0 : index
    %c0_2 = arith.constant 0 : index
    %1 = vector.load %arg2[%c0_1, %c0_2] : memref<512x1024xbf16, #tpu.memory_space<vmem>>, vector<512x1024xbf16>
    %cst = arith.constant dense<0.000000e+00> : vector<8x1024xf32>
    %2 = tpu.matmul %0, %1, %cst {dimension_numbers = #tpu.dot_dimension_numbers<[1], [0], [0], [1], [0, 0, 1, 1], [], []>} : vector<8x512xbf16>, vector<512x1024xbf16>, vector<8x1024xf32> -> vector<8x1024xf32>
    %c0_3 = arith.constant 0 : index
    %c0_4 = arith.constant 0 : index
    %3 = vector.load %arg4[%c0_3, %c0_4] : memref<128x128xbf16, #tpu.memory_space<vmem>>, vector<128x128xbf16>
    %4 = tpu.iota {dimensions = array<i32: 2>} : vector<1x1x64xi32>
    %c40_i32 = arith.constant 40 : i32
    %5 = vector.broadcast %c40_i32 : i32 to vector<1x1x64xi32>
    %6 = arith.cmpi sle, %4, %5 : vector<1x1x64xi32>
    %cst_5 = arith.constant 0.000000e+00 : f32
    %cst_6 = arith.constant -3.40282347E+38 : f32
    %7 = vector.broadcast %cst_5 : f32 to vector<1x1x64xf32>
    %8 = vector.broadcast %cst_6 : f32 to vector<1x1x64xf32>
    %9 = arith.select %6, %7, %8 : vector<1x1x64xi1>, vector<1x1x64xf32>
    %10 = tpu.iota {dimensions = array<i32: 1>} : vector<1x64x1xi32>
    %c40_i32_7 = arith.constant 40 : i32
    %11 = vector.broadcast %c40_i32_7 : i32 to vector<1x64x1xi32>
    %12 = arith.cmpi eq, %10, %11 : vector<1x64x1xi32>
    %13 = vector.extract_strided_slice %2 {offsets = [0, 512], sizes = [8, 128], strides = [1, 1]} : vector<8x1024xf32> to vector<8x128xf32>
    %14 = vector.extract_strided_slice %2 {offsets = [0, 768], sizes = [8, 128], strides = [1, 1]} : vector<8x1024xf32> to vector<8x128xf32>
    %15 = arith.truncf %13 : vector<8x128xf32> to vector<8x128xbf16>
    %cst_8 = arith.constant dense<0.000000e+00> : vector<8x128xf32>
    %16 = tpu.matmul %15, %3, %cst_8 {dimension_numbers = #tpu.dot_dimension_numbers<[1], [0], [0], [1], [0, 0, 1, 1], [], []>} : vector<8x128xbf16>, vector<128x128xbf16>, vector<8x128xf32> -> vector<8x128xf32>
    %17 = vector.shape_cast %16 : vector<8x128xf32> to vector<8x1x128xf32>
    %18 = arith.truncf %17 : vector<8x1x128xf32> to vector<8x1x128xbf16>
    %c0_9 = arith.constant 0 : index
    %c0_10 = arith.constant 0 : index
    %c0_11 = arith.constant 0 : index
    %c0_12 = arith.constant 0 : index
    %19 = vector.load %arg5[%c0_9, %c0_10, %c0_11, %c0_12] : memref<8x2x64x128xbf16, #tpu.memory_space<vmem>>, vector<8x1x64x128xbf16>
    %20 = vector.shape_cast %19 : vector<8x1x64x128xbf16> to vector<8x64x128xbf16>
    %21 = vector.shape_cast %12 : vector<1x64x1xi1> to vector<1x64x1xi1>
    %22 = vector.broadcast %21 : vector<1x64x1xi1> to vector<8x64x128xi1>
    %23 = vector.shape_cast %18 : vector<8x1x128xbf16> to vector<8x1x128xbf16>
    %24 = vector.broadcast %23 : vector<8x1x128xbf16> to vector<8x64x128xbf16>
    %25 = arith.select %22, %24, %20 : vector<8x64x128xi1>, vector<8x64x128xbf16>
    %26 = vector.shape_cast %14 : vector<8x128xf32> to vector<8x1x128xf32>
    %27 = arith.truncf %26 : vector<8x1x128xf32> to vector<8x1x128xbf16>
    %c0_13 = arith.constant 0 : index
    %c0_14 = arith.constant 0 : index
    %c0_15 = arith.constant 0 : index
    %c0_16 = arith.constant 0 : index
    %28 = vector.load %arg6[%c0_13, %c0_14, %c0_15, %c0_16] : memref<8x2x64x128xbf16, #tpu.memory_space<vmem>>, vector<8x1x64x128xbf16>
    %29 = vector.shape_cast %28 : vector<8x1x64x128xbf16> to vector<8x64x128xbf16>
    %30 = vector.shape_cast %12 : vector<1x64x1xi1> to vector<1x64x1xi1>
    %31 = vector.broadcast %30 : vector<1x64x1xi1> to vector<8x64x128xi1>
    %32 = vector.shape_cast %27 : vector<8x1x128xbf16> to vector<8x1x128xbf16>
    %33 = vector.broadcast %32 : vector<8x1x128xbf16> to vector<8x64x128xbf16>
    %34 = arith.select %31, %33, %29 : vector<8x64x128xi1>, vector<8x64x128xbf16>
    %c0_17 = arith.constant 0 : index
    %c0_18 = arith.constant 0 : index
    %c0_19 = arith.constant 0 : index
    %c0_20 = arith.constant 0 : index
    %35 = vector.load %arg8[%c0_17, %c0_18, %c0_19, %c0_20] : memref<8x2x64x128xbf16, #tpu.memory_space<vmem>>, vector<8x1x64x128xbf16>
    %36 = vector.shape_cast %35 : vector<8x1x64x128xbf16> to vector<8x64x128xbf16>
    %37 = vector.shape_cast %25 : vector<8x64x128xbf16> to vector<8x1x64x128xbf16>
    tpu.vector_store %arg8[%c0_17, %c0_18, %c0_19, %c0_20], %37 {strides = array<i32>} : memref<8x2x64x128xbf16, #tpu.memory_space<vmem>>, vector<8x1x64x128xbf16>,
    %c0_21 = arith.constant 0 : index
    %c0_22 = arith.constant 0 : index
    %c0_23 = arith.constant 0 : index
    %c0_24 = arith.constant 0 : index
    %38 = vector.load %arg9[%c0_21, %c0_22, %c0_23, %c0_24] : memref<8x2x64x128xbf16, #tpu.memory_space<vmem>>, vector<8x1x64x128xbf16>
    %39 = vector.shape_cast %38 : vector<8x1x64x128xbf16> to vector<8x64x128xbf16>
    %40 = vector.shape_cast %34 : vector<8x64x128xbf16> to vector<8x1x64x128xbf16>
    tpu.vector_store %arg9[%c0_21, %c0_22, %c0_23, %c0_24], %40 {strides = array<i32>} : memref<8x2x64x128xbf16, #tpu.memory_space<vmem>>, vector<8x1x64x128xbf16>,
    %41 = vector.extract_strided_slice %2 {offsets = [0, 0], sizes = [8, 128], strides = [1, 1]} : vector<8x1024xf32> to vector<8x128xf32>
    %42 = arith.truncf %41 : vector<8x128xf32> to vector<8x128xbf16>
    %cst_25 = arith.constant dense<0.000000e+00> : vector<8x128xf32>
    %43 = tpu.matmul %42, %3, %cst_25 {dimension_numbers = #tpu.dot_dimension_numbers<[1], [0], [0], [1], [0, 0, 1, 1], [], []>} : vector<8x128xbf16>, vector<128x128xbf16>, vector<8x128xf32> -> vector<8x128xf32>
    %44 = vector.shape_cast %43 : vector<8x128xf32> to vector<8x1x128xf32>
    %45 = arith.truncf %44 : vector<8x1x128xf32> to vector<8x1x128xbf16>
    "tpu.trace_start"() <{level = 10 : i32, message = "bqd,bsd->bqs"}> : () -> ()
    %cst_26 = arith.constant dense<0.000000e+00> : vector<8x1x64xf32>
    %46 = tpu.matmul %45, %25, %cst_26 {dimension_numbers = #tpu.dot_dimension_numbers<[2], [2], [1], [1], [0, 0, 0, 1, 1, 1], [0], [0]>} : vector<8x1x128xbf16>, vector<8x64x128xbf16>, vector<8x1x64xf32> -> vector<8x1x64xf32>
    "tpu.trace_stop"() : () -> ()
    %cst_27 = arith.constant 0.0883883461 : f32
    %47 = vector.broadcast %cst_27 : f32 to vector<8x1x64xf32>
    %48 = arith.mulf %46, %47 : vector<8x1x64xf32>
    %49 = vector.broadcast %9 : vector<1x1x64xf32> to vector<8x1x64xf32>
    %50 = arith.addf %48, %49 : vector<8x1x64xf32>
    %cst_28 = arith.constant dense<0xFF800000> : vector<8x1xf32>
    %51 = vector.multi_reduction <maximumf>, %50, %cst_28 [2] : vector<8x1x64xf32> to vector<8x1xf32>
    %52 = vector.shape_cast %51 : vector<8x1xf32> to vector<8x1x1xf32>
    %53 = vector.broadcast %52 : vector<8x1x1xf32> to vector<8x1x64xf32>
    %54 = arith.subf %50, %53 : vector<8x1x64xf32>
    %55 = math.exp %54 : vector<8x1x64xf32>
    %cst_29 = arith.constant dense<0.000000e+00> : vector<8x1xf32>
    %56 = vector.multi_reduction <add>, %55, %cst_29 [2] : vector<8x1x64xf32> to vector<8x1xf32>
    %57 = vector.shape_cast %56 : vector<8x1xf32> to vector<8x1x1xf32>
    %58 = tpu.reciprocal %57 {approx = true} : vector<8x1x1xf32> -> vector<8x1x1xf32>
    %59 = vector.broadcast %58 : vector<8x1x1xf32> to vector<8x1x64xf32>
    %60 = arith.mulf %55, %59 : vector<8x1x64xf32>
    %61 = arith.truncf %60 : vector<8x1x64xf32> to vector<8x1x64xbf16>
    "tpu.trace_start"() <{level = 10 : i32, message = "bqs,bsd->bqd"}> : () -> ()
    %cst_30 = arith.constant dense<0.000000e+00> : vector<8x1x128xf32>
    %62 = tpu.matmul %61, %34, %cst_30 {dimension_numbers = #tpu.dot_dimension_numbers<[2], [1], [1], [2], [0, 0, 0, 1, 1, 2], [0], [0]>} : vector<8x1x64xbf16>, vector<8x64x128xbf16>, vector<8x1x128xf32> -> vector<8x1x128xf32>
    "tpu.trace_stop"() : () -> ()
    %63 = vector.shape_cast %62 : vector<8x1x128xf32> to vector<8x128xf32>
    %64 = arith.truncf %63 : vector<8x128xf32> to vector<8x128xbf16>
    %65 = vector.extract_strided_slice %2 {offsets = [0, 128], sizes = [8, 128], strides = [1, 1]} : vector<8x1024xf32> to vector<8x128xf32>
    %66 = arith.truncf %65 : vector<8x128xf32> to vector<8x128xbf16>
    %cst_31 = arith.constant dense<0.000000e+00> : vector<8x128xf32>
    %67 = tpu.matmul %66, %3, %cst_31 {dimension_numbers = #tpu.dot_dimension_numbers<[1], [0], [0], [1], [0, 0, 1, 1], [], []>} : vector<8x128xbf16>, vector<128x128xbf16>, vector<8x128xf32> -> vector<8x128xf32>
    %68 = vector.shape_cast %67 : vector<8x128xf32> to vector<8x1x128xf32>
    %69 = arith.truncf %68 : vector<8x1x128xf32> to vector<8x1x128xbf16>
    "tpu.trace_start"() <{level = 10 : i32, message = "bqd,bsd->bqs"}> : () -> ()
    %cst_32 = arith.constant dense<0.000000e+00> : vector<8x1x64xf32>
    %70 = tpu.matmul %69, %25, %cst_32 {dimension_numbers = #tpu.dot_dimension_numbers<[2], [2], [1], [1], [0, 0, 0, 1, 1, 1], [0], [0]>} : vector<8x1x128xbf16>, vector<8x64x128xbf16>, vector<8x1x64xf32> -> vector<8x1x64xf32>
    "tpu.trace_stop"() : () -> ()
    %cst_33 = arith.constant 0.0883883461 : f32
    %71 = vector.broadcast %cst_33 : f32 to vector<8x1x64xf32>
    %72 = arith.mulf %70, %71 : vector<8x1x64xf32>
    %73 = vector.broadcast %9 : vector<1x1x64xf32> to vector<8x1x64xf32>
    %74 = arith.addf %72, %73 : vector<8x1x64xf32>
    %cst_34 = arith.constant dense<0xFF800000> : vector<8x1xf32>
    %75 = vector.multi_reduction <maximumf>, %74, %cst_34 [2] : vector<8x1x64xf32> to vector<8x1xf32>
    %76 = vector.shape_cast %75 : vector<8x1xf32> to vector<8x1x1xf32>
    %77 = vector.broadcast %76 : vector<8x1x1xf32> to vector<8x1x64xf32>
    %78 = arith.subf %74, %77 : vector<8x1x64xf32>
    %79 = math.exp %78 : vector<8x1x64xf32>
    %cst_35 = arith.constant dense<0.000000e+00> : vector<8x1xf32>
    %80 = vector.multi_reduction <add>, %79, %cst_35 [2] : vector<8x1x64xf32> to vector<8x1xf32>
    %81 = vector.shape_cast %80 : vector<8x1xf32> to vector<8x1x1xf32>
    %82 = tpu.reciprocal %81 {approx = true} : vector<8x1x1xf32> -> vector<8x1x1xf32>
    %83 = vector.broadcast %82 : vector<8x1x1xf32> to vector<8x1x64xf32>
    %84 = arith.mulf %79, %83 : vector<8x1x64xf32>
    %85 = arith.truncf %84 : vector<8x1x64xf32> to vector<8x1x64xbf16>
    "tpu.trace_start"() <{level = 10 : i32, message = "bqs,bsd->bqd"}> : () -> ()
    %cst_36 = arith.constant dense<0.000000e+00> : vector<8x1x128xf32>
    %86 = tpu.matmul %85, %34, %cst_36 {dimension_numbers = #tpu.dot_dimension_numbers<[2], [1], [1], [2], [0, 0, 0, 1, 1, 2], [0], [0]>} : vector<8x1x64xbf16>, vector<8x64x128xbf16>, vector<8x1x128xf32> -> vector<8x1x128xf32>
    "tpu.trace_stop"() : () -> ()
    %87 = vector.shape_cast %86 : vector<8x1x128xf32> to vector<8x128xf32>
    %88 = arith.truncf %87 : vector<8x128xf32> to vector<8x128xbf16>
    %89 = vector.extract_strided_slice %2 {offsets = [0, 640], sizes = [8, 128], strides = [1, 1]} : vector<8x1024xf32> to vector<8x128xf32>
    %90 = vector.extract_strided_slice %2 {offsets = [0, 896], sizes = [8, 128], strides = [1, 1]} : vector<8x1024xf32> to vector<8x128xf32>
    %91 = arith.truncf %89 : vector<8x128xf32> to vector<8x128xbf16>
    %cst_37 = arith.constant dense<0.000000e+00> : vector<8x128xf32>
    %92 = tpu.matmul %91, %3, %cst_37 {dimension_numbers = #tpu.dot_dimension_numbers<[1], [0], [0], [1], [0, 0, 1, 1], [], []>} : vector<8x128xbf16>, vector<128x128xbf16>, vector<8x128xf32> -> vector<8x128xf32>
    %93 = vector.shape_cast %92 : vector<8x128xf32> to vector<8x1x128xf32>
    %94 = arith.truncf %93 : vector<8x1x128xf32> to vector<8x1x128xbf16>
    %c0_38 = arith.constant 0 : index
    %c1 = arith.constant 1 : index
    %c0_39 = arith.constant 0 : index
    %c0_40 = arith.constant 0 : index
    %95 = vector.load %arg5[%c0_38, %c1, %c0_39, %c0_40] : memref<8x2x64x128xbf16, #tpu.memory_space<vmem>>, vector<8x1x64x128xbf16>
    %96 = vector.shape_cast %95 : vector<8x1x64x128xbf16> to vector<8x64x128xbf16>
    %97 = vector.shape_cast %12 : vector<1x64x1xi1> to vector<1x64x1xi1>
    %98 = vector.broadcast %97 : vector<1x64x1xi1> to vector<8x64x128xi1>
    %99 = vector.shape_cast %94 : vector<8x1x128xbf16> to vector<8x1x128xbf16>
    %100 = vector.broadcast %99 : vector<8x1x128xbf16> to vector<8x64x128xbf16>
    %101 = arith.select %98, %100, %96 : vector<8x64x128xi1>, vector<8x64x128xbf16>
    %102 = vector.shape_cast %90 : vector<8x128xf32> to vector<8x1x128xf32>
    %103 = arith.truncf %102 : vector<8x1x128xf32> to vector<8x1x128xbf16>
    %c0_41 = arith.constant 0 : index
    %c1_42 = arith.constant 1 : index
    %c0_43 = arith.constant 0 : index
    %c0_44 = arith.constant 0 : index
    %104 = vector.load %arg6[%c0_41, %c1_42, %c0_43, %c0_44] : memref<8x2x64x128xbf16, #tpu.memory_space<vmem>>, vector<8x1x64x128xbf16>
    %105 = vector.shape_cast %104 : vector<8x1x64x128xbf16> to vector<8x64x128xbf16>
    %106 = vector.shape_cast %12 : vector<1x64x1xi1> to vector<1x64x1xi1>
    %107 = vector.broadcast %106 : vector<1x64x1xi1> to vector<8x64x128xi1>
    %108 = vector.shape_cast %103 : vector<8x1x128xbf16> to vector<8x1x128xbf16>
    %109 = vector.broadcast %108 : vector<8x1x128xbf16> to vector<8x64x128xbf16>
    %110 = arith.select %107, %109, %105 : vector<8x64x128xi1>, vector<8x64x128xbf16>
    %c0_45 = arith.constant 0 : index
    %c1_46 = arith.constant 1 : index
    %c0_47 = arith.constant 0 : index
    %c0_48 = arith.constant 0 : index
    %111 = vector.load %arg8[%c0_45, %c1_46, %c0_47, %c0_48] : memref<8x2x64x128xbf16, #tpu.memory_space<vmem>>, vector<8x1x64x128xbf16>
    %112 = vector.shape_cast %111 : vector<8x1x64x128xbf16> to vector<8x64x128xbf16>
    %113 = vector.shape_cast %101 : vector<8x64x128xbf16> to vector<8x1x64x128xbf16>
    tpu.vector_store %arg8[%c0_45, %c1_46, %c0_47, %c0_48], %113 {strides = array<i32>} : memref<8x2x64x128xbf16, #tpu.memory_space<vmem>>, vector<8x1x64x128xbf16>,
    %c0_49 = arith.constant 0 : index
    %c1_50 = arith.constant 1 : index
    %c0_51 = arith.constant 0 : index
    %c0_52 = arith.constant 0 : index
    %114 = vector.load %arg9[%c0_49, %c1_50, %c0_51, %c0_52] : memref<8x2x64x128xbf16, #tpu.memory_space<vmem>>, vector<8x1x64x128xbf16>
    %115 = vector.shape_cast %114 : vector<8x1x64x128xbf16> to vector<8x64x128xbf16>
    %116 = vector.shape_cast %110 : vector<8x64x128xbf16> to vector<8x1x64x128xbf16>
    tpu.vector_store %arg9[%c0_49, %c1_50, %c0_51, %c0_52], %116 {strides = array<i32>} : memref<8x2x64x128xbf16, #tpu.memory_space<vmem>>, vector<8x1x64x128xbf16>,
    %117 = vector.extract_strided_slice %2 {offsets = [0, 256], sizes = [8, 128], strides = [1, 1]} : vector<8x1024xf32> to vector<8x128xf32>
    %118 = arith.truncf %117 : vector<8x128xf32> to vector<8x128xbf16>
    %cst_53 = arith.constant dense<0.000000e+00> : vector<8x128xf32>
    %119 = tpu.matmul %118, %3, %cst_53 {dimension_numbers = #tpu.dot_dimension_numbers<[1], [0], [0], [1], [0, 0, 1, 1], [], []>} : vector<8x128xbf16>, vector<128x128xbf16>, vector<8x128xf32> -> vector<8x128xf32>
    %120 = vector.shape_cast %119 : vector<8x128xf32> to vector<8x1x128xf32>
    %121 = arith.truncf %120 : vector<8x1x128xf32> to vector<8x1x128xbf16>
    "tpu.trace_start"() <{level = 10 : i32, message = "bqd,bsd->bqs"}> : () -> ()
    %cst_54 = arith.constant dense<0.000000e+00> : vector<8x1x64xf32>
    %122 = tpu.matmul %121, %101, %cst_54 {dimension_numbers = #tpu.dot_dimension_numbers<[2], [2], [1], [1], [0, 0, 0, 1, 1, 1], [0], [0]>} : vector<8x1x128xbf16>, vector<8x64x128xbf16>, vector<8x1x64xf32> -> vector<8x1x64xf32>
    "tpu.trace_stop"() : () -> ()
    %cst_55 = arith.constant 0.0883883461 : f32
    %123 = vector.broadcast %cst_55 : f32 to vector<8x1x64xf32>
    %124 = arith.mulf %122, %123 : vector<8x1x64xf32>
    %125 = vector.broadcast %9 : vector<1x1x64xf32> to vector<8x1x64xf32>
    %126 = arith.addf %124, %125 : vector<8x1x64xf32>
    %cst_56 = arith.constant dense<0xFF800000> : vector<8x1xf32>
    %127 = vector.multi_reduction <maximumf>, %126, %cst_56 [2] : vector<8x1x64xf32> to vector<8x1xf32>
    %128 = vector.shape_cast %127 : vector<8x1xf32> to vector<8x1x1xf32>
    %129 = vector.broadcast %128 : vector<8x1x1xf32> to vector<8x1x64xf32>
    %130 = arith.subf %126, %129 : vector<8x1x64xf32>
    %131 = math.exp %130 : vector<8x1x64xf32>
    %cst_57 = arith.constant dense<0.000000e+00> : vector<8x1xf32>
    %132 = vector.multi_reduction <add>, %131, %cst_57 [2] : vector<8x1x64xf32> to vector<8x1xf32>
    %133 = vector.shape_cast %132 : vector<8x1xf32> to vector<8x1x1xf32>
    %134 = tpu.reciprocal %133 {approx = true} : vector<8x1x1xf32> -> vector<8x1x1xf32>
    %135 = vector.broadcast %134 : vector<8x1x1xf32> to vector<8x1x64xf32>
    %136 = arith.mulf %131, %135 : vector<8x1x64xf32>
    %137 = arith.truncf %136 : vector<8x1x64xf32> to vector<8x1x64xbf16>
    "tpu.trace_start"() <{level = 10 : i32, message = "bqs,bsd->bqd"}> : () -> ()
    %cst_58 = arith.constant dense<0.000000e+00> : vector<8x1x128xf32>
    %138 = tpu.matmul %137, %110, %cst_58 {dimension_numbers = #tpu.dot_dimension_numbers<[2], [1], [1], [2], [0, 0, 0, 1, 1, 2], [0], [0]>} : vector<8x1x64xbf16>, vector<8x64x128xbf16>, vector<8x1x128xf32> -> vector<8x1x128xf32>
    "tpu.trace_stop"() : () -> ()
    %139 = vector.shape_cast %138 : vector<8x1x128xf32> to vector<8x128xf32>
    %140 = arith.truncf %139 : vector<8x128xf32> to vector<8x128xbf16>
    %141 = vector.extract_strided_slice %2 {offsets = [0, 384], sizes = [8, 128], strides = [1, 1]} : vector<8x1024xf32> to vector<8x128xf32>
    %142 = arith.truncf %141 : vector<8x128xf32> to vector<8x128xbf16>
    %cst_59 = arith.constant dense<0.000000e+00> : vector<8x128xf32>
    %143 = tpu.matmul %142, %3, %cst_59 {dimension_numbers = #tpu.dot_dimension_numbers<[1], [0], [0], [1], [0, 0, 1, 1], [], []>} : vector<8x128xbf16>, vector<128x128xbf16>, vector<8x128xf32> -> vector<8x128xf32>
    %144 = vector.shape_cast %143 : vector<8x128xf32> to vector<8x1x128xf32>
    %145 = arith.truncf %144 : vector<8x1x128xf32> to vector<8x1x128xbf16>
    "tpu.trace_start"() <{level = 10 : i32, message = "bqd,bsd->bqs"}> : () -> ()
    %cst_60 = arith.constant dense<0.000000e+00> : vector<8x1x64xf32>
    %146 = tpu.matmul %145, %101, %cst_60 {dimension_numbers = #tpu.dot_dimension_numbers<[2], [2], [1], [1], [0, 0, 0, 1, 1, 1], [0], [0]>} : vector<8x1x128xbf16>, vector<8x64x128xbf16>, vector<8x1x64xf32> -> vector<8x1x64xf32>
    "tpu.trace_stop"() : () -> ()
    %cst_61 = arith.constant 0.0883883461 : f32
    %147 = vector.broadcast %cst_61 : f32 to vector<8x1x64xf32>
    %148 = arith.mulf %146, %147 : vector<8x1x64xf32>
    %149 = vector.broadcast %9 : vector<1x1x64xf32> to vector<8x1x64xf32>
    %150 = arith.addf %148, %149 : vector<8x1x64xf32>
    %cst_62 = arith.constant dense<0xFF800000> : vector<8x1xf32>
    %151 = vector.multi_reduction <maximumf>, %150, %cst_62 [2] : vector<8x1x64xf32> to vector<8x1xf32>
    %152 = vector.shape_cast %151 : vector<8x1xf32> to vector<8x1x1xf32>
    %153 = vector.broadcast %152 : vector<8x1x1xf32> to vector<8x1x64xf32>
    %154 = arith.subf %150, %153 : vector<8x1x64xf32>
    %155 = math.exp %154 : vector<8x1x64xf32>
    %cst_63 = arith.constant dense<0.000000e+00> : vector<8x1xf32>
    %156 = vector.multi_reduction <add>, %155, %cst_63 [2] : vector<8x1x64xf32> to vector<8x1xf32>
    %157 = vector.shape_cast %156 : vector<8x1xf32> to vector<8x1x1xf32>
    %158 = tpu.reciprocal %157 {approx = true} : vector<8x1x1xf32> -> vector<8x1x1xf32>
    %159 = vector.broadcast %158 : vector<8x1x1xf32> to vector<8x1x64xf32>
    %160 = arith.mulf %155, %159 : vector<8x1x64xf32>
    %161 = arith.truncf %160 : vector<8x1x64xf32> to vector<8x1x64xbf16>
    "tpu.trace_start"() <{level = 10 : i32, message = "bqs,bsd->bqd"}> : () -> ()
    %cst_64 = arith.constant dense<0.000000e+00> : vector<8x1x128xf32>
    %162 = tpu.matmul %161, %110, %cst_64 {dimension_numbers = #tpu.dot_dimension_numbers<[2], [1], [1], [2], [0, 0, 0, 1, 1, 2], [0], [0]>} : vector<8x1x64xbf16>, vector<8x64x128xbf16>, vector<8x1x128xf32> -> vector<8x1x128xf32>
    "tpu.trace_stop"() : () -> ()
    %163 = vector.shape_cast %162 : vector<8x1x128xf32> to vector<8x128xf32>
    %164 = arith.truncf %163 : vector<8x128xf32> to vector<8x128xbf16>
    %165 = tpu.concatenate %64, %88, %140, %164 in 1 : vector<8x128xbf16>, vector<8x128xbf16>, vector<8x128xbf16>, vector<8x128xbf16> -> vector<8x512xbf16>
    %c0_65 = arith.constant 0 : index
    %c0_66 = arith.constant 0 : index
    %166 = vector.load %arg3[%c0_65, %c0_66] : memref<512x512xbf16, #tpu.memory_space<vmem>>, vector<512x512xbf16>
    %cst_67 = arith.constant dense<0.000000e+00> : vector<8x512xf32>
    %167 = tpu.matmul %165, %166, %cst_67 {dimension_numbers = #tpu.dot_dimension_numbers<[1], [0], [0], [1], [0, 0, 1, 1], [], []>} : vector<8x512xbf16>, vector<512x512xbf16>, vector<8x512xf32> -> vector<8x512xf32>
    %c0_68 = arith.constant 0 : index
    %c0_69 = arith.constant 0 : index
    %168 = vector.load %arg7[%c0_68, %c0_69] : memref<8x512xf32, #tpu.memory_space<vmem>>, vector<8x512xf32>
    tpu.vector_store %arg7[%c0_68, %c0_69], %167 {strides = array<i32>} : memref<8x512xf32, #tpu.memory_space<vmem>>, vector<8x512xf32>,
    return
  }
  func.func @transform_0(%arg0: i32) -> (i32, i32) {
    %c0_i32 = arith.constant 0 : i32
    %c0_i32_0 = arith.constant 0 : i32
    return %arg0, %c0_i32 : i32, i32
  }
  func.func @transform_1(%arg0: i32) -> (i32, i32) {
    %c0_i32 = arith.constant 0 : i32
    %c0_i32_0 = arith.constant 0 : i32
    %c0_i32_1 = arith.constant 0 : i32
    return %c0_i32, %c0_i32_0 : i32, i32
  }
  func.func @transform_2(%arg0: i32) -> (i32, i32) {
    %c0_i32 = arith.constant 0 : i32
    %c0_i32_0 = arith.constant 0 : i32
    %c0_i32_1 = arith.constant 0 : i32
    return %c0_i32, %c0_i32_0 : i32, i32
  }
  func.func @transform_3(%arg0: i32) -> (i32, i32) {
    %c0_i32 = arith.constant 0 : i32
    %c0_i32_0 = arith.constant 0 : i32
    %c0_i32_1 = arith.constant 0 : i32
    return %c0_i32, %c0_i32_0 : i32, i32
  }
  func.func @transform_4(%arg0: i32) -> (i32, i32, i32, i32) {
    %c0_i32 = arith.constant 0 : i32
    %c0_i32_0 = arith.constant 0 : i32
    %c0_i32_1 = arith.constant 0 : i32
    %c0_i32_2 = arith.constant 0 : i32
    return %arg0, %c0_i32, %c0_i32_0, %c0_i32_1 : i32, i32, i32, i32
  }
  func.func @transform_5(%arg0: i32) -> (i32, i32, i32, i32) {
    %c0_i32 = arith.constant 0 : i32
    %c0_i32_0 = arith.constant 0 : i32
    %c0_i32_1 = arith.constant 0 : i32
    %c0_i32_2 = arith.constant 0 : i32
    return %arg0, %c0_i32, %c0_i32_0, %c0_i32_1 : i32, i32, i32, i32
  }
  func.func @transform_6(%arg0: i32) -> (i32, i32) {
    %c0_i32 = arith.constant 0 : i32
    %c0_i32_0 = arith.constant 0 : i32
    return %arg0, %c0_i32 : i32, i32
  }
  func.func @transform_7(%arg0: i32) -> (i32, i32, i32, i32) {
    %c0_i32 = arith.constant 0 : i32
    %c0_i32_0 = arith.constant 0 : i32
    %c0_i32_1 = arith.constant 0 : i32
    %c0_i32_2 = arith.constant 0 : i32
    return %arg0, %c0_i32, %c0_i32_0, %c0_i32_1 : i32, i32, i32, i32
  }
  func.func @transform_8(%arg0: i32) -> (i32, i32, i32, i32) {
    %c0_i32 = arith.constant 0 : i32
    %c0_i32_0 = arith.constant 0 : i32
    %c0_i32_1 = arith.constant 0 : i32
    %c0_i32_2 = arith.constant 0 : i32
    return %arg0, %c0_i32, %c0_i32_0, %c0_i32_1 : i32, i32, i32, i32
  }
}

</mosaic_0001>

<llo_original>
// kernel: tpu_custom_call.1
$region0: #{tpu_custom_call.1}
  #allocation0 [shape = 'u32[]', space=smem, size = 0x4, offset = 0x4, fixed_abs, tag = 'smem constant byte address 0x4 - core index']
  #allocation1 [shape = 'u32[144,128]{1,0:T(1,128)}', space=vmem, size = 0x12000, scoped, tag = 'internal scratch']
  #allocation11 [shape = 's32[]', space=sflag, size = 0x4, offset = 0, fixed_abs, tag = 'sflag constant byte address 0x0 - dummy sync flag']
  #allocation13 [shape = 's32[]', space=sflag, size = 0x4, offset = 0, fixed_abs, tag = 'sflag constant byte address 0x0 - dummy sync flag']
  #allocation15 [shape = 's32[]', space=sflag, size = 0x4, offset = 0, fixed_abs, tag = 'sflag constant byte address 0x0 - dummy sync flag']
  #allocation17 [shape = 's32[]', space=sflag, size = 0x4, offset = 0, fixed_abs, tag = 'sflag constant byte address 0x0 - dummy sync flag']
  %s0 = inlined_call_operand.vmem [shape: bf16[16,512], index: 0, kind: input, shape index: {}]
  %s1 = inlined_call_operand.vmem [shape: bf16[512,1024], index: 1, kind: input, shape index: {}]
  %s2 = inlined_call_operand.vmem [shape: bf16[512,512], index: 2, kind: input, shape index: {}]
  %s3 = inlined_call_operand.vmem [shape: bf16[128,128], index: 3, kind: input, shape index: {}]
  %s4 = inlined_call_operand.hbm [shape: bf16[16,2,128,128], index: 4, kind: input, shape index: {}, may-alias: {4,7}]
  %s5 = inlined_call_operand.hbm [shape: bf16[16,2,128,128], index: 5, kind: input, shape index: {}, may-alias: {5,8}]
  %s6 = inlined_call_operand.hbm [shape: f32[16,512], index: 6, kind: output, shape index: {0}]
  %s7 = inlined_call_operand.hbm [shape: bf16[16,2,128,128], index: 7, kind: output, shape index: {1}, may-alias: {4,7}]
  %s8 = inlined_call_operand.hbm [shape: bf16[16,2,128,128], index: 8, kind: output, shape index: {2}, may-alias: {5,8}]
  %9 = xla_tuple %s6, %s7, %s8
  %s10 = sld [smem:[#allocation0]]
  $region81: #{tpu_custom_call.1} parent=0
    _
  %s12 = ssub.s32 1, %s10
  %s13 = scalar_select 0, %s12, %s10
  $region1: #{tpu_custom_call.1} parent=0
    #allocation2 [shape = 'u8[524288]{0}', space=vmem, size = 0x80000, scoped, tag = 'input window, operand 4']
    #allocation3 [shape = 's32[2]{0}', space=sflag, size = 0x8, scoped, tag = 'scoped memory for tpu_custom_call.1']
    #allocation4 [shape = 's32[2]{0}', space=sflag, size = 0x8, scoped, tag = 'scoped memory for tpu_custom_call.1']
    #allocation5 [shape = 'u8[524288]{0}', space=vmem, size = 0x80000, scoped, tag = 'input window, operand 5']
    #allocation6 [shape = 's32[2]{0}', space=sflag, size = 0x8, scoped, tag = 'scoped memory for tpu_custom_call.1']
    #allocation7 [shape = 'u8[32768]{0}', space=vmem, size = 0x8000, scoped, tag = 'output window, operand 0']
    #allocation8 [shape = 'u8[524288]{0}', space=vmem, size = 0x80000, scoped, tag = 'output window, operand 1']
    #allocation9 [shape = 's32[2]{0}', space=sflag, size = 0x8, scoped, tag = 'scoped memory for tpu_custom_call.1']
    #allocation10 [shape = 'u8[524288]{0}', space=vmem, size = 0x80000, scoped, tag = 'output window, operand 2']
    %14 = vsyncpa [#allocation3], 0
    %s15 = scalar_lea.sflag [#allocation3], 1
    %16 = vsyncpa %s15, 0
    %17 = vsyncpa [#allocation6], 0
    %s18 = scalar_lea.sflag [#allocation6], 1
    %19 = vsyncpa %s18, 0
    %20 = vsyncpa [#allocation4], 0
    %s21 = scalar_lea.sflag [#allocation4], 1
    %22 = vsyncpa %s21, 0
    %23 = vsyncpa [#allocation9], 0
    %s24 = scalar_lea.sflag [#allocation9], 1
    %25 = vsyncpa %s24, 0
    loop: start=0, step=1, limit=4
    $region2: #{tpu_custom_call.1} parent=1 // loop_pre_header
      _
    $region3: #{tpu_custom_call.1} parent=1 // loop_header
      %s27 = sphi 0, %s31
      %p28 = scmp.ge.s32.totalorder %s27, 4
      %s37 = sphi 0, %s39
      %s40 = sphi 0, %s37
      %s41 = sphi 0, %s40
      %s57 = sphi 0, %s41
      %s61 = sphi 0, %s61
      %s63 = sphi 0, %s61
      %s64 = sphi 0, %s63
      %s78 = sphi 0, %s64
      %s82 = sphi 0, %s82
      %s84 = sphi 0, %s82
      %s85 = sphi 0, %s84
      %s99 = sphi 0, %s85
      %s103 = sphi 0, %s103
      %s105 = sphi 0, %s103
      %s106 = sphi 0, %s105
      %s120 = sphi 0, %s106
      %s126 = sphi 0, %s128
      %s129 = sphi 0, %s126
      %s130 = sphi 0, %s129
      %s146 = sphi 0, %s130
      %s152 = sphi 0, %s154
      %s155 = sphi 0, %s152
      %s156 = sphi 0, %s155
      %s172 = sphi 0, %s156
      %s178 = sphi 0, %s180
      %s181 = sphi 0, %s178
      %s182 = sphi 0, %s181
      %s198 = sphi 0, %s182
      %s204 = sphi 0, %s206
      %s207 = sphi 0, %s204
      %s208 = sphi 0, %s207
      %s224 = sphi 0, %s208
      %s230 = sphi 0, %s232
      %s233 = sphi 0, %s230
      %s234 = sphi 0, %s233
      %s250 = sphi 0, %s234
    $region4: #{tpu_custom_call.1} parent=1 // loop_header_branch
      %30 = sbr.rel (%p28) target = $region8
    $region5: #{tpu_custom_call.1} parent=1 // loop_body
      %s32 = ssub.s32 %s27, 1
      %s33 = ssub.s32 %s27, 2
      %s34 = sadd.s32 %s27, 1
      %s35 = ssub.s32 %s27, %s34
      %p36 = scmp.eq.s32.totalorder %s35, 0
      %s38 = sadd.s32 %s37, 1
      %s39 = scalar_select %p36, %s37, %s38
      %p42 = pneg %p36
      %p43 = scmp.eq.s32.totalorder %s27, 1
      %p44 = por %p42, %p43
      %p45 = scmp.ne.s32.totalorder %s37, %s40
      %p46 = scmp.eq.s32.totalorder %s27, 0
      %p47 = por %p45, %p46
      %p48 = scmp.ne.s32.totalorder %s37, %s40
      %p49 = scmp.eq.s32.totalorder %s32, 1
      %p50 = por %p48, %p49
      %p51 = scmp.ne.s32.totalorder %s40, %s41
      %p52 = scmp.eq.s32.totalorder %s32, 0
      %p53 = por %p51, %p52
      %p54 = scmp.ne.s32.totalorder %s40, %s41
      %p55 = scmp.eq.s32.totalorder %s33, 1
      %p56 = por %p54, %p55
      %p58 = scmp.ne.s32.totalorder %s41, %s57
      %p59 = scmp.eq.s32.totalorder %s33, 0
      %p60 = por %p58, %p59
      %s62 = sadd.s32 %s61, 1
      %p65 = scmp.eq.s32.totalorder %s27, 1
      %p66 = scmp.ne.s32.totalorder %s61, %s63
      %p67 = scmp.eq.s32.totalorder %s27, 0
      %p68 = por %p66, %p67
      %p69 = scmp.ne.s32.totalorder %s61, %s63
      %p70 = scmp.eq.s32.totalorder %s32, 1
      %p71 = por %p69, %p70
      %p72 = scmp.ne.s32.totalorder %s63, %s64
      %p73 = scmp.eq.s32.totalorder %s32, 0
      %p74 = por %p72, %p73
      %p75 = scmp.ne.s32.totalorder %s63, %s64
      %p76 = scmp.eq.s32.totalorder %s33, 1
      %p77 = por %p75, %p76
      %p79 = scmp.ne.s32.totalorder %s64, %s78
      %p80 = scmp.eq.s32.totalorder %s33, 0
      %p81 = por %p79, %p80
      %s83 = sadd.s32 %s82, 1
      %p86 = scmp.eq.s32.totalorder %s27, 1
      %p87 = scmp.ne.s32.totalorder %s82, %s84
      %p88 = scmp.eq.s32.totalorder %s27, 0
      %p89 = por %p87, %p88
      %p90 = scmp.ne.s32.totalorder %s82, %s84
      %p91 = scmp.eq.s32.totalorder %s32, 1
      %p92 = por %p90, %p91
      %p93 = scmp.ne.s32.totalorder %s84, %s85
      %p94 = scmp.eq.s32.totalorder %s32, 0
      %p95 = por %p93, %p94
      %p96 = scmp.ne.s32.totalorder %s84, %s85
      %p97 = scmp.eq.s32.totalorder %s33, 1
      %p98 = por %p96, %p97
      %p100 = scmp.ne.s32.totalorder %s85, %s99
      %p101 = scmp.eq.s32.totalorder %s33, 0
      %p102 = por %p100, %p101
      %s104 = sadd.s32 %s103, 1
      %p107 = scmp.eq.s32.totalorder %s27, 1
      %p108 = scmp.ne.s32.totalorder %s103, %s105
      %p109 = scmp.eq.s32.totalorder %s27, 0
      %p110 = por %p108, %p109
      %p111 = scmp.ne.s32.totalorder %s103, %s105
      %p112 = scmp.eq.s32.totalorder %s32, 1
      %p113 = por %p111, %p112
      %p114 = scmp.ne.s32.totalorder %s105, %s106
      %p115 = scmp.eq.s32.totalorder %s32, 0
      %p116 = por %p114, %p115
      %p117 = scmp.ne.s32.totalorder %s105, %s106
      %p118 = scmp.eq.s32.totalorder %s33, 1
      %p119 = por %p117, %p118
      %p121 = scmp.ne.s32.totalorder %s106, %s120
      %p122 = scmp.eq.s32.totalorder %s33, 0
      %p123 = por %p121, %p122
      %s124 = ssub.s32 %s27, %s34
      %p125 = scmp.eq.s32.totalorder %s124, 0
      %s127 = sadd.s32 %s126, 1
      %s128 = scalar_select %p125, %s126, %s127
      %p131 = pneg %p125
      %p132 = scmp.eq.s32.totalorder %s27, 1
      %p133 = por %p131, %p132
      %p134 = scmp.ne.s32.totalorder %s126, %s129
      %p135 = scmp.eq.s32.totalorder %s27, 0
      %p136 = por %p134, %p135
      %p137 = scmp.ne.s32.totalorder %s126, %s129
      %p138 = scmp.eq.s32.totalorder %s32, 1
      %p139 = por %p137, %p138
      %p140 = scmp.ne.s32.totalorder %s129, %s130
      %p141 = scmp.eq.s32.totalorder %s32, 0
      %p142 = por %p140, %p141
      %p143 = scmp.ne.s32.totalorder %s129, %s130
      %p144 = scmp.eq.s32.totalorder %s33, 1
      %p145 = por %p143, %p144
      %p147 = scmp.ne.s32.totalorder %s130, %s146
      %p148 = scmp.eq.s32.totalorder %s33, 0
      %p149 = por %p147, %p148
      %s150 = ssub.s32 %s27, %s34
      %p151 = scmp.eq.s32.totalorder %s150, 0
      %s153 = sadd.s32 %s152, 1
      %s154 = scalar_select %p151, %s152, %s153
      %p157 = pneg %p151
      %p158 = scmp.eq.s32.totalorder %s27, 1
      %p159 = por %p157, %p158
      %p160 = scmp.ne.s32.totalorder %s152, %s155
      %p161 = scmp.eq.s32.totalorder %s27, 0
      %p162 = por %p160, %p161
      %p163 = scmp.ne.s32.totalorder %s152, %s155
      %p164 = scmp.eq.s32.totalorder %s32, 1
      %p165 = por %p163, %p164
      %p166 = scmp.ne.s32.totalorder %s155, %s156
      %p167 = scmp.eq.s32.totalorder %s32, 0
      %p168 = por %p166, %p167
      %p169 = scmp.ne.s32.totalorder %s155, %s156
      %p170 = scmp.eq.s32.totalorder %s33, 1
      %p171 = por %p169, %p170
      %p173 = scmp.ne.s32.totalorder %s156, %s172
      %p174 = scmp.eq.s32.totalorder %s33, 0
      %p175 = por %p173, %p174
      %s176 = ssub.s32 %s27, %s34
      %p177 = scmp.eq.s32.totalorder %s176, 0
      %s179 = sadd.s32 %s178, 1
      %s180 = scalar_select %p177, %s178, %s179
      %p183 = pneg %p177
      %p184 = scmp.eq.s32.totalorder %s27, 1
      %p185 = por %p183, %p184
      %p186 = scmp.ne.s32.totalorder %s178, %s181
      %p187 = scmp.eq.s32.totalorder %s27, 0
      %p188 = por %p186, %p187
      %p189 = scmp.ne.s32.totalorder %s178, %s181
      %p190 = scmp.eq.s32.totalorder %s32, 1
      %p191 = por %p189, %p190
      %p192 = scmp.ne.s32.totalorder %s181, %s182
      %p193 = scmp.eq.s32.totalorder %s32, 0
      %p194 = por %p192, %p193
      %p195 = scmp.ne.s32.totalorder %s181, %s182
      %p196 = scmp.eq.s32.totalorder %s33, 1
      %p197 = por %p195, %p196
      %p199 = scmp.ne.s32.totalorder %s182, %s198
      %p200 = scmp.eq.s32.totalorder %s33, 0
      %p201 = por %p199, %p200
      %s202 = ssub.s32 %s27, %s34
      %p203 = scmp.eq.s32.totalorder %s202, 0
      %s205 = sadd.s32 %s204, 1
      %s206 = scalar_select %p203, %s204, %s205
      %p209 = pneg %p203
      %p210 = scmp.eq.s32.totalorder %s27, 1
      %p211 = por %p209, %p210
      %p212 = scmp.ne.s32.totalorder %s204, %s207
      %p213 = scmp.eq.s32.totalorder %s27, 0
      %p214 = por %p212, %p213
      %p215 = scmp.ne.s32.totalorder %s204, %s207
      %p216 = scmp.eq.s32.totalorder %s32, 1
      %p217 = por %p215, %p216
      %p218 = scmp.ne.s32.totalorder %s207, %s208
      %p219 = scmp.eq.s32.totalorder %s32, 0
      %p220 = por %p218, %p219
      %p221 = scmp.ne.s32.totalorder %s207, %s208
      %p222 = scmp.eq.s32.totalorder %s33, 1
      %p223 = por %p221, %p222
      %p225 = scmp.ne.s32.totalorder %s208, %s224
      %p226 = scmp.eq.s32.totalorder %s33, 0
      %p227 = por %p225, %p226
      %s228 = ssub.s32 %s27, %s34
      %p229 = scmp.eq.s32.totalorder %s228, 0
      %s231 = sadd.s32 %s230, 1
      %s232 = scalar_select %p229, %s230, %s231
      %p235 = pneg %p229
      %p236 = scmp.eq.s32.totalorder %s27, 1
      %p237 = por %p235, %p236
      %p238 = scmp.ne.s32.totalorder %s230, %s233
      %p239 = scmp.eq.s32.totalorder %s27, 0
      %p240 = por %p238, %p239
      %p241 = scmp.ne.s32.totalorder %s230, %s233
      %p242 = scmp.eq.s32.totalorder %s32, 1
      %p243 = por %p241, %p242
      %p244 = scmp.ne.s32.totalorder %s233, %s234
      %p245 = scmp.eq.s32.totalorder %s32, 0
      %p246 = por %p244, %p245
      %p247 = scmp.ne.s32.totalorder %s233, %s234
      %p248 = scmp.eq.s32.totalorder %s33, 1
      %p249 = por %p247, %p248
      %p251 = scmp.ne.s32.totalorder %s234, %s250
      %p252 = scmp.eq.s32.totalorder %s33, 0
      %p253 = por %p251, %p252
      %p254 = scmp.le.s32.totalorder 1, %s27
      %p255 = scmp.lt.s32.totalorder %s27, 3
      %p256 = pnand %p254, %p255
      %p257 = pneg %p256
      // Predicated region
      $region9: #{tpu_custom_call.1} parent=5 // pred_check
        _
      $region10: #{tpu_custom_call.1} parent=5 // pred_check_branch
        %259 = sbr.rel (%p256) target = $region12
      $region11: #{tpu_custom_call.1} parent=5 // pred_region
        %s260 = ssub.s32 %s27, 1
        // Predicated region
        $region13: #{tpu_custom_call.1} parent=11 // pred_check
          %p261 = pneg %p74
        $region14: #{tpu_custom_call.1} parent=11 // pred_check_branch
          %263 = sbr.rel (%p261) target = $region16
        $region15: #{tpu_custom_call.1} parent=11 // pred_region
          _
        $region16: #{tpu_custom_call.1} parent=11 // pred_fallthru
          _
        // Predicated region
        $region17: #{tpu_custom_call.1} parent=11 // pred_check
          %p264 = pneg %p95
        $region18: #{tpu_custom_call.1} parent=11 // pred_check_branch
          %266 = sbr.rel (%p264) target = $region20
        $region19: #{tpu_custom_call.1} parent=11 // pred_region
          _
        $region20: #{tpu_custom_call.1} parent=11 // pred_fallthru
          _
        // Predicated region
        $region21: #{tpu_custom_call.1} parent=11 // pred_check
          %p267 = pneg %p116
        $region22: #{tpu_custom_call.1} parent=11 // pred_check_branch
          %269 = sbr.rel (%p267) target = $region24
        $region23: #{tpu_custom_call.1} parent=11 // pred_region
          _
        $region24: #{tpu_custom_call.1} parent=11 // pred_fallthru
          _
      $region12: #{tpu_custom_call.1} parent=5 // pred_fallthru
        _
      %p270 = scmp.lt.s32.totalorder %s27, 2
      // Predicated region
      $region25: #{tpu_custom_call.1} parent=5 // pred_check
        %p271 = pneg %p270
      $region26: #{tpu_custom_call.1} parent=5 // pred_check_branch
        %273 = sbr.rel (%p271) target = $region28
      $region27: #{tpu_custom_call.1} parent=5 // pred_region
        // Predicated region
        $region29: #{tpu_custom_call.1} parent=27 // pred_check
          %p274 = pneg %p47
        $region30: #{tpu_custom_call.1} parent=27 // pred_check_branch
          %276 = sbr.rel (%p274) target = $region32
        $region31: #{tpu_custom_call.1} parent=27 // pred_region
          %p277 = scmp.lt.s32.totalorder %s27, 1
          %s278 = scalar_select %p277, %s27, 1
          %s279 = smul.addr %s278, 4
          %s280 = smul.addr %s279, 4
          %s281 = scalar_lea.vmem %s0, %s280
        $region32: #{tpu_custom_call.1} parent=27 // pred_fallthru
          _
        // Predicated region
        $region33: #{tpu_custom_call.1} parent=27 // pred_check
          %p282 = pneg %p136
        $region34: #{tpu_custom_call.1} parent=27 // pred_check_branch
          %284 = sbr.rel (%p282) target = $region36
        $region35: #{tpu_custom_call.1} parent=27 // pred_region
          #allocation12 [shape = 'u32[6]{0}', space=smem, size = 0x18, scoped, tag = 'DMA stride descriptor']
          %s285 = sand.u32 %s126, 1
          %s286 = scalar_lea.sflag [#allocation3], %s285
          %s287 = sand.u32 %s126, 1
          %s288 = smul.addr %s287, 512
          %s289 = scalar_lea.vmem [#allocation2], %s288
          %s290 = smul.u32 8, %s27
          %s292 = ssub.s32 8192, 8192
          %293 = vsyncadd %s286, %s292
          %s294 = smul.addr %s290, 32
          %s295 = smul.addr %s294, 64
          %s296 = scalar_lea.hbm %s4, %s295
          %s298 = sshll.u32 1, 14
          %s299 = sxor.u32 4294967295, %s298
          %s301 = sld [smem:[#allocation0]]
          %s302 = sadd.s32 2, %s301
          %s304 = sshll.u32 7, 26
          %s305 = sxor.u32 4294967295, %s304
          %s306 = sand.u32 0, %s305
          %s307 = sshll.u32 %s302, 26
          %s308 = sor.u32 %s306, %s307
          %s309 = sshll.u32 %s289, 4
          %s310 = int_to_ptr.vmem [resolvable:$true] %s309
          %316 = sst [smem:[#allocation12]] 1024
          %s317 = scalar_lea.smem [#allocation12], 1
          %318 = sst [smem:[%s317]] 512
          %s319 = scalar_lea.smem [#allocation12], 2
          %320 = sst [smem:[%s319]] 8
          %s321 = scalar_lea.smem [#allocation12], 3
          %322 = sst [smem:[%s321]] 64
          %s323 = scalar_lea.smem [#allocation12], 4
          %324 = sst [smem:[%s323]] 64
          %s325 = scalar_lea.smem [#allocation12], 5
          %326 = sst [smem:[%s325]] 4
          %328 = dma.general %s296, 8192, %s310, %s286, 131072, [#allocation12], %s308, 0
        $region36: #{tpu_custom_call.1} parent=27 // pred_fallthru
          _
        // Predicated region
        $region37: #{tpu_custom_call.1} parent=27 // pred_check
          %p329 = pneg %p162
        $region38: #{tpu_custom_call.1} parent=27 // pred_check_branch
          %331 = sbr.rel (%p329) target = $region40
        $region39: #{tpu_custom_call.1} parent=27 // pred_region
          #allocation14 [shape = 'u32[6]{0}', space=smem, size = 0x18, scoped, tag = 'DMA stride descriptor']
          %s332 = sand.u32 %s152, 1
          %s333 = scalar_lea.sflag [#allocation6], %s332
          %s334 = sand.u32 %s152, 1
          %s335 = smul.addr %s334, 512
          %s336 = scalar_lea.vmem [#allocation5], %s335
          %s337 = smul.u32 8, %s27
          %s339 = ssub.s32 8192, 8192
          %340 = vsyncadd %s333, %s339
          %s341 = smul.addr %s337, 32
          %s342 = smul.addr %s341, 64
          %s343 = scalar_lea.hbm %s5, %s342
          %s345 = sshll.u32 1, 14
          %s346 = sxor.u32 4294967295, %s345
          %s348 = sld [smem:[#allocation0]]
          %s349 = sadd.s32 2, %s348
          %s351 = sshll.u32 7, 26
          %s352 = sxor.u32 4294967295, %s351
          %s353 = sand.u32 0, %s352
          %s354 = sshll.u32 %s349, 26
          %s355 = sor.u32 %s353, %s354
          %s356 = sshll.u32 %s336, 4
          %s357 = int_to_ptr.vmem [resolvable:$true] %s356
          %363 = sst [smem:[#allocation14]] 1024
          %s364 = scalar_lea.smem [#allocation14], 1
          %365 = sst [smem:[%s364]] 512
          %s366 = scalar_lea.smem [#allocation14], 2
          %367 = sst [smem:[%s366]] 8
          %s368 = scalar_lea.smem [#allocation14], 3
          %369 = sst [smem:[%s368]] 64
          %s370 = scalar_lea.smem [#allocation14], 4
          %371 = sst [smem:[%s370]] 64
          %s372 = scalar_lea.smem [#allocation14], 5
          %373 = sst [smem:[%s372]] 4
          %375 = dma.general %s343, 8192, %s357, %s333, 131072, [#allocation14], %s355, 0
        $region40: #{tpu_custom_call.1} parent=27 // pred_fallthru
          _
      $region28: #{tpu_custom_call.1} parent=5 // pred_fallthru
        _
      %p376 = scmp.le.s32.totalorder 1, %s27
      %p377 = scmp.lt.s32.totalorder %s27, 3
      %p378 = pnand %p376, %p377
      %p379 = pneg %p378
      // Predicated region
      $region41: #{tpu_custom_call.1} parent=5 // pred_check
        _
      $region42: #{tpu_custom_call.1} parent=5 // pred_check_branch
        %381 = sbr.rel (%p378) target = $region44
      $region43: #{tpu_custom_call.1} parent=5 // pred_region
        %s382 = ssub.s32 %s27, 1
        %s383 = sand.u32 %s129, 1
        %s384 = scalar_lea.sflag [#allocation3], %s383
        %s385 = sand.u32 %s129, 1
        %s386 = smul.addr %s385, 512
        %s387 = scalar_lea.vmem [#allocation2], %s386
        // Predicated region
        $region45: #{tpu_custom_call.1} parent=43 // pred_check
          %p388 = pneg %p142
        $region46: #{tpu_custom_call.1} parent=43 // pred_check_branch
          %390 = sbr.rel (%p388) target = $region48
        $region47: #{tpu_custom_call.1} parent=43 // pred_region
          %391 = dma.done %s384, 8192
        $region48: #{tpu_custom_call.1} parent=43 // pred_fallthru
          _
        %s392 = sand.u32 %s155, 1
        %s393 = scalar_lea.sflag [#allocation6], %s392
        %s394 = sand.u32 %s155, 1
        %s395 = smul.addr %s394, 512
        %s396 = scalar_lea.vmem [#allocation5], %s395
        // Predicated region
        $region49: #{tpu_custom_call.1} parent=43 // pred_check
          %p397 = pneg %p168
        $region50: #{tpu_custom_call.1} parent=43 // pred_check_branch
          %399 = sbr.rel (%p397) target = $region52
        $region51: #{tpu_custom_call.1} parent=43 // pred_region
          %400 = dma.done %s393, 8192
        $region52: #{tpu_custom_call.1} parent=43 // pred_fallthru
          _
        %p401 = scmp.lt.s32.totalorder %s32, 1
        %s402 = scalar_select %p401, %s32, 1
        %s403 = smul.addr %s402, 4
        %s404 = smul.addr %s403, 4
        %s405 = scalar_lea.vmem %s0, %s404
        %p406 = pneg %p53
        %p407 = pneg %p50
        %p408 = pneg %p74
        %p409 = pneg %p71
        %p410 = pneg %p95
        %p411 = pneg %p92
        %p412 = pneg %p116
        %p413 = pneg %p113
        %s414 = sand.u32 %s129, 1
        %s415 = scalar_lea.sflag [#allocation3], %s414
        %s416 = sand.u32 %s129, 1
        %s417 = smul.addr %s416, 512
        %s418 = scalar_lea.vmem [#allocation2], %s417
        %p419 = pneg %p142
        %p420 = pneg %p139
        %s421 = sand.u32 %s155, 1
        %s422 = scalar_lea.sflag [#allocation6], %s421
        %s423 = sand.u32 %s155, 1
        %s424 = smul.addr %s423, 512
        %s425 = scalar_lea.vmem [#allocation5], %s424
        %p426 = pneg %p168
        %p427 = pneg %p165
        %p428 = pneg %p194
        %p429 = pneg %p191
        %s430 = sand.u32 %s181, 1
        %s431 = scalar_lea.sflag [#allocation4], %s430
        %s432 = sand.u32 %s181, 1
        %s433 = smul.addr %s432, 32
        %s434 = scalar_lea.vmem [#allocation7], %s433
        %p435 = pneg %p220
        %p436 = pneg %p217
        %s437 = sand.u32 %s32, 1
        %s438 = scalar_lea.sflag [#allocation9], %s437
        %s439 = sand.u32 %s207, 1
        %s440 = smul.addr %s439, 512
        %s441 = scalar_lea.vmem [#allocation8], %s440
        %p442 = pneg %p246
        %p443 = pneg %p243
        %s444 = sand.u32 %s32, 1
        %s445 = scalar_lea.sflag [#allocation9], %s444
        %s446 = sand.u32 %s233, 1
        %s447 = smul.addr %s446, 512
        %s448 = scalar_lea.vmem [#allocation10], %s447
        %p449 = scmp.lt.s32.totalorder %s32, 1
        %s450 = scalar_select %p449, %s32, 1
        %s451 = smul.addr %s450, 4
        %s452 = smul.addr %s451, 4
        %s453 = scalar_lea.vmem %s0, %s452
        %s454 = smul.u32 8, %s32
        %s455 = smul.u32 8, %s32
        %s456 = smul.u32 8, %s32
        %s457 = smul.u32 8, %s32
        %v461 = vld [vmem:[%s453] sm:$0xff]
        %v462 = vld [vmem:[%s453 + $0x8] sm:$0xff]
        %v463 = vld [vmem:[%s1] sm:$0xff]
        %v464 = vld [vmem:[%s1 + $0x8] sm:$0xff]
        %v465 = vld [vmem:[%s1 + $0x10] sm:$0xff]
        %v466 = vld [vmem:[%s1 + $0x18] sm:$0xff]
        %v467 = vld [vmem:[%s1 + $0x20] sm:$0xff]
        %v468 = vld [vmem:[%s1 + $0x28] sm:$0xff]
        %v469 = vld [vmem:[%s1 + $0x30] sm:$0xff]
        %v470 = vld [vmem:[%s1 + $0x38] sm:$0xff]
        %v471 = vld [vmem:[%s1 + $0x40] sm:$0xff]
        %v472 = vld [vmem:[%s1 + $0x48] sm:$0xff]
        %v473 = vld [vmem:[%s1 + $0x50] sm:$0xff]
        %v474 = vld [vmem:[%s1 + $0x58] sm:$0xff]
        %v475 = vld [vmem:[%s1 + $0x60] sm:$0xff]
        %v476 = vld [vmem:[%s1 + $0x68] sm:$0xff]
        %v477 = vld [vmem:[%s1 + $0x70] sm:$0xff]
        %v478 = vld [vmem:[%s1 + $0x78] sm:$0xff]
        %v479 = vld [vmem:[%s1 + $0x80] sm:$0xff]
        %v480 = vld [vmem:[%s1 + $0x88] sm:$0xff]
        %v481 = vld [vmem:[%s1 + $0x90] sm:$0xff]
        %v482 = vld [vmem:[%s1 + $0x98] sm:$0xff]
        %v483 = vld [vmem:[%s1 + $0xa0] sm:$0xff]
        %v484 = vld [vmem:[%s1 + $0xa8] sm:$0xff]
        %v485 = vld [vmem:[%s1 + $0xb0] sm:$0xff]
        %v486 = vld [vmem:[%s1 + $0xb8] sm:$0xff]
        %v487 = vld [vmem:[%s1 + $0xc0] sm:$0xff]
        %v488 = vld [vmem:[%s1 + $0xc8] sm:$0xff]
        %v489 = vld [vmem:[%s1 + $0xd0] sm:$0xff]
        %v490 = vld [vmem:[%s1 + $0xd8] sm:$0xff]
        %v491 = vld [vmem:[%s1 + $0xe0] sm:$0xff]
        %v492 = vld [vmem:[%s1 + $0xe8] sm:$0xff]
        %v493 = vld [vmem:[%s1 + $0xf0] sm:$0xff]
        %v494 = vld [vmem:[%s1 + $0xf8] sm:$0xff]
        %v495 = vld [vmem:[%s1 + $0x100] sm:$0xff]
        %v496 = vld [vmem:[%s1 + $0x108] sm:$0xff]
        %v497 = vld [vmem:[%s1 + $0x110] sm:$0xff]
        %v498 = vld [vmem:[%s1 + $0x118] sm:$0xff]
        %v499 = vld [vmem:[%s1 + $0x120] sm:$0xff]
        %v500 = vld [vmem:[%s1 + $0x128] sm:$0xff]
        %v501 = vld [vmem:[%s1 + $0x130] sm:$0xff]
        %v502 = vld [vmem:[%s1 + $0x138] sm:$0xff]
        %v503 = vld [vmem:[%s1 + $0x140] sm:$0xff]
        %v504 = vld [vmem:[%s1 + $0x148] sm:$0xff]
        %v505 = vld [vmem:[%s1 + $0x150] sm:$0xff]
        %v506 = vld [vmem:[%s1 + $0x158] sm:$0xff]
        %v507 = vld [vmem:[%s1 + $0x160] sm:$0xff]
        %v508 = vld [vmem:[%s1 + $0x168] sm:$0xff]
        %v509 = vld [vmem:[%s1 + $0x170] sm:$0xff]
        %v510 = vld [vmem:[%s1 + $0x178] sm:$0xff]
        %v511 = vld [vmem:[%s1 + $0x180] sm:$0xff]
        %v512 = vld [vmem:[%s1 + $0x188] sm:$0xff]
        %v513 = vld [vmem:[%s1 + $0x190] sm:$0xff]
        %v514 = vld [vmem:[%s1 + $0x198] sm:$0xff]
        %v515 = vld [vmem:[%s1 + $0x1a0] sm:$0xff]
        %v516 = vld [vmem:[%s1 + $0x1a8] sm:$0xff]
        %v517 = vld [vmem:[%s1 + $0x1b0] sm:$0xff]
        %v518 = vld [vmem:[%s1 + $0x1b8] sm:$0xff]
        %v519 = vld [vmem:[%s1 + $0x1c0] sm:$0xff]
        %v520 = vld [vmem:[%s1 + $0x1c8] sm:$0xff]
        %v521 = vld [vmem:[%s1 + $0x1d0] sm:$0xff]
        %v522 = vld [vmem:[%s1 + $0x1d8] sm:$0xff]
        %v523 = vld [vmem:[%s1 + $0x1e0] sm:$0xff]
        %v524 = vld [vmem:[%s1 + $0x1e8] sm:$0xff]
        %v525 = vld [vmem:[%s1 + $0x1f0] sm:$0xff]
        %v526 = vld [vmem:[%s1 + $0x1f8] sm:$0xff]
        %v527 = vld [vmem:[%s1 + $0x200] sm:$0xff]
        %v528 = vld [vmem:[%s1 + $0x208] sm:$0xff]
        %v529 = vld [vmem:[%s1 + $0x210] sm:$0xff]
        %v530 = vld [vmem:[%s1 + $0x218] sm:$0xff]
        %v531 = vld [vmem:[%s1 + $0x220] sm:$0xff]
        %v532 = vld [vmem:[%s1 + $0x228] sm:$0xff]
        %v533 = vld [vmem:[%s1 + $0x230] sm:$0xff]
        %v534 = vld [vmem:[%s1 + $0x238] sm:$0xff]
        %v535 = vld [vmem:[%s1 + $0x240] sm:$0xff]
        %v536 = vld [vmem:[%s1 + $0x248] sm:$0xff]
        %v537 = vld [vmem:[%s1 + $0x250] sm:$0xff]
        %v538 = vld [vmem:[%s1 + $0x258] sm:$0xff]
        %v539 = vld [vmem:[%s1 + $0x260] sm:$0xff]
        %v540 = vld [vmem:[%s1 + $0x268] sm:$0xff]
        %v541 = vld [vmem:[%s1 + $0x270] sm:$0xff]
        %v542 = vld [vmem:[%s1 + $0x278] sm:$0xff]
        %v543 = vld [vmem:[%s1 + $0x280] sm:$0xff]
        %v544 = vld [vmem:[%s1 + $0x288] sm:$0xff]
        %v545 = vld [vmem:[%s1 + $0x290] sm:$0xff]
        %v546 = vld [vmem:[%s1 + $0x298] sm:$0xff]
        %v547 = vld [vmem:[%s1 + $0x2a0] sm:$0xff]
        %v548 = vld [vmem:[%s1 + $0x2a8] sm:$0xff]
        %v549 = vld [vmem:[%s1 + $0x2b0] sm:$0xff]
        %v550 = vld [vmem:[%s1 + $0x2b8] sm:$0xff]
        %v551 = vld [vmem:[%s1 + $0x2c0] sm:$0xff]
        %v552 = vld [vmem:[%s1 + $0x2c8] sm:$0xff]
        %v553 = vld [vmem:[%s1 + $0x2d0] sm:$0xff]
        %v554 = vld [vmem:[%s1 + $0x2d8] sm:$0xff]
        %v555 = vld [vmem:[%s1 + $0x2e0] sm:$0xff]
        %v556 = vld [vmem:[%s1 + $0x2e8] sm:$0xff]
        %v557 = vld [vmem:[%s1 + $0x2f0] sm:$0xff]
        %v558 = vld [vmem:[%s1 + $0x2f8] sm:$0xff]
        %v559 = vld [vmem:[%s1 + $0x300] sm:$0xff]
        %v560 = vld [vmem:[%s1 + $0x308] sm:$0xff]
        %v561 = vld [vmem:[%s1 + $0x310] sm:$0xff]
        %v562 = vld [vmem:[%s1 + $0x318] sm:$0xff]
        %v563 = vld [vmem:[%s1 + $0x320] sm:$0xff]
        %v564 = vld [vmem:[%s1 + $0x328] sm:$0xff]
        %v565 = vld [vmem:[%s1 + $0x330] sm:$0xff]
        %v566 = vld [vmem:[%s1 + $0x338] sm:$0xff]
        %v567 = vld [vmem:[%s1 + $0x340] sm:$0xff]
        %v568 = vld [vmem:[%s1 + $0x348] sm:$0xff]
        %v569 = vld [vmem:[%s1 + $0x350] sm:$0xff]
        %v570 = vld [vmem:[%s1 + $0x358] sm:$0xff]
        %v571 = vld [vmem:[%s1 + $0x360] sm:$0xff]
        %v572 = vld [vmem:[%s1 + $0x368] sm:$0xff]
        %v573 = vld [vmem:[%s1 + $0x370] sm:$0xff]
        %v574 = vld [vmem:[%s1 + $0x378] sm:$0xff]
        %v575 = vld [vmem:[%s1 + $0x380] sm:$0xff]
        %v576 = vld [vmem:[%s1 + $0x388] sm:$0xff]
        %v577 = vld [vmem:[%s1 + $0x390] sm:$0xff]
        %v578 = vld [vmem:[%s1 + $0x398] sm:$0xff]
        %v579 = vld [vmem:[%s1 + $0x3a0] sm:$0xff]
        %v580 = vld [vmem:[%s1 + $0x3a8] sm:$0xff]
        %v581 = vld [vmem:[%s1 + $0x3b0] sm:$0xff]
        %v582 = vld [vmem:[%s1 + $0x3b8] sm:$0xff]
        %v583 = vld [vmem:[%s1 + $0x3c0] sm:$0xff]
        %v584 = vld [vmem:[%s1 + $0x3c8] sm:$0xff]
        %v585 = vld [vmem:[%s1 + $0x3d0] sm:$0xff]
        %v586 = vld [vmem:[%s1 + $0x3d8] sm:$0xff]
        %v587 = vld [vmem:[%s1 + $0x3e0] sm:$0xff]
        %v588 = vld [vmem:[%s1 + $0x3e8] sm:$0xff]
        %v589 = vld [vmem:[%s1 + $0x3f0] sm:$0xff]
        %v590 = vld [vmem:[%s1 + $0x3f8] sm:$0xff]
        %v591 = vld [vmem:[%s1 + $0x400] sm:$0xff]
        %v592 = vld [vmem:[%s1 + $0x408] sm:$0xff]
        %v593 = vld [vmem:[%s1 + $0x410] sm:$0xff]
        %v594 = vld [vmem:[%s1 + $0x418] sm:$0xff]
        %v595 = vld [vmem:[%s1 + $0x420] sm:$0xff]
        %v596 = vld [vmem:[%s1 + $0x428] sm:$0xff]
        %v597 = vld [vmem:[%s1 + $0x430] sm:$0xff]
        %v598 = vld [vmem:[%s1 + $0x438] sm:$0xff]
        %v599 = vld [vmem:[%s1 + $0x440] sm:$0xff]
        %v600 = vld [vmem:[%s1 + $0x448] sm:$0xff]
        %v601 = vld [vmem:[%s1 + $0x450] sm:$0xff]
        %v602 = vld [vmem:[%s1 + $0x458] sm:$0xff]
        %v603 = vld [vmem:[%s1 + $0x460] sm:$0xff]
        %v604 = vld [vmem:[%s1 + $0x468] sm:$0xff]
        %v605 = vld [vmem:[%s1 + $0x470] sm:$0xff]
        %v606 = vld [vmem:[%s1 + $0x478] sm:$0xff]
        %v607 = vld [vmem:[%s1 + $0x480] sm:$0xff]
        %v608 = vld [vmem:[%s1 + $0x488] sm:$0xff]
        %v609 = vld [vmem:[%s1 + $0x490] sm:$0xff]
        %v610 = vld [vmem:[%s1 + $0x498] sm:$0xff]
        %v611 = vld [vmem:[%s1 + $0x4a0] sm:$0xff]
        %v612 = vld [vmem:[%s1 + $0x4a8] sm:$0xff]
        %v613 = vld [vmem:[%s1 + $0x4b0] sm:$0xff]
        %v614 = vld [vmem:[%s1 + $0x4b8] sm:$0xff]
        %v615 = vld [vmem:[%s1 + $0x4c0] sm:$0xff]
        %v616 = vld [vmem:[%s1 + $0x4c8] sm:$0xff]
        %v617 = vld [vmem:[%s1 + $0x4d0] sm:$0xff]
        %v618 = vld [vmem:[%s1 + $0x4d8] sm:$0xff]
        %v619 = vld [vmem:[%s1 + $0x4e0] sm:$0xff]
        %v620 = vld [vmem:[%s1 + $0x4e8] sm:$0xff]
        %v621 = vld [vmem:[%s1 + $0x4f0] sm:$0xff]
        %v622 = vld [vmem:[%s1 + $0x4f8] sm:$0xff]
        %v623 = vld [vmem:[%s1 + $0x500] sm:$0xff]
        %v624 = vld [vmem:[%s1 + $0x508] sm:$0xff]
        %v625 = vld [vmem:[%s1 + $0x510] sm:$0xff]
        %v626 = vld [vmem:[%s1 + $0x518] sm:$0xff]
        %v627 = vld [vmem:[%s1 + $0x520] sm:$0xff]
        %v628 = vld [vmem:[%s1 + $0x528] sm:$0xff]
        %v629 = vld [vmem:[%s1 + $0x530] sm:$0xff]
        %v630 = vld [vmem:[%s1 + $0x538] sm:$0xff]
        %v631 = vld [vmem:[%s1 + $0x540] sm:$0xff]
        %v632 = vld [vmem:[%s1 + $0x548] sm:$0xff]
        %v633 = vld [vmem:[%s1 + $0x550] sm:$0xff]
        %v634 = vld [vmem:[%s1 + $0x558] sm:$0xff]
        %v635 = vld [vmem:[%s1 + $0x560] sm:$0xff]
        %v636 = vld [vmem:[%s1 + $0x568] sm:$0xff]
        %v637 = vld [vmem:[%s1 + $0x570] sm:$0xff]
        %v638 = vld [vmem:[%s1 + $0x578] sm:$0xff]
        %v639 = vld [vmem:[%s1 + $0x580] sm:$0xff]
        %v640 = vld [vmem:[%s1 + $0x588] sm:$0xff]
        %v641 = vld [vmem:[%s1 + $0x590] sm:$0xff]
        %v642 = vld [vmem:[%s1 + $0x598] sm:$0xff]
        %v643 = vld [vmem:[%s1 + $0x5a0] sm:$0xff]
        %v644 = vld [vmem:[%s1 + $0x5a8] sm:$0xff]
        %v645 = vld [vmem:[%s1 + $0x5b0] sm:$0xff]
        %v646 = vld [vmem:[%s1 + $0x5b8] sm:$0xff]
        %v647 = vld [vmem:[%s1 + $0x5c0] sm:$0xff]
        %v648 = vld [vmem:[%s1 + $0x5c8] sm:$0xff]
        %v649 = vld [vmem:[%s1 + $0x5d0] sm:$0xff]
        %v650 = vld [vmem:[%s1 + $0x5d8] sm:$0xff]
        %v651 = vld [vmem:[%s1 + $0x5e0] sm:$0xff]
        %v652 = vld [vmem:[%s1 + $0x5e8] sm:$0xff]
        %v653 = vld [vmem:[%s1 + $0x5f0] sm:$0xff]
        %v654 = vld [vmem:[%s1 + $0x5f8] sm:$0xff]
        %v655 = vld [vmem:[%s1 + $0x600] sm:$0xff]
        %v656 = vld [vmem:[%s1 + $0x608] sm:$0xff]
        %v657 = vld [vmem:[%s1 + $0x610] sm:$0xff]
        %v658 = vld [vmem:[%s1 + $0x618] sm:$0xff]
        %v659 = vld [vmem:[%s1 + $0x620] sm:$0xff]
        %v660 = vld [vmem:[%s1 + $0x628] sm:$0xff]
        %v661 = vld [vmem:[%s1 + $0x630] sm:$0xff]
        %v662 = vld [vmem:[%s1 + $0x638] sm:$0xff]
        %v663 = vld [vmem:[%s1 + $0x640] sm:$0xff]
        %v664 = vld [vmem:[%s1 + $0x648] sm:$0xff]
        %v665 = vld [vmem:[%s1 + $0x650] sm:$0xff]
        %v666 = vld [vmem:[%s1 + $0x658] sm:$0xff]
        %v667 = vld [vmem:[%s1 + $0x660] sm:$0xff]
        %v668 = vld [vmem:[%s1 + $0x668] sm:$0xff]
        %v669 = vld [vmem:[%s1 + $0x670] sm:$0xff]
        %v670 = vld [vmem:[%s1 + $0x678] sm:$0xff]
        %v671 = vld [vmem:[%s1 + $0x680] sm:$0xff]
        %v672 = vld [vmem:[%s1 + $0x688] sm:$0xff]
        %v673 = vld [vmem:[%s1 + $0x690] sm:$0xff]
        %v674 = vld [vmem:[%s1 + $0x698] sm:$0xff]
        %v675 = vld [vmem:[%s1 + $0x6a0] sm:$0xff]
        %v676 = vld [vmem:[%s1 + $0x6a8] sm:$0xff]
        %v677 = vld [vmem:[%s1 + $0x6b0] sm:$0xff]
        %v678 = vld [vmem:[%s1 + $0x6b8] sm:$0xff]
        %v679 = vld [vmem:[%s1 + $0x6c0] sm:$0xff]
        %v680 = vld [vmem:[%s1 + $0x6c8] sm:$0xff]
        %v681 = vld [vmem:[%s1 + $0x6d0] sm:$0xff]
        %v682 = vld [vmem:[%s1 + $0x6d8] sm:$0xff]
        %v683 = vld [vmem:[%s1 + $0x6e0] sm:$0xff]
        %v684 = vld [vmem:[%s1 + $0x6e8] sm:$0xff]
        %v685 = vld [vmem:[%s1 + $0x6f0] sm:$0xff]
        %v686 = vld [vmem:[%s1 + $0x6f8] sm:$0xff]
        %v687 = vld [vmem:[%s1 + $0x700] sm:$0xff]
        %v688 = vld [vmem:[%s1 + $0x708] sm:$0xff]
        %v689 = vld [vmem:[%s1 + $0x710] sm:$0xff]
        %v690 = vld [vmem:[%s1 + $0x718] sm:$0xff]
        %v691 = vld [vmem:[%s1 + $0x720] sm:$0xff]
        %v692 = vld [vmem:[%s1 + $0x728] sm:$0xff]
        %v693 = vld [vmem:[%s1 + $0x730] sm:$0xff]
        %v694 = vld [vmem:[%s1 + $0x738] sm:$0xff]
        %v695 = vld [vmem:[%s1 + $0x740] sm:$0xff]
        %v696 = vld [vmem:[%s1 + $0x748] sm:$0xff]
        %v697 = vld [vmem:[%s1 + $0x750] sm:$0xff]
        %v698 = vld [vmem:[%s1 + $0x758] sm:$0xff]
        %v699 = vld [vmem:[%s1 + $0x760] sm:$0xff]
        %v700 = vld [vmem:[%s1 + $0x768] sm:$0xff]
        %v701 = vld [vmem:[%s1 + $0x770] sm:$0xff]
        %v702 = vld [vmem:[%s1 + $0x778] sm:$0xff]
        %v703 = vld [vmem:[%s1 + $0x780] sm:$0xff]
        %v704 = vld [vmem:[%s1 + $0x788] sm:$0xff]
        %v705 = vld [vmem:[%s1 + $0x790] sm:$0xff]
        %v706 = vld [vmem:[%s1 + $0x798] sm:$0xff]
        %v707 = vld [vmem:[%s1 + $0x7a0] sm:$0xff]
        %v708 = vld [vmem:[%s1 + $0x7a8] sm:$0xff]
        %v709 = vld [vmem:[%s1 + $0x7b0] sm:$0xff]
        %v710 = vld [vmem:[%s1 + $0x7b8] sm:$0xff]
        %v711 = vld [vmem:[%s1 + $0x7c0] sm:$0xff]
        %v712 = vld [vmem:[%s1 + $0x7c8] sm:$0xff]
        %v713 = vld [vmem:[%s1 + $0x7d0] sm:$0xff]
        %v714 = vld [vmem:[%s1 + $0x7d8] sm:$0xff]
        %v715 = vld [vmem:[%s1 + $0x7e0] sm:$0xff]
        %v716 = vld [vmem:[%s1 + $0x7e8] sm:$0xff]
        %v717 = vld [vmem:[%s1 + $0x7f0] sm:$0xff]
        %v718 = vld [vmem:[%s1 + $0x7f8] sm:$0xff]
        %v721 = vunpack.c.l.b16 %v461
        %v722 = vunpack.c.h.b16 %v461
        %v723 = vunpack.c.l.b16 %v462
        %v724 = vunpack.c.h.b16 %v462
        %v725 = vpack.c.b16 %v721, %v721
        %v726 = vpack.c.b16 %v722, %v722
        %v727 = vpack.c.b16 %v723, %v723
        %v728 = vpack.c.b16 %v724, %v724
        %v989 = vunpack.c.l.b16 %v463
        %v990 = vunpack.c.h.b16 %v463
        %v991 = vunpack.c.l.b16 %v464
        %v992 = vunpack.c.h.b16 %v464
        %v993 = vunpack.c.l.b16 %v465
        %v994 = vunpack.c.h.b16 %v465
        %v995 = vunpack.c.l.b16 %v466
        %v996 = vunpack.c.h.b16 %v466
        %v997 = vunpack.c.l.b16 %v467
        %v998 = vunpack.c.h.b16 %v467
        %v999 = vunpack.c.l.b16 %v468
        %v1000 = vunpack.c.h.b16 %v468
        %v1001 = vunpack.c.l.b16 %v469
        %v1002 = vunpack.c.h.b16 %v469
        %v1003 = vunpack.c.l.b16 %v470
        %v1004 = vunpack.c.h.b16 %v470
        %v1005 = vunpack.c.l.b16 %v471
        %v1006 = vunpack.c.h.b16 %v471
        %v1007 = vunpack.c.l.b16 %v472
        %v1008 = vunpack.c.h.b16 %v472
        %v1009 = vunpack.c.l.b16 %v473
        %v1010 = vunpack.c.h.b16 %v473
        %v1011 = vunpack.c.l.b16 %v474
        %v1012 = vunpack.c.h.b16 %v474
        %v1013 = vunpack.c.l.b16 %v475
        %v1014 = vunpack.c.h.b16 %v475
        %v1015 = vunpack.c.l.b16 %v476
        %v1016 = vunpack.c.h.b16 %v476
        %v1017 = vunpack.c.l.b16 %v477
        %v1018 = vunpack.c.h.b16 %v477
        %v1019 = vunpack.c.l.b16 %v478
        %v1020 = vunpack.c.h.b16 %v478
        %v1021 = vunpack.c.l.b16 %v479
        %v1022 = vunpack.c.h.b16 %v479
        %v1023 = vunpack.c.l.b16 %v480
        %v1024 = vunpack.c.h.b16 %v480
        %v1025 = vunpack.c.l.b16 %v481
        %v1026 = vunpack.c.h.b16 %v481
        %v1027 = vunpack.c.l.b16 %v482
        %v1028 = vunpack.c.h.b16 %v482
        %v1029 = vunpack.c.l.b16 %v483
        %v1030 = vunpack.c.h.b16 %v483
        %v1031 = vunpack.c.l.b16 %v484
        %v1032 = vunpack.c.h.b16 %v484
        %v1033 = vunpack.c.l.b16 %v485
        %v1034 = vunpack.c.h.b16 %v485
        %v1035 = vunpack.c.l.b16 %v486
        %v1036 = vunpack.c.h.b16 %v486
        %v1037 = vunpack.c.l.b16 %v487
        %v1038 = vunpack.c.h.b16 %v487
        %v1039 = vunpack.c.l.b16 %v488
        %v1040 = vunpack.c.h.b16 %v488
        %v1041 = vunpack.c.l.b16 %v489
        %v1042 = vunpack.c.h.b16 %v489
        %v1043 = vunpack.c.l.b16 %v490
        %v1044 = vunpack.c.h.b16 %v490
        %v1045 = vunpack.c.l.b16 %v491
        %v1046 = vunpack.c.h.b16 %v491
        %v1047 = vunpack.c.l.b16 %v492
        %v1048 = vunpack.c.h.b16 %v492
        %v1049 = vunpack.c.l.b16 %v493
        %v1050 = vunpack.c.h.b16 %v493
        %v1051 = vunpack.c.l.b16 %v494
        %v1052 = vunpack.c.h.b16 %v494
        %v1053 = vunpack.c.l.b16 %v495
        %v1054 = vunpack.c.h.b16 %v495
        %v1055 = vunpack.c.l.b16 %v496
        %v1056 = vunpack.c.h.b16 %v496
        %v1057 = vunpack.c.l.b16 %v497
        %v1058 = vunpack.c.h.b16 %v497
        %v1059 = vunpack.c.l.b16 %v498
        %v1060 = vunpack.c.h.b16 %v498
        %v1061 = vunpack.c.l.b16 %v499
        %v1062 = vunpack.c.h.b16 %v499
        %v1063 = vunpack.c.l.b16 %v500
        %v1064 = vunpack.c.h.b16 %v500
        %v1065 = vunpack.c.l.b16 %v501
        %v1066 = vunpack.c.h.b16 %v501
        %v1067 = vunpack.c.l.b16 %v502
        %v1068 = vunpack.c.h.b16 %v502
        %v1069 = vunpack.c.l.b16 %v503
        %v1070 = vunpack.c.h.b16 %v503
        %v1071 = vunpack.c.l.b16 %v504
        %v1072 = vunpack.c.h.b16 %v504
        %v1073 = vunpack.c.l.b16 %v505
        %v1074 = vunpack.c.h.b16 %v505
        %v1075 = vunpack.c.l.b16 %v506
        %v1076 = vunpack.c.h.b16 %v506
        %v1077 = vunpack.c.l.b16 %v507
        %v1078 = vunpack.c.h.b16 %v507
        %v1079 = vunpack.c.l.b16 %v508
        %v1080 = vunpack.c.h.b16 %v508
        %v1081 = vunpack.c.l.b16 %v509
        %v1082 = vunpack.c.h.b16 %v509
        %v1083 = vunpack.c.l.b16 %v510
        %v1084 = vunpack.c.h.b16 %v510
        %v1085 = vunpack.c.l.b16 %v511
        %v1086 = vunpack.c.h.b16 %v511
        %v1087 = vunpack.c.l.b16 %v512
        %v1088 = vunpack.c.h.b16 %v512
        %v1089 = vunpack.c.l.b16 %v513
        %v1090 = vunpack.c.h.b16 %v513
        %v1091 = vunpack.c.l.b16 %v514
        %v1092 = vunpack.c.h.b16 %v514
        %v1093 = vunpack.c.l.b16 %v515
        %v1094 = vunpack.c.h.b16 %v515
        %v1095 = vunpack.c.l.b16 %v516
        %v1096 = vunpack.c.h.b16 %v516
        %v1097 = vunpack.c.l.b16 %v517
        %v1098 = vunpack.c.h.b16 %v517
        %v1099 = vunpack.c.l.b16 %v518
        %v1100 = vunpack.c.h.b16 %v518
        %v1101 = vunpack.c.l.b16 %v519
        %v1102 = vunpack.c.h.b16 %v519
        %v1103 = vunpack.c.l.b16 %v520
        %v1104 = vunpack.c.h.b16 %v520
        %v1105 = vunpack.c.l.b16 %v521
        %v1106 = vunpack.c.h.b16 %v521
        %v1107 = vunpack.c.l.b16 %v522
        %v1108 = vunpack.c.h.b16 %v522
        %v1109 = vunpack.c.l.b16 %v523
        %v1110 = vunpack.c.h.b16 %v523
        %v1111 = vunpack.c.l.b16 %v524
        %v1112 = vunpack.c.h.b16 %v524
        %v1113 = vunpack.c.l.b16 %v525
        %v1114 = vunpack.c.h.b16 %v525
        %v1115 = vunpack.c.l.b16 %v526
        %v1116 = vunpack.c.h.b16 %v526
        %v1117 = vunpack.c.l.b16 %v527
        %v1118 = vunpack.c.h.b16 %v527
        %v1119 = vunpack.c.l.b16 %v528
        %v1120 = vunpack.c.h.b16 %v528
        %v1121 = vunpack.c.l.b16 %v529
        %v1122 = vunpack.c.h.b16 %v529
        %v1123 = vunpack.c.l.b16 %v530
        %v1124 = vunpack.c.h.b16 %v530
        %v1125 = vunpack.c.l.b16 %v531
        %v1126 = vunpack.c.h.b16 %v531
        %v1127 = vunpack.c.l.b16 %v532
        %v1128 = vunpack.c.h.b16 %v532
        %v1129 = vunpack.c.l.b16 %v533
        %v1130 = vunpack.c.h.b16 %v533
        %v1131 = vunpack.c.l.b16 %v534
        %v1132 = vunpack.c.h.b16 %v534
        %v1133 = vunpack.c.l.b16 %v535
        %v1134 = vunpack.c.h.b16 %v535
        %v1135 = vunpack.c.l.b16 %v536
        %v1136 = vunpack.c.h.b16 %v536
        %v1137 = vunpack.c.l.b16 %v537
        %v1138 = vunpack.c.h.b16 %v537
        %v1139 = vunpack.c.l.b16 %v538
        %v1140 = vunpack.c.h.b16 %v538
        %v1141 = vunpack.c.l.b16 %v539
        %v1142 = vunpack.c.h.b16 %v539
        %v1143 = vunpack.c.l.b16 %v540
        %v1144 = vunpack.c.h.b16 %v540
        %v1145 = vunpack.c.l.b16 %v541
        %v1146 = vunpack.c.h.b16 %v541
        %v1147 = vunpack.c.l.b16 %v542
        %v1148 = vunpack.c.h.b16 %v542
        %v1149 = vunpack.c.l.b16 %v543
        %v1150 = vunpack.c.h.b16 %v543
        %v1151 = vunpack.c.l.b16 %v544
        %v1152 = vunpack.c.h.b16 %v544
        %v1153 = vunpack.c.l.b16 %v545
        %v1154 = vunpack.c.h.b16 %v545
        %v1155 = vunpack.c.l.b16 %v546
        %v1156 = vunpack.c.h.b16 %v546
        %v1157 = vunpack.c.l.b16 %v547
        %v1158 = vunpack.c.h.b16 %v547
        %v1159 = vunpack.c.l.b16 %v548
        %v1160 = vunpack.c.h.b16 %v548
        %v1161 = vunpack.c.l.b16 %v549
        %v1162 = vunpack.c.h.b16 %v549
        %v1163 = vunpack.c.l.b16 %v550
        %v1164 = vunpack.c.h.b16 %v550
        %v1165 = vunpack.c.l.b16 %v551
        %v1166 = vunpack.c.h.b16 %v551
        %v1167 = vunpack.c.l.b16 %v552
        %v1168 = vunpack.c.h.b16 %v552
        %v1169 = vunpack.c.l.b16 %v553
        %v1170 = vunpack.c.h.b16 %v553
        %v1171 = vunpack.c.l.b16 %v554
        %v1172 = vunpack.c.h.b16 %v554
        %v1173 = vunpack.c.l.b16 %v555
        %v1174 = vunpack.c.h.b16 %v555
        %v1175 = vunpack.c.l.b16 %v556
        %v1176 = vunpack.c.h.b16 %v556
        %v1177 = vunpack.c.l.b16 %v557
        %v1178 = vunpack.c.h.b16 %v557
        %v1179 = vunpack.c.l.b16 %v558
        %v1180 = vunpack.c.h.b16 %v558
        %v1181 = vunpack.c.l.b16 %v559
        %v1182 = vunpack.c.h.b16 %v559
        %v1183 = vunpack.c.l.b16 %v560
        %v1184 = vunpack.c.h.b16 %v560
        %v1185 = vunpack.c.l.b16 %v561
        %v1186 = vunpack.c.h.b16 %v561
        %v1187 = vunpack.c.l.b16 %v562
        %v1188 = vunpack.c.h.b16 %v562
        %v1189 = vunpack.c.l.b16 %v563
        %v1190 = vunpack.c.h.b16 %v563
        %v1191 = vunpack.c.l.b16 %v564
        %v1192 = vunpack.c.h.b16 %v564
        %v1193 = vunpack.c.l.b16 %v565
        %v1194 = vunpack.c.h.b16 %v565
        %v1195 = vunpack.c.l.b16 %v566
        %v1196 = vunpack.c.h.b16 %v566
        %v1197 = vunpack.c.l.b16 %v567
        %v1198 = vunpack.c.h.b16 %v567
        %v1199 = vunpack.c.l.b16 %v568
        %v1200 = vunpack.c.h.b16 %v568
        %v1201 = vunpack.c.l.b16 %v569
        %v1202 = vunpack.c.h.b16 %v569
        %v1203 = vunpack.c.l.b16 %v570
        %v1204 = vunpack.c.h.b16 %v570
        %v1205 = vunpack.c.l.b16 %v571
        %v1206 = vunpack.c.h.b16 %v571
        %v1207 = vunpack.c.l.b16 %v572
        %v1208 = vunpack.c.h.b16 %v572
        %v1209 = vunpack.c.l.b16 %v573
        %v1210 = vunpack.c.h.b16 %v573
        %v1211 = vunpack.c.l.b16 %v574
        %v1212 = vunpack.c.h.b16 %v574
        %v1213 = vunpack.c.l.b16 %v575
        %v1214 = vunpack.c.h.b16 %v575
        %v1215 = vunpack.c.l.b16 %v576
        %v1216 = vunpack.c.h.b16 %v576
        %v1217 = vunpack.c.l.b16 %v577
        %v1218 = vunpack.c.h.b16 %v577
        %v1219 = vunpack.c.l.b16 %v578
        %v1220 = vunpack.c.h.b16 %v578
        %v1221 = vunpack.c.l.b16 %v579
        %v1222 = vunpack.c.h.b16 %v579
        %v1223 = vunpack.c.l.b16 %v580
        %v1224 = vunpack.c.h.b16 %v580
        %v1225 = vunpack.c.l.b16 %v581
        %v1226 = vunpack.c.h.b16 %v581
        %v1227 = vunpack.c.l.b16 %v582
        %v1228 = vunpack.c.h.b16 %v582
        %v1229 = vunpack.c.l.b16 %v583
        %v1230 = vunpack.c.h.b16 %v583
        %v1231 = vunpack.c.l.b16 %v584
        %v1232 = vunpack.c.h.b16 %v584
        %v1233 = vunpack.c.l.b16 %v585
        %v1234 = vunpack.c.h.b16 %v585
        %v1235 = vunpack.c.l.b16 %v586
        %v1236 = vunpack.c.h.b16 %v586
        %v1237 = vunpack.c.l.b16 %v587
        %v1238 = vunpack.c.h.b16 %v587
        %v1239 = vunpack.c.l.b16 %v588
        %v1240 = vunpack.c.h.b16 %v588
        %v1241 = vunpack.c.l.b16 %v589
        %v1242 = vunpack.c.h.b16 %v589
        %v1243 = vunpack.c.l.b16 %v590
        %v1244 = vunpack.c.h.b16 %v590
        %v1245 = vunpack.c.l.b16 %v591
        %v1246 = vunpack.c.h.b16 %v591
        %v1247 = vunpack.c.l.b16 %v592
        %v1248 = vunpack.c.h.b16 %v592
        %v1249 = vunpack.c.l.b16 %v593
        %v1250 = vunpack.c.h.b16 %v593
        %v1251 = vunpack.c.l.b16 %v594
        %v1252 = vunpack.c.h.b16 %v594
        %v1253 = vunpack.c.l.b16 %v595
        %v1254 = vunpack.c.h.b16 %v595
        %v1255 = vunpack.c.l.b16 %v596
        %v1256 = vunpack.c.h.b16 %v596
        %v1257 = vunpack.c.l.b16 %v597
        %v1258 = vunpack.c.h.b16 %v597
        %v1259 = vunpack.c.l.b16 %v598
        %v1260 = vunpack.c.h.b16 %v598
        %v1261 = vunpack.c.l.b16 %v599
        %v1262 = vunpack.c.h.b16 %v599
        %v1263 = vunpack.c.l.b16 %v600
        %v1264 = vunpack.c.h.b16 %v600
        %v1265 = vunpack.c.l.b16 %v601
        %v1266 = vunpack.c.h.b16 %v601
        %v1267 = vunpack.c.l.b16 %v602
        %v1268 = vunpack.c.h.b16 %v602
        %v1269 = vunpack.c.l.b16 %v603
        %v1270 = vunpack.c.h.b16 %v603
        %v1271 = vunpack.c.l.b16 %v604
        %v1272 = vunpack.c.h.b16 %v604
        %v1273 = vunpack.c.l.b16 %v605
        %v1274 = vunpack.c.h.b16 %v605
        %v1275 = vunpack.c.l.b16 %v606
        %v1276 = vunpack.c.h.b16 %v606
        %v1277 = vunpack.c.l.b16 %v607
        %v1278 = vunpack.c.h.b16 %v607
        %v1279 = vunpack.c.l.b16 %v608
        %v1280 = vunpack.c.h.b16 %v608
        %v1281 = vunpack.c.l.b16 %v609
        %v1282 = vunpack.c.h.b16 %v609
        %v1283 = vunpack.c.l.b16 %v610
        %v1284 = vunpack.c.h.b16 %v610
        %v1285 = vunpack.c.l.b16 %v611
        %v1286 = vunpack.c.h.b16 %v611
        %v1287 = vunpack.c.l.b16 %v612
        %v1288 = vunpack.c.h.b16 %v612
        %v1289 = vunpack.c.l.b16 %v613
        %v1290 = vunpack.c.h.b16 %v613
        %v1291 = vunpack.c.l.b16 %v614
        %v1292 = vunpack.c.h.b16 %v614
        %v1293 = vunpack.c.l.b16 %v615
        %v1294 = vunpack.c.h.b16 %v615
        %v1295 = vunpack.c.l.b16 %v616
        %v1296 = vunpack.c.h.b16 %v616
        %v1297 = vunpack.c.l.b16 %v617
        %v1298 = vunpack.c.h.b16 %v617
        %v1299 = vunpack.c.l.b16 %v618
        %v1300 = vunpack.c.h.b16 %v618
        %v1301 = vunpack.c.l.b16 %v619
        %v1302 = vunpack.c.h.b16 %v619
        %v1303 = vunpack.c.l.b16 %v620
        %v1304 = vunpack.c.h.b16 %v620
        %v1305 = vunpack.c.l.b16 %v621
        %v1306 = vunpack.c.h.b16 %v621
        %v1307 = vunpack.c.l.b16 %v622
        %v1308 = vunpack.c.h.b16 %v622
        %v1309 = vunpack.c.l.b16 %v623
        %v1310 = vunpack.c.h.b16 %v623
        %v1311 = vunpack.c.l.b16 %v624
        %v1312 = vunpack.c.h.b16 %v624
        %v1313 = vunpack.c.l.b16 %v625
        %v1314 = vunpack.c.h.b16 %v625
        %v1315 = vunpack.c.l.b16 %v626
        %v1316 = vunpack.c.h.b16 %v626
        %v1317 = vunpack.c.l.b16 %v627
        %v1318 = vunpack.c.h.b16 %v627
        %v1319 = vunpack.c.l.b16 %v628
        %v1320 = vunpack.c.h.b16 %v628
        %v1321 = vunpack.c.l.b16 %v629
        %v1322 = vunpack.c.h.b16 %v629
        %v1323 = vunpack.c.l.b16 %v630
        %v1324 = vunpack.c.h.b16 %v630
        %v1325 = vunpack.c.l.b16 %v631
        %v1326 = vunpack.c.h.b16 %v631
        %v1327 = vunpack.c.l.b16 %v632
        %v1328 = vunpack.c.h.b16 %v632
        %v1329 = vunpack.c.l.b16 %v633
        %v1330 = vunpack.c.h.b16 %v633
        %v1331 = vunpack.c.l.b16 %v634
        %v1332 = vunpack.c.h.b16 %v634
        %v1333 = vunpack.c.l.b16 %v635
        %v1334 = vunpack.c.h.b16 %v635
        %v1335 = vunpack.c.l.b16 %v636
        %v1336 = vunpack.c.h.b16 %v636
        %v1337 = vunpack.c.l.b16 %v637
        %v1338 = vunpack.c.h.b16 %v637
        %v1339 = vunpack.c.l.b16 %v638
        %v1340 = vunpack.c.h.b16 %v638
        %v1341 = vunpack.c.l.b16 %v639
        %v1342 = vunpack.c.h.b16 %v639
        %v1343 = vunpack.c.l.b16 %v640
        %v1344 = vunpack.c.h.b16 %v640
        %v1345 = vunpack.c.l.b16 %v641
        %v1346 = vunpack.c.h.b16 %v641
        %v1347 = vunpack.c.l.b16 %v642
        %v1348 = vunpack.c.h.b16 %v642
        %v1349 = vunpack.c.l.b16 %v643
        %v1350 = vunpack.c.h.b16 %v643
        %v1351 = vunpack.c.l.b16 %v644
        %v1352 = vunpack.c.h.b16 %v644
        %v1353 = vunpack.c.l.b16 %v645
        %v1354 = vunpack.c.h.b16 %v645
        %v1355 = vunpack.c.l.b16 %v646
        %v1356 = vunpack.c.h.b16 %v646
        %v1357 = vunpack.c.l.b16 %v647
        %v1358 = vunpack.c.h.b16 %v647
        %v1359 = vunpack.c.l.b16 %v648
        %v1360 = vunpack.c.h.b16 %v648
        %v1361 = vunpack.c.l.b16 %v649
        %v1362 = vunpack.c.h.b16 %v649
        %v1363 = vunpack.c.l.b16 %v650
        %v1364 = vunpack.c.h.b16 %v650
        %v1365 = vunpack.c.l.b16 %v651
        %v1366 = vunpack.c.h.b16 %v651
        %v1367 = vunpack.c.l.b16 %v652
        %v1368 = vunpack.c.h.b16 %v652
        %v1369 = vunpack.c.l.b16 %v653
        %v1370 = vunpack.c.h.b16 %v653
        %v1371 = vunpack.c.l.b16 %v654
        %v1372 = vunpack.c.h.b16 %v654
        %v1373 = vunpack.c.l.b16 %v655
        %v1374 = vunpack.c.h.b16 %v655
        %v1375 = vunpack.c.l.b16 %v656
        %v1376 = vunpack.c.h.b16 %v656
        %v1377 = vunpack.c.l.b16 %v657
        %v1378 = vunpack.c.h.b16 %v657
        %v1379 = vunpack.c.l.b16 %v658
        %v1380 = vunpack.c.h.b16 %v658
        %v1381 = vunpack.c.l.b16 %v659
        %v1382 = vunpack.c.h.b16 %v659
        %v1383 = vunpack.c.l.b16 %v660
        %v1384 = vunpack.c.h.b16 %v660
        %v1385 = vunpack.c.l.b16 %v661
        %v1386 = vunpack.c.h.b16 %v661
        %v1387 = vunpack.c.l.b16 %v662
        %v1388 = vunpack.c.h.b16 %v662
        %v1389 = vunpack.c.l.b16 %v663
        %v1390 = vunpack.c.h.b16 %v663
        %v1391 = vunpack.c.l.b16 %v664
        %v1392 = vunpack.c.h.b16 %v664
        %v1393 = vunpack.c.l.b16 %v665
        %v1394 = vunpack.c.h.b16 %v665
        %v1395 = vunpack.c.l.b16 %v666
        %v1396 = vunpack.c.h.b16 %v666
        %v1397 = vunpack.c.l.b16 %v667
        %v1398 = vunpack.c.h.b16 %v667
        %v1399 = vunpack.c.l.b16 %v668
        %v1400 = vunpack.c.h.b16 %v668
        %v1401 = vunpack.c.l.b16 %v669
        %v1402 = vunpack.c.h.b16 %v669
        %v1403 = vunpack.c.l.b16 %v670
        %v1404 = vunpack.c.h.b16 %v670
        %v1405 = vunpack.c.l.b16 %v671
        %v1406 = vunpack.c.h.b16 %v671
        %v1407 = vunpack.c.l.b16 %v672
        %v1408 = vunpack.c.h.b16 %v672
        %v1409 = vunpack.c.l.b16 %v673
        %v1410 = vunpack.c.h.b16 %v673
        %v1411 = vunpack.c.l.b16 %v674
        %v1412 = vunpack.c.h.b16 %v674
        %v1413 = vunpack.c.l.b16 %v675
        %v1414 = vunpack.c.h.b16 %v675
        %v1415 = vunpack.c.l.b16 %v676
        %v1416 = vunpack.c.h.b16 %v676
        %v1417 = vunpack.c.l.b16 %v677
        %v1418 = vunpack.c.h.b16 %v677
        %v1419 = vunpack.c.l.b16 %v678
        %v1420 = vunpack.c.h.b16 %v678
        %v1421 = vunpack.c.l.b16 %v679
        %v1422 = vunpack.c.h.b16 %v679
        %v1423 = vunpack.c.l.b16 %v680
        %v1424 = vunpack.c.h.b16 %v680
        %v1425 = vunpack.c.l.b16 %v681
        %v1426 = vunpack.c.h.b16 %v681
        %v1427 = vunpack.c.l.b16 %v682
        %v1428 = vunpack.c.h.b16 %v682
        %v1429 = vunpack.c.l.b16 %v683
        %v1430 = vunpack.c.h.b16 %v683
        %v1431 = vunpack.c.l.b16 %v684
        %v1432 = vunpack.c.h.b16 %v684
        %v1433 = vunpack.c.l.b16 %v685
        %v1434 = vunpack.c.h.b16 %v685
        %v1435 = vunpack.c.l.b16 %v686
        %v1436 = vunpack.c.h.b16 %v686
        %v1437 = vunpack.c.l.b16 %v687
        %v1438 = vunpack.c.h.b16 %v687
        %v1439 = vunpack.c.l.b16 %v688
        %v1440 = vunpack.c.h.b16 %v688
        %v1441 = vunpack.c.l.b16 %v689
        %v1442 = vunpack.c.h.b16 %v689
        %v1443 = vunpack.c.l.b16 %v690
        %v1444 = vunpack.c.h.b16 %v690
        %v1445 = vunpack.c.l.b16 %v691
        %v1446 = vunpack.c.h.b16 %v691
        %v1447 = vunpack.c.l.b16 %v692
        %v1448 = vunpack.c.h.b16 %v692
        %v1449 = vunpack.c.l.b16 %v693
        %v1450 = vunpack.c.h.b16 %v693
        %v1451 = vunpack.c.l.b16 %v694
        %v1452 = vunpack.c.h.b16 %v694
        %v1453 = vunpack.c.l.b16 %v695
        %v1454 = vunpack.c.h.b16 %v695
        %v1455 = vunpack.c.l.b16 %v696
        %v1456 = vunpack.c.h.b16 %v696
        %v1457 = vunpack.c.l.b16 %v697
        %v1458 = vunpack.c.h.b16 %v697
        %v1459 = vunpack.c.l.b16 %v698
        %v1460 = vunpack.c.h.b16 %v698
        %v1461 = vunpack.c.l.b16 %v699
        %v1462 = vunpack.c.h.b16 %v699
        %v1463 = vunpack.c.l.b16 %v700
        %v1464 = vunpack.c.h.b16 %v700
        %v1465 = vunpack.c.l.b16 %v701
        %v1466 = vunpack.c.h.b16 %v701
        %v1467 = vunpack.c.l.b16 %v702
        %v1468 = vunpack.c.h.b16 %v702
        %v1469 = vunpack.c.l.b16 %v703
        %v1470 = vunpack.c.h.b16 %v703
        %v1471 = vunpack.c.l.b16 %v704
        %v1472 = vunpack.c.h.b16 %v704
        %v1473 = vunpack.c.l.b16 %v705
        %v1474 = vunpack.c.h.b16 %v705
        %v1475 = vunpack.c.l.b16 %v706
        %v1476 = vunpack.c.h.b16 %v706
        %v1477 = vunpack.c.l.b16 %v707
        %v1478 = vunpack.c.h.b16 %v707
        %v1479 = vunpack.c.l.b16 %v708
        %v1480 = vunpack.c.h.b16 %v708
        %v1481 = vunpack.c.l.b16 %v709
        %v1482 = vunpack.c.h.b16 %v709
        %v1483 = vunpack.c.l.b16 %v710
        %v1484 = vunpack.c.h.b16 %v710
        %v1485 = vunpack.c.l.b16 %v711
        %v1486 = vunpack.c.h.b16 %v711
        %v1487 = vunpack.c.l.b16 %v712
        %v1488 = vunpack.c.h.b16 %v712
        %v1489 = vunpack.c.l.b16 %v713
        %v1490 = vunpack.c.h.b16 %v713
        %v1491 = vunpack.c.l.b16 %v714
        %v1492 = vunpack.c.h.b16 %v714
        %v1493 = vunpack.c.l.b16 %v715
        %v1494 = vunpack.c.h.b16 %v715
        %v1495 = vunpack.c.l.b16 %v716
        %v1496 = vunpack.c.h.b16 %v716
        %v1497 = vunpack.c.l.b16 %v717
        %v1498 = vunpack.c.h.b16 %v717
        %v1499 = vunpack.c.l.b16 %v718
        %v1500 = vunpack.c.h.b16 %v718
        %v1501 = vpack.c.b16 %v997, %v989
        %v1502 = vpack.c.b16 %v998, %v990
        %v1503 = vpack.c.b16 %v999, %v991
        %v1504 = vpack.c.b16 %v1000, %v992
        %v1505 = vpack.c.b16 %v1001, %v993
        %v1506 = vpack.c.b16 %v1002, %v994
        %v1507 = vpack.c.b16 %v1003, %v995
        %v1508 = vpack.c.b16 %v1004, %v996
        %v1509 = vpack.c.b16 %v1013, %v1005
        %v1510 = vpack.c.b16 %v1014, %v1006
        %v1511 = vpack.c.b16 %v1015, %v1007
        %v1512 = vpack.c.b16 %v1016, %v1008
        %v1513 = vpack.c.b16 %v1017, %v1009
        %v1514 = vpack.c.b16 %v1018, %v1010
        %v1515 = vpack.c.b16 %v1019, %v1011
        %v1516 = vpack.c.b16 %v1020, %v1012
        %v1517 = vpack.c.b16 %v1029, %v1021
        %v1518 = vpack.c.b16 %v1030, %v1022
        %v1519 = vpack.c.b16 %v1031, %v1023
        %v1520 = vpack.c.b16 %v1032, %v1024
        %v1521 = vpack.c.b16 %v1033, %v1025
        %v1522 = vpack.c.b16 %v1034, %v1026
        %v1523 = vpack.c.b16 %v1035, %v1027
        %v1524 = vpack.c.b16 %v1036, %v1028
        %v1525 = vpack.c.b16 %v1045, %v1037
        %v1526 = vpack.c.b16 %v1046, %v1038
        %v1527 = vpack.c.b16 %v1047, %v1039
        %v1528 = vpack.c.b16 %v1048, %v1040
        %v1529 = vpack.c.b16 %v1049, %v1041
        %v1530 = vpack.c.b16 %v1050, %v1042
        %v1531 = vpack.c.b16 %v1051, %v1043
        %v1532 = vpack.c.b16 %v1052, %v1044
        %v1533 = vpack.c.b16 %v1061, %v1053
        %v1534 = vpack.c.b16 %v1062, %v1054
        %v1535 = vpack.c.b16 %v1063, %v1055
        %v1536 = vpack.c.b16 %v1064, %v1056
        %v1537 = vpack.c.b16 %v1065, %v1057
        %v1538 = vpack.c.b16 %v1066, %v1058
        %v1539 = vpack.c.b16 %v1067, %v1059
        %v1540 = vpack.c.b16 %v1068, %v1060
        %v1541 = vpack.c.b16 %v1077, %v1069
        %v1542 = vpack.c.b16 %v1078, %v1070
        %v1543 = vpack.c.b16 %v1079, %v1071
        %v1544 = vpack.c.b16 %v1080, %v1072
        %v1545 = vpack.c.b16 %v1081, %v1073
        %v1546 = vpack.c.b16 %v1082, %v1074
        %v1547 = vpack.c.b16 %v1083, %v1075
        %v1548 = vpack.c.b16 %v1084, %v1076
        %v1549 = vpack.c.b16 %v1093, %v1085
        %v1550 = vpack.c.b16 %v1094, %v1086
        %v1551 = vpack.c.b16 %v1095, %v1087
        %v1552 = vpack.c.b16 %v1096, %v1088
        %v1553 = vpack.c.b16 %v1097, %v1089
        %v1554 = vpack.c.b16 %v1098, %v1090
        %v1555 = vpack.c.b16 %v1099, %v1091
        %v1556 = vpack.c.b16 %v1100, %v1092
        %v1557 = vpack.c.b16 %v1109, %v1101
        %v1558 = vpack.c.b16 %v1110, %v1102
        %v1559 = vpack.c.b16 %v1111, %v1103
        %v1560 = vpack.c.b16 %v1112, %v1104
        %v1561 = vpack.c.b16 %v1113, %v1105
        %v1562 = vpack.c.b16 %v1114, %v1106
        %v1563 = vpack.c.b16 %v1115, %v1107
        %v1564 = vpack.c.b16 %v1116, %v1108
        %v1565 = vpack.c.b16 %v1125, %v1117
        %v1566 = vpack.c.b16 %v1126, %v1118
        %v1567 = vpack.c.b16 %v1127, %v1119
        %v1568 = vpack.c.b16 %v1128, %v1120
        %v1569 = vpack.c.b16 %v1129, %v1121
        %v1570 = vpack.c.b16 %v1130, %v1122
        %v1571 = vpack.c.b16 %v1131, %v1123
        %v1572 = vpack.c.b16 %v1132, %v1124
        %v1573 = vpack.c.b16 %v1141, %v1133
        %v1574 = vpack.c.b16 %v1142, %v1134
        %v1575 = vpack.c.b16 %v1143, %v1135
        %v1576 = vpack.c.b16 %v1144, %v1136
        %v1577 = vpack.c.b16 %v1145, %v1137
        %v1578 = vpack.c.b16 %v1146, %v1138
        %v1579 = vpack.c.b16 %v1147, %v1139
        %v1580 = vpack.c.b16 %v1148, %v1140
        %v1581 = vpack.c.b16 %v1157, %v1149
        %v1582 = vpack.c.b16 %v1158, %v1150
        %v1583 = vpack.c.b16 %v1159, %v1151
        %v1584 = vpack.c.b16 %v1160, %v1152
        %v1585 = vpack.c.b16 %v1161, %v1153
        %v1586 = vpack.c.b16 %v1162, %v1154
        %v1587 = vpack.c.b16 %v1163, %v1155
        %v1588 = vpack.c.b16 %v1164, %v1156
        %v1589 = vpack.c.b16 %v1173, %v1165
        %v1590 = vpack.c.b16 %v1174, %v1166
        %v1591 = vpack.c.b16 %v1175, %v1167
        %v1592 = vpack.c.b16 %v1176, %v1168
        %v1593 = vpack.c.b16 %v1177, %v1169
        %v1594 = vpack.c.b16 %v1178, %v1170
        %v1595 = vpack.c.b16 %v1179, %v1171
        %v1596 = vpack.c.b16 %v1180, %v1172
        %v1597 = vpack.c.b16 %v1189, %v1181
        %v1598 = vpack.c.b16 %v1190, %v1182
        %v1599 = vpack.c.b16 %v1191, %v1183
        %v1600 = vpack.c.b16 %v1192, %v1184
        %v1601 = vpack.c.b16 %v1193, %v1185
        %v1602 = vpack.c.b16 %v1194, %v1186
        %v1603 = vpack.c.b16 %v1195, %v1187
        %v1604 = vpack.c.b16 %v1196, %v1188
        %v1605 = vpack.c.b16 %v1205, %v1197
        %v1606 = vpack.c.b16 %v1206, %v1198
        %v1607 = vpack.c.b16 %v1207, %v1199
        %v1608 = vpack.c.b16 %v1208, %v1200
        %v1609 = vpack.c.b16 %v1209, %v1201
        %v1610 = vpack.c.b16 %v1210, %v1202
        %v1611 = vpack.c.b16 %v1211, %v1203
        %v1612 = vpack.c.b16 %v1212, %v1204
        %v1613 = vpack.c.b16 %v1221, %v1213
        %v1614 = vpack.c.b16 %v1222, %v1214
        %v1615 = vpack.c.b16 %v1223, %v1215
        %v1616 = vpack.c.b16 %v1224, %v1216
        %v1617 = vpack.c.b16 %v1225, %v1217
        %v1618 = vpack.c.b16 %v1226, %v1218
        %v1619 = vpack.c.b16 %v1227, %v1219
        %v1620 = vpack.c.b16 %v1228, %v1220
        %v1621 = vpack.c.b16 %v1237, %v1229
        %v1622 = vpack.c.b16 %v1238, %v1230
        %v1623 = vpack.c.b16 %v1239, %v1231
        %v1624 = vpack.c.b16 %v1240, %v1232
        %v1625 = vpack.c.b16 %v1241, %v1233
        %v1626 = vpack.c.b16 %v1242, %v1234
        %v1627 = vpack.c.b16 %v1243, %v1235
        %v1628 = vpack.c.b16 %v1244, %v1236
        %v1629 = vpack.c.b16 %v1253, %v1245
        %v1630 = vpack.c.b16 %v1254, %v1246
        %v1631 = vpack.c.b16 %v1255, %v1247
        %v1632 = vpack.c.b16 %v1256, %v1248
        %v1633 = vpack.c.b16 %v1257, %v1249
        %v1634 = vpack.c.b16 %v1258, %v1250
        %v1635 = vpack.c.b16 %v1259, %v1251
        %v1636 = vpack.c.b16 %v1260, %v1252
        %v1637 = vpack.c.b16 %v1269, %v1261
        %v1638 = vpack.c.b16 %v1270, %v1262
        %v1639 = vpack.c.b16 %v1271, %v1263
        %v1640 = vpack.c.b16 %v1272, %v1264
        %v1641 = vpack.c.b16 %v1273, %v1265
        %v1642 = vpack.c.b16 %v1274, %v1266
        %v1643 = vpack.c.b16 %v1275, %v1267
        %v1644 = vpack.c.b16 %v1276, %v1268
        %v1645 = vpack.c.b16 %v1285, %v1277
        %v1646 = vpack.c.b16 %v1286, %v1278
        %v1647 = vpack.c.b16 %v1287, %v1279
        %v1648 = vpack.c.b16 %v1288, %v1280
        %v1649 = vpack.c.b16 %v1289, %v1281
        %v1650 = vpack.c.b16 %v1290, %v1282
        %v1651 = vpack.c.b16 %v1291, %v1283
        %v1652 = vpack.c.b16 %v1292, %v1284
        %v1653 = vpack.c.b16 %v1301, %v1293
        %v1654 = vpack.c.b16 %v1302, %v1294
        %v1655 = vpack.c.b16 %v1303, %v1295
        %v1656 = vpack.c.b16 %v1304, %v1296
        %v1657 = vpack.c.b16 %v1305, %v1297
        %v1658 = vpack.c.b16 %v1306, %v1298
        %v1659 = vpack.c.b16 %v1307, %v1299
        %v1660 = vpack.c.b16 %v1308, %v1300
        %v1661 = vpack.c.b16 %v1317, %v1309
        %v1662 = vpack.c.b16 %v1318, %v1310
        %v1663 = vpack.c.b16 %v1319, %v1311
        %v1664 = vpack.c.b16 %v1320, %v1312
        %v1665 = vpack.c.b16 %v1321, %v1313
        %v1666 = vpack.c.b16 %v1322, %v1314
        %v1667 = vpack.c.b16 %v1323, %v1315
        %v1668 = vpack.c.b16 %v1324, %v1316
        %v1669 = vpack.c.b16 %v1333, %v1325
        %v1670 = vpack.c.b16 %v1334, %v1326
        %v1671 = vpack.c.b16 %v1335, %v1327
        %v1672 = vpack.c.b16 %v1336, %v1328
        %v1673 = vpack.c.b16 %v1337, %v1329
        %v1674 = vpack.c.b16 %v1338, %v1330
        %v1675 = vpack.c.b16 %v1339, %v1331
        %v1676 = vpack.c.b16 %v1340, %v1332
        %v1677 = vpack.c.b16 %v1349, %v1341
        %v1678 = vpack.c.b16 %v1350, %v1342
        %v1679 = vpack.c.b16 %v1351, %v1343
        %v1680 = vpack.c.b16 %v1352, %v1344
        %v1681 = vpack.c.b16 %v1353, %v1345
        %v1682 = vpack.c.b16 %v1354, %v1346
        %v1683 = vpack.c.b16 %v1355, %v1347
        %v1684 = vpack.c.b16 %v1356, %v1348
        %v1685 = vpack.c.b16 %v1365, %v1357
        %v1686 = vpack.c.b16 %v1366, %v1358
        %v1687 = vpack.c.b16 %v1367, %v1359
        %v1688 = vpack.c.b16 %v1368, %v1360
        %v1689 = vpack.c.b16 %v1369, %v1361
        %v1690 = vpack.c.b16 %v1370, %v1362
        %v1691 = vpack.c.b16 %v1371, %v1363
        %v1692 = vpack.c.b16 %v1372, %v1364
        %v1693 = vpack.c.b16 %v1381, %v1373
        %v1694 = vpack.c.b16 %v1382, %v1374
        %v1695 = vpack.c.b16 %v1383, %v1375
        %v1696 = vpack.c.b16 %v1384, %v1376
        %v1697 = vpack.c.b16 %v1385, %v1377
        %v1698 = vpack.c.b16 %v1386, %v1378
        %v1699 = vpack.c.b16 %v1387, %v1379
        %v1700 = vpack.c.b16 %v1388, %v1380
        %v1701 = vpack.c.b16 %v1397, %v1389
        %v1702 = vpack.c.b16 %v1398, %v1390
        %v1703 = vpack.c.b16 %v1399, %v1391
        %v1704 = vpack.c.b16 %v1400, %v1392
        %v1705 = vpack.c.b16 %v1401, %v1393
        %v1706 = vpack.c.b16 %v1402, %v1394
        %v1707 = vpack.c.b16 %v1403, %v1395
        %v1708 = vpack.c.b16 %v1404, %v1396
        %v1709 = vpack.c.b16 %v1413, %v1405
        %v1710 = vpack.c.b16 %v1414, %v1406
        %v1711 = vpack.c.b16 %v1415, %v1407
        %v1712 = vpack.c.b16 %v1416, %v1408
        %v1713 = vpack.c.b16 %v1417, %v1409
        %v1714 = vpack.c.b16 %v1418, %v1410
        %v1715 = vpack.c.b16 %v1419, %v1411
        %v1716 = vpack.c.b16 %v1420, %v1412
        %v1717 = vpack.c.b16 %v1429, %v1421
        %v1718 = vpack.c.b16 %v1430, %v1422
        %v1719 = vpack.c.b16 %v1431, %v1423
        %v1720 = vpack.c.b16 %v1432, %v1424
        %v1721 = vpack.c.b16 %v1433, %v1425
        %v1722 = vpack.c.b16 %v1434, %v1426
        %v1723 = vpack.c.b16 %v1435, %v1427
        %v1724 = vpack.c.b16 %v1436, %v1428
        %v1725 = vpack.c.b16 %v1445, %v1437
        %v1726 = vpack.c.b16 %v1446, %v1438
        %v1727 = vpack.c.b16 %v1447, %v1439
        %v1728 = vpack.c.b16 %v1448, %v1440
        %v1729 = vpack.c.b16 %v1449, %v1441
        %v1730 = vpack.c.b16 %v1450, %v1442
        %v1731 = vpack.c.b16 %v1451, %v1443
        %v1732 = vpack.c.b16 %v1452, %v1444
        %v1733 = vpack.c.b16 %v1461, %v1453
        %v1734 = vpack.c.b16 %v1462, %v1454
        %v1735 = vpack.c.b16 %v1463, %v1455
        %v1736 = vpack.c.b16 %v1464, %v1456
        %v1737 = vpack.c.b16 %v1465, %v1457
        %v1738 = vpack.c.b16 %v1466, %v1458
        %v1739 = vpack.c.b16 %v1467, %v1459
        %v1740 = vpack.c.b16 %v1468, %v1460
        %v1741 = vpack.c.b16 %v1477, %v1469
        %v1742 = vpack.c.b16 %v1478, %v1470
        %v1743 = vpack.c.b16 %v1479, %v1471
        %v1744 = vpack.c.b16 %v1480, %v1472
        %v1745 = vpack.c.b16 %v1481, %v1473
        %v1746 = vpack.c.b16 %v1482, %v1474
        %v1747 = vpack.c.b16 %v1483, %v1475
        %v1748 = vpack.c.b16 %v1484, %v1476
        %v1749 = vpack.c.b16 %v1493, %v1485
        %v1750 = vpack.c.b16 %v1494, %v1486
        %v1751 = vpack.c.b16 %v1495, %v1487
        %v1752 = vpack.c.b16 %v1496, %v1488
        %v1753 = vpack.c.b16 %v1497, %v1489
        %v1754 = vpack.c.b16 %v1498, %v1490
        %v1755 = vpack.c.b16 %v1499, %v1491
        %v1756 = vpack.c.b16 %v1500, %v1492
        %2013 = vmatprep.subr.bf16.mxu0 %v1558
        %2014 = vmatpush1.bf16.msra.mxu0 %v1557
        %2015 = vmatprep.subr.bf16.mxu0 %v1550
        %2016 = vmatpush1.bf16.msra.mxu0 %v1549
        %2017 = vmatprep.subr.bf16.mxu0 %v1542
        %2018 = vmatpush1.bf16.msra.mxu0 %v1541
        %2019 = vmatprep.subr.bf16.mxu0 %v1534
        %2020 = vmatpush1.bf16.msra.mxu0 %v1533
        %2021 = vmatprep.subr.bf16.mxu0 %v1526
        %2022 = vmatpush1.bf16.msra.mxu0 %v1525
        %2023 = vmatprep.subr.bf16.mxu0 %v1518
        %2024 = vmatpush1.bf16.msra.mxu0 %v1517
        %2025 = vmatprep.subr.bf16.mxu0 %v1510
        %2026 = vmatpush1.bf16.msra.mxu0 %v1509
        %2027 = vmatprep.subr.bf16.mxu0 %v1502
        %2028 = vmatpush1.bf16.msra.mxu0 %v1501
        %2029 = vmatprep.subr.bf16.mxu0 %v1622
        %2030 = vmatpush2.bf16.msra.mxu0 %v1621
        %2031 = vmatprep.subr.bf16.mxu0 %v1614
        %2032 = vmatpush2.bf16.msra.mxu0 %v1613
        %2033 = vmatprep.subr.bf16.mxu0 %v1606
        %2034 = vmatpush2.bf16.msra.mxu0 %v1605
        %2035 = vmatprep.subr.bf16.mxu0 %v1598
        %2036 = vmatpush2.bf16.msra.mxu0 %v1597
        %2037 = vmatprep.subr.bf16.mxu0 %v1590
        %2038 = vmatpush2.bf16.msra.mxu0 %v1589
        %2039 = vmatprep.subr.bf16.mxu0 %v1582
        %2040 = vmatpush2.bf16.msra.mxu0 %v1581
        %2041 = vmatprep.subr.bf16.mxu0 %v1574
        %2042 = vmatpush2.bf16.msra.mxu0 %v1573
        %2043 = vmatprep.subr.bf16.mxu0 %v1566
        %2044 = vmatpush2.bf16.msra.mxu0 %v1565
        %2045 = vmatprep.mubr.bf16.mxu0 %v726
        %2046 = vmatmul.mubr.bf16.gmra.mxu0 %v725
        %v2047 = vpop.f32.mrf.mxu0
        %v2048 = vadd.f32 0.0, %v2047
        %v2049 = vpop.f32.mrf.mxu0
        %v2050 = vadd.f32 0.0, %v2049
        %v2051 = vpop.f32.mrf.mxu0
        %v2052 = vpop.f32.mrf.mxu0
        %2053 = vdwg.mxu0
        %2054 = vmatprep.subr.bf16.mxu0 %v1686
        %2055 = vmatpush1.bf16.msra.mxu0 %v1685
        %2056 = vmatprep.subr.bf16.mxu0 %v1678
        %2057 = vmatpush1.bf16.msra.mxu0 %v1677
        %2058 = vmatprep.subr.bf16.mxu0 %v1670
        %2059 = vmatpush1.bf16.msra.mxu0 %v1669
        %2060 = vmatprep.subr.bf16.mxu0 %v1662
        %2061 = vmatpush1.bf16.msra.mxu0 %v1661
        %2062 = vmatprep.subr.bf16.mxu0 %v1654
        %2063 = vmatpush1.bf16.msra.mxu0 %v1653
        %2064 = vmatprep.subr.bf16.mxu0 %v1646
        %2065 = vmatpush1.bf16.msra.mxu0 %v1645
        %2066 = vmatprep.subr.bf16.mxu0 %v1638
        %2067 = vmatpush1.bf16.msra.mxu0 %v1637
        %2068 = vmatprep.subr.bf16.mxu0 %v1630
        %2069 = vmatpush1.bf16.msra.mxu0 %v1629
        %2070 = vmatprep.subr.bf16.mxu0 %v1750
        %2071 = vmatpush2.bf16.msra.mxu0 %v1749
        %2072 = vmatprep.subr.bf16.mxu0 %v1742
        %2073 = vmatpush2.bf16.msra.mxu0 %v1741
        %2074 = vmatprep.subr.bf16.mxu0 %v1734
        %2075 = vmatpush2.bf16.msra.mxu0 %v1733
        %2076 = vmatprep.subr.bf16.mxu0 %v1726
        %2077 = vmatpush2.bf16.msra.mxu0 %v1725
        %2078 = vmatprep.subr.bf16.mxu0 %v1718
        %2079 = vmatpush2.bf16.msra.mxu0 %v1717
        %2080 = vmatprep.subr.bf16.mxu0 %v1710
        %2081 = vmatpush2.bf16.msra.mxu0 %v1709
        %2082 = vmatprep.subr.bf16.mxu0 %v1702
        %2083 = vmatpush2.bf16.msra.mxu0 %v1701
        %2084 = vmatprep.subr.bf16.mxu0 %v1694
        %2085 = vmatpush2.bf16.msra.mxu0 %v1693
        %2086 = vmatprep.mubr.bf16.mxu0 %v728
        %2087 = vmatmul.mubr.bf16.gmra.mxu0 %v727
        %v2088 = vpop.f32.mrf.mxu0
        %v2089 = vadd.f32 %v2048, %v2088
        %v2090 = vpop.f32.mrf.mxu0
        %v2091 = vadd.f32 %v2050, %v2090
        %v2092 = vpop.f32.mrf.mxu0
        %v2093 = vpop.f32.mrf.mxu0
        %2094 = vdwg.mxu0
        %2095 = vmatprep.subr.bf16.mxu0 %v1560
        %2096 = vmatpush1.bf16.msra.mxu0 %v1559
        %2097 = vmatprep.subr.bf16.mxu0 %v1552
        %2098 = vmatpush1.bf16.msra.mxu0 %v1551
        %2099 = vmatprep.subr.bf16.mxu0 %v1544
        %2100 = vmatpush1.bf16.msra.mxu0 %v1543
        %2101 = vmatprep.subr.bf16.mxu0 %v1536
        %2102 = vmatpush1.bf16.msra.mxu0 %v1535
        %2103 = vmatprep.subr.bf16.mxu0 %v1528
        %2104 = vmatpush1.bf16.msra.mxu0 %v1527
        %2105 = vmatprep.subr.bf16.mxu0 %v1520
        %2106 = vmatpush1.bf16.msra.mxu0 %v1519
        %2107 = vmatprep.subr.bf16.mxu0 %v1512
        %2108 = vmatpush1.bf16.msra.mxu0 %v1511
        %2109 = vmatprep.subr.bf16.mxu0 %v1504
        %2110 = vmatpush1.bf16.msra.mxu0 %v1503
        %2111 = vmatprep.subr.bf16.mxu0 %v1624
        %2112 = vmatpush2.bf16.msra.mxu0 %v1623
        %2113 = vmatprep.subr.bf16.mxu0 %v1616
        %2114 = vmatpush2.bf16.msra.mxu0 %v1615
        %2115 = vmatprep.subr.bf16.mxu0 %v1608
        %2116 = vmatpush2.bf16.msra.mxu0 %v1607
        %2117 = vmatprep.subr.bf16.mxu0 %v1600
        %2118 = vmatpush2.bf16.msra.mxu0 %v1599
        %2119 = vmatprep.subr.bf16.mxu0 %v1592
        %2120 = vmatpush2.bf16.msra.mxu0 %v1591
        %2121 = vmatprep.subr.bf16.mxu0 %v1584
        %2122 = vmatpush2.bf16.msra.mxu0 %v1583
        %2123 = vmatprep.subr.bf16.mxu0 %v1576
        %2124 = vmatpush2.bf16.msra.mxu0 %v1575
        %2125 = vmatprep.subr.bf16.mxu0 %v1568
        %2126 = vmatpush2.bf16.msra.mxu0 %v1567
        %2127 = vmatprep.mubr.bf16.mxu0 %v726
        %2128 = vmatmul.mubr.bf16.gmra.mxu0 %v725
        %v2129 = vpop.f32.mrf.mxu0
        %v2130 = vadd.f32 0.0, %v2129
        %v2131 = vpop.f32.mrf.mxu0
        %v2132 = vadd.f32 0.0, %v2131
        %v2133 = vpop.f32.mrf.mxu0
        %v2134 = vpop.f32.mrf.mxu0
        %2135 = vdwg.mxu0
        %2136 = vmatprep.subr.bf16.mxu0 %v1688
        %2137 = vmatpush1.bf16.msra.mxu0 %v1687
        %2138 = vmatprep.subr.bf16.mxu0 %v1680
        %2139 = vmatpush1.bf16.msra.mxu0 %v1679
        %2140 = vmatprep.subr.bf16.mxu0 %v1672
        %2141 = vmatpush1.bf16.msra.mxu0 %v1671
        %2142 = vmatprep.subr.bf16.mxu0 %v1664
        %2143 = vmatpush1.bf16.msra.mxu0 %v1663
        %2144 = vmatprep.subr.bf16.mxu0 %v1656
        %2145 = vmatpush1.bf16.msra.mxu0 %v1655
        %2146 = vmatprep.subr.bf16.mxu0 %v1648
        %2147 = vmatpush1.bf16.msra.mxu0 %v1647
        %2148 = vmatprep.subr.bf16.mxu0 %v1640
        %2149 = vmatpush1.bf16.msra.mxu0 %v1639
        %2150 = vmatprep.subr.bf16.mxu0 %v1632
        %2151 = vmatpush1.bf16.msra.mxu0 %v1631
        %2152 = vmatprep.subr.bf16.mxu0 %v1752
        %2153 = vmatpush2.bf16.msra.mxu0 %v1751
        %2154 = vmatprep.subr.bf16.mxu0 %v1744
        %2155 = vmatpush2.bf16.msra.mxu0 %v1743
        %2156 = vmatprep.subr.bf16.mxu0 %v1736
        %2157 = vmatpush2.bf16.msra.mxu0 %v1735
        %2158 = vmatprep.subr.bf16.mxu0 %v1728
        %2159 = vmatpush2.bf16.msra.mxu0 %v1727
        %2160 = vmatprep.subr.bf16.mxu0 %v1720
        %2161 = vmatpush2.bf16.msra.mxu0 %v1719
        %2162 = vmatprep.subr.bf16.mxu0 %v1712
        %2163 = vmatpush2.bf16.msra.mxu0 %v1711
        %2164 = vmatprep.subr.bf16.mxu0 %v1704
        %2165 = vmatpush2.bf16.msra.mxu0 %v1703
        %2166 = vmatprep.subr.bf16.mxu0 %v1696
        %2167 = vmatpush2.bf16.msra.mxu0 %v1695
        %2168 = vmatprep.mubr.bf16.mxu0 %v728
        %2169 = vmatmul.mubr.bf16.gmra.mxu0 %v727
        %v2170 = vpop.f32.mrf.mxu0
        %v2171 = vadd.f32 %v2130, %v2170
        %v2172 = vpop.f32.mrf.mxu0
        %v2173 = vadd.f32 %v2132, %v2172
        %v2174 = vpop.f32.mrf.mxu0
        %v2175 = vpop.f32.mrf.mxu0
        %2176 = vdwg.mxu0
        %2177 = vmatprep.subr.bf16.mxu0 %v1562
        %2178 = vmatpush1.bf16.msra.mxu0 %v1561
        %2179 = vmatprep.subr.bf16.mxu0 %v1554
        %2180 = vmatpush1.bf16.msra.mxu0 %v1553
        %2181 = vmatprep.subr.bf16.mxu0 %v1546
        %2182 = vmatpush1.bf16.msra.mxu0 %v1545
        %2183 = vmatprep.subr.bf16.mxu0 %v1538
        %2184 = vmatpush1.bf16.msra.mxu0 %v1537
        %2185 = vmatprep.subr.bf16.mxu0 %v1530
        %2186 = vmatpush1.bf16.msra.mxu0 %v1529
        %2187 = vmatprep.subr.bf16.mxu0 %v1522
        %2188 = vmatpush1.bf16.msra.mxu0 %v1521
        %2189 = vmatprep.subr.bf16.mxu0 %v1514
        %2190 = vmatpush1.bf16.msra.mxu0 %v1513
        %2191 = vmatprep.subr.bf16.mxu0 %v1506
        %2192 = vmatpush1.bf16.msra.mxu0 %v1505
        %2193 = vmatprep.subr.bf16.mxu0 %v1626
        %2194 = vmatpush2.bf16.msra.mxu0 %v1625
        %2195 = vmatprep.subr.bf16.mxu0 %v1618
        %2196 = vmatpush2.bf16.msra.mxu0 %v1617
        %2197 = vmatprep.subr.bf16.mxu0 %v1610
        %2198 = vmatpush2.bf16.msra.mxu0 %v1609
        %2199 = vmatprep.subr.bf16.mxu0 %v1602
        %2200 = vmatpush2.bf16.msra.mxu0 %v1601
        %2201 = vmatprep.subr.bf16.mxu0 %v1594
        %2202 = vmatpush2.bf16.msra.mxu0 %v1593
        %2203 = vmatprep.subr.bf16.mxu0 %v1586
        %2204 = vmatpush2.bf16.msra.mxu0 %v1585
        %2205 = vmatprep.subr.bf16.mxu0 %v1578
        %2206 = vmatpush2.bf16.msra.mxu0 %v1577
        %2207 = vmatprep.subr.bf16.mxu0 %v1570
        %2208 = vmatpush2.bf16.msra.mxu0 %v1569
        %2209 = vmatprep.mubr.bf16.mxu0 %v726
        %2210 = vmatmul.mubr.bf16.gmra.mxu0 %v725
        %v2211 = vpop.f32.mrf.mxu0
        %v2212 = vadd.f32 0.0, %v2211
        %v2213 = vpop.f32.mrf.mxu0
        %v2214 = vadd.f32 0.0, %v2213
        %v2215 = vpop.f32.mrf.mxu0
        %v2216 = vpop.f32.mrf.mxu0
        %2217 = vdwg.mxu0
        %2218 = vmatprep.subr.bf16.mxu0 %v1690
        %2219 = vmatpush1.bf16.msra.mxu0 %v1689
        %2220 = vmatprep.subr.bf16.mxu0 %v1682
        %2221 = vmatpush1.bf16.msra.mxu0 %v1681
        %2222 = vmatprep.subr.bf16.mxu0 %v1674
        %2223 = vmatpush1.bf16.msra.mxu0 %v1673
        %2224 = vmatprep.subr.bf16.mxu0 %v1666
        %2225 = vmatpush1.bf16.msra.mxu0 %v1665
        %2226 = vmatprep.subr.bf16.mxu0 %v1658
        %2227 = vmatpush1.bf16.msra.mxu0 %v1657
        %2228 = vmatprep.subr.bf16.mxu0 %v1650
        %2229 = vmatpush1.bf16.msra.mxu0 %v1649
        %2230 = vmatprep.subr.bf16.mxu0 %v1642
        %2231 = vmatpush1.bf16.msra.mxu0 %v1641
        %2232 = vmatprep.subr.bf16.mxu0 %v1634
        %2233 = vmatpush1.bf16.msra.mxu0 %v1633
        %2234 = vmatprep.subr.bf16.mxu0 %v1754
        %2235 = vmatpush2.bf16.msra.mxu0 %v1753
        %2236 = vmatprep.subr.bf16.mxu0 %v1746
        %2237 = vmatpush2.bf16.msra.mxu0 %v1745
        %2238 = vmatprep.subr.bf16.mxu0 %v1738
        %2239 = vmatpush2.bf16.msra.mxu0 %v1737
        %2240 = vmatprep.subr.bf16.mxu0 %v1730
        %2241 = vmatpush2.bf16.msra.mxu0 %v1729
        %2242 = vmatprep.subr.bf16.mxu0 %v1722
        %2243 = vmatpush2.bf16.msra.mxu0 %v1721
        %2244 = vmatprep.subr.bf16.mxu0 %v1714
        %2245 = vmatpush2.bf16.msra.mxu0 %v1713
        %2246 = vmatprep.subr.bf16.mxu0 %v1706
        %2247 = vmatpush2.bf16.msra.mxu0 %v1705
        %2248 = vmatprep.subr.bf16.mxu0 %v1698
        %2249 = vmatpush2.bf16.msra.mxu0 %v1697
        %2250 = vmatprep.mubr.bf16.mxu0 %v728
        %2251 = vmatmul.mubr.bf16.gmra.mxu0 %v727
        %v2252 = vpop.f32.mrf.mxu0
        %v2253 = vadd.f32 %v2212, %v2252
        %v2254 = vpop.f32.mrf.mxu0
        %v2255 = vadd.f32 %v2214, %v2254
        %v2256 = vpop.f32.mrf.mxu0
        %v2257 = vpop.f32.mrf.mxu0
        %2258 = vdwg.mxu0
        %2259 = vmatprep.subr.bf16.mxu0 %v1564
        %2260 = vmatpush1.bf16.msra.mxu0 %v1563
        %2261 = vmatprep.subr.bf16.mxu0 %v1556
        %2262 = vmatpush1.bf16.msra.mxu0 %v1555
        %2263 = vmatprep.subr.bf16.mxu0 %v1548
        %2264 = vmatpush1.bf16.msra.mxu0 %v1547
        %2265 = vmatprep.subr.bf16.mxu0 %v1540
        %2266 = vmatpush1.bf16.msra.mxu0 %v1539
        %2267 = vmatprep.subr.bf16.mxu0 %v1532
        %2268 = vmatpush1.bf16.msra.mxu0 %v1531
        %2269 = vmatprep.subr.bf16.mxu0 %v1524
        %2270 = vmatpush1.bf16.msra.mxu0 %v1523
        %2271 = vmatprep.subr.bf16.mxu0 %v1516
        %2272 = vmatpush1.bf16.msra.mxu0 %v1515
        %2273 = vmatprep.subr.bf16.mxu0 %v1508
        %2274 = vmatpush1.bf16.msra.mxu0 %v1507
        %2275 = vmatprep.subr.bf16.mxu0 %v1628
        %2276 = vmatpush2.bf16.msra.mxu0 %v1627
        %2277 = vmatprep.subr.bf16.mxu0 %v1620
        %2278 = vmatpush2.bf16.msra.mxu0 %v1619
        %2279 = vmatprep.subr.bf16.mxu0 %v1612
        %2280 = vmatpush2.bf16.msra.mxu0 %v1611
        %2281 = vmatprep.subr.bf16.mxu0 %v1604
        %2282 = vmatpush2.bf16.msra.mxu0 %v1603
        %2283 = vmatprep.subr.bf16.mxu0 %v1596
        %2284 = vmatpush2.bf16.msra.mxu0 %v1595
        %2285 = vmatprep.subr.bf16.mxu0 %v1588
        %2286 = vmatpush2.bf16.msra.mxu0 %v1587
        %2287 = vmatprep.subr.bf16.mxu0 %v1580
        %2288 = vmatpush2.bf16.msra.mxu0 %v1579
        %2289 = vmatprep.subr.bf16.mxu0 %v1572
        %2290 = vmatpush2.bf16.msra.mxu0 %v1571
        %2291 = vmatprep.mubr.bf16.mxu0 %v726
        %2292 = vmatmul.mubr.bf16.gmra.mxu0 %v725
        %v2293 = vpop.f32.mrf.mxu0
        %v2294 = vadd.f32 0.0, %v2293
        %v2295 = vpop.f32.mrf.mxu0
        %v2296 = vadd.f32 0.0, %v2295
        %v2297 = vpop.f32.mrf.mxu0
        %v2298 = vpop.f32.mrf.mxu0
        %2299 = vdwg.mxu0
        %2300 = vmatprep.subr.bf16.mxu0 %v1692
        %2301 = vmatpush1.bf16.msra.mxu0 %v1691
        %2302 = vmatprep.subr.bf16.mxu0 %v1684
        %2303 = vmatpush1.bf16.msra.mxu0 %v1683
        %2304 = vmatprep.subr.bf16.mxu0 %v1676
        %2305 = vmatpush1.bf16.msra.mxu0 %v1675
        %2306 = vmatprep.subr.bf16.mxu0 %v1668
        %2307 = vmatpush1.bf16.msra.mxu0 %v1667
        %2308 = vmatprep.subr.bf16.mxu0 %v1660
        %2309 = vmatpush1.bf16.msra.mxu0 %v1659
        %2310 = vmatprep.subr.bf16.mxu0 %v1652
        %2311 = vmatpush1.bf16.msra.mxu0 %v1651
        %2312 = vmatprep.subr.bf16.mxu0 %v1644
        %2313 = vmatpush1.bf16.msra.mxu0 %v1643
        %2314 = vmatprep.subr.bf16.mxu0 %v1636
        %2315 = vmatpush1.bf16.msra.mxu0 %v1635
        %2316 = vmatprep.subr.bf16.mxu0 %v1756
        %2317 = vmatpush2.bf16.msra.mxu0 %v1755
        %2318 = vmatprep.subr.bf16.mxu0 %v1748
        %2319 = vmatpush2.bf16.msra.mxu0 %v1747
        %2320 = vmatprep.subr.bf16.mxu0 %v1740
        %2321 = vmatpush2.bf16.msra.mxu0 %v1739
        %2322 = vmatprep.subr.bf16.mxu0 %v1732
        %2323 = vmatpush2.bf16.msra.mxu0 %v1731
        %2324 = vmatprep.subr.bf16.mxu0 %v1724
        %2325 = vmatpush2.bf16.msra.mxu0 %v1723
        %2326 = vmatprep.subr.bf16.mxu0 %v1716
        %2327 = vmatpush2.bf16.msra.mxu0 %v1715
        %2328 = vmatprep.subr.bf16.mxu0 %v1708
        %2329 = vmatpush2.bf16.msra.mxu0 %v1707
        %2330 = vmatprep.subr.bf16.mxu0 %v1700
        %2331 = vmatpush2.bf16.msra.mxu0 %v1699
        %2332 = vmatprep.mubr.bf16.mxu0 %v728
        %2333 = vmatmul.mubr.bf16.gmra.mxu0 %v727
        %v2334 = vpop.f32.mrf.mxu0
        %v2335 = vadd.f32 %v2294, %v2334
        %v2336 = vpop.f32.mrf.mxu0
        %v2337 = vadd.f32 %v2296, %v2336
        %v2338 = vpop.f32.mrf.mxu0
        %v2339 = vpop.f32.mrf.mxu0
        %2340 = vdwg.mxu0
        %v2341 = vld [vmem:[%s3] sm:$0xf]
        %v2342 = vld [vmem:[%s3 + $0x4] sm:$0xf]
        %v2343 = vld [vmem:[%s3 + $0x8] sm:$0xf]
        %v2344 = vld [vmem:[%s3 + $0xc] sm:$0xf]
        %v2345 = vld [vmem:[%s3 + $0x10] sm:$0xf]
        %v2346 = vld [vmem:[%s3 + $0x14] sm:$0xf]
        %v2347 = vld [vmem:[%s3 + $0x18] sm:$0xf]
        %v2348 = vld [vmem:[%s3 + $0x1c] sm:$0xf]
        %v2349 = vld [vmem:[%s3 + $0x20] sm:$0xf]
        %v2350 = vld [vmem:[%s3 + $0x24] sm:$0xf]
        %v2351 = vld [vmem:[%s3 + $0x28] sm:$0xf]
        %v2352 = vld [vmem:[%s3 + $0x2c] sm:$0xf]
        %v2353 = vld [vmem:[%s3 + $0x30] sm:$0xf]
        %v2354 = vld [vmem:[%s3 + $0x34] sm:$0xf]
        %v2355 = vld [vmem:[%s3 + $0x38] sm:$0xf]
        %v2356 = vld [vmem:[%s3 + $0x3c] sm:$0xf]
        %v2357 = vlaneseq
        %v2358 = vand.u32 %v2357, 127
        %vm2359 = vcmp.le.s32.totalorder %v2358, 40
        %v2360 = vsel %vm2359, 0.0, -3.4028235e+38
        %v2361 = vlaneseq
        %v2362 = vshrl.u32 %v2361, 7
        %v2363 = vadd.s32 %v2362, 8
        %v2364 = vadd.s32 %v2362, 16
        %v2365 = vadd.s32 %v2362, 24
        %v2366 = vadd.s32 %v2362, 32
        %v2367 = vadd.s32 %v2362, 40
        %v2368 = vadd.s32 %v2362, 48
        %v2369 = vadd.s32 %v2362, 56
        %vm2370 = vcmp.eq.s32.totalorder %v2362, 40
        %vm2371 = vcmp.eq.s32.totalorder %v2363, 40
        %vm2372 = vcmp.eq.s32.totalorder %v2364, 40
        %vm2373 = vcmp.eq.s32.totalorder %v2365, 40
        %vm2374 = vcmp.eq.s32.totalorder %v2366, 40
        %vm2375 = vcmp.eq.s32.totalorder %v2367, 40
        %vm2376 = vcmp.eq.s32.totalorder %v2368, 40
        %vm2377 = vcmp.eq.s32.totalorder %v2369, 40
        %v2378 = vpack.c.bf16 %v2253, %v2253
        %v2395 = vunpack.c.l.b16 %v2341
        %v2396 = vunpack.c.l.b16 %v2342
        %v2397 = vunpack.c.l.b16 %v2343
        %v2398 = vunpack.c.l.b16 %v2344
        %v2399 = vunpack.c.l.b16 %v2345
        %v2400 = vunpack.c.l.b16 %v2346
        %v2401 = vunpack.c.l.b16 %v2347
        %v2402 = vunpack.c.l.b16 %v2348
        %v2403 = vunpack.c.l.b16 %v2349
        %v2404 = vunpack.c.l.b16 %v2350
        %v2405 = vunpack.c.l.b16 %v2351
        %v2406 = vunpack.c.l.b16 %v2352
        %v2407 = vunpack.c.l.b16 %v2353
        %v2408 = vunpack.c.l.b16 %v2354
        %v2409 = vunpack.c.l.b16 %v2355
        %v2410 = vunpack.c.l.b16 %v2356
        %v2411 = vpack.c.b16 %v2396, %v2395
        %v2412 = vpack.c.b16 %v2398, %v2397
        %v2413 = vpack.c.b16 %v2400, %v2399
        %v2414 = vpack.c.b16 %v2402, %v2401
        %v2415 = vpack.c.b16 %v2404, %v2403
        %v2416 = vpack.c.b16 %v2406, %v2405
        %v2417 = vpack.c.b16 %v2408, %v2407
        %v2418 = vpack.c.b16 %v2410, %v2409
        %2427 = vmatprep.subr.bf16.mxu0 0
        %2428 = vmatpush1.bf16.msra.mxu0 %v2418
        %2429 = vmatprep.subr.bf16.mxu0 0
        %2430 = vmatpush1.bf16.msra.mxu0 %v2417
        %2431 = vmatprep.subr.bf16.mxu0 0
        %2432 = vmatpush1.bf16.msra.mxu0 %v2416
        %2433 = vmatprep.subr.bf16.mxu0 0
        %2434 = vmatpush1.bf16.msra.mxu0 %v2415
        %2435 = vmatprep.subr.bf16.mxu0 0
        %2436 = vmatpush1.bf16.msra.mxu0 %v2414
        %2437 = vmatprep.subr.bf16.mxu0 0
        %2438 = vmatpush1.bf16.msra.mxu0 %v2413
        %2439 = vmatprep.subr.bf16.mxu0 0
        %2440 = vmatpush1.bf16.msra.mxu0 %v2412
        %2441 = vmatprep.subr.bf16.mxu0 0
        %2442 = vmatpush1.bf16.msra.mxu0 %v2411
        %2443 = vmatprep.subr.bf16.mxu0 0
        %2444 = vmatpush2.bf16.msra.mxu0 0
        %2445 = vmatprep.subr.bf16.mxu0 0
        %2446 = vmatpush2.bf16.msra.mxu0 0
        %2447 = vmatprep.subr.bf16.mxu0 0
        %2448 = vmatpush2.bf16.msra.mxu0 0
        %2449 = vmatprep.subr.bf16.mxu0 0
        %2450 = vmatpush2.bf16.msra.mxu0 0
        %2451 = vmatprep.subr.bf16.mxu0 0
        %2452 = vmatpush2.bf16.msra.mxu0 0
        %2453 = vmatprep.subr.bf16.mxu0 0
        %2454 = vmatpush2.bf16.msra.mxu0 0
        %2455 = vmatprep.subr.bf16.mxu0 0
        %2456 = vmatpush2.bf16.msra.mxu0 0
        %2457 = vmatprep.subr.bf16.mxu0 0
        %2458 = vmatpush2.bf16.msra.mxu0 0
        %2459 = vmatprep.mubr.bf16.mxu0 0
        %2460 = vmatmul.mubr.bf16.gmra.mxu0 %v2378
        %v2461 = vpop.f32.mrf.mxu0
        %v2462 = vadd.f32 0.0, %v2461
        %v2463 = vpop.f32.mrf.mxu0
        %v2464 = vpop.f32.mrf.mxu0
        %v2465 = vpop.f32.mrf.mxu0
        %2466 = vdwg.mxu0
        %v2468 = vcombine.high %v2462, %v2462
        %v2470 = vunpack.c.l.s4 1966171168
        %v2471 = vunpack.c.0.s8 %v2470
        %v2472 = vlaneseq
        %v2473 = vshrl.u32 %v2472, 7
        %v2474 = vsub.s32 %v2471, %v2473
        %v2475 = vrot.slane %v2462, %v2474
        %v2477 = vunpack.c.l.s4 1966171168
        %v2478 = vunpack.c.0.s8 %v2477
        %v2479 = vlaneseq
        %v2480 = vshrl.u32 %v2479, 7
        %v2481 = vsub.s32 %v2478, %v2480
        %v2482 = vrot.slane %v2468, %v2481
        %v2483 = vcombine.high %v2475, %v2475
        %v2484 = vcombine.high %v2482, %v2482
        %v2486 = vunpack.c.l.s4 1966171168
        %v2487 = vunpack.c.0.s8 %v2486
        %v2488 = vlaneseq
        %v2489 = vshrl.u32 %v2488, 7
        %v2490 = vsub.s32 %v2487, %v2489
        %v2491 = vrot.slane %v2475, %v2490
        %v2493 = vunpack.c.l.s4 1966171168
        %v2494 = vunpack.c.0.s8 %v2493
        %v2495 = vlaneseq
        %v2496 = vshrl.u32 %v2495, 7
        %v2497 = vsub.s32 %v2494, %v2496
        %v2498 = vrot.slane %v2482, %v2497
        %v2500 = vunpack.c.l.s4 1966171168
        %v2501 = vunpack.c.0.s8 %v2500
        %v2502 = vlaneseq
        %v2503 = vshrl.u32 %v2502, 7
        %v2504 = vsub.s32 %v2501, %v2503
        %v2505 = vrot.slane %v2483, %v2504
        %v2507 = vunpack.c.l.s4 1966171168
        %v2508 = vunpack.c.0.s8 %v2507
        %v2509 = vlaneseq
        %v2510 = vshrl.u32 %v2509, 7
        %v2511 = vsub.s32 %v2508, %v2510
        %v2512 = vrot.slane %v2484, %v2511
        %v2513 = vcombine.high %v2491, %v2491
        %v2514 = vcombine.high %v2498, %v2498
        %v2515 = vcombine.high %v2505, %v2505
        %v2516 = vcombine.high %v2512, %v2512
        %v2525 = vpack.c.bf16 %v2491, %v2491
        %v2526 = vpack.c.bf16 %v2505, %v2505
        %v2527 = vpack.c.bf16 %v2513, %v2513
        %v2528 = vpack.c.bf16 %v2515, %v2515
        %v2529 = vpack.c.bf16 %v2498, %v2498
        %v2530 = vpack.c.bf16 %v2512, %v2512
        %v2531 = vpack.c.bf16 %v2514, %v2514
        %v2532 = vpack.c.bf16 %v2516, %v2516
        %v2533 = vld [vmem:[%s387] sm:$0xf]
        %v2534 = vld [vmem:[%s387 + $0x4] sm:$0xf]
        %v2535 = vld [vmem:[%s387 + $0x8] sm:$0xf]
        %v2536 = vld [vmem:[%s387 + $0xc] sm:$0xf]
        %v2537 = vld [vmem:[%s387 + $0x10] sm:$0xf]
        %v2538 = vld [vmem:[%s387 + $0x14] sm:$0xf]
        %v2539 = vld [vmem:[%s387 + $0x18] sm:$0xf]
        %v2540 = vld [vmem:[%s387 + $0x1c] sm:$0xf]
        %v2541 = vld [vmem:[%s387 + $0x40] sm:$0xf]
        %v2542 = vld [vmem:[%s387 + $0x44] sm:$0xf]
        %v2543 = vld [vmem:[%s387 + $0x48] sm:$0xf]
        %v2544 = vld [vmem:[%s387 + $0x4c] sm:$0xf]
        %v2545 = vld [vmem:[%s387 + $0x50] sm:$0xf]
        %v2546 = vld [vmem:[%s387 + $0x54] sm:$0xf]
        %v2547 = vld [vmem:[%s387 + $0x58] sm:$0xf]
        %v2548 = vld [vmem:[%s387 + $0x5c] sm:$0xf]
        %v2549 = vld [vmem:[%s387 + $0x80] sm:$0xf]
        %v2550 = vld [vmem:[%s387 + $0x84] sm:$0xf]
        %v2551 = vld [vmem:[%s387 + $0x88] sm:$0xf]
        %v2552 = vld [vmem:[%s387 + $0x8c] sm:$0xf]
        %v2553 = vld [vmem:[%s387 + $0x90] sm:$0xf]
        %v2554 = vld [vmem:[%s387 + $0x94] sm:$0xf]
        %v2555 = vld [vmem:[%s387 + $0x98] sm:$0xf]
        %v2556 = vld [vmem:[%s387 + $0x9c] sm:$0xf]
        %v2557 = vld [vmem:[%s387 + $0xc0] sm:$0xf]
        %v2558 = vld [vmem:[%s387 + $0xc4] sm:$0xf]
        %v2559 = vld [vmem:[%s387 + $0xc8] sm:$0xf]
        %v2560 = vld [vmem:[%s387 + $0xcc] sm:$0xf]
        %v2561 = vld [vmem:[%s387 + $0xd0] sm:$0xf]
        %v2562 = vld [vmem:[%s387 + $0xd4] sm:$0xf]
        %v2563 = vld [vmem:[%s387 + $0xd8] sm:$0xf]
        %v2564 = vld [vmem:[%s387 + $0xdc] sm:$0xf]
        %v2565 = vld [vmem:[%s387 + $0x100] sm:$0xf]
        %v2566 = vld [vmem:[%s387 + $0x104] sm:$0xf]
        %v2567 = vld [vmem:[%s387 + $0x108] sm:$0xf]
        %v2568 = vld [vmem:[%s387 + $0x10c] sm:$0xf]
        %v2569 = vld [vmem:[%s387 + $0x110] sm:$0xf]
        %v2570 = vld [vmem:[%s387 + $0x114] sm:$0xf]
        %v2571 = vld [vmem:[%s387 + $0x118] sm:$0xf]
        %v2572 = vld [vmem:[%s387 + $0x11c] sm:$0xf]
        %v2573 = vld [vmem:[%s387 + $0x140] sm:$0xf]
        %v2574 = vld [vmem:[%s387 + $0x144] sm:$0xf]
        %v2575 = vld [vmem:[%s387 + $0x148] sm:$0xf]
        %v2576 = vld [vmem:[%s387 + $0x14c] sm:$0xf]
        %v2577 = vld [vmem:[%s387 + $0x150] sm:$0xf]
        %v2578 = vld [vmem:[%s387 + $0x154] sm:$0xf]
        %v2579 = vld [vmem:[%s387 + $0x158] sm:$0xf]
        %v2580 = vld [vmem:[%s387 + $0x15c] sm:$0xf]
        %v2581 = vld [vmem:[%s387 + $0x180] sm:$0xf]
        %v2582 = vld [vmem:[%s387 + $0x184] sm:$0xf]
        %v2583 = vld [vmem:[%s387 + $0x188] sm:$0xf]
        %v2584 = vld [vmem:[%s387 + $0x18c] sm:$0xf]
        %v2585 = vld [vmem:[%s387 + $0x190] sm:$0xf]
        %v2586 = vld [vmem:[%s387 + $0x194] sm:$0xf]
        %v2587 = vld [vmem:[%s387 + $0x198] sm:$0xf]
        %v2588 = vld [vmem:[%s387 + $0x19c] sm:$0xf]
        %v2589 = vld [vmem:[%s387 + $0x1c0] sm:$0xf]
        %v2590 = vld [vmem:[%s387 + $0x1c4] sm:$0xf]
        %v2591 = vld [vmem:[%s387 + $0x1c8] sm:$0xf]
        %v2592 = vld [vmem:[%s387 + $0x1cc] sm:$0xf]
        %v2593 = vld [vmem:[%s387 + $0x1d0] sm:$0xf]
        %v2594 = vld [vmem:[%s387 + $0x1d4] sm:$0xf]
        %v2595 = vld [vmem:[%s387 + $0x1d8] sm:$0xf]
        %v2596 = vld [vmem:[%s387 + $0x1dc] sm:$0xf]
        %v2597 = vsel %vm2370, 1, 0
        %v2598 = vsel %vm2371, 1, 0
        %v2599 = vsel %vm2372, 1, 0
        %v2600 = vsel %vm2373, 1, 0
        %v2601 = vsel %vm2374, 1, 0
        %v2602 = vsel %vm2375, 1, 0
        %v2603 = vsel %vm2376, 1, 0
        %v2604 = vsel %vm2377, 1, 0
        %vm2605 = vcmp.eq.s32.totalorder %v2597, 1
        %vm2606 = vcmp.eq.s32.totalorder %v2598, 1
        %vm2607 = vcmp.eq.s32.totalorder %v2599, 1
        %vm2608 = vcmp.eq.s32.totalorder %v2600, 1
        %vm2609 = vcmp.eq.s32.totalorder %v2601, 1
        %vm2610 = vcmp.eq.s32.totalorder %v2602, 1
        %vm2611 = vcmp.eq.s32.totalorder %v2603, 1
        %vm2612 = vcmp.eq.s32.totalorder %v2604, 1
        %v2614 = vpack.i.b16 %v2525, %v2525
        %v2616 = vlaneseq
        %v2617 = vshrl.u32 %v2616, 7
        %v2618 = vsub.s32 0, %v2617
        %v2619 = vrot.slane %v2614, %v2618
        %v2621 = vpack.i.b16 %v2526, %v2526
        %v2623 = vlaneseq
        %v2624 = vshrl.u32 %v2623, 7
        %v2625 = vsub.s32 0, %v2624
        %v2626 = vrot.slane %v2621, %v2625
        %v2628 = vpack.i.b16 %v2527, %v2527
        %v2630 = vlaneseq
        %v2631 = vshrl.u32 %v2630, 7
        %v2632 = vsub.s32 0, %v2631
        %v2633 = vrot.slane %v2628, %v2632
        %v2635 = vpack.i.b16 %v2528, %v2528
        %v2637 = vlaneseq
        %v2638 = vshrl.u32 %v2637, 7
        %v2639 = vsub.s32 0, %v2638
        %v2640 = vrot.slane %v2635, %v2639
        %v2642 = vpack.i.b16 %v2529, %v2529
        %v2644 = vlaneseq
        %v2645 = vshrl.u32 %v2644, 7
        %v2646 = vsub.s32 0, %v2645
        %v2647 = vrot.slane %v2642, %v2646
        %v2649 = vpack.i.b16 %v2530, %v2530
        %v2651 = vlaneseq
        %v2652 = vshrl.u32 %v2651, 7
        %v2653 = vsub.s32 0, %v2652
        %v2654 = vrot.slane %v2649, %v2653
        %v2656 = vpack.i.b16 %v2531, %v2531
        %v2658 = vlaneseq
        %v2659 = vshrl.u32 %v2658, 7
        %v2660 = vsub.s32 0, %v2659
        %v2661 = vrot.slane %v2656, %v2660
        %v2663 = vpack.i.b16 %v2532, %v2532
        %v2665 = vlaneseq
        %v2666 = vshrl.u32 %v2665, 7
        %v2667 = vsub.s32 0, %v2666
        %v2668 = vrot.slane %v2663, %v2667
        %vm2669 = vmpackc.low %vm2605, %vm2605
        %vm2670 = vmpackc.low %vm2606, %vm2606
        %vm2671 = vmpackc.low %vm2607, %vm2607
        %vm2672 = vmpackc.low %vm2608, %vm2608
        %vm2673 = vmpackc.low %vm2609, %vm2609
        %vm2674 = vmpackc.low %vm2610, %vm2610
        %vm2675 = vmpackc.low %vm2611, %vm2611
        %vm2676 = vmpackc.low %vm2612, %vm2612
        %v2677 = vsel %vm2669, 65537, 0
        %v2678 = vsel %vm2670, 65537, 0
        %v2679 = vsel %vm2671, 65537, 0
        %v2680 = vsel %vm2672, 65537, 0
        %v2681 = vsel %vm2673, 65537, 0
        %v2682 = vsel %vm2674, 65537, 0
        %v2683 = vsel %vm2675, 65537, 0
        %v2684 = vsel %vm2676, 65537, 0
        %v2685 = vunpack.c.l.b16 %v2677
        %v2686 = vunpack.c.l.b16 %v2678
        %v2687 = vunpack.c.l.b16 %v2679
        %v2688 = vunpack.c.l.b16 %v2680
        %v2689 = vunpack.c.l.b16 %v2681
        %v2690 = vunpack.c.l.b16 %v2682
        %v2691 = vunpack.c.l.b16 %v2683
        %v2692 = vunpack.c.l.b16 %v2684
        %v2693 = vpack.c.b16 %v2686, %v2685
        %v2694 = vpack.c.b16 %v2688, %v2687
        %v2695 = vpack.c.b16 %v2690, %v2689
        %v2696 = vpack.c.b16 %v2692, %v2691
        %vm2697 = vcmp.ne.s16.totalorder %v2693, 0
        %vm2698 = vcmp.ne.s16.totalorder %v2694, 0
        %vm2699 = vcmp.ne.s16.totalorder %v2695, 0
        %vm2700 = vcmp.ne.s16.totalorder %v2696, 0
        %v2765 = vunpack.c.l.b16 %v2533
        %v2766 = vunpack.c.l.b16 %v2534
        %v2767 = vunpack.c.l.b16 %v2535
        %v2768 = vunpack.c.l.b16 %v2536
        %v2769 = vunpack.c.l.b16 %v2537
        %v2770 = vunpack.c.l.b16 %v2538
        %v2771 = vunpack.c.l.b16 %v2539
        %v2772 = vunpack.c.l.b16 %v2540
        %v2773 = vunpack.c.l.b16 %v2541
        %v2774 = vunpack.c.l.b16 %v2542
        %v2775 = vunpack.c.l.b16 %v2543
        %v2776 = vunpack.c.l.b16 %v2544
        %v2777 = vunpack.c.l.b16 %v2545
        %v2778 = vunpack.c.l.b16 %v2546
        %v2779 = vunpack.c.l.b16 %v2547
        %v2780 = vunpack.c.l.b16 %v2548
        %v2781 = vunpack.c.l.b16 %v2549
        %v2782 = vunpack.c.l.b16 %v2550
        %v2783 = vunpack.c.l.b16 %v2551
        %v2784 = vunpack.c.l.b16 %v2552
        %v2785 = vunpack.c.l.b16 %v2553
        %v2786 = vunpack.c.l.b16 %v2554
        %v2787 = vunpack.c.l.b16 %v2555
        %v2788 = vunpack.c.l.b16 %v2556
        %v2789 = vunpack.c.l.b16 %v2557
        %v2790 = vunpack.c.l.b16 %v2558
        %v2791 = vunpack.c.l.b16 %v2559
        %v2792 = vunpack.c.l.b16 %v2560
        %v2793 = vunpack.c.l.b16 %v2561
        %v2794 = vunpack.c.l.b16 %v2562
        %v2795 = vunpack.c.l.b16 %v2563
        %v2796 = vunpack.c.l.b16 %v2564
        %v2797 = vunpack.c.l.b16 %v2565
        %v2798 = vunpack.c.l.b16 %v2566
        %v2799 = vunpack.c.l.b16 %v2567
        %v2800 = vunpack.c.l.b16 %v2568
        %v2801 = vunpack.c.l.b16 %v2569
        %v2802 = vunpack.c.l.b16 %v2570
        %v2803 = vunpack.c.l.b16 %v2571
        %v2804 = vunpack.c.l.b16 %v2572
        %v2805 = vunpack.c.l.b16 %v2573
        %v2806 = vunpack.c.l.b16 %v2574
        %v2807 = vunpack.c.l.b16 %v2575
        %v2808 = vunpack.c.l.b16 %v2576
        %v2809 = vunpack.c.l.b16 %v2577
        %v2810 = vunpack.c.l.b16 %v2578
        %v2811 = vunpack.c.l.b16 %v2579
        %v2812 = vunpack.c.l.b16 %v2580
        %v2813 = vunpack.c.l.b16 %v2581
        %v2814 = vunpack.c.l.b16 %v2582
        %v2815 = vunpack.c.l.b16 %v2583
        %v2816 = vunpack.c.l.b16 %v2584
        %v2817 = vunpack.c.l.b16 %v2585
        %v2818 = vunpack.c.l.b16 %v2586
        %v2819 = vunpack.c.l.b16 %v2587
        %v2820 = vunpack.c.l.b16 %v2588
        %v2821 = vunpack.c.l.b16 %v2589
        %v2822 = vunpack.c.l.b16 %v2590
        %v2823 = vunpack.c.l.b16 %v2591
        %v2824 = vunpack.c.l.b16 %v2592
        %v2825 = vunpack.c.l.b16 %v2593
        %v2826 = vunpack.c.l.b16 %v2594
        %v2827 = vunpack.c.l.b16 %v2595
        %v2828 = vunpack.c.l.b16 %v2596
        %v2829 = vpack.c.b16 %v2766, %v2765
        %v2830 = vpack.c.b16 %v2768, %v2767
        %v2831 = vpack.c.b16 %v2770, %v2769
        %v2832 = vpack.c.b16 %v2772, %v2771
        %v2833 = vpack.c.b16 %v2774, %v2773
        %v2834 = vpack.c.b16 %v2776, %v2775
        %v2835 = vpack.c.b16 %v2778, %v2777
        %v2836 = vpack.c.b16 %v2780, %v2779
        %v2837 = vpack.c.b16 %v2782, %v2781
        %v2838 = vpack.c.b16 %v2784, %v2783
        %v2839 = vpack.c.b16 %v2786, %v2785
        %v2840 = vpack.c.b16 %v2788, %v2787
        %v2841 = vpack.c.b16 %v2790, %v2789
        %v2842 = vpack.c.b16 %v2792, %v2791
        %v2843 = vpack.c.b16 %v2794, %v2793
        %v2844 = vpack.c.b16 %v2796, %v2795
        %v2845 = vpack.c.b16 %v2798, %v2797
        %v2846 = vpack.c.b16 %v2800, %v2799
        %v2847 = vpack.c.b16 %v2802, %v2801
        %v2848 = vpack.c.b16 %v2804, %v2803
        %v2849 = vpack.c.b16 %v2806, %v2805
        %v2850 = vpack.c.b16 %v2808, %v2807
        %v2851 = vpack.c.b16 %v2810, %v2809
        %v2852 = vpack.c.b16 %v2812, %v2811
        %v2853 = vpack.c.b16 %v2814, %v2813
        %v2854 = vpack.c.b16 %v2816, %v2815
        %v2855 = vpack.c.b16 %v2818, %v2817
        %v2856 = vpack.c.b16 %v2820, %v2819
        %v2857 = vpack.c.b16 %v2822, %v2821
        %v2858 = vpack.c.b16 %v2824, %v2823
        %v2859 = vpack.c.b16 %v2826, %v2825
        %v2860 = vpack.c.b16 %v2828, %v2827
        %v2893 = vsel %vm2697, %v2619, %v2829
        %v2894 = vsel %vm2698, %v2619, %v2830
        %v2895 = vsel %vm2699, %v2619, %v2831
        %v2896 = vsel %vm2700, %v2619, %v2832
        %v2897 = vsel %vm2697, %v2626, %v2833
        %v2898 = vsel %vm2698, %v2626, %v2834
        %v2899 = vsel %vm2699, %v2626, %v2835
        %v2900 = vsel %vm2700, %v2626, %v2836
        %v2901 = vsel %vm2697, %v2633, %v2837
        %v2902 = vsel %vm2698, %v2633, %v2838
        %v2903 = vsel %vm2699, %v2633, %v2839
        %v2904 = vsel %vm2700, %v2633, %v2840
        %v2905 = vsel %vm2697, %v2640, %v2841
        %v2906 = vsel %vm2698, %v2640, %v2842
        %v2907 = vsel %vm2699, %v2640, %v2843
        %v2908 = vsel %vm2700, %v2640, %v2844
        %v2909 = vsel %vm2697, %v2647, %v2845
        %v2910 = vsel %vm2698, %v2647, %v2846
        %v2911 = vsel %vm2699, %v2647, %v2847
        %v2912 = vsel %vm2700, %v2647, %v2848
        %v2913 = vsel %vm2697, %v2654, %v2849
        %v2914 = vsel %vm2698, %v2654, %v2850
        %v2915 = vsel %vm2699, %v2654, %v2851
        %v2916 = vsel %vm2700, %v2654, %v2852
        %v2917 = vsel %vm2697, %v2661, %v2853
        %v2918 = vsel %vm2698, %v2661, %v2854
        %v2919 = vsel %vm2699, %v2661, %v2855
        %v2920 = vsel %vm2700, %v2661, %v2856
        %v2921 = vsel %vm2697, %v2668, %v2857
        %v2922 = vsel %vm2698, %v2668, %v2858
        %v2923 = vsel %vm2699, %v2668, %v2859
        %v2924 = vsel %vm2700, %v2668, %v2860
        %v2926 = vcombine.high %v2335, %v2335
        %v2928 = vunpack.c.l.s4 1966171168
        %v2929 = vunpack.c.0.s8 %v2928
        %v2930 = vlaneseq
        %v2931 = vshrl.u32 %v2930, 7
        %v2932 = vsub.s32 %v2929, %v2931
        %v2933 = vrot.slane %v2335, %v2932
        %v2935 = vunpack.c.l.s4 1966171168
        %v2936 = vunpack.c.0.s8 %v2935
        %v2937 = vlaneseq
        %v2938 = vshrl.u32 %v2937, 7
        %v2939 = vsub.s32 %v2936, %v2938
        %v2940 = vrot.slane %v2926, %v2939
        %v2941 = vcombine.high %v2933, %v2933
        %v2942 = vcombine.high %v2940, %v2940
        %v2944 = vunpack.c.l.s4 1966171168
        %v2945 = vunpack.c.0.s8 %v2944
        %v2946 = vlaneseq
        %v2947 = vshrl.u32 %v2946, 7
        %v2948 = vsub.s32 %v2945, %v2947
        %v2949 = vrot.slane %v2933, %v2948
        %v2951 = vunpack.c.l.s4 1966171168
        %v2952 = vunpack.c.0.s8 %v2951
        %v2953 = vlaneseq
        %v2954 = vshrl.u32 %v2953, 7
        %v2955 = vsub.s32 %v2952, %v2954
        %v2956 = vrot.slane %v2940, %v2955
        %v2958 = vunpack.c.l.s4 1966171168
        %v2959 = vunpack.c.0.s8 %v2958
        %v2960 = vlaneseq
        %v2961 = vshrl.u32 %v2960, 7
        %v2962 = vsub.s32 %v2959, %v2961
        %v2963 = vrot.slane %v2941, %v2962
        %v2965 = vunpack.c.l.s4 1966171168
        %v2966 = vunpack.c.0.s8 %v2965
        %v2967 = vlaneseq
        %v2968 = vshrl.u32 %v2967, 7
        %v2969 = vsub.s32 %v2966, %v2968
        %v2970 = vrot.slane %v2942, %v2969
        %v2971 = vcombine.high %v2949, %v2949
        %v2972 = vcombine.high %v2956, %v2956
        %v2973 = vcombine.high %v2963, %v2963
        %v2974 = vcombine.high %v2970, %v2970
        %v2983 = vpack.c.bf16 %v2949, %v2949
        %v2984 = vpack.c.bf16 %v2963, %v2963
        %v2985 = vpack.c.bf16 %v2971, %v2971
        %v2986 = vpack.c.bf16 %v2973, %v2973
        %v2987 = vpack.c.bf16 %v2956, %v2956
        %v2988 = vpack.c.bf16 %v2970, %v2970
        %v2989 = vpack.c.bf16 %v2972, %v2972
        %v2990 = vpack.c.bf16 %v2974, %v2974
        %v2991 = vld [vmem:[%s396] sm:$0xf]
        %v2992 = vld [vmem:[%s396 + $0x4] sm:$0xf]
        %v2993 = vld [vmem:[%s396 + $0x8] sm:$0xf]
        %v2994 = vld [vmem:[%s396 + $0xc] sm:$0xf]
        %v2995 = vld [vmem:[%s396 + $0x10] sm:$0xf]
        %v2996 = vld [vmem:[%s396 + $0x14] sm:$0xf]
        %v2997 = vld [vmem:[%s396 + $0x18] sm:$0xf]
        %v2998 = vld [vmem:[%s396 + $0x1c] sm:$0xf]
        %v2999 = vld [vmem:[%s396 + $0x40] sm:$0xf]
        %v3000 = vld [vmem:[%s396 + $0x44] sm:$0xf]
        %v3001 = vld [vmem:[%s396 + $0x48] sm:$0xf]
        %v3002 = vld [vmem:[%s396 + $0x4c] sm:$0xf]
        %v3003 = vld [vmem:[%s396 + $0x50] sm:$0xf]
        %v3004 = vld [vmem:[%s396 + $0x54] sm:$0xf]
        %v3005 = vld [vmem:[%s396 + $0x58] sm:$0xf]
        %v3006 = vld [vmem:[%s396 + $0x5c] sm:$0xf]
        %v3007 = vld [vmem:[%s396 + $0x80] sm:$0xf]
        %v3008 = vld [vmem:[%s396 + $0x84] sm:$0xf]
        %v3009 = vld [vmem:[%s396 + $0x88] sm:$0xf]
        %v3010 = vld [vmem:[%s396 + $0x8c] sm:$0xf]
        %v3011 = vld [vmem:[%s396 + $0x90] sm:$0xf]
        %v3012 = vld [vmem:[%s396 + $0x94] sm:$0xf]
        %v3013 = vld [vmem:[%s396 + $0x98] sm:$0xf]
        %v3014 = vld [vmem:[%s396 + $0x9c] sm:$0xf]
        %v3015 = vld [vmem:[%s396 + $0xc0] sm:$0xf]
        %v3016 = vld [vmem:[%s396 + $0xc4] sm:$0xf]
        %v3017 = vld [vmem:[%s396 + $0xc8] sm:$0xf]
        %v3018 = vld [vmem:[%s396 + $0xcc] sm:$0xf]
        %v3019 = vld [vmem:[%s396 + $0xd0] sm:$0xf]
        %v3020 = vld [vmem:[%s396 + $0xd4] sm:$0xf]
        %v3021 = vld [vmem:[%s396 + $0xd8] sm:$0xf]
        %v3022 = vld [vmem:[%s396 + $0xdc] sm:$0xf]
        %v3023 = vld [vmem:[%s396 + $0x100] sm:$0xf]
        %v3024 = vld [vmem:[%s396 + $0x104] sm:$0xf]
        %v3025 = vld [vmem:[%s396 + $0x108] sm:$0xf]
        %v3026 = vld [vmem:[%s396 + $0x10c] sm:$0xf]
        %v3027 = vld [vmem:[%s396 + $0x110] sm:$0xf]
        %v3028 = vld [vmem:[%s396 + $0x114] sm:$0xf]
        %v3029 = vld [vmem:[%s396 + $0x118] sm:$0xf]
        %v3030 = vld [vmem:[%s396 + $0x11c] sm:$0xf]
        %v3031 = vld [vmem:[%s396 + $0x140] sm:$0xf]
        %v3032 = vld [vmem:[%s396 + $0x144] sm:$0xf]
        %v3033 = vld [vmem:[%s396 + $0x148] sm:$0xf]
        %v3034 = vld [vmem:[%s396 + $0x14c] sm:$0xf]
        %v3035 = vld [vmem:[%s396 + $0x150] sm:$0xf]
        %v3036 = vld [vmem:[%s396 + $0x154] sm:$0xf]
        %v3037 = vld [vmem:[%s396 + $0x158] sm:$0xf]
        %v3038 = vld [vmem:[%s396 + $0x15c] sm:$0xf]
        %v3039 = vld [vmem:[%s396 + $0x180] sm:$0xf]
        %v3040 = vld [vmem:[%s396 + $0x184] sm:$0xf]
        %v3041 = vld [vmem:[%s396 + $0x188] sm:$0xf]
        %v3042 = vld [vmem:[%s396 + $0x18c] sm:$0xf]
        %v3043 = vld [vmem:[%s396 + $0x190] sm:$0xf]
        %v3044 = vld [vmem:[%s396 + $0x194] sm:$0xf]
        %v3045 = vld [vmem:[%s396 + $0x198] sm:$0xf]
        %v3046 = vld [vmem:[%s396 + $0x19c] sm:$0xf]
        %v3047 = vld [vmem:[%s396 + $0x1c0] sm:$0xf]
        %v3048 = vld [vmem:[%s396 + $0x1c4] sm:$0xf]
        %v3049 = vld [vmem:[%s396 + $0x1c8] sm:$0xf]
        %v3050 = vld [vmem:[%s396 + $0x1cc] sm:$0xf]
        %v3051 = vld [vmem:[%s396 + $0x1d0] sm:$0xf]
        %v3052 = vld [vmem:[%s396 + $0x1d4] sm:$0xf]
        %v3053 = vld [vmem:[%s396 + $0x1d8] sm:$0xf]
        %v3054 = vld [vmem:[%s396 + $0x1dc] sm:$0xf]
        %v3056 = vpack.i.b16 %v2983, %v2983
        %v3058 = vlaneseq
        %v3059 = vshrl.u32 %v3058, 7
        %v3060 = vsub.s32 0, %v3059
        %v3061 = vrot.slane %v3056, %v3060
        %v3063 = vpack.i.b16 %v2984, %v2984
        %v3065 = vlaneseq
        %v3066 = vshrl.u32 %v3065, 7
        %v3067 = vsub.s32 0, %v3066
        %v3068 = vrot.slane %v3063, %v3067
        %v3070 = vpack.i.b16 %v2985, %v2985
        %v3072 = vlaneseq
        %v3073 = vshrl.u32 %v3072, 7
        %v3074 = vsub.s32 0, %v3073
        %v3075 = vrot.slane %v3070, %v3074
        %v3077 = vpack.i.b16 %v2986, %v2986
        %v3079 = vlaneseq
        %v3080 = vshrl.u32 %v3079, 7
        %v3081 = vsub.s32 0, %v3080
        %v3082 = vrot.slane %v3077, %v3081
        %v3084 = vpack.i.b16 %v2987, %v2987
        %v3086 = vlaneseq
        %v3087 = vshrl.u32 %v3086, 7
        %v3088 = vsub.s32 0, %v3087
        %v3089 = vrot.slane %v3084, %v3088
        %v3091 = vpack.i.b16 %v2988, %v2988
        %v3093 = vlaneseq
        %v3094 = vshrl.u32 %v3093, 7
        %v3095 = vsub.s32 0, %v3094
        %v3096 = vrot.slane %v3091, %v3095
        %v3098 = vpack.i.b16 %v2989, %v2989
        %v3100 = vlaneseq
        %v3101 = vshrl.u32 %v3100, 7
        %v3102 = vsub.s32 0, %v3101
        %v3103 = vrot.slane %v3098, %v3102
        %v3105 = vpack.i.b16 %v2990, %v2990
        %v3107 = vlaneseq
        %v3108 = vshrl.u32 %v3107, 7
        %v3109 = vsub.s32 0, %v3108
        %v3110 = vrot.slane %v3105, %v3109
        %v3175 = vunpack.c.l.b16 %v2991
        %v3176 = vunpack.c.l.b16 %v2992
        %v3177 = vunpack.c.l.b16 %v2993
        %v3178 = vunpack.c.l.b16 %v2994
        %v3179 = vunpack.c.l.b16 %v2995
        %v3180 = vunpack.c.l.b16 %v2996
        %v3181 = vunpack.c.l.b16 %v2997
        %v3182 = vunpack.c.l.b16 %v2998
        %v3183 = vunpack.c.l.b16 %v2999
        %v3184 = vunpack.c.l.b16 %v3000
        %v3185 = vunpack.c.l.b16 %v3001
        %v3186 = vunpack.c.l.b16 %v3002
        %v3187 = vunpack.c.l.b16 %v3003
        %v3188 = vunpack.c.l.b16 %v3004
        %v3189 = vunpack.c.l.b16 %v3005
        %v3190 = vunpack.c.l.b16 %v3006
        %v3191 = vunpack.c.l.b16 %v3007
        %v3192 = vunpack.c.l.b16 %v3008
        %v3193 = vunpack.c.l.b16 %v3009
        %v3194 = vunpack.c.l.b16 %v3010
        %v3195 = vunpack.c.l.b16 %v3011
        %v3196 = vunpack.c.l.b16 %v3012
        %v3197 = vunpack.c.l.b16 %v3013
        %v3198 = vunpack.c.l.b16 %v3014
        %v3199 = vunpack.c.l.b16 %v3015
        %v3200 = vunpack.c.l.b16 %v3016
        %v3201 = vunpack.c.l.b16 %v3017
        %v3202 = vunpack.c.l.b16 %v3018
        %v3203 = vunpack.c.l.b16 %v3019
        %v3204 = vunpack.c.l.b16 %v3020
        %v3205 = vunpack.c.l.b16 %v3021
        %v3206 = vunpack.c.l.b16 %v3022
        %v3207 = vunpack.c.l.b16 %v3023
        %v3208 = vunpack.c.l.b16 %v3024
        %v3209 = vunpack.c.l.b16 %v3025
        %v3210 = vunpack.c.l.b16 %v3026
        %v3211 = vunpack.c.l.b16 %v3027
        %v3212 = vunpack.c.l.b16 %v3028
        %v3213 = vunpack.c.l.b16 %v3029
        %v3214 = vunpack.c.l.b16 %v3030
        %v3215 = vunpack.c.l.b16 %v3031
        %v3216 = vunpack.c.l.b16 %v3032
        %v3217 = vunpack.c.l.b16 %v3033
        %v3218 = vunpack.c.l.b16 %v3034
        %v3219 = vunpack.c.l.b16 %v3035
        %v3220 = vunpack.c.l.b16 %v3036
        %v3221 = vunpack.c.l.b16 %v3037
        %v3222 = vunpack.c.l.b16 %v3038
        %v3223 = vunpack.c.l.b16 %v3039
        %v3224 = vunpack.c.l.b16 %v3040
        %v3225 = vunpack.c.l.b16 %v3041
        %v3226 = vunpack.c.l.b16 %v3042
        %v3227 = vunpack.c.l.b16 %v3043
        %v3228 = vunpack.c.l.b16 %v3044
        %v3229 = vunpack.c.l.b16 %v3045
        %v3230 = vunpack.c.l.b16 %v3046
        %v3231 = vunpack.c.l.b16 %v3047
        %v3232 = vunpack.c.l.b16 %v3048
        %v3233 = vunpack.c.l.b16 %v3049
        %v3234 = vunpack.c.l.b16 %v3050
        %v3235 = vunpack.c.l.b16 %v3051
        %v3236 = vunpack.c.l.b16 %v3052
        %v3237 = vunpack.c.l.b16 %v3053
        %v3238 = vunpack.c.l.b16 %v3054
        %v3239 = vpack.c.b16 %v3176, %v3175
        %v3240 = vpack.c.b16 %v3178, %v3177
        %v3241 = vpack.c.b16 %v3180, %v3179
        %v3242 = vpack.c.b16 %v3182, %v3181
        %v3243 = vpack.c.b16 %v3184, %v3183
        %v3244 = vpack.c.b16 %v3186, %v3185
        %v3245 = vpack.c.b16 %v3188, %v3187
        %v3246 = vpack.c.b16 %v3190, %v3189
        %v3247 = vpack.c.b16 %v3192, %v3191
        %v3248 = vpack.c.b16 %v3194, %v3193
        %v3249 = vpack.c.b16 %v3196, %v3195
        %v3250 = vpack.c.b16 %v3198, %v3197
        %v3251 = vpack.c.b16 %v3200, %v3199
        %v3252 = vpack.c.b16 %v3202, %v3201
        %v3253 = vpack.c.b16 %v3204, %v3203
        %v3254 = vpack.c.b16 %v3206, %v3205
        %v3255 = vpack.c.b16 %v3208, %v3207
        %v3256 = vpack.c.b16 %v3210, %v3209
        %v3257 = vpack.c.b16 %v3212, %v3211
        %v3258 = vpack.c.b16 %v3214, %v3213
        %v3259 = vpack.c.b16 %v3216, %v3215
        %v3260 = vpack.c.b16 %v3218, %v3217
        %v3261 = vpack.c.b16 %v3220, %v3219
        %v3262 = vpack.c.b16 %v3222, %v3221
        %v3263 = vpack.c.b16 %v3224, %v3223
        %v3264 = vpack.c.b16 %v3226, %v3225
        %v3265 = vpack.c.b16 %v3228, %v3227
        %v3266 = vpack.c.b16 %v3230, %v3229
        %v3267 = vpack.c.b16 %v3232, %v3231
        %v3268 = vpack.c.b16 %v3234, %v3233
        %v3269 = vpack.c.b16 %v3236, %v3235
        %v3270 = vpack.c.b16 %v3238, %v3237
        %v3303 = vsel %vm2697, %v3061, %v3239
        %v3304 = vsel %vm2698, %v3061, %v3240
        %v3305 = vsel %vm2699, %v3061, %v3241
        %v3306 = vsel %vm2700, %v3061, %v3242
        %v3307 = vsel %vm2697, %v3068, %v3243
        %v3308 = vsel %vm2698, %v3068, %v3244
        %v3309 = vsel %vm2699, %v3068, %v3245
        %v3310 = vsel %vm2700, %v3068, %v3246
        %v3311 = vsel %vm2697, %v3075, %v3247
        %v3312 = vsel %vm2698, %v3075, %v3248
        %v3313 = vsel %vm2699, %v3075, %v3249
        %v3314 = vsel %vm2700, %v3075, %v3250
        %v3315 = vsel %vm2697, %v3082, %v3251
        %v3316 = vsel %vm2698, %v3082, %v3252
        %v3317 = vsel %vm2699, %v3082, %v3253
        %v3318 = vsel %vm2700, %v3082, %v3254
        %v3319 = vsel %vm2697, %v3089, %v3255
        %v3320 = vsel %vm2698, %v3089, %v3256
        %v3321 = vsel %vm2699, %v3089, %v3257
        %v3322 = vsel %vm2700, %v3089, %v3258
        %v3323 = vsel %vm2697, %v3096, %v3259
        %v3324 = vsel %vm2698, %v3096, %v3260
        %v3325 = vsel %vm2699, %v3096, %v3261
        %v3326 = vsel %vm2700, %v3096, %v3262
        %v3327 = vsel %vm2697, %v3103, %v3263
        %v3328 = vsel %vm2698, %v3103, %v3264
        %v3329 = vsel %vm2699, %v3103, %v3265
        %v3330 = vsel %vm2700, %v3103, %v3266
        %v3331 = vsel %vm2697, %v3110, %v3267
        %v3332 = vsel %vm2698, %v3110, %v3268
        %v3333 = vsel %vm2699, %v3110, %v3269
        %v3334 = vsel %vm2700, %v3110, %v3270
        %v3367 = vunpack.c.l.b16 %v2893
        %v3368 = vunpack.c.h.b16 %v2893
        %v3369 = vunpack.c.l.b16 %v2894
        %v3370 = vunpack.c.h.b16 %v2894
        %v3371 = vunpack.c.l.b16 %v2895
        %v3372 = vunpack.c.h.b16 %v2895
        %v3373 = vunpack.c.l.b16 %v2896
        %v3374 = vunpack.c.h.b16 %v2896
        %v3375 = vunpack.c.l.b16 %v2897
        %v3376 = vunpack.c.h.b16 %v2897
        %v3377 = vunpack.c.l.b16 %v2898
        %v3378 = vunpack.c.h.b16 %v2898
        %v3379 = vunpack.c.l.b16 %v2899
        %v3380 = vunpack.c.h.b16 %v2899
        %v3381 = vunpack.c.l.b16 %v2900
        %v3382 = vunpack.c.h.b16 %v2900
        %v3383 = vunpack.c.l.b16 %v2901
        %v3384 = vunpack.c.h.b16 %v2901
        %v3385 = vunpack.c.l.b16 %v2902
        %v3386 = vunpack.c.h.b16 %v2902
        %v3387 = vunpack.c.l.b16 %v2903
        %v3388 = vunpack.c.h.b16 %v2903
        %v3389 = vunpack.c.l.b16 %v2904
        %v3390 = vunpack.c.h.b16 %v2904
        %v3391 = vunpack.c.l.b16 %v2905
        %v3392 = vunpack.c.h.b16 %v2905
        %v3393 = vunpack.c.l.b16 %v2906
        %v3394 = vunpack.c.h.b16 %v2906
        %v3395 = vunpack.c.l.b16 %v2907
        %v3396 = vunpack.c.h.b16 %v2907
        %v3397 = vunpack.c.l.b16 %v2908
        %v3398 = vunpack.c.h.b16 %v2908
        %v3399 = vunpack.c.l.b16 %v2909
        %v3400 = vunpack.c.h.b16 %v2909
        %v3401 = vunpack.c.l.b16 %v2910
        %v3402 = vunpack.c.h.b16 %v2910
        %v3403 = vunpack.c.l.b16 %v2911
        %v3404 = vunpack.c.h.b16 %v2911
        %v3405 = vunpack.c.l.b16 %v2912
        %v3406 = vunpack.c.h.b16 %v2912
        %v3407 = vunpack.c.l.b16 %v2913
        %v3408 = vunpack.c.h.b16 %v2913
        %v3409 = vunpack.c.l.b16 %v2914
        %v3410 = vunpack.c.h.b16 %v2914
        %v3411 = vunpack.c.l.b16 %v2915
        %v3412 = vunpack.c.h.b16 %v2915
        %v3413 = vunpack.c.l.b16 %v2916
        %v3414 = vunpack.c.h.b16 %v2916
        %v3415 = vunpack.c.l.b16 %v2917
        %v3416 = vunpack.c.h.b16 %v2917
        %v3417 = vunpack.c.l.b16 %v2918
        %v3418 = vunpack.c.h.b16 %v2918
        %v3419 = vunpack.c.l.b16 %v2919
        %v3420 = vunpack.c.h.b16 %v2919
        %v3421 = vunpack.c.l.b16 %v2920
        %v3422 = vunpack.c.h.b16 %v2920
        %v3423 = vunpack.c.l.b16 %v2921
        %v3424 = vunpack.c.h.b16 %v2921
        %v3425 = vunpack.c.l.b16 %v2922
        %v3426 = vunpack.c.h.b16 %v2922
        %v3427 = vunpack.c.l.b16 %v2923
        %v3428 = vunpack.c.h.b16 %v2923
        %v3429 = vunpack.c.l.b16 %v2924
        %v3430 = vunpack.c.h.b16 %v2924
        %v3431 = vpack.c.b16 %v3367, %v3367
        %v3432 = vpack.c.b16 %v3368, %v3368
        %v3433 = vpack.c.b16 %v3369, %v3369
        %v3434 = vpack.c.b16 %v3370, %v3370
        %v3435 = vpack.c.b16 %v3371, %v3371
        %v3436 = vpack.c.b16 %v3372, %v3372
        %v3437 = vpack.c.b16 %v3373, %v3373
        %v3438 = vpack.c.b16 %v3374, %v3374
        %v3439 = vpack.c.b16 %v3375, %v3375
        %v3440 = vpack.c.b16 %v3376, %v3376
        %v3441 = vpack.c.b16 %v3377, %v3377
        %v3442 = vpack.c.b16 %v3378, %v3378
        %v3443 = vpack.c.b16 %v3379, %v3379
        %v3444 = vpack.c.b16 %v3380, %v3380
        %v3445 = vpack.c.b16 %v3381, %v3381
        %v3446 = vpack.c.b16 %v3382, %v3382
        %v3447 = vpack.c.b16 %v3383, %v3383
        %v3448 = vpack.c.b16 %v3384, %v3384
        %v3449 = vpack.c.b16 %v3385, %v3385
        %v3450 = vpack.c.b16 %v3386, %v3386
        %v3451 = vpack.c.b16 %v3387, %v3387
        %v3452 = vpack.c.b16 %v3388, %v3388
        %v3453 = vpack.c.b16 %v3389, %v3389
        %v3454 = vpack.c.b16 %v3390, %v3390
        %v3455 = vpack.c.b16 %v3391, %v3391
        %v3456 = vpack.c.b16 %v3392, %v3392
        %v3457 = vpack.c.b16 %v3393, %v3393
        %v3458 = vpack.c.b16 %v3394, %v3394
        %v3459 = vpack.c.b16 %v3395, %v3395
        %v3460 = vpack.c.b16 %v3396, %v3396
        %v3461 = vpack.c.b16 %v3397, %v3397
        %v3462 = vpack.c.b16 %v3398, %v3398
        %v3463 = vpack.c.b16 %v3399, %v3399
        %v3464 = vpack.c.b16 %v3400, %v3400
        %v3465 = vpack.c.b16 %v3401, %v3401
        %v3466 = vpack.c.b16 %v3402, %v3402
        %v3467 = vpack.c.b16 %v3403, %v3403
        %v3468 = vpack.c.b16 %v3404, %v3404
        %v3469 = vpack.c.b16 %v3405, %v3405
        %v3470 = vpack.c.b16 %v3406, %v3406
        %v3471 = vpack.c.b16 %v3407, %v3407
        %v3472 = vpack.c.b16 %v3408, %v3408
        %v3473 = vpack.c.b16 %v3409, %v3409
        %v3474 = vpack.c.b16 %v3410, %v3410
        %v3475 = vpack.c.b16 %v3411, %v3411
        %v3476 = vpack.c.b16 %v3412, %v3412
        %v3477 = vpack.c.b16 %v3413, %v3413
        %v3478 = vpack.c.b16 %v3414, %v3414
        %v3479 = vpack.c.b16 %v3415, %v3415
        %v3480 = vpack.c.b16 %v3416, %v3416
        %v3481 = vpack.c.b16 %v3417, %v3417
        %v3482 = vpack.c.b16 %v3418, %v3418
        %v3483 = vpack.c.b16 %v3419, %v3419
        %v3484 = vpack.c.b16 %v3420, %v3420
        %v3485 = vpack.c.b16 %v3421, %v3421
        %v3486 = vpack.c.b16 %v3422, %v3422
        %v3487 = vpack.c.b16 %v3423, %v3423
        %v3488 = vpack.c.b16 %v3424, %v3424
        %v3489 = vpack.c.b16 %v3425, %v3425
        %v3490 = vpack.c.b16 %v3426, %v3426
        %v3491 = vpack.c.b16 %v3427, %v3427
        %v3492 = vpack.c.b16 %v3428, %v3428
        %v3493 = vpack.c.b16 %v3429, %v3429
        %v3494 = vpack.c.b16 %v3430, %v3430
        %3559 = vst [vmem:[%s441] sm:$0xf] %v3431
        %3560 = vst [vmem:[%s441 + $0x4] sm:$0xf] %v3432
        %3561 = vst [vmem:[%s441 + $0x8] sm:$0xf] %v3433
        %3562 = vst [vmem:[%s441 + $0xc] sm:$0xf] %v3434
        %3563 = vst [vmem:[%s441 + $0x10] sm:$0xf] %v3435
        %3564 = vst [vmem:[%s441 + $0x14] sm:$0xf] %v3436
        %3565 = vst [vmem:[%s441 + $0x18] sm:$0xf] %v3437
        %3566 = vst [vmem:[%s441 + $0x1c] sm:$0xf] %v3438
        %3567 = vst [vmem:[%s441 + $0x40] sm:$0xf] %v3439
        %3568 = vst [vmem:[%s441 + $0x44] sm:$0xf] %v3440
        %3569 = vst [vmem:[%s441 + $0x48] sm:$0xf] %v3441
        %3570 = vst [vmem:[%s441 + $0x4c] sm:$0xf] %v3442
        %3571 = vst [vmem:[%s441 + $0x50] sm:$0xf] %v3443
        %3572 = vst [vmem:[%s441 + $0x54] sm:$0xf] %v3444
        %3573 = vst [vmem:[%s441 + $0x58] sm:$0xf] %v3445
        %3574 = vst [vmem:[%s441 + $0x5c] sm:$0xf] %v3446
        %3575 = vst [vmem:[%s441 + $0x80] sm:$0xf] %v3447
        %3576 = vst [vmem:[%s441 + $0x84] sm:$0xf] %v3448
        %3577 = vst [vmem:[%s441 + $0x88] sm:$0xf] %v3449
        %3578 = vst [vmem:[%s441 + $0x8c] sm:$0xf] %v3450
        %3579 = vst [vmem:[%s441 + $0x90] sm:$0xf] %v3451
        %3580 = vst [vmem:[%s441 + $0x94] sm:$0xf] %v3452
        %3581 = vst [vmem:[%s441 + $0x98] sm:$0xf] %v3453
        %3582 = vst [vmem:[%s441 + $0x9c] sm:$0xf] %v3454
        %3583 = vst [vmem:[%s441 + $0xc0] sm:$0xf] %v3455
        %3584 = vst [vmem:[%s441 + $0xc4] sm:$0xf] %v3456
        %3585 = vst [vmem:[%s441 + $0xc8] sm:$0xf] %v3457
        %3586 = vst [vmem:[%s441 + $0xcc] sm:$0xf] %v3458
        %3587 = vst [vmem:[%s441 + $0xd0] sm:$0xf] %v3459
        %3588 = vst [vmem:[%s441 + $0xd4] sm:$0xf] %v3460
        %3589 = vst [vmem:[%s441 + $0xd8] sm:$0xf] %v3461
        %3590 = vst [vmem:[%s441 + $0xdc] sm:$0xf] %v3462
        %3591 = vst [vmem:[%s441 + $0x100] sm:$0xf] %v3463
        %3592 = vst [vmem:[%s441 + $0x104] sm:$0xf] %v3464
        %3593 = vst [vmem:[%s441 + $0x108] sm:$0xf] %v3465
        %3594 = vst [vmem:[%s441 + $0x10c] sm:$0xf] %v3466
        %3595 = vst [vmem:[%s441 + $0x110] sm:$0xf] %v3467
        %3596 = vst [vmem:[%s441 + $0x114] sm:$0xf] %v3468
        %3597 = vst [vmem:[%s441 + $0x118] sm:$0xf] %v3469
        %3598 = vst [vmem:[%s441 + $0x11c] sm:$0xf] %v3470
        %3599 = vst [vmem:[%s441 + $0x140] sm:$0xf] %v3471
        %3600 = vst [vmem:[%s441 + $0x144] sm:$0xf] %v3472
        %3601 = vst [vmem:[%s441 + $0x148] sm:$0xf] %v3473
        %3602 = vst [vmem:[%s441 + $0x14c] sm:$0xf] %v3474
        %3603 = vst [vmem:[%s441 + $0x150] sm:$0xf] %v3475
        %3604 = vst [vmem:[%s441 + $0x154] sm:$0xf] %v3476
        %3605 = vst [vmem:[%s441 + $0x158] sm:$0xf] %v3477
        %3606 = vst [vmem:[%s441 + $0x15c] sm:$0xf] %v3478
        %3607 = vst [vmem:[%s441 + $0x180] sm:$0xf] %v3479
        %3608 = vst [vmem:[%s441 + $0x184] sm:$0xf] %v3480
        %3609 = vst [vmem:[%s441 + $0x188] sm:$0xf] %v3481
        %3610 = vst [vmem:[%s441 + $0x18c] sm:$0xf] %v3482
        %3611 = vst [vmem:[%s441 + $0x190] sm:$0xf] %v3483
        %3612 = vst [vmem:[%s441 + $0x194] sm:$0xf] %v3484
        %3613 = vst [vmem:[%s441 + $0x198] sm:$0xf] %v3485
        %3614 = vst [vmem:[%s441 + $0x19c] sm:$0xf] %v3486
        %3615 = vst [vmem:[%s441 + $0x1c0] sm:$0xf] %v3487
        %3616 = vst [vmem:[%s441 + $0x1c4] sm:$0xf] %v3488
        %3617 = vst [vmem:[%s441 + $0x1c8] sm:$0xf] %v3489
        %3618 = vst [vmem:[%s441 + $0x1cc] sm:$0xf] %v3490
        %3619 = vst [vmem:[%s441 + $0x1d0] sm:$0xf] %v3491
        %3620 = vst [vmem:[%s441 + $0x1d4] sm:$0xf] %v3492
        %3621 = vst [vmem:[%s441 + $0x1d8] sm:$0xf] %v3493
        %3622 = vst [vmem:[%s441 + $0x1dc] sm:$0xf] %v3494
        %v3655 = vunpack.c.l.b16 %v3303
        %v3656 = vunpack.c.h.b16 %v3303
        %v3657 = vunpack.c.l.b16 %v3304
        %v3658 = vunpack.c.h.b16 %v3304
        %v3659 = vunpack.c.l.b16 %v3305
        %v3660 = vunpack.c.h.b16 %v3305
        %v3661 = vunpack.c.l.b16 %v3306
        %v3662 = vunpack.c.h.b16 %v3306
        %v3663 = vunpack.c.l.b16 %v3307
        %v3664 = vunpack.c.h.b16 %v3307
        %v3665 = vunpack.c.l.b16 %v3308
        %v3666 = vunpack.c.h.b16 %v3308
        %v3667 = vunpack.c.l.b16 %v3309
        %v3668 = vunpack.c.h.b16 %v3309
        %v3669 = vunpack.c.l.b16 %v3310
        %v3670 = vunpack.c.h.b16 %v3310
        %v3671 = vunpack.c.l.b16 %v3311
        %v3672 = vunpack.c.h.b16 %v3311
        %v3673 = vunpack.c.l.b16 %v3312
        %v3674 = vunpack.c.h.b16 %v3312
        %v3675 = vunpack.c.l.b16 %v3313
        %v3676 = vunpack.c.h.b16 %v3313
        %v3677 = vunpack.c.l.b16 %v3314
        %v3678 = vunpack.c.h.b16 %v3314
        %v3679 = vunpack.c.l.b16 %v3315
        %v3680 = vunpack.c.h.b16 %v3315
        %v3681 = vunpack.c.l.b16 %v3316
        %v3682 = vunpack.c.h.b16 %v3316
        %v3683 = vunpack.c.l.b16 %v3317
        %v3684 = vunpack.c.h.b16 %v3317
        %v3685 = vunpack.c.l.b16 %v3318
        %v3686 = vunpack.c.h.b16 %v3318
        %v3687 = vunpack.c.l.b16 %v3319
        %v3688 = vunpack.c.h.b16 %v3319
        %v3689 = vunpack.c.l.b16 %v3320
        %v3690 = vunpack.c.h.b16 %v3320
        %v3691 = vunpack.c.l.b16 %v3321
        %v3692 = vunpack.c.h.b16 %v3321
        %v3693 = vunpack.c.l.b16 %v3322
        %v3694 = vunpack.c.h.b16 %v3322
        %v3695 = vunpack.c.l.b16 %v3323
        %v3696 = vunpack.c.h.b16 %v3323
        %v3697 = vunpack.c.l.b16 %v3324
        %v3698 = vunpack.c.h.b16 %v3324
        %v3699 = vunpack.c.l.b16 %v3325
        %v3700 = vunpack.c.h.b16 %v3325
        %v3701 = vunpack.c.l.b16 %v3326
        %v3702 = vunpack.c.h.b16 %v3326
        %v3703 = vunpack.c.l.b16 %v3327
        %v3704 = vunpack.c.h.b16 %v3327
        %v3705 = vunpack.c.l.b16 %v3328
        %v3706 = vunpack.c.h.b16 %v3328
        %v3707 = vunpack.c.l.b16 %v3329
        %v3708 = vunpack.c.h.b16 %v3329
        %v3709 = vunpack.c.l.b16 %v3330
        %v3710 = vunpack.c.h.b16 %v3330
        %v3711 = vunpack.c.l.b16 %v3331
        %v3712 = vunpack.c.h.b16 %v3331
        %v3713 = vunpack.c.l.b16 %v3332
        %v3714 = vunpack.c.h.b16 %v3332
        %v3715 = vunpack.c.l.b16 %v3333
        %v3716 = vunpack.c.h.b16 %v3333
        %v3717 = vunpack.c.l.b16 %v3334
        %v3718 = vunpack.c.h.b16 %v3334
        %v3719 = vpack.c.b16 %v3655, %v3655
        %v3720 = vpack.c.b16 %v3656, %v3656
        %v3721 = vpack.c.b16 %v3657, %v3657
        %v3722 = vpack.c.b16 %v3658, %v3658
        %v3723 = vpack.c.b16 %v3659, %v3659
        %v3724 = vpack.c.b16 %v3660, %v3660
        %v3725 = vpack.c.b16 %v3661, %v3661
        %v3726 = vpack.c.b16 %v3662, %v3662
        %v3727 = vpack.c.b16 %v3663, %v3663
        %v3728 = vpack.c.b16 %v3664, %v3664
        %v3729 = vpack.c.b16 %v3665, %v3665
        %v3730 = vpack.c.b16 %v3666, %v3666
        %v3731 = vpack.c.b16 %v3667, %v3667
        %v3732 = vpack.c.b16 %v3668, %v3668
        %v3733 = vpack.c.b16 %v3669, %v3669
        %v3734 = vpack.c.b16 %v3670, %v3670
        %v3735 = vpack.c.b16 %v3671, %v3671
        %v3736 = vpack.c.b16 %v3672, %v3672
        %v3737 = vpack.c.b16 %v3673, %v3673
        %v3738 = vpack.c.b16 %v3674, %v3674
        %v3739 = vpack.c.b16 %v3675, %v3675
        %v3740 = vpack.c.b16 %v3676, %v3676
        %v3741 = vpack.c.b16 %v3677, %v3677
        %v3742 = vpack.c.b16 %v3678, %v3678
        %v3743 = vpack.c.b16 %v3679, %v3679
        %v3744 = vpack.c.b16 %v3680, %v3680
        %v3745 = vpack.c.b16 %v3681, %v3681
        %v3746 = vpack.c.b16 %v3682, %v3682
        %v3747 = vpack.c.b16 %v3683, %v3683
        %v3748 = vpack.c.b16 %v3684, %v3684
        %v3749 = vpack.c.b16 %v3685, %v3685
        %v3750 = vpack.c.b16 %v3686, %v3686
        %v3751 = vpack.c.b16 %v3687, %v3687
        %v3752 = vpack.c.b16 %v3688, %v3688
        %v3753 = vpack.c.b16 %v3689, %v3689
        %v3754 = vpack.c.b16 %v3690, %v3690
        %v3755 = vpack.c.b16 %v3691, %v3691
        %v3756 = vpack.c.b16 %v3692, %v3692
        %v3757 = vpack.c.b16 %v3693, %v3693
        %v3758 = vpack.c.b16 %v3694, %v3694
        %v3759 = vpack.c.b16 %v3695, %v3695
        %v3760 = vpack.c.b16 %v3696, %v3696
        %v3761 = vpack.c.b16 %v3697, %v3697
        %v3762 = vpack.c.b16 %v3698, %v3698
        %v3763 = vpack.c.b16 %v3699, %v3699
        %v3764 = vpack.c.b16 %v3700, %v3700
        %v3765 = vpack.c.b16 %v3701, %v3701
        %v3766 = vpack.c.b16 %v3702, %v3702
        %v3767 = vpack.c.b16 %v3703, %v3703
        %v3768 = vpack.c.b16 %v3704, %v3704
        %v3769 = vpack.c.b16 %v3705, %v3705
        %v3770 = vpack.c.b16 %v3706, %v3706
        %v3771 = vpack.c.b16 %v3707, %v3707
        %v3772 = vpack.c.b16 %v3708, %v3708
        %v3773 = vpack.c.b16 %v3709, %v3709
        %v3774 = vpack.c.b16 %v3710, %v3710
        %v3775 = vpack.c.b16 %v3711, %v3711
        %v3776 = vpack.c.b16 %v3712, %v3712
        %v3777 = vpack.c.b16 %v3713, %v3713
        %v3778 = vpack.c.b16 %v3714, %v3714
        %v3779 = vpack.c.b16 %v3715, %v3715
        %v3780 = vpack.c.b16 %v3716, %v3716
        %v3781 = vpack.c.b16 %v3717, %v3717
        %v3782 = vpack.c.b16 %v3718, %v3718
        %3847 = vst [vmem:[%s448] sm:$0xf] %v3719
        %3848 = vst [vmem:[%s448 + $0x4] sm:$0xf] %v3720
        %3849 = vst [vmem:[%s448 + $0x8] sm:$0xf] %v3721
        %3850 = vst [vmem:[%s448 + $0xc] sm:$0xf] %v3722
        %3851 = vst [vmem:[%s448 + $0x10] sm:$0xf] %v3723
        %3852 = vst [vmem:[%s448 + $0x14] sm:$0xf] %v3724
        %3853 = vst [vmem:[%s448 + $0x18] sm:$0xf] %v3725
        %3854 = vst [vmem:[%s448 + $0x1c] sm:$0xf] %v3726
        %3855 = vst [vmem:[%s448 + $0x40] sm:$0xf] %v3727
        %3856 = vst [vmem:[%s448 + $0x44] sm:$0xf] %v3728
        %3857 = vst [vmem:[%s448 + $0x48] sm:$0xf] %v3729
        %3858 = vst [vmem:[%s448 + $0x4c] sm:$0xf] %v3730
        %3859 = vst [vmem:[%s448 + $0x50] sm:$0xf] %v3731
        %3860 = vst [vmem:[%s448 + $0x54] sm:$0xf] %v3732
        %3861 = vst [vmem:[%s448 + $0x58] sm:$0xf] %v3733
        %3862 = vst [vmem:[%s448 + $0x5c] sm:$0xf] %v3734
        %3863 = vst [vmem:[%s448 + $0x80] sm:$0xf] %v3735
        %3864 = vst [vmem:[%s448 + $0x84] sm:$0xf] %v3736
        %3865 = vst [vmem:[%s448 + $0x88] sm:$0xf] %v3737
        %3866 = vst [vmem:[%s448 + $0x8c] sm:$0xf] %v3738
        %3867 = vst [vmem:[%s448 + $0x90] sm:$0xf] %v3739
        %3868 = vst [vmem:[%s448 + $0x94] sm:$0xf] %v3740
        %3869 = vst [vmem:[%s448 + $0x98] sm:$0xf] %v3741
        %3870 = vst [vmem:[%s448 + $0x9c] sm:$0xf] %v3742
        %3871 = vst [vmem:[%s448 + $0xc0] sm:$0xf] %v3743
        %3872 = vst [vmem:[%s448 + $0xc4] sm:$0xf] %v3744
        %3873 = vst [vmem:[%s448 + $0xc8] sm:$0xf] %v3745
        %3874 = vst [vmem:[%s448 + $0xcc] sm:$0xf] %v3746
        %3875 = vst [vmem:[%s448 + $0xd0] sm:$0xf] %v3747
        %3876 = vst [vmem:[%s448 + $0xd4] sm:$0xf] %v3748
        %3877 = vst [vmem:[%s448 + $0xd8] sm:$0xf] %v3749
        %3878 = vst [vmem:[%s448 + $0xdc] sm:$0xf] %v3750
        %3879 = vst [vmem:[%s448 + $0x100] sm:$0xf] %v3751
        %3880 = vst [vmem:[%s448 + $0x104] sm:$0xf] %v3752
        %3881 = vst [vmem:[%s448 + $0x108] sm:$0xf] %v3753
        %3882 = vst [vmem:[%s448 + $0x10c] sm:$0xf] %v3754
        %3883 = vst [vmem:[%s448 + $0x110] sm:$0xf] %v3755
        %3884 = vst [vmem:[%s448 + $0x114] sm:$0xf] %v3756
        %3885 = vst [vmem:[%s448 + $0x118] sm:$0xf] %v3757
        %3886 = vst [vmem:[%s448 + $0x11c] sm:$0xf] %v3758
        %3887 = vst [vmem:[%s448 + $0x140] sm:$0xf] %v3759
        %3888 = vst [vmem:[%s448 + $0x144] sm:$0xf] %v3760
        %3889 = vst [vmem:[%s448 + $0x148] sm:$0xf] %v3761
        %3890 = vst [vmem:[%s448 + $0x14c] sm:$0xf] %v3762
        %3891 = vst [vmem:[%s448 + $0x150] sm:$0xf] %v3763
        %3892 = vst [vmem:[%s448 + $0x154] sm:$0xf] %v3764
        %3893 = vst [vmem:[%s448 + $0x158] sm:$0xf] %v3765
        %3894 = vst [vmem:[%s448 + $0x15c] sm:$0xf] %v3766
        %3895 = vst [vmem:[%s448 + $0x180] sm:$0xf] %v3767
        %3896 = vst [vmem:[%s448 + $0x184] sm:$0xf] %v3768
        %3897 = vst [vmem:[%s448 + $0x188] sm:$0xf] %v3769
        %3898 = vst [vmem:[%s448 + $0x18c] sm:$0xf] %v3770
        %3899 = vst [vmem:[%s448 + $0x190] sm:$0xf] %v3771
        %3900 = vst [vmem:[%s448 + $0x194] sm:$0xf] %v3772
        %3901 = vst [vmem:[%s448 + $0x198] sm:$0xf] %v3773
        %3902 = vst [vmem:[%s448 + $0x19c] sm:$0xf] %v3774
        %3903 = vst [vmem:[%s448 + $0x1c0] sm:$0xf] %v3775
        %3904 = vst [vmem:[%s448 + $0x1c4] sm:$0xf] %v3776
        %3905 = vst [vmem:[%s448 + $0x1c8] sm:$0xf] %v3777
        %3906 = vst [vmem:[%s448 + $0x1cc] sm:$0xf] %v3778
        %3907 = vst [vmem:[%s448 + $0x1d0] sm:$0xf] %v3779
        %3908 = vst [vmem:[%s448 + $0x1d4] sm:$0xf] %v3780
        %3909 = vst [vmem:[%s448 + $0x1d8] sm:$0xf] %v3781
        %3910 = vst [vmem:[%s448 + $0x1dc] sm:$0xf] %v3782
        %v3911 = vpack.c.bf16 %v2089, %v2089
        %3912 = vmatprep.subr.bf16.mxu0 0
        %3913 = vmatpush1.bf16.msra.mxu0 %v2418
        %3914 = vmatprep.subr.bf16.mxu0 0
        %3915 = vmatpush1.bf16.msra.mxu0 %v2417
        %3916 = vmatprep.subr.bf16.mxu0 0
        %3917 = vmatpush1.bf16.msra.mxu0 %v2416
        %3918 = vmatprep.subr.bf16.mxu0 0
        %3919 = vmatpush1.bf16.msra.mxu0 %v2415
        %3920 = vmatprep.subr.bf16.mxu0 0
        %3921 = vmatpush1.bf16.msra.mxu0 %v2414
        %3922 = vmatprep.subr.bf16.mxu0 0
        %3923 = vmatpush1.bf16.msra.mxu0 %v2413
        %3924 = vmatprep.subr.bf16.mxu0 0
        %3925 = vmatpush1.bf16.msra.mxu0 %v2412
        %3926 = vmatprep.subr.bf16.mxu0 0
        %3927 = vmatpush1.bf16.msra.mxu0 %v2411
        %3928 = vmatprep.subr.bf16.mxu0 0
        %3929 = vmatpush2.bf16.msra.mxu0 0
        %3930 = vmatprep.subr.bf16.mxu0 0
        %3931 = vmatpush2.bf16.msra.mxu0 0
        %3932 = vmatprep.subr.bf16.mxu0 0
        %3933 = vmatpush2.bf16.msra.mxu0 0
        %3934 = vmatprep.subr.bf16.mxu0 0
        %3935 = vmatpush2.bf16.msra.mxu0 0
        %3936 = vmatprep.subr.bf16.mxu0 0
        %3937 = vmatpush2.bf16.msra.mxu0 0
        %3938 = vmatprep.subr.bf16.mxu0 0
        %3939 = vmatpush2.bf16.msra.mxu0 0
        %3940 = vmatprep.subr.bf16.mxu0 0
        %3941 = vmatpush2.bf16.msra.mxu0 0
        %3942 = vmatprep.subr.bf16.mxu0 0
        %3943 = vmatpush2.bf16.msra.mxu0 0
        %3944 = vmatprep.mubr.bf16.mxu0 0
        %3945 = vmatmul.mubr.bf16.gmra.mxu0 %v3911
        %v3946 = vpop.f32.mrf.mxu0
        %v3947 = vadd.f32 0.0, %v3946
        %v3948 = vpop.f32.mrf.mxu0
        %v3949 = vpop.f32.mrf.mxu0
        %v3950 = vpop.f32.mrf.mxu0
        %3951 = vdwg.mxu0
        %v3953 = vcombine.high %v3947, %v3947
        %v3955 = vunpack.c.l.s4 1966171168
        %v3956 = vunpack.c.0.s8 %v3955
        %v3957 = vlaneseq
        %v3958 = vshrl.u32 %v3957, 7
        %v3959 = vsub.s32 %v3956, %v3958
        %v3960 = vrot.slane %v3947, %v3959
        %v3962 = vunpack.c.l.s4 1966171168
        %v3963 = vunpack.c.0.s8 %v3962
        %v3964 = vlaneseq
        %v3965 = vshrl.u32 %v3964, 7
        %v3966 = vsub.s32 %v3963, %v3965
        %v3967 = vrot.slane %v3953, %v3966
        %v3968 = vcombine.high %v3960, %v3960
        %v3969 = vcombine.high %v3967, %v3967
        %v3971 = vunpack.c.l.s4 1966171168
        %v3972 = vunpack.c.0.s8 %v3971
        %v3973 = vlaneseq
        %v3974 = vshrl.u32 %v3973, 7
        %v3975 = vsub.s32 %v3972, %v3974
        %v3976 = vrot.slane %v3960, %v3975
        %v3978 = vunpack.c.l.s4 1966171168
        %v3979 = vunpack.c.0.s8 %v3978
        %v3980 = vlaneseq
        %v3981 = vshrl.u32 %v3980, 7
        %v3982 = vsub.s32 %v3979, %v3981
        %v3983 = vrot.slane %v3967, %v3982
        %v3985 = vunpack.c.l.s4 1966171168
        %v3986 = vunpack.c.0.s8 %v3985
        %v3987 = vlaneseq
        %v3988 = vshrl.u32 %v3987, 7
        %v3989 = vsub.s32 %v3986, %v3988
        %v3990 = vrot.slane %v3968, %v3989
        %v3992 = vunpack.c.l.s4 1966171168
        %v3993 = vunpack.c.0.s8 %v3992
        %v3994 = vlaneseq
        %v3995 = vshrl.u32 %v3994, 7
        %v3996 = vsub.s32 %v3993, %v3995
        %v3997 = vrot.slane %v3969, %v3996
        %v3998 = vcombine.high %v3976, %v3976
        %v3999 = vcombine.high %v3983, %v3983
        %v4000 = vcombine.high %v3990, %v3990
        %v4001 = vcombine.high %v3997, %v3997
        %v4010 = vpack.c.bf16 %v3976, %v3976
        %v4011 = vpack.c.bf16 %v3990, %v3990
        %v4012 = vpack.c.bf16 %v3998, %v3998
        %v4013 = vpack.c.bf16 %v4000, %v4000
        %v4014 = vpack.c.bf16 %v3983, %v3983
        %v4015 = vpack.c.bf16 %v3997, %v3997
        %v4016 = vpack.c.bf16 %v3999, %v3999
        %v4017 = vpack.c.bf16 %v4001, %v4001
        %4018 = vmatprep.subr.bf16.mxu0 0
        %4019 = vmatpush1.bf16.xpose.msra.mxu0 0
        %4020 = vmatprep.subr.bf16.mxu0 0
        %4021 = vmatpush1.bf16.xpose.msra.mxu0 0
        %4022 = vmatprep.subr.bf16.mxu0 0
        %4023 = vmatpush1.bf16.xpose.msra.mxu0 0
        %4024 = vmatprep.subr.bf16.mxu0 0
        %4025 = vmatpush1.bf16.xpose.msra.mxu0 0
        %4026 = vmatprep.subr.bf16.mxu0 0
        %4027 = vmatpush1.bf16.xpose.msra.mxu0 %v2896
        %4028 = vmatprep.subr.bf16.mxu0 0
        %4029 = vmatpush1.bf16.xpose.msra.mxu0 %v2895
        %4030 = vmatprep.subr.bf16.mxu0 0
        %4031 = vmatpush1.bf16.xpose.msra.mxu0 %v2894
        %4032 = vmatprep.subr.bf16.mxu0 0
        %4033 = vmatpush1.bf16.xpose.msra.mxu0 %v2893
        %4034 = vmatprep.subr.bf16.mxu0 0
        %4035 = vmatpush2.bf16.xpose.msra.mxu0 0
        %4036 = vmatprep.subr.bf16.mxu0 0
        %4037 = vmatpush2.bf16.xpose.msra.mxu0 0
        %4038 = vmatprep.subr.bf16.mxu0 0
        %4039 = vmatpush2.bf16.xpose.msra.mxu0 0
        %4040 = vmatprep.subr.bf16.mxu0 0
        %4041 = vmatpush2.bf16.xpose.msra.mxu0 0
        %4042 = vmatprep.subr.bf16.mxu0 0
        %4043 = vmatpush2.bf16.xpose.msra.mxu0 0
        %4044 = vmatprep.subr.bf16.mxu0 0
        %4045 = vmatpush2.bf16.xpose.msra.mxu0 0
        %4046 = vmatprep.subr.bf16.mxu0 0
        %4047 = vmatpush2.bf16.xpose.msra.mxu0 0
        %4048 = vmatprep.subr.bf16.mxu0 0
        %4049 = vmatpush2.bf16.xpose.msra.mxu0 0
        %4050 = vmatprep.mubr.bf16.mxu0 0
        %4051 = vmatmul.mubr.bf16.gmra.mxu0 %v4010
        %v4052 = vpop.f32.mrf.mxu0
        %v4053 = vadd.f32 0.0, %v4052
        %v4054 = vpop.f32.mrf.mxu0
        %v4055 = vpop.f32.mrf.mxu0
        %v4056 = vpop.f32.mrf.mxu0
        %4057 = vdwg.mxu0
        %4058 = vmatprep.subr.bf16.mxu0 0
        %4059 = vmatpush1.bf16.xpose.msra.mxu0 0
        %4060 = vmatprep.subr.bf16.mxu0 0
        %4061 = vmatpush1.bf16.xpose.msra.mxu0 0
        %4062 = vmatprep.subr.bf16.mxu0 0
        %4063 = vmatpush1.bf16.xpose.msra.mxu0 0
        %4064 = vmatprep.subr.bf16.mxu0 0
        %4065 = vmatpush1.bf16.xpose.msra.mxu0 0
        %4066 = vmatprep.subr.bf16.mxu0 0
        %4067 = vmatpush1.bf16.xpose.msra.mxu0 %v2900
        %4068 = vmatprep.subr.bf16.mxu0 0
        %4069 = vmatpush1.bf16.xpose.msra.mxu0 %v2899
        %4070 = vmatprep.subr.bf16.mxu0 0
        %4071 = vmatpush1.bf16.xpose.msra.mxu0 %v2898
        %4072 = vmatprep.subr.bf16.mxu0 0
        %4073 = vmatpush1.bf16.xpose.msra.mxu0 %v2897
        %4074 = vmatprep.subr.bf16.mxu0 0
        %4075 = vmatpush2.bf16.xpose.msra.mxu0 0
        %4076 = vmatprep.subr.bf16.mxu0 0
        %4077 = vmatpush2.bf16.xpose.msra.mxu0 0
        %4078 = vmatprep.subr.bf16.mxu0 0
        %4079 = vmatpush2.bf16.xpose.msra.mxu0 0
        %4080 = vmatprep.subr.bf16.mxu0 0
        %4081 = vmatpush2.bf16.xpose.msra.mxu0 0
        %4082 = vmatprep.subr.bf16.mxu0 0
        %4083 = vmatpush2.bf16.xpose.msra.mxu0 0
        %4084 = vmatprep.subr.bf16.mxu0 0
        %4085 = vmatpush2.bf16.xpose.msra.mxu0 0
        %4086 = vmatprep.subr.bf16.mxu0 0
        %4087 = vmatpush2.bf16.xpose.msra.mxu0 0
        %4088 = vmatprep.subr.bf16.mxu0 0
        %4089 = vmatpush2.bf16.xpose.msra.mxu0 0
        %4090 = vmatprep.mubr.bf16.mxu0 0
        %4091 = vmatmul.mubr.bf16.gmra.mxu0 %v4011
        %v4092 = vpop.f32.mrf.mxu0
        %v4093 = vadd.f32 0.0, %v4092
        %v4094 = vpop.f32.mrf.mxu0
        %v4095 = vpop.f32.mrf.mxu0
        %v4096 = vpop.f32.mrf.mxu0
        %4097 = vdwg.mxu0
        %4098 = vmatprep.subr.bf16.mxu0 0
        %4099 = vmatpush1.bf16.xpose.msra.mxu0 0
        %4100 = vmatprep.subr.bf16.mxu0 0
        %4101 = vmatpush1.bf16.xpose.msra.mxu0 0
        %4102 = vmatprep.subr.bf16.mxu0 0
        %4103 = vmatpush1.bf16.xpose.msra.mxu0 0
        %4104 = vmatprep.subr.bf16.mxu0 0
        %4105 = vmatpush1.bf16.xpose.msra.mxu0 0
        %4106 = vmatprep.subr.bf16.mxu0 0
        %4107 = vmatpush1.bf16.xpose.msra.mxu0 %v2904
        %4108 = vmatprep.subr.bf16.mxu0 0
        %4109 = vmatpush1.bf16.xpose.msra.mxu0 %v2903
        %4110 = vmatprep.subr.bf16.mxu0 0
        %4111 = vmatpush1.bf16.xpose.msra.mxu0 %v2902
        %4112 = vmatprep.subr.bf16.mxu0 0
        %4113 = vmatpush1.bf16.xpose.msra.mxu0 %v2901
        %4114 = vmatprep.subr.bf16.mxu0 0
        %4115 = vmatpush2.bf16.xpose.msra.mxu0 0
        %4116 = vmatprep.subr.bf16.mxu0 0
        %4117 = vmatpush2.bf16.xpose.msra.mxu0 0
        %4118 = vmatprep.subr.bf16.mxu0 0
        %4119 = vmatpush2.bf16.xpose.msra.mxu0 0
        %4120 = vmatprep.subr.bf16.mxu0 0
        %4121 = vmatpush2.bf16.xpose.msra.mxu0 0
        %4122 = vmatprep.subr.bf16.mxu0 0
        %4123 = vmatpush2.bf16.xpose.msra.mxu0 0
        %4124 = vmatprep.subr.bf16.mxu0 0
        %4125 = vmatpush2.bf16.xpose.msra.mxu0 0
        %4126 = vmatprep.subr.bf16.mxu0 0
        %4127 = vmatpush2.bf16.xpose.msra.mxu0 0
        %4128 = vmatprep.subr.bf16.mxu0 0
        %4129 = vmatpush2.bf16.xpose.msra.mxu0 0
        %4130 = vmatprep.mubr.bf16.mxu0 0
        %4131 = vmatmul.mubr.bf16.gmra.mxu0 %v4012
        %v4132 = vpop.f32.mrf.mxu0
        %v4133 = vadd.f32 0.0, %v4132
        %v4134 = vpop.f32.mrf.mxu0
        %v4135 = vpop.f32.mrf.mxu0
        %v4136 = vpop.f32.mrf.mxu0
        %4137 = vdwg.mxu0
        %4138 = vmatprep.subr.bf16.mxu0 0
        %4139 = vmatpush1.bf16.xpose.msra.mxu0 0
        %4140 = vmatprep.subr.bf16.mxu0 0
        %4141 = vmatpush1.bf16.xpose.msra.mxu0 0
        %4142 = vmatprep.subr.bf16.mxu0 0
        %4143 = vmatpush1.bf16.xpose.msra.mxu0 0
        %4144 = vmatprep.subr.bf16.mxu0 0
        %4145 = vmatpush1.bf16.xpose.msra.mxu0 0
        %4146 = vmatprep.subr.bf16.mxu0 0
        %4147 = vmatpush1.bf16.xpose.msra.mxu0 %v2908
        %4148 = vmatprep.subr.bf16.mxu0 0
        %4149 = vmatpush1.bf16.xpose.msra.mxu0 %v2907
        %4150 = vmatprep.subr.bf16.mxu0 0
        %4151 = vmatpush1.bf16.xpose.msra.mxu0 %v2906
        %4152 = vmatprep.subr.bf16.mxu0 0
        %4153 = vmatpush1.bf16.xpose.msra.mxu0 %v2905
        %4154 = vmatprep.subr.bf16.mxu0 0
        %4155 = vmatpush2.bf16.xpose.msra.mxu0 0
        %4156 = vmatprep.subr.bf16.mxu0 0
        %4157 = vmatpush2.bf16.xpose.msra.mxu0 0
        %4158 = vmatprep.subr.bf16.mxu0 0
        %4159 = vmatpush2.bf16.xpose.msra.mxu0 0
        %4160 = vmatprep.subr.bf16.mxu0 0
        %4161 = vmatpush2.bf16.xpose.msra.mxu0 0
        %4162 = vmatprep.subr.bf16.mxu0 0
        %4163 = vmatpush2.bf16.xpose.msra.mxu0 0
        %4164 = vmatprep.subr.bf16.mxu0 0
        %4165 = vmatpush2.bf16.xpose.msra.mxu0 0
        %4166 = vmatprep.subr.bf16.mxu0 0
        %4167 = vmatpush2.bf16.xpose.msra.mxu0 0
        %4168 = vmatprep.subr.bf16.mxu0 0
        %4169 = vmatpush2.bf16.xpose.msra.mxu0 0
        %4170 = vmatprep.mubr.bf16.mxu0 0
        %4171 = vmatmul.mubr.bf16.gmra.mxu0 %v4013
        %v4172 = vpop.f32.mrf.mxu0
        %v4173 = vadd.f32 0.0, %v4172
        %v4174 = vpop.f32.mrf.mxu0
        %v4175 = vpop.f32.mrf.mxu0
        %v4176 = vpop.f32.mrf.mxu0
        %4177 = vdwg.mxu0
        %4178 = vmatprep.subr.bf16.mxu0 0
        %4179 = vmatpush1.bf16.xpose.msra.mxu0 0
        %4180 = vmatprep.subr.bf16.mxu0 0
        %4181 = vmatpush1.bf16.xpose.msra.mxu0 0
        %4182 = vmatprep.subr.bf16.mxu0 0
        %4183 = vmatpush1.bf16.xpose.msra.mxu0 0
        %4184 = vmatprep.subr.bf16.mxu0 0
        %4185 = vmatpush1.bf16.xpose.msra.mxu0 0
        %4186 = vmatprep.subr.bf16.mxu0 0
        %4187 = vmatpush1.bf16.xpose.msra.mxu0 %v2912
        %4188 = vmatprep.subr.bf16.mxu0 0
        %4189 = vmatpush1.bf16.xpose.msra.mxu0 %v2911
        %4190 = vmatprep.subr.bf16.mxu0 0
        %4191 = vmatpush1.bf16.xpose.msra.mxu0 %v2910
        %4192 = vmatprep.subr.bf16.mxu0 0
        %4193 = vmatpush1.bf16.xpose.msra.mxu0 %v2909
        %4194 = vmatprep.subr.bf16.mxu0 0
        %4195 = vmatpush2.bf16.xpose.msra.mxu0 0
        %4196 = vmatprep.subr.bf16.mxu0 0
        %4197 = vmatpush2.bf16.xpose.msra.mxu0 0
        %4198 = vmatprep.subr.bf16.mxu0 0
        %4199 = vmatpush2.bf16.xpose.msra.mxu0 0
        %4200 = vmatprep.subr.bf16.mxu0 0
        %4201 = vmatpush2.bf16.xpose.msra.mxu0 0
        %4202 = vmatprep.subr.bf16.mxu0 0
        %4203 = vmatpush2.bf16.xpose.msra.mxu0 0
        %4204 = vmatprep.subr.bf16.mxu0 0
        %4205 = vmatpush2.bf16.xpose.msra.mxu0 0
        %4206 = vmatprep.subr.bf16.mxu0 0
        %4207 = vmatpush2.bf16.xpose.msra.mxu0 0
        %4208 = vmatprep.subr.bf16.mxu0 0
        %4209 = vmatpush2.bf16.xpose.msra.mxu0 0
        %4210 = vmatprep.mubr.bf16.mxu0 0
        %4211 = vmatmul.mubr.bf16.gmra.mxu0 %v4014
        %v4212 = vpop.f32.mrf.mxu0
        %v4213 = vadd.f32 0.0, %v4212
        %v4214 = vpop.f32.mrf.mxu0
        %v4215 = vpop.f32.mrf.mxu0
        %v4216 = vpop.f32.mrf.mxu0
        %4217 = vdwg.mxu0
        %4218 = vmatprep.subr.bf16.mxu0 0
        %4219 = vmatpush1.bf16.xpose.msra.mxu0 0
        %4220 = vmatprep.subr.bf16.mxu0 0
        %4221 = vmatpush1.bf16.xpose.msra.mxu0 0
        %4222 = vmatprep.subr.bf16.mxu0 0
        %4223 = vmatpush1.bf16.xpose.msra.mxu0 0
        %4224 = vmatprep.subr.bf16.mxu0 0
        %4225 = vmatpush1.bf16.xpose.msra.mxu0 0
        %4226 = vmatprep.subr.bf16.mxu0 0
        %4227 = vmatpush1.bf16.xpose.msra.mxu0 %v2916
        %4228 = vmatprep.subr.bf16.mxu0 0
        %4229 = vmatpush1.bf16.xpose.msra.mxu0 %v2915
        %4230 = vmatprep.subr.bf16.mxu0 0
        %4231 = vmatpush1.bf16.xpose.msra.mxu0 %v2914
        %4232 = vmatprep.subr.bf16.mxu0 0
        %4233 = vmatpush1.bf16.xpose.msra.mxu0 %v2913
        %4234 = vmatprep.subr.bf16.mxu0 0
        %4235 = vmatpush2.bf16.xpose.msra.mxu0 0
        %4236 = vmatprep.subr.bf16.mxu0 0
        %4237 = vmatpush2.bf16.xpose.msra.mxu0 0
        %4238 = vmatprep.subr.bf16.mxu0 0
        %4239 = vmatpush2.bf16.xpose.msra.mxu0 0
        %4240 = vmatprep.subr.bf16.mxu0 0
        %4241 = vmatpush2.bf16.xpose.msra.mxu0 0
        %4242 = vmatprep.subr.bf16.mxu0 0
        %4243 = vmatpush2.bf16.xpose.msra.mxu0 0
        %4244 = vmatprep.subr.bf16.mxu0 0
        %4245 = vmatpush2.bf16.xpose.msra.mxu0 0
        %4246 = vmatprep.subr.bf16.mxu0 0
        %4247 = vmatpush2.bf16.xpose.msra.mxu0 0
        %4248 = vmatprep.subr.bf16.mxu0 0
        %4249 = vmatpush2.bf16.xpose.msra.mxu0 0
        %4250 = vmatprep.mubr.bf16.mxu0 0
        %4251 = vmatmul.mubr.bf16.gmra.mxu0 %v4015
        %v4252 = vpop.f32.mrf.mxu0
        %v4253 = vadd.f32 0.0, %v4252
        %v4254 = vpop.f32.mrf.mxu0
        %v4255 = vpop.f32.mrf.mxu0
        %v4256 = vpop.f32.mrf.mxu0
        %4257 = vdwg.mxu0
        %4258 = vmatprep.subr.bf16.mxu0 0
        %4259 = vmatpush1.bf16.xpose.msra.mxu0 0
        %4260 = vmatprep.subr.bf16.mxu0 0
        %4261 = vmatpush1.bf16.xpose.msra.mxu0 0
        %4262 = vmatprep.subr.bf16.mxu0 0
        %4263 = vmatpush1.bf16.xpose.msra.mxu0 0
        %4264 = vmatprep.subr.bf16.mxu0 0
        %4265 = vmatpush1.bf16.xpose.msra.mxu0 0
        %4266 = vmatprep.subr.bf16.mxu0 0
        %4267 = vmatpush1.bf16.xpose.msra.mxu0 %v2920
        %4268 = vmatprep.subr.bf16.mxu0 0
        %4269 = vmatpush1.bf16.xpose.msra.mxu0 %v2919
        %4270 = vmatprep.subr.bf16.mxu0 0
        %4271 = vmatpush1.bf16.xpose.msra.mxu0 %v2918
        %4272 = vmatprep.subr.bf16.mxu0 0
        %4273 = vmatpush1.bf16.xpose.msra.mxu0 %v2917
        %4274 = vmatprep.subr.bf16.mxu0 0
        %4275 = vmatpush2.bf16.xpose.msra.mxu0 0
        %4276 = vmatprep.subr.bf16.mxu0 0
        %4277 = vmatpush2.bf16.xpose.msra.mxu0 0
        %4278 = vmatprep.subr.bf16.mxu0 0
        %4279 = vmatpush2.bf16.xpose.msra.mxu0 0
        %4280 = vmatprep.subr.bf16.mxu0 0
        %4281 = vmatpush2.bf16.xpose.msra.mxu0 0
        %4282 = vmatprep.subr.bf16.mxu0 0
        %4283 = vmatpush2.bf16.xpose.msra.mxu0 0
        %4284 = vmatprep.subr.bf16.mxu0 0
        %4285 = vmatpush2.bf16.xpose.msra.mxu0 0
        %4286 = vmatprep.subr.bf16.mxu0 0
        %4287 = vmatpush2.bf16.xpose.msra.mxu0 0
        %4288 = vmatprep.subr.bf16.mxu0 0
        %4289 = vmatpush2.bf16.xpose.msra.mxu0 0
        %4290 = vmatprep.mubr.bf16.mxu0 0
        %4291 = vmatmul.mubr.bf16.gmra.mxu0 %v4016
        %v4292 = vpop.f32.mrf.mxu0
        %v4293 = vadd.f32 0.0, %v4292
        %v4294 = vpop.f32.mrf.mxu0
        %v4295 = vpop.f32.mrf.mxu0
        %v4296 = vpop.f32.mrf.mxu0
        %4297 = vdwg.mxu0
        %4298 = vmatprep.subr.bf16.mxu0 0
        %4299 = vmatpush1.bf16.xpose.msra.mxu0 0
        %4300 = vmatprep.subr.bf16.mxu0 0
        %4301 = vmatpush1.bf16.xpose.msra.mxu0 0
        %4302 = vmatprep.subr.bf16.mxu0 0
        %4303 = vmatpush1.bf16.xpose.msra.mxu0 0
        %4304 = vmatprep.subr.bf16.mxu0 0
        %4305 = vmatpush1.bf16.xpose.msra.mxu0 0
        %4306 = vmatprep.subr.bf16.mxu0 0
        %4307 = vmatpush1.bf16.xpose.msra.mxu0 %v2924
        %4308 = vmatprep.subr.bf16.mxu0 0
        %4309 = vmatpush1.bf16.xpose.msra.mxu0 %v2923
        %4310 = vmatprep.subr.bf16.mxu0 0
        %4311 = vmatpush1.bf16.xpose.msra.mxu0 %v2922
        %4312 = vmatprep.subr.bf16.mxu0 0
        %4313 = vmatpush1.bf16.xpose.msra.mxu0 %v2921
        %4314 = vmatprep.subr.bf16.mxu0 0
        %4315 = vmatpush2.bf16.xpose.msra.mxu0 0
        %4316 = vmatprep.subr.bf16.mxu0 0
        %4317 = vmatpush2.bf16.xpose.msra.mxu0 0
        %4318 = vmatprep.subr.bf16.mxu0 0
        %4319 = vmatpush2.bf16.xpose.msra.mxu0 0
        %4320 = vmatprep.subr.bf16.mxu0 0
        %4321 = vmatpush2.bf16.xpose.msra.mxu0 0
        %4322 = vmatprep.subr.bf16.mxu0 0
        %4323 = vmatpush2.bf16.xpose.msra.mxu0 0
        %4324 = vmatprep.subr.bf16.mxu0 0
        %4325 = vmatpush2.bf16.xpose.msra.mxu0 0
        %4326 = vmatprep.subr.bf16.mxu0 0
        %4327 = vmatpush2.bf16.xpose.msra.mxu0 0
        %4328 = vmatprep.subr.bf16.mxu0 0
        %4329 = vmatpush2.bf16.xpose.msra.mxu0 0
        %4330 = vmatprep.mubr.bf16.mxu0 0
        %4331 = vmatmul.mubr.bf16.gmra.mxu0 %v4017
        %v4332 = vpop.f32.mrf.mxu0
        %v4333 = vadd.f32 0.0, %v4332
        %v4334 = vpop.f32.mrf.mxu0
        %v4335 = vpop.f32.mrf.mxu0
        %v4336 = vpop.f32.mrf.mxu0
        %4337 = vdwg.mxu0
        %v4338 = vmul.f32 %v4053, 0.088388346
        %v4339 = vmul.f32 %v4093, 0.088388346
        %v4340 = vmul.f32 %v4133, 0.088388346
        %v4341 = vmul.f32 %v4173, 0.088388346
        %v4342 = vmul.f32 %v4213, 0.088388346
        %v4343 = vmul.f32 %v4253, 0.088388346
        %v4344 = vmul.f32 %v4293, 0.088388346
        %v4345 = vmul.f32 %v4333, 0.088388346
        %v4346 = vadd.f32 %v4338, %v2360
        %v4347 = vadd.f32 %v4339, %v2360
        %v4348 = vadd.f32 %v4340, %v2360
        %v4349 = vadd.f32 %v4341, %v2360
        %v4350 = vadd.f32 %v4342, %v2360
        %v4351 = vadd.f32 %v4343, %v2360
        %v4352 = vadd.f32 %v4344, %v2360
        %v4353 = vadd.f32 %v4345, %v2360
        %vm4354 = vcmask 516096
        %v4355 = vsel %vm4354, %v4346, -inf
        %4356 = vmax.xlane.f32.xlu0 %v4355
        %v4357 = vpop.xlane.xlu0 %4356
        %v4358 = vsel %vm4354, %v4347, -inf
        %4359 = vmax.xlane.f32.xlu0 %v4358
        %v4360 = vpop.xlane.xlu0 %4359
        %v4361 = vsel %vm4354, %v4348, -inf
        %4362 = vmax.xlane.f32.xlu0 %v4361
        %v4363 = vpop.xlane.xlu0 %4362
        %v4364 = vsel %vm4354, %v4349, -inf
        %4365 = vmax.xlane.f32.xlu0 %v4364
        %v4366 = vpop.xlane.xlu0 %4365
        %v4367 = vsel %vm4354, %v4350, -inf
        %4368 = vmax.xlane.f32.xlu0 %v4367
        %v4369 = vpop.xlane.xlu0 %4368
        %v4370 = vsel %vm4354, %v4351, -inf
        %4371 = vmax.xlane.f32.xlu0 %v4370
        %v4372 = vpop.xlane.xlu0 %4371
        %v4373 = vsel %vm4354, %v4352, -inf
        %4374 = vmax.xlane.f32.xlu0 %v4373
        %v4375 = vpop.xlane.xlu0 %4374
        %v4376 = vsel %vm4354, %v4353, -inf
        %4377 = vmax.xlane.f32.xlu0 %v4376
        %v4378 = vpop.xlane.xlu0 %4377
        %v4379 = vsub.f32 %v4346, %v4357
        %v4380 = vsub.f32 %v4347, %v4360
        %v4381 = vsub.f32 %v4348, %v4363
        %v4382 = vsub.f32 %v4349, %v4366
        %v4383 = vsub.f32 %v4350, %v4369
        %v4384 = vsub.f32 %v4351, %v4372
        %v4385 = vsub.f32 %v4352, %v4375
        %v4386 = vsub.f32 %v4353, %v4378
        %v4387 = vmul.f32 %v4379, 1.442695
        %v4388 = vpow.pop %v4387
        %v4389 = vmul.f32 %v4380, 1.442695
        %v4390 = vpow.pop %v4389
        %v4391 = vmul.f32 %v4381, 1.442695
        %v4392 = vpow.pop %v4391
        %v4393 = vmul.f32 %v4382, 1.442695
        %v4394 = vpow.pop %v4393
        %v4395 = vmul.f32 %v4383, 1.442695
        %v4396 = vpow.pop %v4395
        %v4397 = vmul.f32 %v4384, 1.442695
        %v4398 = vpow.pop %v4397
        %v4399 = vmul.f32 %v4385, 1.442695
        %v4400 = vpow.pop %v4399
        %v4401 = vmul.f32 %v4386, 1.442695
        %v4402 = vpow.pop %v4401
        %v4403 = vsel %vm4354, %v4388, 0.0
        %4404 = vadd.xlane.f32.xlu0 %v4403
        %v4405 = vpop.xlane.xlu0 %4404
        %v4406 = vsel %vm4354, %v4390, 0.0
        %4407 = vadd.xlane.f32.xlu0 %v4406
        %v4408 = vpop.xlane.xlu0 %4407
        %v4409 = vsel %vm4354, %v4392, 0.0
        %4410 = vadd.xlane.f32.xlu0 %v4409
        %v4411 = vpop.xlane.xlu0 %4410
        %v4412 = vsel %vm4354, %v4394, 0.0
        %4413 = vadd.xlane.f32.xlu0 %v4412
        %v4414 = vpop.xlane.xlu0 %4413
        %v4415 = vsel %vm4354, %v4396, 0.0
        %4416 = vadd.xlane.f32.xlu0 %v4415
        %v4417 = vpop.xlane.xlu0 %4416
        %v4418 = vsel %vm4354, %v4398, 0.0
        %4419 = vadd.xlane.f32.xlu0 %v4418
        %v4420 = vpop.xlane.xlu0 %4419
        %v4421 = vsel %vm4354, %v4400, 0.0
        %4422 = vadd.xlane.f32.xlu0 %v4421
        %v4423 = vpop.xlane.xlu0 %4422
        %v4424 = vsel %vm4354, %v4402, 0.0
        %4425 = vadd.xlane.f32.xlu0 %v4424
        %v4426 = vpop.xlane.xlu0 %4425
        %v4427 = vrcp.pop %v4405
        %v4428 = vrcp.pop %v4408
        %v4429 = vrcp.pop %v4411
        %v4430 = vrcp.pop %v4414
        %v4431 = vrcp.pop %v4417
        %v4432 = vrcp.pop %v4420
        %v4433 = vrcp.pop %v4423
        %v4434 = vrcp.pop %v4426
        %v4435 = vmul.f32 %v4388, %v4427
        %v4436 = vmul.f32 %v4390, %v4428
        %v4437 = vmul.f32 %v4392, %v4429
        %v4438 = vmul.f32 %v4394, %v4430
        %v4439 = vmul.f32 %v4396, %v4431
        %v4440 = vmul.f32 %v4398, %v4432
        %v4441 = vmul.f32 %v4400, %v4433
        %v4442 = vmul.f32 %v4402, %v4434
        %v4443 = vpack.c.bf16 %v4435, %v4435
        %v4444 = vpack.c.bf16 %v4436, %v4436
        %v4445 = vpack.c.bf16 %v4437, %v4437
        %v4446 = vpack.c.bf16 %v4438, %v4438
        %v4447 = vpack.c.bf16 %v4439, %v4439
        %v4448 = vpack.c.bf16 %v4440, %v4440
        %v4449 = vpack.c.bf16 %v4441, %v4441
        %v4450 = vpack.c.bf16 %v4442, %v4442
        %vm4451 = vcmask 523264
        %v4453 = vsel %vm4451, %v4443, 0
        %4455 = vmatprep.subr.bf16.mxu0 0
        %4456 = vmatpush1.bf16.msra.mxu0 0
        %4457 = vmatprep.subr.bf16.mxu0 0
        %4458 = vmatpush1.bf16.msra.mxu0 0
        %4459 = vmatprep.subr.bf16.mxu0 0
        %4460 = vmatpush1.bf16.msra.mxu0 0
        %4461 = vmatprep.subr.bf16.mxu0 0
        %4462 = vmatpush1.bf16.msra.mxu0 0
        %4463 = vmatprep.subr.bf16.mxu0 0
        %4464 = vmatpush1.bf16.msra.mxu0 %v3306
        %4465 = vmatprep.subr.bf16.mxu0 0
        %4466 = vmatpush1.bf16.msra.mxu0 %v3305
        %4467 = vmatprep.subr.bf16.mxu0 0
        %4468 = vmatpush1.bf16.msra.mxu0 %v3304
        %4469 = vmatprep.subr.bf16.mxu0 0
        %4470 = vmatpush1.bf16.msra.mxu0 %v3303
        %4471 = vmatprep.subr.bf16.mxu0 0
        %4472 = vmatpush2.bf16.msra.mxu0 0
        %4473 = vmatprep.subr.bf16.mxu0 0
        %4474 = vmatpush2.bf16.msra.mxu0 0
        %4475 = vmatprep.subr.bf16.mxu0 0
        %4476 = vmatpush2.bf16.msra.mxu0 0
        %4477 = vmatprep.subr.bf16.mxu0 0
        %4478 = vmatpush2.bf16.msra.mxu0 0
        %4479 = vmatprep.subr.bf16.mxu0 0
        %4480 = vmatpush2.bf16.msra.mxu0 0
        %4481 = vmatprep.subr.bf16.mxu0 0
        %4482 = vmatpush2.bf16.msra.mxu0 0
        %4483 = vmatprep.subr.bf16.mxu0 0
        %4484 = vmatpush2.bf16.msra.mxu0 0
        %4485 = vmatprep.subr.bf16.mxu0 0
        %4486 = vmatpush2.bf16.msra.mxu0 0
        %4487 = vmatprep.mubr.bf16.mxu0 0
        %4488 = vmatmul.mubr.bf16.gmra.mxu0 %v4453
        %v4489 = vpop.f32.mrf.mxu0
        %v4490 = vadd.f32 0.0, %v4489
        %v4491 = vpop.f32.mrf.mxu0
        %v4492 = vpop.f32.mrf.mxu0
        %v4493 = vpop.f32.mrf.mxu0
        %4494 = vdwg.mxu0
        %v4496 = vsel %vm4451, %v4444, 0
        %4498 = vmatprep.subr.bf16.mxu0 0
        %4499 = vmatpush1.bf16.msra.mxu0 0
        %4500 = vmatprep.subr.bf16.mxu0 0
        %4501 = vmatpush1.bf16.msra.mxu0 0
        %4502 = vmatprep.subr.bf16.mxu0 0
        %4503 = vmatpush1.bf16.msra.mxu0 0
        %4504 = vmatprep.subr.bf16.mxu0 0
        %4505 = vmatpush1.bf16.msra.mxu0 0
        %4506 = vmatprep.subr.bf16.mxu0 0
        %4507 = vmatpush1.bf16.msra.mxu0 %v3310
        %4508 = vmatprep.subr.bf16.mxu0 0
        %4509 = vmatpush1.bf16.msra.mxu0 %v3309
        %4510 = vmatprep.subr.bf16.mxu0 0
        %4511 = vmatpush1.bf16.msra.mxu0 %v3308
        %4512 = vmatprep.subr.bf16.mxu0 0
        %4513 = vmatpush1.bf16.msra.mxu0 %v3307
        %4514 = vmatprep.subr.bf16.mxu0 0
        %4515 = vmatpush2.bf16.msra.mxu0 0
        %4516 = vmatprep.subr.bf16.mxu0 0
        %4517 = vmatpush2.bf16.msra.mxu0 0
        %4518 = vmatprep.subr.bf16.mxu0 0
        %4519 = vmatpush2.bf16.msra.mxu0 0
        %4520 = vmatprep.subr.bf16.mxu0 0
        %4521 = vmatpush2.bf16.msra.mxu0 0
        %4522 = vmatprep.subr.bf16.mxu0 0
        %4523 = vmatpush2.bf16.msra.mxu0 0
        %4524 = vmatprep.subr.bf16.mxu0 0
        %4525 = vmatpush2.bf16.msra.mxu0 0
        %4526 = vmatprep.subr.bf16.mxu0 0
        %4527 = vmatpush2.bf16.msra.mxu0 0
        %4528 = vmatprep.subr.bf16.mxu0 0
        %4529 = vmatpush2.bf16.msra.mxu0 0
        %4530 = vmatprep.mubr.bf16.mxu0 0
        %4531 = vmatmul.mubr.bf16.gmra.mxu0 %v4496
        %v4532 = vpop.f32.mrf.mxu0
        %v4533 = vadd.f32 0.0, %v4532
        %v4534 = vpop.f32.mrf.mxu0
        %v4535 = vpop.f32.mrf.mxu0
        %v4536 = vpop.f32.mrf.mxu0
        %4537 = vdwg.mxu0
        %v4539 = vsel %vm4451, %v4445, 0
        %4541 = vmatprep.subr.bf16.mxu0 0
        %4542 = vmatpush1.bf16.msra.mxu0 0
        %4543 = vmatprep.subr.bf16.mxu0 0
        %4544 = vmatpush1.bf16.msra.mxu0 0
        %4545 = vmatprep.subr.bf16.mxu0 0
        %4546 = vmatpush1.bf16.msra.mxu0 0
        %4547 = vmatprep.subr.bf16.mxu0 0
        %4548 = vmatpush1.bf16.msra.mxu0 0
        %4549 = vmatprep.subr.bf16.mxu0 0
        %4550 = vmatpush1.bf16.msra.mxu0 %v3314
        %4551 = vmatprep.subr.bf16.mxu0 0
        %4552 = vmatpush1.bf16.msra.mxu0 %v3313
        %4553 = vmatprep.subr.bf16.mxu0 0
        %4554 = vmatpush1.bf16.msra.mxu0 %v3312
        %4555 = vmatprep.subr.bf16.mxu0 0
        %4556 = vmatpush1.bf16.msra.mxu0 %v3311
        %4557 = vmatprep.subr.bf16.mxu0 0
        %4558 = vmatpush2.bf16.msra.mxu0 0
        %4559 = vmatprep.subr.bf16.mxu0 0
        %4560 = vmatpush2.bf16.msra.mxu0 0
        %4561 = vmatprep.subr.bf16.mxu0 0
        %4562 = vmatpush2.bf16.msra.mxu0 0
        %4563 = vmatprep.subr.bf16.mxu0 0
        %4564 = vmatpush2.bf16.msra.mxu0 0
        %4565 = vmatprep.subr.bf16.mxu0 0
        %4566 = vmatpush2.bf16.msra.mxu0 0
        %4567 = vmatprep.subr.bf16.mxu0 0
        %4568 = vmatpush2.bf16.msra.mxu0 0
        %4569 = vmatprep.subr.bf16.mxu0 0
        %4570 = vmatpush2.bf16.msra.mxu0 0
        %4571 = vmatprep.subr.bf16.mxu0 0
        %4572 = vmatpush2.bf16.msra.mxu0 0
        %4573 = vmatprep.mubr.bf16.mxu0 0
        %4574 = vmatmul.mubr.bf16.gmra.mxu0 %v4539
        %v4575 = vpop.f32.mrf.mxu0
        %v4576 = vadd.f32 0.0, %v4575
        %v4577 = vpop.f32.mrf.mxu0
        %v4578 = vpop.f32.mrf.mxu0
        %v4579 = vpop.f32.mrf.mxu0
        %4580 = vdwg.mxu0
        %v4582 = vsel %vm4451, %v4446, 0
        %4584 = vmatprep.subr.bf16.mxu0 0
        %4585 = vmatpush1.bf16.msra.mxu0 0
        %4586 = vmatprep.subr.bf16.mxu0 0
        %4587 = vmatpush1.bf16.msra.mxu0 0
        %4588 = vmatprep.subr.bf16.mxu0 0
        %4589 = vmatpush1.bf16.msra.mxu0 0
        %4590 = vmatprep.subr.bf16.mxu0 0
        %4591 = vmatpush1.bf16.msra.mxu0 0
        %4592 = vmatprep.subr.bf16.mxu0 0
        %4593 = vmatpush1.bf16.msra.mxu0 %v3318
        %4594 = vmatprep.subr.bf16.mxu0 0
        %4595 = vmatpush1.bf16.msra.mxu0 %v3317
        %4596 = vmatprep.subr.bf16.mxu0 0
        %4597 = vmatpush1.bf16.msra.mxu0 %v3316
        %4598 = vmatprep.subr.bf16.mxu0 0
        %4599 = vmatpush1.bf16.msra.mxu0 %v3315
        %4600 = vmatprep.subr.bf16.mxu0 0
        %4601 = vmatpush2.bf16.msra.mxu0 0
        %4602 = vmatprep.subr.bf16.mxu0 0
        %4603 = vmatpush2.bf16.msra.mxu0 0
        %4604 = vmatprep.subr.bf16.mxu0 0
        %4605 = vmatpush2.bf16.msra.mxu0 0
        %4606 = vmatprep.subr.bf16.mxu0 0
        %4607 = vmatpush2.bf16.msra.mxu0 0
        %4608 = vmatprep.subr.bf16.mxu0 0
        %4609 = vmatpush2.bf16.msra.mxu0 0
        %4610 = vmatprep.subr.bf16.mxu0 0
        %4611 = vmatpush2.bf16.msra.mxu0 0
        %4612 = vmatprep.subr.bf16.mxu0 0
        %4613 = vmatpush2.bf16.msra.mxu0 0
        %4614 = vmatprep.subr.bf16.mxu0 0
        %4615 = vmatpush2.bf16.msra.mxu0 0
        %4616 = vmatprep.mubr.bf16.mxu0 0
        %4617 = vmatmul.mubr.bf16.gmra.mxu0 %v4582
        %v4618 = vpop.f32.mrf.mxu0
        %v4619 = vadd.f32 0.0, %v4618
        %v4620 = vpop.f32.mrf.mxu0
        %v4621 = vpop.f32.mrf.mxu0
        %v4622 = vpop.f32.mrf.mxu0
        %4623 = vdwg.mxu0
        %v4625 = vsel %vm4451, %v4447, 0
        %4627 = vmatprep.subr.bf16.mxu0 0
        %4628 = vmatpush1.bf16.msra.mxu0 0
        %4629 = vmatprep.subr.bf16.mxu0 0
        %4630 = vmatpush1.bf16.msra.mxu0 0
        %4631 = vmatprep.subr.bf16.mxu0 0
        %4632 = vmatpush1.bf16.msra.mxu0 0
        %4633 = vmatprep.subr.bf16.mxu0 0
        %4634 = vmatpush1.bf16.msra.mxu0 0
        %4635 = vmatprep.subr.bf16.mxu0 0
        %4636 = vmatpush1.bf16.msra.mxu0 %v3322
        %4637 = vmatprep.subr.bf16.mxu0 0
        %4638 = vmatpush1.bf16.msra.mxu0 %v3321
        %4639 = vmatprep.subr.bf16.mxu0 0
        %4640 = vmatpush1.bf16.msra.mxu0 %v3320
        %4641 = vmatprep.subr.bf16.mxu0 0
        %4642 = vmatpush1.bf16.msra.mxu0 %v3319
        %4643 = vmatprep.subr.bf16.mxu0 0
        %4644 = vmatpush2.bf16.msra.mxu0 0
        %4645 = vmatprep.subr.bf16.mxu0 0
        %4646 = vmatpush2.bf16.msra.mxu0 0
        %4647 = vmatprep.subr.bf16.mxu0 0
        %4648 = vmatpush2.bf16.msra.mxu0 0
        %4649 = vmatprep.subr.bf16.mxu0 0
        %4650 = vmatpush2.bf16.msra.mxu0 0
        %4651 = vmatprep.subr.bf16.mxu0 0
        %4652 = vmatpush2.bf16.msra.mxu0 0
        %4653 = vmatprep.subr.bf16.mxu0 0
        %4654 = vmatpush2.bf16.msra.mxu0 0
        %4655 = vmatprep.subr.bf16.mxu0 0
        %4656 = vmatpush2.bf16.msra.mxu0 0
        %4657 = vmatprep.subr.bf16.mxu0 0
        %4658 = vmatpush2.bf16.msra.mxu0 0
        %4659 = vmatprep.mubr.bf16.mxu0 0
        %4660 = vmatmul.mubr.bf16.gmra.mxu0 %v4625
        %v4661 = vpop.f32.mrf.mxu0
        %v4662 = vadd.f32 0.0, %v4661
        %v4663 = vpop.f32.mrf.mxu0
        %v4664 = vpop.f32.mrf.mxu0
        %v4665 = vpop.f32.mrf.mxu0
        %4666 = vdwg.mxu0
        %v4668 = vsel %vm4451, %v4448, 0
        %4670 = vmatprep.subr.bf16.mxu0 0
        %4671 = vmatpush1.bf16.msra.mxu0 0
        %4672 = vmatprep.subr.bf16.mxu0 0
        %4673 = vmatpush1.bf16.msra.mxu0 0
        %4674 = vmatprep.subr.bf16.mxu0 0
        %4675 = vmatpush1.bf16.msra.mxu0 0
        %4676 = vmatprep.subr.bf16.mxu0 0
        %4677 = vmatpush1.bf16.msra.mxu0 0
        %4678 = vmatprep.subr.bf16.mxu0 0
        %4679 = vmatpush1.bf16.msra.mxu0 %v3326
        %4680 = vmatprep.subr.bf16.mxu0 0
        %4681 = vmatpush1.bf16.msra.mxu0 %v3325
        %4682 = vmatprep.subr.bf16.mxu0 0
        %4683 = vmatpush1.bf16.msra.mxu0 %v3324
        %4684 = vmatprep.subr.bf16.mxu0 0
        %4685 = vmatpush1.bf16.msra.mxu0 %v3323
        %4686 = vmatprep.subr.bf16.mxu0 0
        %4687 = vmatpush2.bf16.msra.mxu0 0
        %4688 = vmatprep.subr.bf16.mxu0 0
        %4689 = vmatpush2.bf16.msra.mxu0 0
        %4690 = vmatprep.subr.bf16.mxu0 0
        %4691 = vmatpush2.bf16.msra.mxu0 0
        %4692 = vmatprep.subr.bf16.mxu0 0
        %4693 = vmatpush2.bf16.msra.mxu0 0
        %4694 = vmatprep.subr.bf16.mxu0 0
        %4695 = vmatpush2.bf16.msra.mxu0 0
        %4696 = vmatprep.subr.bf16.mxu0 0
        %4697 = vmatpush2.bf16.msra.mxu0 0
        %4698 = vmatprep.subr.bf16.mxu0 0
        %4699 = vmatpush2.bf16.msra.mxu0 0
        %4700 = vmatprep.subr.bf16.mxu0 0
        %4701 = vmatpush2.bf16.msra.mxu0 0
        %4702 = vmatprep.mubr.bf16.mxu0 0
        %4703 = vmatmul.mubr.bf16.gmra.mxu0 %v4668
        %v4704 = vpop.f32.mrf.mxu0
        %v4705 = vadd.f32 0.0, %v4704
        %v4706 = vpop.f32.mrf.mxu0
        %v4707 = vpop.f32.mrf.mxu0
        %v4708 = vpop.f32.mrf.mxu0
        %4709 = vdwg.mxu0
        %v4711 = vsel %vm4451, %v4449, 0
        %4713 = vmatprep.subr.bf16.mxu0 0
        %4714 = vmatpush1.bf16.msra.mxu0 0
        %4715 = vmatprep.subr.bf16.mxu0 0
        %4716 = vmatpush1.bf16.msra.mxu0 0
        %4717 = vmatprep.subr.bf16.mxu0 0
        %4718 = vmatpush1.bf16.msra.mxu0 0
        %4719 = vmatprep.subr.bf16.mxu0 0
        %4720 = vmatpush1.bf16.msra.mxu0 0
        %4721 = vmatprep.subr.bf16.mxu0 0
        %4722 = vmatpush1.bf16.msra.mxu0 %v3330
        %4723 = vmatprep.subr.bf16.mxu0 0
        %4724 = vmatpush1.bf16.msra.mxu0 %v3329
        %4725 = vmatprep.subr.bf16.mxu0 0
        %4726 = vmatpush1.bf16.msra.mxu0 %v3328
        %4727 = vmatprep.subr.bf16.mxu0 0
        %4728 = vmatpush1.bf16.msra.mxu0 %v3327
        %4729 = vmatprep.subr.bf16.mxu0 0
        %4730 = vmatpush2.bf16.msra.mxu0 0
        %4731 = vmatprep.subr.bf16.mxu0 0
        %4732 = vmatpush2.bf16.msra.mxu0 0
        %4733 = vmatprep.subr.bf16.mxu0 0
        %4734 = vmatpush2.bf16.msra.mxu0 0
        %4735 = vmatprep.subr.bf16.mxu0 0
        %4736 = vmatpush2.bf16.msra.mxu0 0
        %4737 = vmatprep.subr.bf16.mxu0 0
        %4738 = vmatpush2.bf16.msra.mxu0 0
        %4739 = vmatprep.subr.bf16.mxu0 0
        %4740 = vmatpush2.bf16.msra.mxu0 0
        %4741 = vmatprep.subr.bf16.mxu0 0
        %4742 = vmatpush2.bf16.msra.mxu0 0
        %4743 = vmatprep.subr.bf16.mxu0 0
        %4744 = vmatpush2.bf16.msra.mxu0 0
        %4745 = vmatprep.mubr.bf16.mxu0 0
        %4746 = vmatmul.mubr.bf16.gmra.mxu0 %v4711
        %v4747 = vpop.f32.mrf.mxu0
        %v4748 = vadd.f32 0.0, %v4747
        %v4749 = vpop.f32.mrf.mxu0
        %v4750 = vpop.f32.mrf.mxu0
        %v4751 = vpop.f32.mrf.mxu0
        %4752 = vdwg.mxu0
        %v4754 = vsel %vm4451, %v4450, 0
        %4756 = vmatprep.subr.bf16.mxu0 0
        %4757 = vmatpush1.bf16.msra.mxu0 0
        %4758 = vmatprep.subr.bf16.mxu0 0
        %4759 = vmatpush1.bf16.msra.mxu0 0
        %4760 = vmatprep.subr.bf16.mxu0 0
        %4761 = vmatpush1.bf16.msra.mxu0 0
        %4762 = vmatprep.subr.bf16.mxu0 0
        %4763 = vmatpush1.bf16.msra.mxu0 0
        %4764 = vmatprep.subr.bf16.mxu0 0
        %4765 = vmatpush1.bf16.msra.mxu0 %v3334
        %4766 = vmatprep.subr.bf16.mxu0 0
        %4767 = vmatpush1.bf16.msra.mxu0 %v3333
        %4768 = vmatprep.subr.bf16.mxu0 0
        %4769 = vmatpush1.bf16.msra.mxu0 %v3332
        %4770 = vmatprep.subr.bf16.mxu0 0
        %4771 = vmatpush1.bf16.msra.mxu0 %v3331
        %4772 = vmatprep.subr.bf16.mxu0 0
        %4773 = vmatpush2.bf16.msra.mxu0 0
        %4774 = vmatprep.subr.bf16.mxu0 0
        %4775 = vmatpush2.bf16.msra.mxu0 0
        %4776 = vmatprep.subr.bf16.mxu0 0
        %4777 = vmatpush2.bf16.msra.mxu0 0
        %4778 = vmatprep.subr.bf16.mxu0 0
        %4779 = vmatpush2.bf16.msra.mxu0 0
        %4780 = vmatprep.subr.bf16.mxu0 0
        %4781 = vmatpush2.bf16.msra.mxu0 0
        %4782 = vmatprep.subr.bf16.mxu0 0
        %4783 = vmatpush2.bf16.msra.mxu0 0
        %4784 = vmatprep.subr.bf16.mxu0 0
        %4785 = vmatpush2.bf16.msra.mxu0 0
        %4786 = vmatprep.subr.bf16.mxu0 0
        %4787 = vmatpush2.bf16.msra.mxu0 0
        %4788 = vmatprep.mubr.bf16.mxu0 0
        %4789 = vmatmul.mubr.bf16.gmra.mxu0 %v4754
        %v4790 = vpop.f32.mrf.mxu0
        %v4791 = vadd.f32 0.0, %v4790
        %v4792 = vpop.f32.mrf.mxu0
        %v4793 = vpop.f32.mrf.mxu0
        %v4794 = vpop.f32.mrf.mxu0
        %4795 = vdwg.mxu0
        %v4796 = vpack.c.bf16 %v4490, %v4490
        %v4797 = vpack.c.bf16 %v4533, %v4533
        %v4798 = vpack.c.bf16 %v4576, %v4576
        %v4799 = vpack.c.bf16 %v4619, %v4619
        %v4800 = vpack.c.bf16 %v4662, %v4662
        %v4801 = vpack.c.bf16 %v4705, %v4705
        %v4802 = vpack.c.bf16 %v4748, %v4748
        %v4803 = vpack.c.bf16 %v4791, %v4791
        %v4804 = vpack.c.bf16 %v2091, %v2091
        %4805 = vmatprep.subr.bf16.mxu0 0
        %4806 = vmatpush1.bf16.msra.mxu0 %v2418
        %4807 = vmatprep.subr.bf16.mxu0 0
        %4808 = vmatpush1.bf16.msra.mxu0 %v2417
        %4809 = vmatprep.subr.bf16.mxu0 0
        %4810 = vmatpush1.bf16.msra.mxu0 %v2416
        %4811 = vmatprep.subr.bf16.mxu0 0
        %4812 = vmatpush1.bf16.msra.mxu0 %v2415
        %4813 = vmatprep.subr.bf16.mxu0 0
        %4814 = vmatpush1.bf16.msra.mxu0 %v2414
        %4815 = vmatprep.subr.bf16.mxu0 0
        %4816 = vmatpush1.bf16.msra.mxu0 %v2413
        %4817 = vmatprep.subr.bf16.mxu0 0
        %4818 = vmatpush1.bf16.msra.mxu0 %v2412
        %4819 = vmatprep.subr.bf16.mxu0 0
        %4820 = vmatpush1.bf16.msra.mxu0 %v2411
        %4821 = vmatprep.subr.bf16.mxu0 0
        %4822 = vmatpush2.bf16.msra.mxu0 0
        %4823 = vmatprep.subr.bf16.mxu0 0
        %4824 = vmatpush2.bf16.msra.mxu0 0
        %4825 = vmatprep.subr.bf16.mxu0 0
        %4826 = vmatpush2.bf16.msra.mxu0 0
        %4827 = vmatprep.subr.bf16.mxu0 0
        %4828 = vmatpush2.bf16.msra.mxu0 0
        %4829 = vmatprep.subr.bf16.mxu0 0
        %4830 = vmatpush2.bf16.msra.mxu0 0
        %4831 = vmatprep.subr.bf16.mxu0 0
        %4832 = vmatpush2.bf16.msra.mxu0 0
        %4833 = vmatprep.subr.bf16.mxu0 0
        %4834 = vmatpush2.bf16.msra.mxu0 0
        %4835 = vmatprep.subr.bf16.mxu0 0
        %4836 = vmatpush2.bf16.msra.mxu0 0
        %4837 = vmatprep.mubr.bf16.mxu0 0
        %4838 = vmatmul.mubr.bf16.gmra.mxu0 %v4804
        %v4839 = vpop.f32.mrf.mxu0
        %v4840 = vadd.f32 0.0, %v4839
        %v4841 = vpop.f32.mrf.mxu0
        %v4842 = vpop.f32.mrf.mxu0
        %v4843 = vpop.f32.mrf.mxu0
        %4844 = vdwg.mxu0
        %v4846 = vcombine.high %v4840, %v4840
        %v4848 = vunpack.c.l.s4 1966171168
        %v4849 = vunpack.c.0.s8 %v4848
        %v4850 = vlaneseq
        %v4851 = vshrl.u32 %v4850, 7
        %v4852 = vsub.s32 %v4849, %v4851
        %v4853 = vrot.slane %v4840, %v4852
        %v4855 = vunpack.c.l.s4 1966171168
        %v4856 = vunpack.c.0.s8 %v4855
        %v4857 = vlaneseq
        %v4858 = vshrl.u32 %v4857, 7
        %v4859 = vsub.s32 %v4856, %v4858
        %v4860 = vrot.slane %v4846, %v4859
        %v4861 = vcombine.high %v4853, %v4853
        %v4862 = vcombine.high %v4860, %v4860
        %v4864 = vunpack.c.l.s4 1966171168
        %v4865 = vunpack.c.0.s8 %v4864
        %v4866 = vlaneseq
        %v4867 = vshrl.u32 %v4866, 7
        %v4868 = vsub.s32 %v4865, %v4867
        %v4869 = vrot.slane %v4853, %v4868
        %v4871 = vunpack.c.l.s4 1966171168
        %v4872 = vunpack.c.0.s8 %v4871
        %v4873 = vlaneseq
        %v4874 = vshrl.u32 %v4873, 7
        %v4875 = vsub.s32 %v4872, %v4874
        %v4876 = vrot.slane %v4860, %v4875
        %v4878 = vunpack.c.l.s4 1966171168
        %v4879 = vunpack.c.0.s8 %v4878
        %v4880 = vlaneseq
        %v4881 = vshrl.u32 %v4880, 7
        %v4882 = vsub.s32 %v4879, %v4881
        %v4883 = vrot.slane %v4861, %v4882
        %v4885 = vunpack.c.l.s4 1966171168
        %v4886 = vunpack.c.0.s8 %v4885
        %v4887 = vlaneseq
        %v4888 = vshrl.u32 %v4887, 7
        %v4889 = vsub.s32 %v4886, %v4888
        %v4890 = vrot.slane %v4862, %v4889
        %v4891 = vcombine.high %v4869, %v4869
        %v4892 = vcombine.high %v4876, %v4876
        %v4893 = vcombine.high %v4883, %v4883
        %v4894 = vcombine.high %v4890, %v4890
        %v4903 = vpack.c.bf16 %v4869, %v4869
        %v4904 = vpack.c.bf16 %v4883, %v4883
        %v4905 = vpack.c.bf16 %v4891, %v4891
        %v4906 = vpack.c.bf16 %v4893, %v4893
        %v4907 = vpack.c.bf16 %v4876, %v4876
        %v4908 = vpack.c.bf16 %v4890, %v4890
        %v4909 = vpack.c.bf16 %v4892, %v4892
        %v4910 = vpack.c.bf16 %v4894, %v4894
        %4911 = vmatprep.subr.bf16.mxu0 0
        %4912 = vmatpush1.bf16.xpose.msra.mxu0 0
        %4913 = vmatprep.subr.bf16.mxu0 0
        %4914 = vmatpush1.bf16.xpose.msra.mxu0 0
        %4915 = vmatprep.subr.bf16.mxu0 0
        %4916 = vmatpush1.bf16.xpose.msra.mxu0 0
        %4917 = vmatprep.subr.bf16.mxu0 0
        %4918 = vmatpush1.bf16.xpose.msra.mxu0 0
        %4919 = vmatprep.subr.bf16.mxu0 0
        %4920 = vmatpush1.bf16.xpose.msra.mxu0 %v2896
        %4921 = vmatprep.subr.bf16.mxu0 0
        %4922 = vmatpush1.bf16.xpose.msra.mxu0 %v2895
        %4923 = vmatprep.subr.bf16.mxu0 0
        %4924 = vmatpush1.bf16.xpose.msra.mxu0 %v2894
        %4925 = vmatprep.subr.bf16.mxu0 0
        %4926 = vmatpush1.bf16.xpose.msra.mxu0 %v2893
        %4927 = vmatprep.subr.bf16.mxu0 0
        %4928 = vmatpush2.bf16.xpose.msra.mxu0 0
        %4929 = vmatprep.subr.bf16.mxu0 0
        %4930 = vmatpush2.bf16.xpose.msra.mxu0 0
        %4931 = vmatprep.subr.bf16.mxu0 0
        %4932 = vmatpush2.bf16.xpose.msra.mxu0 0
        %4933 = vmatprep.subr.bf16.mxu0 0
        %4934 = vmatpush2.bf16.xpose.msra.mxu0 0
        %4935 = vmatprep.subr.bf16.mxu0 0
        %4936 = vmatpush2.bf16.xpose.msra.mxu0 0
        %4937 = vmatprep.subr.bf16.mxu0 0
        %4938 = vmatpush2.bf16.xpose.msra.mxu0 0
        %4939 = vmatprep.subr.bf16.mxu0 0
        %4940 = vmatpush2.bf16.xpose.msra.mxu0 0
        %4941 = vmatprep.subr.bf16.mxu0 0
        %4942 = vmatpush2.bf16.xpose.msra.mxu0 0
        %4943 = vmatprep.mubr.bf16.mxu0 0
        %4944 = vmatmul.mubr.bf16.gmra.mxu0 %v4903
        %v4945 = vpop.f32.mrf.mxu0
        %v4946 = vadd.f32 0.0, %v4945
        %v4947 = vpop.f32.mrf.mxu0
        %v4948 = vpop.f32.mrf.mxu0
        %v4949 = vpop.f32.mrf.mxu0
        %4950 = vdwg.mxu0
        %4951 = vmatprep.subr.bf16.mxu0 0
        %4952 = vmatpush1.bf16.xpose.msra.mxu0 0
        %4953 = vmatprep.subr.bf16.mxu0 0
        %4954 = vmatpush1.bf16.xpose.msra.mxu0 0
        %4955 = vmatprep.subr.bf16.mxu0 0
        %4956 = vmatpush1.bf16.xpose.msra.mxu0 0
        %4957 = vmatprep.subr.bf16.mxu0 0
        %4958 = vmatpush1.bf16.xpose.msra.mxu0 0
        %4959 = vmatprep.subr.bf16.mxu0 0
        %4960 = vmatpush1.bf16.xpose.msra.mxu0 %v2900
        %4961 = vmatprep.subr.bf16.mxu0 0
        %4962 = vmatpush1.bf16.xpose.msra.mxu0 %v2899
        %4963 = vmatprep.subr.bf16.mxu0 0
        %4964 = vmatpush1.bf16.xpose.msra.mxu0 %v2898
        %4965 = vmatprep.subr.bf16.mxu0 0
        %4966 = vmatpush1.bf16.xpose.msra.mxu0 %v2897
        %4967 = vmatprep.subr.bf16.mxu0 0
        %4968 = vmatpush2.bf16.xpose.msra.mxu0 0
        %4969 = vmatprep.subr.bf16.mxu0 0
        %4970 = vmatpush2.bf16.xpose.msra.mxu0 0
        %4971 = vmatprep.subr.bf16.mxu0 0
        %4972 = vmatpush2.bf16.xpose.msra.mxu0 0
        %4973 = vmatprep.subr.bf16.mxu0 0
        %4974 = vmatpush2.bf16.xpose.msra.mxu0 0
        %4975 = vmatprep.subr.bf16.mxu0 0
        %4976 = vmatpush2.bf16.xpose.msra.mxu0 0
        %4977 = vmatprep.subr.bf16.mxu0 0
        %4978 = vmatpush2.bf16.xpose.msra.mxu0 0
        %4979 = vmatprep.subr.bf16.mxu0 0
        %4980 = vmatpush2.bf16.xpose.msra.mxu0 0
        %4981 = vmatprep.subr.bf16.mxu0 0
        %4982 = vmatpush2.bf16.xpose.msra.mxu0 0
        %4983 = vmatprep.mubr.bf16.mxu0 0
        %4984 = vmatmul.mubr.bf16.gmra.mxu0 %v4904
        %v4985 = vpop.f32.mrf.mxu0
        %v4986 = vadd.f32 0.0, %v4985
        %v4987 = vpop.f32.mrf.mxu0
        %v4988 = vpop.f32.mrf.mxu0
        %v4989 = vpop.f32.mrf.mxu0
        %4990 = vdwg.mxu0
        %4991 = vmatprep.subr.bf16.mxu0 0
        %4992 = vmatpush1.bf16.xpose.msra.mxu0 0
        %4993 = vmatprep.subr.bf16.mxu0 0
        %4994 = vmatpush1.bf16.xpose.msra.mxu0 0
        %4995 = vmatprep.subr.bf16.mxu0 0
        %4996 = vmatpush1.bf16.xpose.msra.mxu0 0
        %4997 = vmatprep.subr.bf16.mxu0 0
        %4998 = vmatpush1.bf16.xpose.msra.mxu0 0
        %4999 = vmatprep.subr.bf16.mxu0 0
        %5000 = vmatpush1.bf16.xpose.msra.mxu0 %v2904
        %5001 = vmatprep.subr.bf16.mxu0 0
        %5002 = vmatpush1.bf16.xpose.msra.mxu0 %v2903
        %5003 = vmatprep.subr.bf16.mxu0 0
        %5004 = vmatpush1.bf16.xpose.msra.mxu0 %v2902
        %5005 = vmatprep.subr.bf16.mxu0 0
        %5006 = vmatpush1.bf16.xpose.msra.mxu0 %v2901
        %5007 = vmatprep.subr.bf16.mxu0 0
        %5008 = vmatpush2.bf16.xpose.msra.mxu0 0
        %5009 = vmatprep.subr.bf16.mxu0 0
        %5010 = vmatpush2.bf16.xpose.msra.mxu0 0
        %5011 = vmatprep.subr.bf16.mxu0 0
        %5012 = vmatpush2.bf16.xpose.msra.mxu0 0
        %5013 = vmatprep.subr.bf16.mxu0 0
        %5014 = vmatpush2.bf16.xpose.msra.mxu0 0
        %5015 = vmatprep.subr.bf16.mxu0 0
        %5016 = vmatpush2.bf16.xpose.msra.mxu0 0
        %5017 = vmatprep.subr.bf16.mxu0 0
        %5018 = vmatpush2.bf16.xpose.msra.mxu0 0
        %5019 = vmatprep.subr.bf16.mxu0 0
        %5020 = vmatpush2.bf16.xpose.msra.mxu0 0
        %5021 = vmatprep.subr.bf16.mxu0 0
        %5022 = vmatpush2.bf16.xpose.msra.mxu0 0
        %5023 = vmatprep.mubr.bf16.mxu0 0
        %5024 = vmatmul.mubr.bf16.gmra.mxu0 %v4905
        %v5025 = vpop.f32.mrf.mxu0
        %v5026 = vadd.f32 0.0, %v5025
        %v5027 = vpop.f32.mrf.mxu0
        %v5028 = vpop.f32.mrf.mxu0
        %v5029 = vpop.f32.mrf.mxu0
        %5030 = vdwg.mxu0
        %5031 = vmatprep.subr.bf16.mxu0 0
        %5032 = vmatpush1.bf16.xpose.msra.mxu0 0
        %5033 = vmatprep.subr.bf16.mxu0 0
        %5034 = vmatpush1.bf16.xpose.msra.mxu0 0
        %5035 = vmatprep.subr.bf16.mxu0 0
        %5036 = vmatpush1.bf16.xpose.msra.mxu0 0
        %5037 = vmatprep.subr.bf16.mxu0 0
        %5038 = vmatpush1.bf16.xpose.msra.mxu0 0
        %5039 = vmatprep.subr.bf16.mxu0 0
        %5040 = vmatpush1.bf16.xpose.msra.mxu0 %v2908
        %5041 = vmatprep.subr.bf16.mxu0 0
        %5042 = vmatpush1.bf16.xpose.msra.mxu0 %v2907
        %5043 = vmatprep.subr.bf16.mxu0 0
        %5044 = vmatpush1.bf16.xpose.msra.mxu0 %v2906
        %5045 = vmatprep.subr.bf16.mxu0 0
        %5046 = vmatpush1.bf16.xpose.msra.mxu0 %v2905
        %5047 = vmatprep.subr.bf16.mxu0 0
        %5048 = vmatpush2.bf16.xpose.msra.mxu0 0
        %5049 = vmatprep.subr.bf16.mxu0 0
        %5050 = vmatpush2.bf16.xpose.msra.mxu0 0
        %5051 = vmatprep.subr.bf16.mxu0 0
        %5052 = vmatpush2.bf16.xpose.msra.mxu0 0
        %5053 = vmatprep.subr.bf16.mxu0 0
        %5054 = vmatpush2.bf16.xpose.msra.mxu0 0
        %5055 = vmatprep.subr.bf16.mxu0 0
        %5056 = vmatpush2.bf16.xpose.msra.mxu0 0
        %5057 = vmatprep.subr.bf16.mxu0 0
        %5058 = vmatpush2.bf16.xpose.msra.mxu0 0
        %5059 = vmatprep.subr.bf16.mxu0 0
        %5060 = vmatpush2.bf16.xpose.msra.mxu0 0
        %5061 = vmatprep.subr.bf16.mxu0 0
        %5062 = vmatpush2.bf16.xpose.msra.mxu0 0
        %5063 = vmatprep.mubr.bf16.mxu0 0
        %5064 = vmatmul.mubr.bf16.gmra.mxu0 %v4906
        %v5065 = vpop.f32.mrf.mxu0
        %v5066 = vadd.f32 0.0, %v5065
        %v5067 = vpop.f32.mrf.mxu0
        %v5068 = vpop.f32.mrf.mxu0
        %v5069 = vpop.f32.mrf.mxu0
        %5070 = vdwg.mxu0
        %5071 = vmatprep.subr.bf16.mxu0 0
        %5072 = vmatpush1.bf16.xpose.msra.mxu0 0
        %5073 = vmatprep.subr.bf16.mxu0 0
        %5074 = vmatpush1.bf16.xpose.msra.mxu0 0
        %5075 = vmatprep.subr.bf16.mxu0 0
        %5076 = vmatpush1.bf16.xpose.msra.mxu0 0
        %5077 = vmatprep.subr.bf16.mxu0 0
        %5078 = vmatpush1.bf16.xpose.msra.mxu0 0
        %5079 = vmatprep.subr.bf16.mxu0 0
        %5080 = vmatpush1.bf16.xpose.msra.mxu0 %v2912
        %5081 = vmatprep.subr.bf16.mxu0 0
        %5082 = vmatpush1.bf16.xpose.msra.mxu0 %v2911
        %5083 = vmatprep.subr.bf16.mxu0 0
        %5084 = vmatpush1.bf16.xpose.msra.mxu0 %v2910
        %5085 = vmatprep.subr.bf16.mxu0 0
        %5086 = vmatpush1.bf16.xpose.msra.mxu0 %v2909
        %5087 = vmatprep.subr.bf16.mxu0 0
        %5088 = vmatpush2.bf16.xpose.msra.mxu0 0
        %5089 = vmatprep.subr.bf16.mxu0 0
        %5090 = vmatpush2.bf16.xpose.msra.mxu0 0
        %5091 = vmatprep.subr.bf16.mxu0 0
        %5092 = vmatpush2.bf16.xpose.msra.mxu0 0
        %5093 = vmatprep.subr.bf16.mxu0 0
        %5094 = vmatpush2.bf16.xpose.msra.mxu0 0
        %5095 = vmatprep.subr.bf16.mxu0 0
        %5096 = vmatpush2.bf16.xpose.msra.mxu0 0
        %5097 = vmatprep.subr.bf16.mxu0 0
        %5098 = vmatpush2.bf16.xpose.msra.mxu0 0
        %5099 = vmatprep.subr.bf16.mxu0 0
        %5100 = vmatpush2.bf16.xpose.msra.mxu0 0
        %5101 = vmatprep.subr.bf16.mxu0 0
        %5102 = vmatpush2.bf16.xpose.msra.mxu0 0
        %5103 = vmatprep.mubr.bf16.mxu0 0
        %5104 = vmatmul.mubr.bf16.gmra.mxu0 %v4907
        %v5105 = vpop.f32.mrf.mxu0
        %v5106 = vadd.f32 0.0, %v5105
        %v5107 = vpop.f32.mrf.mxu0
        %v5108 = vpop.f32.mrf.mxu0
        %v5109 = vpop.f32.mrf.mxu0
        %5110 = vdwg.mxu0
        %5111 = vmatprep.subr.bf16.mxu0 0
        %5112 = vmatpush1.bf16.xpose.msra.mxu0 0
        %5113 = vmatprep.subr.bf16.mxu0 0
        %5114 = vmatpush1.bf16.xpose.msra.mxu0 0
        %5115 = vmatprep.subr.bf16.mxu0 0
        %5116 = vmatpush1.bf16.xpose.msra.mxu0 0
        %5117 = vmatprep.subr.bf16.mxu0 0
        %5118 = vmatpush1.bf16.xpose.msra.mxu0 0
        %5119 = vmatprep.subr.bf16.mxu0 0
        %5120 = vmatpush1.bf16.xpose.msra.mxu0 %v2916
        %5121 = vmatprep.subr.bf16.mxu0 0
        %5122 = vmatpush1.bf16.xpose.msra.mxu0 %v2915
        %5123 = vmatprep.subr.bf16.mxu0 0
        %5124 = vmatpush1.bf16.xpose.msra.mxu0 %v2914
        %5125 = vmatprep.subr.bf16.mxu0 0
        %5126 = vmatpush1.bf16.xpose.msra.mxu0 %v2913
        %5127 = vmatprep.subr.bf16.mxu0 0
        %5128 = vmatpush2.bf16.xpose.msra.mxu0 0
        %5129 = vmatprep.subr.bf16.mxu0 0
        %5130 = vmatpush2.bf16.xpose.msra.mxu0 0
        %5131 = vmatprep.subr.bf16.mxu0 0
        %5132 = vmatpush2.bf16.xpose.msra.mxu0 0
        %5133 = vmatprep.subr.bf16.mxu0 0
        %5134 = vmatpush2.bf16.xpose.msra.mxu0 0
        %5135 = vmatprep.subr.bf16.mxu0 0
        %5136 = vmatpush2.bf16.xpose.msra.mxu0 0
        %5137 = vmatprep.subr.bf16.mxu0 0
        %5138 = vmatpush2.bf16.xpose.msra.mxu0 0
        %5139 = vmatprep.subr.bf16.mxu0 0
        %5140 = vmatpush2.bf16.xpose.msra.mxu0 0
        %5141 = vmatprep.subr.bf16.mxu0 0
        %5142 = vmatpush2.bf16.xpose.msra.mxu0 0
        %5143 = vmatprep.mubr.bf16.mxu0 0
        %5144 = vmatmul.mubr.bf16.gmra.mxu0 %v4908
        %v5145 = vpop.f32.mrf.mxu0
        %v5146 = vadd.f32 0.0, %v5145
        %v5147 = vpop.f32.mrf.mxu0
        %v5148 = vpop.f32.mrf.mxu0
        %v5149 = vpop.f32.mrf.mxu0
        %5150 = vdwg.mxu0
        %5151 = vmatprep.subr.bf16.mxu0 0
        %5152 = vmatpush1.bf16.xpose.msra.mxu0 0
        %5153 = vmatprep.subr.bf16.mxu0 0
        %5154 = vmatpush1.bf16.xpose.msra.mxu0 0
        %5155 = vmatprep.subr.bf16.mxu0 0
        %5156 = vmatpush1.bf16.xpose.msra.mxu0 0
        %5157 = vmatprep.subr.bf16.mxu0 0
        %5158 = vmatpush1.bf16.xpose.msra.mxu0 0
        %5159 = vmatprep.subr.bf16.mxu0 0
        %5160 = vmatpush1.bf16.xpose.msra.mxu0 %v2920
        %5161 = vmatprep.subr.bf16.mxu0 0
        %5162 = vmatpush1.bf16.xpose.msra.mxu0 %v2919
        %5163 = vmatprep.subr.bf16.mxu0 0
        %5164 = vmatpush1.bf16.xpose.msra.mxu0 %v2918
        %5165 = vmatprep.subr.bf16.mxu0 0
        %5166 = vmatpush1.bf16.xpose.msra.mxu0 %v2917
        %5167 = vmatprep.subr.bf16.mxu0 0
        %5168 = vmatpush2.bf16.xpose.msra.mxu0 0
        %5169 = vmatprep.subr.bf16.mxu0 0
        %5170 = vmatpush2.bf16.xpose.msra.mxu0 0
        %5171 = vmatprep.subr.bf16.mxu0 0
        %5172 = vmatpush2.bf16.xpose.msra.mxu0 0
        %5173 = vmatprep.subr.bf16.mxu0 0
        %5174 = vmatpush2.bf16.xpose.msra.mxu0 0
        %5175 = vmatprep.subr.bf16.mxu0 0
        %5176 = vmatpush2.bf16.xpose.msra.mxu0 0
        %5177 = vmatprep.subr.bf16.mxu0 0
        %5178 = vmatpush2.bf16.xpose.msra.mxu0 0
        %5179 = vmatprep.subr.bf16.mxu0 0
        %5180 = vmatpush2.bf16.xpose.msra.mxu0 0
        %5181 = vmatprep.subr.bf16.mxu0 0
        %5182 = vmatpush2.bf16.xpose.msra.mxu0 0
        %5183 = vmatprep.mubr.bf16.mxu0 0
        %5184 = vmatmul.mubr.bf16.gmra.mxu0 %v4909
        %v5185 = vpop.f32.mrf.mxu0
        %v5186 = vadd.f32 0.0, %v5185
        %v5187 = vpop.f32.mrf.mxu0
        %v5188 = vpop.f32.mrf.mxu0
        %v5189 = vpop.f32.mrf.mxu0
        %5190 = vdwg.mxu0
        %5191 = vmatprep.subr.bf16.mxu0 0
        %5192 = vmatpush1.bf16.xpose.msra.mxu0 0
        %5193 = vmatprep.subr.bf16.mxu0 0
        %5194 = vmatpush1.bf16.xpose.msra.mxu0 0
        %5195 = vmatprep.subr.bf16.mxu0 0
        %5196 = vmatpush1.bf16.xpose.msra.mxu0 0
        %5197 = vmatprep.subr.bf16.mxu0 0
        %5198 = vmatpush1.bf16.xpose.msra.mxu0 0
        %5199 = vmatprep.subr.bf16.mxu0 0
        %5200 = vmatpush1.bf16.xpose.msra.mxu0 %v2924
        %5201 = vmatprep.subr.bf16.mxu0 0
        %5202 = vmatpush1.bf16.xpose.msra.mxu0 %v2923
        %5203 = vmatprep.subr.bf16.mxu0 0
        %5204 = vmatpush1.bf16.xpose.msra.mxu0 %v2922
        %5205 = vmatprep.subr.bf16.mxu0 0
        %5206 = vmatpush1.bf16.xpose.msra.mxu0 %v2921
        %5207 = vmatprep.subr.bf16.mxu0 0
        %5208 = vmatpush2.bf16.xpose.msra.mxu0 0
        %5209 = vmatprep.subr.bf16.mxu0 0
        %5210 = vmatpush2.bf16.xpose.msra.mxu0 0
        %5211 = vmatprep.subr.bf16.mxu0 0
        %5212 = vmatpush2.bf16.xpose.msra.mxu0 0
        %5213 = vmatprep.subr.bf16.mxu0 0
        %5214 = vmatpush2.bf16.xpose.msra.mxu0 0
        %5215 = vmatprep.subr.bf16.mxu0 0
        %5216 = vmatpush2.bf16.xpose.msra.mxu0 0
        %5217 = vmatprep.subr.bf16.mxu0 0
        %5218 = vmatpush2.bf16.xpose.msra.mxu0 0
        %5219 = vmatprep.subr.bf16.mxu0 0
        %5220 = vmatpush2.bf16.xpose.msra.mxu0 0
        %5221 = vmatprep.subr.bf16.mxu0 0
        %5222 = vmatpush2.bf16.xpose.msra.mxu0 0
        %5223 = vmatprep.mubr.bf16.mxu0 0
        %5224 = vmatmul.mubr.bf16.gmra.mxu0 %v4910
        %v5225 = vpop.f32.mrf.mxu0
        %v5226 = vadd.f32 0.0, %v5225
        %v5227 = vpop.f32.mrf.mxu0
        %v5228 = vpop.f32.mrf.mxu0
        %v5229 = vpop.f32.mrf.mxu0
        %5230 = vdwg.mxu0
        %v5231 = vmul.f32 %v4946, 0.088388346
        %v5232 = vmul.f32 %v4986, 0.088388346
        %v5233 = vmul.f32 %v5026, 0.088388346
        %v5234 = vmul.f32 %v5066, 0.088388346
        %v5235 = vmul.f32 %v5106, 0.088388346
        %v5236 = vmul.f32 %v5146, 0.088388346
        %v5237 = vmul.f32 %v5186, 0.088388346
        %v5238 = vmul.f32 %v5226, 0.088388346
        %v5239 = vadd.f32 %v5231, %v2360
        %v5240 = vadd.f32 %v5232, %v2360
        %v5241 = vadd.f32 %v5233, %v2360
        %v5242 = vadd.f32 %v5234, %v2360
        %v5243 = vadd.f32 %v5235, %v2360
        %v5244 = vadd.f32 %v5236, %v2360
        %v5245 = vadd.f32 %v5237, %v2360
        %v5246 = vadd.f32 %v5238, %v2360
        %v5247 = vsel %vm4354, %v5239, -inf
        %5248 = vmax.xlane.f32.xlu0 %v5247
        %v5249 = vpop.xlane.xlu0 %5248
        %v5250 = vsel %vm4354, %v5240, -inf
        %5251 = vmax.xlane.f32.xlu0 %v5250
        %v5252 = vpop.xlane.xlu0 %5251
        %v5253 = vsel %vm4354, %v5241, -inf
        %5254 = vmax.xlane.f32.xlu0 %v5253
        %v5255 = vpop.xlane.xlu0 %5254
        %v5256 = vsel %vm4354, %v5242, -inf
        %5257 = vmax.xlane.f32.xlu0 %v5256
        %v5258 = vpop.xlane.xlu0 %5257
        %v5259 = vsel %vm4354, %v5243, -inf
        %5260 = vmax.xlane.f32.xlu0 %v5259
        %v5261 = vpop.xlane.xlu0 %5260
        %v5262 = vsel %vm4354, %v5244, -inf
        %5263 = vmax.xlane.f32.xlu0 %v5262
        %v5264 = vpop.xlane.xlu0 %5263
        %v5265 = vsel %vm4354, %v5245, -inf
        %5266 = vmax.xlane.f32.xlu0 %v5265
        %v5267 = vpop.xlane.xlu0 %5266
        %v5268 = vsel %vm4354, %v5246, -inf
        %5269 = vmax.xlane.f32.xlu0 %v5268
        %v5270 = vpop.xlane.xlu0 %5269
        %v5271 = vsub.f32 %v5239, %v5249
        %v5272 = vsub.f32 %v5240, %v5252
        %v5273 = vsub.f32 %v5241, %v5255
        %v5274 = vsub.f32 %v5242, %v5258
        %v5275 = vsub.f32 %v5243, %v5261
        %v5276 = vsub.f32 %v5244, %v5264
        %v5277 = vsub.f32 %v5245, %v5267
        %v5278 = vsub.f32 %v5246, %v5270
        %v5279 = vmul.f32 %v5271, 1.442695
        %v5280 = vpow.pop %v5279
        %v5281 = vmul.f32 %v5272, 1.442695
        %v5282 = vpow.pop %v5281
        %v5283 = vmul.f32 %v5273, 1.442695
        %v5284 = vpow.pop %v5283
        %v5285 = vmul.f32 %v5274, 1.442695
        %v5286 = vpow.pop %v5285
        %v5287 = vmul.f32 %v5275, 1.442695
        %v5288 = vpow.pop %v5287
        %v5289 = vmul.f32 %v5276, 1.442695
        %v5290 = vpow.pop %v5289
        %v5291 = vmul.f32 %v5277, 1.442695
        %v5292 = vpow.pop %v5291
        %v5293 = vmul.f32 %v5278, 1.442695
        %v5294 = vpow.pop %v5293
        %v5295 = vsel %vm4354, %v5280, 0.0
        %5296 = vadd.xlane.f32.xlu0 %v5295
        %v5297 = vpop.xlane.xlu0 %5296
        %v5298 = vsel %vm4354, %v5282, 0.0
        %5299 = vadd.xlane.f32.xlu0 %v5298
        %v5300 = vpop.xlane.xlu0 %5299
        %v5301 = vsel %vm4354, %v5284, 0.0
        %5302 = vadd.xlane.f32.xlu0 %v5301
        %v5303 = vpop.xlane.xlu0 %5302
        %v5304 = vsel %vm4354, %v5286, 0.0
        %5305 = vadd.xlane.f32.xlu0 %v5304
        %v5306 = vpop.xlane.xlu0 %5305
        %v5307 = vsel %vm4354, %v5288, 0.0
        %5308 = vadd.xlane.f32.xlu0 %v5307
        %v5309 = vpop.xlane.xlu0 %5308
        %v5310 = vsel %vm4354, %v5290, 0.0
        %5311 = vadd.xlane.f32.xlu0 %v5310
        %v5312 = vpop.xlane.xlu0 %5311
        %v5313 = vsel %vm4354, %v5292, 0.0
        %5314 = vadd.xlane.f32.xlu0 %v5313
        %v5315 = vpop.xlane.xlu0 %5314
        %v5316 = vsel %vm4354, %v5294, 0.0
        %5317 = vadd.xlane.f32.xlu0 %v5316
        %v5318 = vpop.xlane.xlu0 %5317
        %v5319 = vrcp.pop %v5297
        %v5320 = vrcp.pop %v5300
        %v5321 = vrcp.pop %v5303
        %v5322 = vrcp.pop %v5306
        %v5323 = vrcp.pop %v5309
        %v5324 = vrcp.pop %v5312
        %v5325 = vrcp.pop %v5315
        %v5326 = vrcp.pop %v5318
        %v5327 = vmul.f32 %v5280, %v5319
        %v5328 = vmul.f32 %v5282, %v5320
        %v5329 = vmul.f32 %v5284, %v5321
        %v5330 = vmul.f32 %v5286, %v5322
        %v5331 = vmul.f32 %v5288, %v5323
        %v5332 = vmul.f32 %v5290, %v5324
        %v5333 = vmul.f32 %v5292, %v5325
        %v5334 = vmul.f32 %v5294, %v5326
        %v5335 = vpack.c.bf16 %v5327, %v5327
        %v5336 = vpack.c.bf16 %v5328, %v5328
        %v5337 = vpack.c.bf16 %v5329, %v5329
        %v5338 = vpack.c.bf16 %v5330, %v5330
        %v5339 = vpack.c.bf16 %v5331, %v5331
        %v5340 = vpack.c.bf16 %v5332, %v5332
        %v5341 = vpack.c.bf16 %v5333, %v5333
        %v5342 = vpack.c.bf16 %v5334, %v5334
        %v5344 = vsel %vm4451, %v5335, 0
        %5346 = vmatprep.subr.bf16.mxu0 0
        %5347 = vmatpush1.bf16.msra.mxu0 0
        %5348 = vmatprep.subr.bf16.mxu0 0
        %5349 = vmatpush1.bf16.msra.mxu0 0
        %5350 = vmatprep.subr.bf16.mxu0 0
        %5351 = vmatpush1.bf16.msra.mxu0 0
        %5352 = vmatprep.subr.bf16.mxu0 0
        %5353 = vmatpush1.bf16.msra.mxu0 0
        %5354 = vmatprep.subr.bf16.mxu0 0
        %5355 = vmatpush1.bf16.msra.mxu0 %v3306
        %5356 = vmatprep.subr.bf16.mxu0 0
        %5357 = vmatpush1.bf16.msra.mxu0 %v3305
        %5358 = vmatprep.subr.bf16.mxu0 0
        %5359 = vmatpush1.bf16.msra.mxu0 %v3304
        %5360 = vmatprep.subr.bf16.mxu0 0
        %5361 = vmatpush1.bf16.msra.mxu0 %v3303
        %5362 = vmatprep.subr.bf16.mxu0 0
        %5363 = vmatpush2.bf16.msra.mxu0 0
        %5364 = vmatprep.subr.bf16.mxu0 0
        %5365 = vmatpush2.bf16.msra.mxu0 0
        %5366 = vmatprep.subr.bf16.mxu0 0
        %5367 = vmatpush2.bf16.msra.mxu0 0
        %5368 = vmatprep.subr.bf16.mxu0 0
        %5369 = vmatpush2.bf16.msra.mxu0 0
        %5370 = vmatprep.subr.bf16.mxu0 0
        %5371 = vmatpush2.bf16.msra.mxu0 0
        %5372 = vmatprep.subr.bf16.mxu0 0
        %5373 = vmatpush2.bf16.msra.mxu0 0
        %5374 = vmatprep.subr.bf16.mxu0 0
        %5375 = vmatpush2.bf16.msra.mxu0 0
        %5376 = vmatprep.subr.bf16.mxu0 0
        %5377 = vmatpush2.bf16.msra.mxu0 0
        %5378 = vmatprep.mubr.bf16.mxu0 0
        %5379 = vmatmul.mubr.bf16.gmra.mxu0 %v5344
        %v5380 = vpop.f32.mrf.mxu0
        %v5381 = vadd.f32 0.0, %v5380
        %v5382 = vpop.f32.mrf.mxu0
        %v5383 = vpop.f32.mrf.mxu0
        %v5384 = vpop.f32.mrf.mxu0
        %5385 = vdwg.mxu0
        %v5387 = vsel %vm4451, %v5336, 0
        %5389 = vmatprep.subr.bf16.mxu0 0
        %5390 = vmatpush1.bf16.msra.mxu0 0
        %5391 = vmatprep.subr.bf16.mxu0 0
        %5392 = vmatpush1.bf16.msra.mxu0 0
        %5393 = vmatprep.subr.bf16.mxu0 0
        %5394 = vmatpush1.bf16.msra.mxu0 0
        %5395 = vmatprep.subr.bf16.mxu0 0
        %5396 = vmatpush1.bf16.msra.mxu0 0
        %5397 = vmatprep.subr.bf16.mxu0 0
        %5398 = vmatpush1.bf16.msra.mxu0 %v3310
        %5399 = vmatprep.subr.bf16.mxu0 0
        %5400 = vmatpush1.bf16.msra.mxu0 %v3309
        %5401 = vmatprep.subr.bf16.mxu0 0
        %5402 = vmatpush1.bf16.msra.mxu0 %v3308
        %5403 = vmatprep.subr.bf16.mxu0 0
        %5404 = vmatpush1.bf16.msra.mxu0 %v3307
        %5405 = vmatprep.subr.bf16.mxu0 0
        %5406 = vmatpush2.bf16.msra.mxu0 0
        %5407 = vmatprep.subr.bf16.mxu0 0
        %5408 = vmatpush2.bf16.msra.mxu0 0
        %5409 = vmatprep.subr.bf16.mxu0 0
        %5410 = vmatpush2.bf16.msra.mxu0 0
        %5411 = vmatprep.subr.bf16.mxu0 0
        %5412 = vmatpush2.bf16.msra.mxu0 0
        %5413 = vmatprep.subr.bf16.mxu0 0
        %5414 = vmatpush2.bf16.msra.mxu0 0
        %5415 = vmatprep.subr.bf16.mxu0 0
        %5416 = vmatpush2.bf16.msra.mxu0 0
        %5417 = vmatprep.subr.bf16.mxu0 0
        %5418 = vmatpush2.bf16.msra.mxu0 0
        %5419 = vmatprep.subr.bf16.mxu0 0
        %5420 = vmatpush2.bf16.msra.mxu0 0
        %5421 = vmatprep.mubr.bf16.mxu0 0
        %5422 = vmatmul.mubr.bf16.gmra.mxu0 %v5387
        %v5423 = vpop.f32.mrf.mxu0
        %v5424 = vadd.f32 0.0, %v5423
        %v5425 = vpop.f32.mrf.mxu0
        %v5426 = vpop.f32.mrf.mxu0
        %v5427 = vpop.f32.mrf.mxu0
        %5428 = vdwg.mxu0
        %v5430 = vsel %vm4451, %v5337, 0
        %5432 = vmatprep.subr.bf16.mxu0 0
        %5433 = vmatpush1.bf16.msra.mxu0 0
        %5434 = vmatprep.subr.bf16.mxu0 0
        %5435 = vmatpush1.bf16.msra.mxu0 0
        %5436 = vmatprep.subr.bf16.mxu0 0
        %5437 = vmatpush1.bf16.msra.mxu0 0
        %5438 = vmatprep.subr.bf16.mxu0 0
        %5439 = vmatpush1.bf16.msra.mxu0 0
        %5440 = vmatprep.subr.bf16.mxu0 0
        %5441 = vmatpush1.bf16.msra.mxu0 %v3314
        %5442 = vmatprep.subr.bf16.mxu0 0
        %5443 = vmatpush1.bf16.msra.mxu0 %v3313
        %5444 = vmatprep.subr.bf16.mxu0 0
        %5445 = vmatpush1.bf16.msra.mxu0 %v3312
        %5446 = vmatprep.subr.bf16.mxu0 0
        %5447 = vmatpush1.bf16.msra.mxu0 %v3311
        %5448 = vmatprep.subr.bf16.mxu0 0
        %5449 = vmatpush2.bf16.msra.mxu0 0
        %5450 = vmatprep.subr.bf16.mxu0 0
        %5451 = vmatpush2.bf16.msra.mxu0 0
        %5452 = vmatprep.subr.bf16.mxu0 0
        %5453 = vmatpush2.bf16.msra.mxu0 0
        %5454 = vmatprep.subr.bf16.mxu0 0
        %5455 = vmatpush2.bf16.msra.mxu0 0
        %5456 = vmatprep.subr.bf16.mxu0 0
        %5457 = vmatpush2.bf16.msra.mxu0 0
        %5458 = vmatprep.subr.bf16.mxu0 0
        %5459 = vmatpush2.bf16.msra.mxu0 0
        %5460 = vmatprep.subr.bf16.mxu0 0
        %5461 = vmatpush2.bf16.msra.mxu0 0
        %5462 = vmatprep.subr.bf16.mxu0 0
        %5463 = vmatpush2.bf16.msra.mxu0 0
        %5464 = vmatprep.mubr.bf16.mxu0 0
        %5465 = vmatmul.mubr.bf16.gmra.mxu0 %v5430
        %v5466 = vpop.f32.mrf.mxu0
        %v5467 = vadd.f32 0.0, %v5466
        %v5468 = vpop.f32.mrf.mxu0
        %v5469 = vpop.f32.mrf.mxu0
        %v5470 = vpop.f32.mrf.mxu0
        %5471 = vdwg.mxu0
        %v5473 = vsel %vm4451, %v5338, 0
        %5475 = vmatprep.subr.bf16.mxu0 0
        %5476 = vmatpush1.bf16.msra.mxu0 0
        %5477 = vmatprep.subr.bf16.mxu0 0
        %5478 = vmatpush1.bf16.msra.mxu0 0
        %5479 = vmatprep.subr.bf16.mxu0 0
        %5480 = vmatpush1.bf16.msra.mxu0 0
        %5481 = vmatprep.subr.bf16.mxu0 0
        %5482 = vmatpush1.bf16.msra.mxu0 0
        %5483 = vmatprep.subr.bf16.mxu0 0
        %5484 = vmatpush1.bf16.msra.mxu0 %v3318
        %5485 = vmatprep.subr.bf16.mxu0 0
        %5486 = vmatpush1.bf16.msra.mxu0 %v3317
        %5487 = vmatprep.subr.bf16.mxu0 0
        %5488 = vmatpush1.bf16.msra.mxu0 %v3316
        %5489 = vmatprep.subr.bf16.mxu0 0
        %5490 = vmatpush1.bf16.msra.mxu0 %v3315
        %5491 = vmatprep.subr.bf16.mxu0 0
        %5492 = vmatpush2.bf16.msra.mxu0 0
        %5493 = vmatprep.subr.bf16.mxu0 0
        %5494 = vmatpush2.bf16.msra.mxu0 0
        %5495 = vmatprep.subr.bf16.mxu0 0
        %5496 = vmatpush2.bf16.msra.mxu0 0
        %5497 = vmatprep.subr.bf16.mxu0 0
        %5498 = vmatpush2.bf16.msra.mxu0 0
        %5499 = vmatprep.subr.bf16.mxu0 0
        %5500 = vmatpush2.bf16.msra.mxu0 0
        %5501 = vmatprep.subr.bf16.mxu0 0
        %5502 = vmatpush2.bf16.msra.mxu0 0
        %5503 = vmatprep.subr.bf16.mxu0 0
        %5504 = vmatpush2.bf16.msra.mxu0 0
        %5505 = vmatprep.subr.bf16.mxu0 0
        %5506 = vmatpush2.bf16.msra.mxu0 0
        %5507 = vmatprep.mubr.bf16.mxu0 0
        %5508 = vmatmul.mubr.bf16.gmra.mxu0 %v5473
        %v5509 = vpop.f32.mrf.mxu0
        %v5510 = vadd.f32 0.0, %v5509
        %v5511 = vpop.f32.mrf.mxu0
        %v5512 = vpop.f32.mrf.mxu0
        %v5513 = vpop.f32.mrf.mxu0
        %5514 = vdwg.mxu0
        %v5516 = vsel %vm4451, %v5339, 0
        %5518 = vmatprep.subr.bf16.mxu0 0
        %5519 = vmatpush1.bf16.msra.mxu0 0
        %5520 = vmatprep.subr.bf16.mxu0 0
        %5521 = vmatpush1.bf16.msra.mxu0 0
        %5522 = vmatprep.subr.bf16.mxu0 0
        %5523 = vmatpush1.bf16.msra.mxu0 0
        %5524 = vmatprep.subr.bf16.mxu0 0
        %5525 = vmatpush1.bf16.msra.mxu0 0
        %5526 = vmatprep.subr.bf16.mxu0 0
        %5527 = vmatpush1.bf16.msra.mxu0 %v3322
        %5528 = vmatprep.subr.bf16.mxu0 0
        %5529 = vmatpush1.bf16.msra.mxu0 %v3321
        %5530 = vmatprep.subr.bf16.mxu0 0
        %5531 = vmatpush1.bf16.msra.mxu0 %v3320
        %5532 = vmatprep.subr.bf16.mxu0 0
        %5533 = vmatpush1.bf16.msra.mxu0 %v3319
        %5534 = vmatprep.subr.bf16.mxu0 0
        %5535 = vmatpush2.bf16.msra.mxu0 0
        %5536 = vmatprep.subr.bf16.mxu0 0
        %5537 = vmatpush2.bf16.msra.mxu0 0
        %5538 = vmatprep.subr.bf16.mxu0 0
        %5539 = vmatpush2.bf16.msra.mxu0 0
        %5540 = vmatprep.subr.bf16.mxu0 0
        %5541 = vmatpush2.bf16.msra.mxu0 0
        %5542 = vmatprep.subr.bf16.mxu0 0
        %5543 = vmatpush2.bf16.msra.mxu0 0
        %5544 = vmatprep.subr.bf16.mxu0 0
        %5545 = vmatpush2.bf16.msra.mxu0 0
        %5546 = vmatprep.subr.bf16.mxu0 0
        %5547 = vmatpush2.bf16.msra.mxu0 0
        %5548 = vmatprep.subr.bf16.mxu0 0
        %5549 = vmatpush2.bf16.msra.mxu0 0
        %5550 = vmatprep.mubr.bf16.mxu0 0
        %5551 = vmatmul.mubr.bf16.gmra.mxu0 %v5516
        %v5552 = vpop.f32.mrf.mxu0
        %v5553 = vadd.f32 0.0, %v5552
        %v5554 = vpop.f32.mrf.mxu0
        %v5555 = vpop.f32.mrf.mxu0
        %v5556 = vpop.f32.mrf.mxu0
        %5557 = vdwg.mxu0
        %v5559 = vsel %vm4451, %v5340, 0
        %5561 = vmatprep.subr.bf16.mxu0 0
        %5562 = vmatpush1.bf16.msra.mxu0 0
        %5563 = vmatprep.subr.bf16.mxu0 0
        %5564 = vmatpush1.bf16.msra.mxu0 0
        %5565 = vmatprep.subr.bf16.mxu0 0
        %5566 = vmatpush1.bf16.msra.mxu0 0
        %5567 = vmatprep.subr.bf16.mxu0 0
        %5568 = vmatpush1.bf16.msra.mxu0 0
        %5569 = vmatprep.subr.bf16.mxu0 0
        %5570 = vmatpush1.bf16.msra.mxu0 %v3326
        %5571 = vmatprep.subr.bf16.mxu0 0
        %5572 = vmatpush1.bf16.msra.mxu0 %v3325
        %5573 = vmatprep.subr.bf16.mxu0 0
        %5574 = vmatpush1.bf16.msra.mxu0 %v3324
        %5575 = vmatprep.subr.bf16.mxu0 0
        %5576 = vmatpush1.bf16.msra.mxu0 %v3323
        %5577 = vmatprep.subr.bf16.mxu0 0
        %5578 = vmatpush2.bf16.msra.mxu0 0
        %5579 = vmatprep.subr.bf16.mxu0 0
        %5580 = vmatpush2.bf16.msra.mxu0 0
        %5581 = vmatprep.subr.bf16.mxu0 0
        %5582 = vmatpush2.bf16.msra.mxu0 0
        %5583 = vmatprep.subr.bf16.mxu0 0
        %5584 = vmatpush2.bf16.msra.mxu0 0
        %5585 = vmatprep.subr.bf16.mxu0 0
        %5586 = vmatpush2.bf16.msra.mxu0 0
        %5587 = vmatprep.subr.bf16.mxu0 0
        %5588 = vmatpush2.bf16.msra.mxu0 0
        %5589 = vmatprep.subr.bf16.mxu0 0
        %5590 = vmatpush2.bf16.msra.mxu0 0
        %5591 = vmatprep.subr.bf16.mxu0 0
        %5592 = vmatpush2.bf16.msra.mxu0 0
        %5593 = vmatprep.mubr.bf16.mxu0 0
        %5594 = vmatmul.mubr.bf16.gmra.mxu0 %v5559
        %v5595 = vpop.f32.mrf.mxu0
        %v5596 = vadd.f32 0.0, %v5595
        %v5597 = vpop.f32.mrf.mxu0
        %v5598 = vpop.f32.mrf.mxu0
        %v5599 = vpop.f32.mrf.mxu0
        %5600 = vdwg.mxu0
        %v5602 = vsel %vm4451, %v5341, 0
        %5604 = vmatprep.subr.bf16.mxu0 0
        %5605 = vmatpush1.bf16.msra.mxu0 0
        %5606 = vmatprep.subr.bf16.mxu0 0
        %5607 = vmatpush1.bf16.msra.mxu0 0
        %5608 = vmatprep.subr.bf16.mxu0 0
        %5609 = vmatpush1.bf16.msra.mxu0 0
        %5610 = vmatprep.subr.bf16.mxu0 0
        %5611 = vmatpush1.bf16.msra.mxu0 0
        %5612 = vmatprep.subr.bf16.mxu0 0
        %5613 = vmatpush1.bf16.msra.mxu0 %v3330
        %5614 = vmatprep.subr.bf16.mxu0 0
        %5615 = vmatpush1.bf16.msra.mxu0 %v3329
        %5616 = vmatprep.subr.bf16.mxu0 0
        %5617 = vmatpush1.bf16.msra.mxu0 %v3328
        %5618 = vmatprep.subr.bf16.mxu0 0
        %5619 = vmatpush1.bf16.msra.mxu0 %v3327
        %5620 = vmatprep.subr.bf16.mxu0 0
        %5621 = vmatpush2.bf16.msra.mxu0 0
        %5622 = vmatprep.subr.bf16.mxu0 0
        %5623 = vmatpush2.bf16.msra.mxu0 0
        %5624 = vmatprep.subr.bf16.mxu0 0
        %5625 = vmatpush2.bf16.msra.mxu0 0
        %5626 = vmatprep.subr.bf16.mxu0 0
        %5627 = vmatpush2.bf16.msra.mxu0 0
        %5628 = vmatprep.subr.bf16.mxu0 0
        %5629 = vmatpush2.bf16.msra.mxu0 0
        %5630 = vmatprep.subr.bf16.mxu0 0
        %5631 = vmatpush2.bf16.msra.mxu0 0
        %5632 = vmatprep.subr.bf16.mxu0 0
        %5633 = vmatpush2.bf16.msra.mxu0 0
        %5634 = vmatprep.subr.bf16.mxu0 0
        %5635 = vmatpush2.bf16.msra.mxu0 0
        %5636 = vmatprep.mubr.bf16.mxu0 0
        %5637 = vmatmul.mubr.bf16.gmra.mxu0 %v5602
        %v5638 = vpop.f32.mrf.mxu0
        %v5639 = vadd.f32 0.0, %v5638
        %v5640 = vpop.f32.mrf.mxu0
        %v5641 = vpop.f32.mrf.mxu0
        %v5642 = vpop.f32.mrf.mxu0
        %5643 = vdwg.mxu0
        %v5645 = vsel %vm4451, %v5342, 0
        %5647 = vmatprep.subr.bf16.mxu0 0
        %5648 = vmatpush1.bf16.msra.mxu0 0
        %5649 = vmatprep.subr.bf16.mxu0 0
        %5650 = vmatpush1.bf16.msra.mxu0 0
        %5651 = vmatprep.subr.bf16.mxu0 0
        %5652 = vmatpush1.bf16.msra.mxu0 0
        %5653 = vmatprep.subr.bf16.mxu0 0
        %5654 = vmatpush1.bf16.msra.mxu0 0
        %5655 = vmatprep.subr.bf16.mxu0 0
        %5656 = vmatpush1.bf16.msra.mxu0 %v3334
        %5657 = vmatprep.subr.bf16.mxu0 0
        %5658 = vmatpush1.bf16.msra.mxu0 %v3333
        %5659 = vmatprep.subr.bf16.mxu0 0
        %5660 = vmatpush1.bf16.msra.mxu0 %v3332
        %5661 = vmatprep.subr.bf16.mxu0 0
        %5662 = vmatpush1.bf16.msra.mxu0 %v3331
        %5663 = vmatprep.subr.bf16.mxu0 0
        %5664 = vmatpush2.bf16.msra.mxu0 0
        %5665 = vmatprep.subr.bf16.mxu0 0
        %5666 = vmatpush2.bf16.msra.mxu0 0
        %5667 = vmatprep.subr.bf16.mxu0 0
        %5668 = vmatpush2.bf16.msra.mxu0 0
        %5669 = vmatprep.subr.bf16.mxu0 0
        %5670 = vmatpush2.bf16.msra.mxu0 0
        %5671 = vmatprep.subr.bf16.mxu0 0
        %5672 = vmatpush2.bf16.msra.mxu0 0
        %5673 = vmatprep.subr.bf16.mxu0 0
        %5674 = vmatpush2.bf16.msra.mxu0 0
        %5675 = vmatprep.subr.bf16.mxu0 0
        %5676 = vmatpush2.bf16.msra.mxu0 0
        %5677 = vmatprep.subr.bf16.mxu0 0
        %5678 = vmatpush2.bf16.msra.mxu0 0
        %5679 = vmatprep.mubr.bf16.mxu0 0
        %5680 = vmatmul.mubr.bf16.gmra.mxu0 %v5645
        %v5681 = vpop.f32.mrf.mxu0
        %v5682 = vadd.f32 0.0, %v5681
        %v5683 = vpop.f32.mrf.mxu0
        %v5684 = vpop.f32.mrf.mxu0
        %v5685 = vpop.f32.mrf.mxu0
        %5686 = vdwg.mxu0
        %v5687 = vpack.c.bf16 %v5381, %v5381
        %v5688 = vpack.c.bf16 %v5424, %v5424
        %v5689 = vpack.c.bf16 %v5467, %v5467
        %v5690 = vpack.c.bf16 %v5510, %v5510
        %v5691 = vpack.c.bf16 %v5553, %v5553
        %v5692 = vpack.c.bf16 %v5596, %v5596
        %v5693 = vpack.c.bf16 %v5639, %v5639
        %v5694 = vpack.c.bf16 %v5682, %v5682
        %v5695 = vpack.c.bf16 %v2255, %v2255
        %5696 = vmatprep.subr.bf16.mxu0 0
        %5697 = vmatpush1.bf16.msra.mxu0 %v2418
        %5698 = vmatprep.subr.bf16.mxu0 0
        %5699 = vmatpush1.bf16.msra.mxu0 %v2417
        %5700 = vmatprep.subr.bf16.mxu0 0
        %5701 = vmatpush1.bf16.msra.mxu0 %v2416
        %5702 = vmatprep.subr.bf16.mxu0 0
        %5703 = vmatpush1.bf16.msra.mxu0 %v2415
        %5704 = vmatprep.subr.bf16.mxu0 0
        %5705 = vmatpush1.bf16.msra.mxu0 %v2414
        %5706 = vmatprep.subr.bf16.mxu0 0
        %5707 = vmatpush1.bf16.msra.mxu0 %v2413
        %5708 = vmatprep.subr.bf16.mxu0 0
        %5709 = vmatpush1.bf16.msra.mxu0 %v2412
        %5710 = vmatprep.subr.bf16.mxu0 0
        %5711 = vmatpush1.bf16.msra.mxu0 %v2411
        %5712 = vmatprep.subr.bf16.mxu0 0
        %5713 = vmatpush2.bf16.msra.mxu0 0
        %5714 = vmatprep.subr.bf16.mxu0 0
        %5715 = vmatpush2.bf16.msra.mxu0 0
        %5716 = vmatprep.subr.bf16.mxu0 0
        %5717 = vmatpush2.bf16.msra.mxu0 0
        %5718 = vmatprep.subr.bf16.mxu0 0
        %5719 = vmatpush2.bf16.msra.mxu0 0
        %5720 = vmatprep.subr.bf16.mxu0 0
        %5721 = vmatpush2.bf16.msra.mxu0 0
        %5722 = vmatprep.subr.bf16.mxu0 0
        %5723 = vmatpush2.bf16.msra.mxu0 0
        %5724 = vmatprep.subr.bf16.mxu0 0
        %5725 = vmatpush2.bf16.msra.mxu0 0
        %5726 = vmatprep.subr.bf16.mxu0 0
        %5727 = vmatpush2.bf16.msra.mxu0 0
        %5728 = vmatprep.mubr.bf16.mxu0 0
        %5729 = vmatmul.mubr.bf16.gmra.mxu0 %v5695
        %v5730 = vpop.f32.mrf.mxu0
        %v5731 = vadd.f32 0.0, %v5730
        %v5732 = vpop.f32.mrf.mxu0
        %v5733 = vpop.f32.mrf.mxu0
        %v5734 = vpop.f32.mrf.mxu0
        %5735 = vdwg.mxu0
        %v5737 = vcombine.high %v5731, %v5731
        %v5739 = vunpack.c.l.s4 1966171168
        %v5740 = vunpack.c.0.s8 %v5739
        %v5741 = vlaneseq
        %v5742 = vshrl.u32 %v5741, 7
        %v5743 = vsub.s32 %v5740, %v5742
        %v5744 = vrot.slane %v5731, %v5743
        %v5746 = vunpack.c.l.s4 1966171168
        %v5747 = vunpack.c.0.s8 %v5746
        %v5748 = vlaneseq
        %v5749 = vshrl.u32 %v5748, 7
        %v5750 = vsub.s32 %v5747, %v5749
        %v5751 = vrot.slane %v5737, %v5750
        %v5752 = vcombine.high %v5744, %v5744
        %v5753 = vcombine.high %v5751, %v5751
        %v5755 = vunpack.c.l.s4 1966171168
        %v5756 = vunpack.c.0.s8 %v5755
        %v5757 = vlaneseq
        %v5758 = vshrl.u32 %v5757, 7
        %v5759 = vsub.s32 %v5756, %v5758
        %v5760 = vrot.slane %v5744, %v5759
        %v5762 = vunpack.c.l.s4 1966171168
        %v5763 = vunpack.c.0.s8 %v5762
        %v5764 = vlaneseq
        %v5765 = vshrl.u32 %v5764, 7
        %v5766 = vsub.s32 %v5763, %v5765
        %v5767 = vrot.slane %v5751, %v5766
        %v5769 = vunpack.c.l.s4 1966171168
        %v5770 = vunpack.c.0.s8 %v5769
        %v5771 = vlaneseq
        %v5772 = vshrl.u32 %v5771, 7
        %v5773 = vsub.s32 %v5770, %v5772
        %v5774 = vrot.slane %v5752, %v5773
        %v5776 = vunpack.c.l.s4 1966171168
        %v5777 = vunpack.c.0.s8 %v5776
        %v5778 = vlaneseq
        %v5779 = vshrl.u32 %v5778, 7
        %v5780 = vsub.s32 %v5777, %v5779
        %v5781 = vrot.slane %v5753, %v5780
        %v5782 = vcombine.high %v5760, %v5760
        %v5783 = vcombine.high %v5767, %v5767
        %v5784 = vcombine.high %v5774, %v5774
        %v5785 = vcombine.high %v5781, %v5781
        %v5794 = vpack.c.bf16 %v5760, %v5760
        %v5795 = vpack.c.bf16 %v5774, %v5774
        %v5796 = vpack.c.bf16 %v5782, %v5782
        %v5797 = vpack.c.bf16 %v5784, %v5784
        %v5798 = vpack.c.bf16 %v5767, %v5767
        %v5799 = vpack.c.bf16 %v5781, %v5781
        %v5800 = vpack.c.bf16 %v5783, %v5783
        %v5801 = vpack.c.bf16 %v5785, %v5785
        %s5802 = scalar_lea.vmem %s387, 32 [#allocation2]
        %v5803 = vld [vmem:[%s5802] sm:$0xf]
        %v5804 = vld [vmem:[%s5802 + $0x4] sm:$0xf]
        %v5805 = vld [vmem:[%s5802 + $0x8] sm:$0xf]
        %v5806 = vld [vmem:[%s5802 + $0xc] sm:$0xf]
        %v5807 = vld [vmem:[%s5802 + $0x10] sm:$0xf]
        %v5808 = vld [vmem:[%s5802 + $0x14] sm:$0xf]
        %v5809 = vld [vmem:[%s5802 + $0x18] sm:$0xf]
        %v5810 = vld [vmem:[%s5802 + $0x1c] sm:$0xf]
        %v5811 = vld [vmem:[%s5802 + $0x40] sm:$0xf]
        %v5812 = vld [vmem:[%s5802 + $0x44] sm:$0xf]
        %v5813 = vld [vmem:[%s5802 + $0x48] sm:$0xf]
        %v5814 = vld [vmem:[%s5802 + $0x4c] sm:$0xf]
        %v5815 = vld [vmem:[%s5802 + $0x50] sm:$0xf]
        %v5816 = vld [vmem:[%s5802 + $0x54] sm:$0xf]
        %v5817 = vld [vmem:[%s5802 + $0x58] sm:$0xf]
        %v5818 = vld [vmem:[%s5802 + $0x5c] sm:$0xf]
        %v5819 = vld [vmem:[%s5802 + $0x80] sm:$0xf]
        %v5820 = vld [vmem:[%s5802 + $0x84] sm:$0xf]
        %v5821 = vld [vmem:[%s5802 + $0x88] sm:$0xf]
        %v5822 = vld [vmem:[%s5802 + $0x8c] sm:$0xf]
        %v5823 = vld [vmem:[%s5802 + $0x90] sm:$0xf]
        %v5824 = vld [vmem:[%s5802 + $0x94] sm:$0xf]
        %v5825 = vld [vmem:[%s5802 + $0x98] sm:$0xf]
        %v5826 = vld [vmem:[%s5802 + $0x9c] sm:$0xf]
        %v5827 = vld [vmem:[%s5802 + $0xc0] sm:$0xf]
        %v5828 = vld [vmem:[%s5802 + $0xc4] sm:$0xf]
        %v5829 = vld [vmem:[%s5802 + $0xc8] sm:$0xf]
        %v5830 = vld [vmem:[%s5802 + $0xcc] sm:$0xf]
        %v5831 = vld [vmem:[%s5802 + $0xd0] sm:$0xf]
        %v5832 = vld [vmem:[%s5802 + $0xd4] sm:$0xf]
        %v5833 = vld [vmem:[%s5802 + $0xd8] sm:$0xf]
        %v5834 = vld [vmem:[%s5802 + $0xdc] sm:$0xf]
        %v5835 = vld [vmem:[%s5802 + $0x100] sm:$0xf]
        %v5836 = vld [vmem:[%s5802 + $0x104] sm:$0xf]
        %v5837 = vld [vmem:[%s5802 + $0x108] sm:$0xf]
        %v5838 = vld [vmem:[%s5802 + $0x10c] sm:$0xf]
        %v5839 = vld [vmem:[%s5802 + $0x110] sm:$0xf]
        %v5840 = vld [vmem:[%s5802 + $0x114] sm:$0xf]
        %v5841 = vld [vmem:[%s5802 + $0x118] sm:$0xf]
        %v5842 = vld [vmem:[%s5802 + $0x11c] sm:$0xf]
        %v5843 = vld [vmem:[%s5802 + $0x140] sm:$0xf]
        %v5844 = vld [vmem:[%s5802 + $0x144] sm:$0xf]
        %v5845 = vld [vmem:[%s5802 + $0x148] sm:$0xf]
        %v5846 = vld [vmem:[%s5802 + $0x14c] sm:$0xf]
        %v5847 = vld [vmem:[%s5802 + $0x150] sm:$0xf]
        %v5848 = vld [vmem:[%s5802 + $0x154] sm:$0xf]
        %v5849 = vld [vmem:[%s5802 + $0x158] sm:$0xf]
        %v5850 = vld [vmem:[%s5802 + $0x15c] sm:$0xf]
        %v5851 = vld [vmem:[%s5802 + $0x180] sm:$0xf]
        %v5852 = vld [vmem:[%s5802 + $0x184] sm:$0xf]
        %v5853 = vld [vmem:[%s5802 + $0x188] sm:$0xf]
        %v5854 = vld [vmem:[%s5802 + $0x18c] sm:$0xf]
        %v5855 = vld [vmem:[%s5802 + $0x190] sm:$0xf]
        %v5856 = vld [vmem:[%s5802 + $0x194] sm:$0xf]
        %v5857 = vld [vmem:[%s5802 + $0x198] sm:$0xf]
        %v5858 = vld [vmem:[%s5802 + $0x19c] sm:$0xf]
        %v5859 = vld [vmem:[%s5802 + $0x1c0] sm:$0xf]
        %v5860 = vld [vmem:[%s5802 + $0x1c4] sm:$0xf]
        %v5861 = vld [vmem:[%s5802 + $0x1c8] sm:$0xf]
        %v5862 = vld [vmem:[%s5802 + $0x1cc] sm:$0xf]
        %v5863 = vld [vmem:[%s5802 + $0x1d0] sm:$0xf]
        %v5864 = vld [vmem:[%s5802 + $0x1d4] sm:$0xf]
        %v5865 = vld [vmem:[%s5802 + $0x1d8] sm:$0xf]
        %v5866 = vld [vmem:[%s5802 + $0x1dc] sm:$0xf]
        %v5868 = vpack.i.b16 %v5794, %v5794
        %v5870 = vlaneseq
        %v5871 = vshrl.u32 %v5870, 7
        %v5872 = vsub.s32 0, %v5871
        %v5873 = vrot.slane %v5868, %v5872
        %v5875 = vpack.i.b16 %v5795, %v5795
        %v5877 = vlaneseq
        %v5878 = vshrl.u32 %v5877, 7
        %v5879 = vsub.s32 0, %v5878
        %v5880 = vrot.slane %v5875, %v5879
        %v5882 = vpack.i.b16 %v5796, %v5796
        %v5884 = vlaneseq
        %v5885 = vshrl.u32 %v5884, 7
        %v5886 = vsub.s32 0, %v5885
        %v5887 = vrot.slane %v5882, %v5886
        %v5889 = vpack.i.b16 %v5797, %v5797
        %v5891 = vlaneseq
        %v5892 = vshrl.u32 %v5891, 7
        %v5893 = vsub.s32 0, %v5892
        %v5894 = vrot.slane %v5889, %v5893
        %v5896 = vpack.i.b16 %v5798, %v5798
        %v5898 = vlaneseq
        %v5899 = vshrl.u32 %v5898, 7
        %v5900 = vsub.s32 0, %v5899
        %v5901 = vrot.slane %v5896, %v5900
        %v5903 = vpack.i.b16 %v5799, %v5799
        %v5905 = vlaneseq
        %v5906 = vshrl.u32 %v5905, 7
        %v5907 = vsub.s32 0, %v5906
        %v5908 = vrot.slane %v5903, %v5907
        %v5910 = vpack.i.b16 %v5800, %v5800
        %v5912 = vlaneseq
        %v5913 = vshrl.u32 %v5912, 7
        %v5914 = vsub.s32 0, %v5913
        %v5915 = vrot.slane %v5910, %v5914
        %v5917 = vpack.i.b16 %v5801, %v5801
        %v5919 = vlaneseq
        %v5920 = vshrl.u32 %v5919, 7
        %v5921 = vsub.s32 0, %v5920
        %v5922 = vrot.slane %v5917, %v5921
        %v5987 = vunpack.c.l.b16 %v5803
        %v5988 = vunpack.c.l.b16 %v5804
        %v5989 = vunpack.c.l.b16 %v5805
        %v5990 = vunpack.c.l.b16 %v5806
        %v5991 = vunpack.c.l.b16 %v5807
        %v5992 = vunpack.c.l.b16 %v5808
        %v5993 = vunpack.c.l.b16 %v5809
        %v5994 = vunpack.c.l.b16 %v5810
        %v5995 = vunpack.c.l.b16 %v5811
        %v5996 = vunpack.c.l.b16 %v5812
        %v5997 = vunpack.c.l.b16 %v5813
        %v5998 = vunpack.c.l.b16 %v5814
        %v5999 = vunpack.c.l.b16 %v5815
        %v6000 = vunpack.c.l.b16 %v5816
        %v6001 = vunpack.c.l.b16 %v5817
        %v6002 = vunpack.c.l.b16 %v5818
        %v6003 = vunpack.c.l.b16 %v5819
        %v6004 = vunpack.c.l.b16 %v5820
        %v6005 = vunpack.c.l.b16 %v5821
        %v6006 = vunpack.c.l.b16 %v5822
        %v6007 = vunpack.c.l.b16 %v5823
        %v6008 = vunpack.c.l.b16 %v5824
        %v6009 = vunpack.c.l.b16 %v5825
        %v6010 = vunpack.c.l.b16 %v5826
        %v6011 = vunpack.c.l.b16 %v5827
        %v6012 = vunpack.c.l.b16 %v5828
        %v6013 = vunpack.c.l.b16 %v5829
        %v6014 = vunpack.c.l.b16 %v5830
        %v6015 = vunpack.c.l.b16 %v5831
        %v6016 = vunpack.c.l.b16 %v5832
        %v6017 = vunpack.c.l.b16 %v5833
        %v6018 = vunpack.c.l.b16 %v5834
        %v6019 = vunpack.c.l.b16 %v5835
        %v6020 = vunpack.c.l.b16 %v5836
        %v6021 = vunpack.c.l.b16 %v5837
        %v6022 = vunpack.c.l.b16 %v5838
        %v6023 = vunpack.c.l.b16 %v5839
        %v6024 = vunpack.c.l.b16 %v5840
        %v6025 = vunpack.c.l.b16 %v5841
        %v6026 = vunpack.c.l.b16 %v5842
        %v6027 = vunpack.c.l.b16 %v5843
        %v6028 = vunpack.c.l.b16 %v5844
        %v6029 = vunpack.c.l.b16 %v5845
        %v6030 = vunpack.c.l.b16 %v5846
        %v6031 = vunpack.c.l.b16 %v5847
        %v6032 = vunpack.c.l.b16 %v5848
        %v6033 = vunpack.c.l.b16 %v5849
        %v6034 = vunpack.c.l.b16 %v5850
        %v6035 = vunpack.c.l.b16 %v5851
        %v6036 = vunpack.c.l.b16 %v5852
        %v6037 = vunpack.c.l.b16 %v5853
        %v6038 = vunpack.c.l.b16 %v5854
        %v6039 = vunpack.c.l.b16 %v5855
        %v6040 = vunpack.c.l.b16 %v5856
        %v6041 = vunpack.c.l.b16 %v5857
        %v6042 = vunpack.c.l.b16 %v5858
        %v6043 = vunpack.c.l.b16 %v5859
        %v6044 = vunpack.c.l.b16 %v5860
        %v6045 = vunpack.c.l.b16 %v5861
        %v6046 = vunpack.c.l.b16 %v5862
        %v6047 = vunpack.c.l.b16 %v5863
        %v6048 = vunpack.c.l.b16 %v5864
        %v6049 = vunpack.c.l.b16 %v5865
        %v6050 = vunpack.c.l.b16 %v5866
        %v6051 = vpack.c.b16 %v5988, %v5987
        %v6052 = vpack.c.b16 %v5990, %v5989
        %v6053 = vpack.c.b16 %v5992, %v5991
        %v6054 = vpack.c.b16 %v5994, %v5993
        %v6055 = vpack.c.b16 %v5996, %v5995
        %v6056 = vpack.c.b16 %v5998, %v5997
        %v6057 = vpack.c.b16 %v6000, %v5999
        %v6058 = vpack.c.b16 %v6002, %v6001
        %v6059 = vpack.c.b16 %v6004, %v6003
        %v6060 = vpack.c.b16 %v6006, %v6005
        %v6061 = vpack.c.b16 %v6008, %v6007
        %v6062 = vpack.c.b16 %v6010, %v6009
        %v6063 = vpack.c.b16 %v6012, %v6011
        %v6064 = vpack.c.b16 %v6014, %v6013
        %v6065 = vpack.c.b16 %v6016, %v6015
        %v6066 = vpack.c.b16 %v6018, %v6017
        %v6067 = vpack.c.b16 %v6020, %v6019
        %v6068 = vpack.c.b16 %v6022, %v6021
        %v6069 = vpack.c.b16 %v6024, %v6023
        %v6070 = vpack.c.b16 %v6026, %v6025
        %v6071 = vpack.c.b16 %v6028, %v6027
        %v6072 = vpack.c.b16 %v6030, %v6029
        %v6073 = vpack.c.b16 %v6032, %v6031
        %v6074 = vpack.c.b16 %v6034, %v6033
        %v6075 = vpack.c.b16 %v6036, %v6035
        %v6076 = vpack.c.b16 %v6038, %v6037
        %v6077 = vpack.c.b16 %v6040, %v6039
        %v6078 = vpack.c.b16 %v6042, %v6041
        %v6079 = vpack.c.b16 %v6044, %v6043
        %v6080 = vpack.c.b16 %v6046, %v6045
        %v6081 = vpack.c.b16 %v6048, %v6047
        %v6082 = vpack.c.b16 %v6050, %v6049
        %v6115 = vsel %vm2697, %v5873, %v6051
        %v6116 = vsel %vm2698, %v5873, %v6052
        %v6117 = vsel %vm2699, %v5873, %v6053
        %v6118 = vsel %vm2700, %v5873, %v6054
        %v6119 = vsel %vm2697, %v5880, %v6055
        %v6120 = vsel %vm2698, %v5880, %v6056
        %v6121 = vsel %vm2699, %v5880, %v6057
        %v6122 = vsel %vm2700, %v5880, %v6058
        %v6123 = vsel %vm2697, %v5887, %v6059
        %v6124 = vsel %vm2698, %v5887, %v6060
        %v6125 = vsel %vm2699, %v5887, %v6061
        %v6126 = vsel %vm2700, %v5887, %v6062
        %v6127 = vsel %vm2697, %v5894, %v6063
        %v6128 = vsel %vm2698, %v5894, %v6064
        %v6129 = vsel %vm2699, %v5894, %v6065
        %v6130 = vsel %vm2700, %v5894, %v6066
        %v6131 = vsel %vm2697, %v5901, %v6067
        %v6132 = vsel %vm2698, %v5901, %v6068
        %v6133 = vsel %vm2699, %v5901, %v6069
        %v6134 = vsel %vm2700, %v5901, %v6070
        %v6135 = vsel %vm2697, %v5908, %v6071
        %v6136 = vsel %vm2698, %v5908, %v6072
        %v6137 = vsel %vm2699, %v5908, %v6073
        %v6138 = vsel %vm2700, %v5908, %v6074
        %v6139 = vsel %vm2697, %v5915, %v6075
        %v6140 = vsel %vm2698, %v5915, %v6076
        %v6141 = vsel %vm2699, %v5915, %v6077
        %v6142 = vsel %vm2700, %v5915, %v6078
        %v6143 = vsel %vm2697, %v5922, %v6079
        %v6144 = vsel %vm2698, %v5922, %v6080
        %v6145 = vsel %vm2699, %v5922, %v6081
        %v6146 = vsel %vm2700, %v5922, %v6082
        %v6148 = vcombine.high %v2337, %v2337
        %v6150 = vunpack.c.l.s4 1966171168
        %v6151 = vunpack.c.0.s8 %v6150
        %v6152 = vlaneseq
        %v6153 = vshrl.u32 %v6152, 7
        %v6154 = vsub.s32 %v6151, %v6153
        %v6155 = vrot.slane %v2337, %v6154
        %v6157 = vunpack.c.l.s4 1966171168
        %v6158 = vunpack.c.0.s8 %v6157
        %v6159 = vlaneseq
        %v6160 = vshrl.u32 %v6159, 7
        %v6161 = vsub.s32 %v6158, %v6160
        %v6162 = vrot.slane %v6148, %v6161
        %v6163 = vcombine.high %v6155, %v6155
        %v6164 = vcombine.high %v6162, %v6162
        %v6166 = vunpack.c.l.s4 1966171168
        %v6167 = vunpack.c.0.s8 %v6166
        %v6168 = vlaneseq
        %v6169 = vshrl.u32 %v6168, 7
        %v6170 = vsub.s32 %v6167, %v6169
        %v6171 = vrot.slane %v6155, %v6170
        %v6173 = vunpack.c.l.s4 1966171168
        %v6174 = vunpack.c.0.s8 %v6173
        %v6175 = vlaneseq
        %v6176 = vshrl.u32 %v6175, 7
        %v6177 = vsub.s32 %v6174, %v6176
        %v6178 = vrot.slane %v6162, %v6177
        %v6180 = vunpack.c.l.s4 1966171168
        %v6181 = vunpack.c.0.s8 %v6180
        %v6182 = vlaneseq
        %v6183 = vshrl.u32 %v6182, 7
        %v6184 = vsub.s32 %v6181, %v6183
        %v6185 = vrot.slane %v6163, %v6184
        %v6187 = vunpack.c.l.s4 1966171168
        %v6188 = vunpack.c.0.s8 %v6187
        %v6189 = vlaneseq
        %v6190 = vshrl.u32 %v6189, 7
        %v6191 = vsub.s32 %v6188, %v6190
        %v6192 = vrot.slane %v6164, %v6191
        %v6193 = vcombine.high %v6171, %v6171
        %v6194 = vcombine.high %v6178, %v6178
        %v6195 = vcombine.high %v6185, %v6185
        %v6196 = vcombine.high %v6192, %v6192
        %v6205 = vpack.c.bf16 %v6171, %v6171
        %v6206 = vpack.c.bf16 %v6185, %v6185
        %v6207 = vpack.c.bf16 %v6193, %v6193
        %v6208 = vpack.c.bf16 %v6195, %v6195
        %v6209 = vpack.c.bf16 %v6178, %v6178
        %v6210 = vpack.c.bf16 %v6192, %v6192
        %v6211 = vpack.c.bf16 %v6194, %v6194
        %v6212 = vpack.c.bf16 %v6196, %v6196
        %s6213 = scalar_lea.vmem %s396, 32 [#allocation5]
        %v6214 = vld [vmem:[%s6213] sm:$0xf]
        %v6215 = vld [vmem:[%s6213 + $0x4] sm:$0xf]
        %v6216 = vld [vmem:[%s6213 + $0x8] sm:$0xf]
        %v6217 = vld [vmem:[%s6213 + $0xc] sm:$0xf]
        %v6218 = vld [vmem:[%s6213 + $0x10] sm:$0xf]
        %v6219 = vld [vmem:[%s6213 + $0x14] sm:$0xf]
        %v6220 = vld [vmem:[%s6213 + $0x18] sm:$0xf]
        %v6221 = vld [vmem:[%s6213 + $0x1c] sm:$0xf]
        %v6222 = vld [vmem:[%s6213 + $0x40] sm:$0xf]
        %v6223 = vld [vmem:[%s6213 + $0x44] sm:$0xf]
        %v6224 = vld [vmem:[%s6213 + $0x48] sm:$0xf]
        %v6225 = vld [vmem:[%s6213 + $0x4c] sm:$0xf]
        %v6226 = vld [vmem:[%s6213 + $0x50] sm:$0xf]
        %v6227 = vld [vmem:[%s6213 + $0x54] sm:$0xf]
        %v6228 = vld [vmem:[%s6213 + $0x58] sm:$0xf]
        %v6229 = vld [vmem:[%s6213 + $0x5c] sm:$0xf]
        %v6230 = vld [vmem:[%s6213 + $0x80] sm:$0xf]
        %v6231 = vld [vmem:[%s6213 + $0x84] sm:$0xf]
        %v6232 = vld [vmem:[%s6213 + $0x88] sm:$0xf]
        %v6233 = vld [vmem:[%s6213 + $0x8c] sm:$0xf]
        %v6234 = vld [vmem:[%s6213 + $0x90] sm:$0xf]
        %v6235 = vld [vmem:[%s6213 + $0x94] sm:$0xf]
        %v6236 = vld [vmem:[%s6213 + $0x98] sm:$0xf]
        %v6237 = vld [vmem:[%s6213 + $0x9c] sm:$0xf]
        %v6238 = vld [vmem:[%s6213 + $0xc0] sm:$0xf]
        %v6239 = vld [vmem:[%s6213 + $0xc4] sm:$0xf]
        %v6240 = vld [vmem:[%s6213 + $0xc8] sm:$0xf]
        %v6241 = vld [vmem:[%s6213 + $0xcc] sm:$0xf]
        %v6242 = vld [vmem:[%s6213 + $0xd0] sm:$0xf]
        %v6243 = vld [vmem:[%s6213 + $0xd4] sm:$0xf]
        %v6244 = vld [vmem:[%s6213 + $0xd8] sm:$0xf]
        %v6245 = vld [vmem:[%s6213 + $0xdc] sm:$0xf]
        %v6246 = vld [vmem:[%s6213 + $0x100] sm:$0xf]
        %v6247 = vld [vmem:[%s6213 + $0x104] sm:$0xf]
        %v6248 = vld [vmem:[%s6213 + $0x108] sm:$0xf]
        %v6249 = vld [vmem:[%s6213 + $0x10c] sm:$0xf]
        %v6250 = vld [vmem:[%s6213 + $0x110] sm:$0xf]
        %v6251 = vld [vmem:[%s6213 + $0x114] sm:$0xf]
        %v6252 = vld [vmem:[%s6213 + $0x118] sm:$0xf]
        %v6253 = vld [vmem:[%s6213 + $0x11c] sm:$0xf]
        %v6254 = vld [vmem:[%s6213 + $0x140] sm:$0xf]
        %v6255 = vld [vmem:[%s6213 + $0x144] sm:$0xf]
        %v6256 = vld [vmem:[%s6213 + $0x148] sm:$0xf]
        %v6257 = vld [vmem:[%s6213 + $0x14c] sm:$0xf]
        %v6258 = vld [vmem:[%s6213 + $0x150] sm:$0xf]
        %v6259 = vld [vmem:[%s6213 + $0x154] sm:$0xf]
        %v6260 = vld [vmem:[%s6213 + $0x158] sm:$0xf]
        %v6261 = vld [vmem:[%s6213 + $0x15c] sm:$0xf]
        %v6262 = vld [vmem:[%s6213 + $0x180] sm:$0xf]
        %v6263 = vld [vmem:[%s6213 + $0x184] sm:$0xf]
        %v6264 = vld [vmem:[%s6213 + $0x188] sm:$0xf]
        %v6265 = vld [vmem:[%s6213 + $0x18c] sm:$0xf]
        %v6266 = vld [vmem:[%s6213 + $0x190] sm:$0xf]
        %v6267 = vld [vmem:[%s6213 + $0x194] sm:$0xf]
        %v6268 = vld [vmem:[%s6213 + $0x198] sm:$0xf]
        %v6269 = vld [vmem:[%s6213 + $0x19c] sm:$0xf]
        %v6270 = vld [vmem:[%s6213 + $0x1c0] sm:$0xf]
        %v6271 = vld [vmem:[%s6213 + $0x1c4] sm:$0xf]
        %v6272 = vld [vmem:[%s6213 + $0x1c8] sm:$0xf]
        %v6273 = vld [vmem:[%s6213 + $0x1cc] sm:$0xf]
        %v6274 = vld [vmem:[%s6213 + $0x1d0] sm:$0xf]
        %v6275 = vld [vmem:[%s6213 + $0x1d4] sm:$0xf]
        %v6276 = vld [vmem:[%s6213 + $0x1d8] sm:$0xf]
        %v6277 = vld [vmem:[%s6213 + $0x1dc] sm:$0xf]
        %v6279 = vpack.i.b16 %v6205, %v6205
        %v6281 = vlaneseq
        %v6282 = vshrl.u32 %v6281, 7
        %v6283 = vsub.s32 0, %v6282
        %v6284 = vrot.slane %v6279, %v6283
        %v6286 = vpack.i.b16 %v6206, %v6206
        %v6288 = vlaneseq
        %v6289 = vshrl.u32 %v6288, 7
        %v6290 = vsub.s32 0, %v6289
        %v6291 = vrot.slane %v6286, %v6290
        %v6293 = vpack.i.b16 %v6207, %v6207
        %v6295 = vlaneseq
        %v6296 = vshrl.u32 %v6295, 7
        %v6297 = vsub.s32 0, %v6296
        %v6298 = vrot.slane %v6293, %v6297
        %v6300 = vpack.i.b16 %v6208, %v6208
        %v6302 = vlaneseq
        %v6303 = vshrl.u32 %v6302, 7
        %v6304 = vsub.s32 0, %v6303
        %v6305 = vrot.slane %v6300, %v6304
        %v6307 = vpack.i.b16 %v6209, %v6209
        %v6309 = vlaneseq
        %v6310 = vshrl.u32 %v6309, 7
        %v6311 = vsub.s32 0, %v6310
        %v6312 = vrot.slane %v6307, %v6311
        %v6314 = vpack.i.b16 %v6210, %v6210
        %v6316 = vlaneseq
        %v6317 = vshrl.u32 %v6316, 7
        %v6318 = vsub.s32 0, %v6317
        %v6319 = vrot.slane %v6314, %v6318
        %v6321 = vpack.i.b16 %v6211, %v6211
        %v6323 = vlaneseq
        %v6324 = vshrl.u32 %v6323, 7
        %v6325 = vsub.s32 0, %v6324
        %v6326 = vrot.slane %v6321, %v6325
        %v6328 = vpack.i.b16 %v6212, %v6212
        %v6330 = vlaneseq
        %v6331 = vshrl.u32 %v6330, 7
        %v6332 = vsub.s32 0, %v6331
        %v6333 = vrot.slane %v6328, %v6332
        %v6398 = vunpack.c.l.b16 %v6214
        %v6399 = vunpack.c.l.b16 %v6215
        %v6400 = vunpack.c.l.b16 %v6216
        %v6401 = vunpack.c.l.b16 %v6217
        %v6402 = vunpack.c.l.b16 %v6218
        %v6403 = vunpack.c.l.b16 %v6219
        %v6404 = vunpack.c.l.b16 %v6220
        %v6405 = vunpack.c.l.b16 %v6221
        %v6406 = vunpack.c.l.b16 %v6222
        %v6407 = vunpack.c.l.b16 %v6223
        %v6408 = vunpack.c.l.b16 %v6224
        %v6409 = vunpack.c.l.b16 %v6225
        %v6410 = vunpack.c.l.b16 %v6226
        %v6411 = vunpack.c.l.b16 %v6227
        %v6412 = vunpack.c.l.b16 %v6228
        %v6413 = vunpack.c.l.b16 %v6229
        %v6414 = vunpack.c.l.b16 %v6230
        %v6415 = vunpack.c.l.b16 %v6231
        %v6416 = vunpack.c.l.b16 %v6232
        %v6417 = vunpack.c.l.b16 %v6233
        %v6418 = vunpack.c.l.b16 %v6234
        %v6419 = vunpack.c.l.b16 %v6235
        %v6420 = vunpack.c.l.b16 %v6236
        %v6421 = vunpack.c.l.b16 %v6237
        %v6422 = vunpack.c.l.b16 %v6238
        %v6423 = vunpack.c.l.b16 %v6239
        %v6424 = vunpack.c.l.b16 %v6240
        %v6425 = vunpack.c.l.b16 %v6241
        %v6426 = vunpack.c.l.b16 %v6242
        %v6427 = vunpack.c.l.b16 %v6243
        %v6428 = vunpack.c.l.b16 %v6244
        %v6429 = vunpack.c.l.b16 %v6245
        %v6430 = vunpack.c.l.b16 %v6246
        %v6431 = vunpack.c.l.b16 %v6247
        %v6432 = vunpack.c.l.b16 %v6248
        %v6433 = vunpack.c.l.b16 %v6249
        %v6434 = vunpack.c.l.b16 %v6250
        %v6435 = vunpack.c.l.b16 %v6251
        %v6436 = vunpack.c.l.b16 %v6252
        %v6437 = vunpack.c.l.b16 %v6253
        %v6438 = vunpack.c.l.b16 %v6254
        %v6439 = vunpack.c.l.b16 %v6255
        %v6440 = vunpack.c.l.b16 %v6256
        %v6441 = vunpack.c.l.b16 %v6257
        %v6442 = vunpack.c.l.b16 %v6258
        %v6443 = vunpack.c.l.b16 %v6259
        %v6444 = vunpack.c.l.b16 %v6260
        %v6445 = vunpack.c.l.b16 %v6261
        %v6446 = vunpack.c.l.b16 %v6262
        %v6447 = vunpack.c.l.b16 %v6263
        %v6448 = vunpack.c.l.b16 %v6264
        %v6449 = vunpack.c.l.b16 %v6265
        %v6450 = vunpack.c.l.b16 %v6266
        %v6451 = vunpack.c.l.b16 %v6267
        %v6452 = vunpack.c.l.b16 %v6268
        %v6453 = vunpack.c.l.b16 %v6269
        %v6454 = vunpack.c.l.b16 %v6270
        %v6455 = vunpack.c.l.b16 %v6271
        %v6456 = vunpack.c.l.b16 %v6272
        %v6457 = vunpack.c.l.b16 %v6273
        %v6458 = vunpack.c.l.b16 %v6274
        %v6459 = vunpack.c.l.b16 %v6275
        %v6460 = vunpack.c.l.b16 %v6276
        %v6461 = vunpack.c.l.b16 %v6277
        %v6462 = vpack.c.b16 %v6399, %v6398
        %v6463 = vpack.c.b16 %v6401, %v6400
        %v6464 = vpack.c.b16 %v6403, %v6402
        %v6465 = vpack.c.b16 %v6405, %v6404
        %v6466 = vpack.c.b16 %v6407, %v6406
        %v6467 = vpack.c.b16 %v6409, %v6408
        %v6468 = vpack.c.b16 %v6411, %v6410
        %v6469 = vpack.c.b16 %v6413, %v6412
        %v6470 = vpack.c.b16 %v6415, %v6414
        %v6471 = vpack.c.b16 %v6417, %v6416
        %v6472 = vpack.c.b16 %v6419, %v6418
        %v6473 = vpack.c.b16 %v6421, %v6420
        %v6474 = vpack.c.b16 %v6423, %v6422
        %v6475 = vpack.c.b16 %v6425, %v6424
        %v6476 = vpack.c.b16 %v6427, %v6426
        %v6477 = vpack.c.b16 %v6429, %v6428
        %v6478 = vpack.c.b16 %v6431, %v6430
        %v6479 = vpack.c.b16 %v6433, %v6432
        %v6480 = vpack.c.b16 %v6435, %v6434
        %v6481 = vpack.c.b16 %v6437, %v6436
        %v6482 = vpack.c.b16 %v6439, %v6438
        %v6483 = vpack.c.b16 %v6441, %v6440
        %v6484 = vpack.c.b16 %v6443, %v6442
        %v6485 = vpack.c.b16 %v6445, %v6444
        %v6486 = vpack.c.b16 %v6447, %v6446
        %v6487 = vpack.c.b16 %v6449, %v6448
        %v6488 = vpack.c.b16 %v6451, %v6450
        %v6489 = vpack.c.b16 %v6453, %v6452
        %v6490 = vpack.c.b16 %v6455, %v6454
        %v6491 = vpack.c.b16 %v6457, %v6456
        %v6492 = vpack.c.b16 %v6459, %v6458
        %v6493 = vpack.c.b16 %v6461, %v6460
        %v6526 = vsel %vm2697, %v6284, %v6462
        %v6527 = vsel %vm2698, %v6284, %v6463
        %v6528 = vsel %vm2699, %v6284, %v6464
        %v6529 = vsel %vm2700, %v6284, %v6465
        %v6530 = vsel %vm2697, %v6291, %v6466
        %v6531 = vsel %vm2698, %v6291, %v6467
        %v6532 = vsel %vm2699, %v6291, %v6468
        %v6533 = vsel %vm2700, %v6291, %v6469
        %v6534 = vsel %vm2697, %v6298, %v6470
        %v6535 = vsel %vm2698, %v6298, %v6471
        %v6536 = vsel %vm2699, %v6298, %v6472
        %v6537 = vsel %vm2700, %v6298, %v6473
        %v6538 = vsel %vm2697, %v6305, %v6474
        %v6539 = vsel %vm2698, %v6305, %v6475
        %v6540 = vsel %vm2699, %v6305, %v6476
        %v6541 = vsel %vm2700, %v6305, %v6477
        %v6542 = vsel %vm2697, %v6312, %v6478
        %v6543 = vsel %vm2698, %v6312, %v6479
        %v6544 = vsel %vm2699, %v6312, %v6480
        %v6545 = vsel %vm2700, %v6312, %v6481
        %v6546 = vsel %vm2697, %v6319, %v6482
        %v6547 = vsel %vm2698, %v6319, %v6483
        %v6548 = vsel %vm2699, %v6319, %v6484
        %v6549 = vsel %vm2700, %v6319, %v6485
        %v6550 = vsel %vm2697, %v6326, %v6486
        %v6551 = vsel %vm2698, %v6326, %v6487
        %v6552 = vsel %vm2699, %v6326, %v6488
        %v6553 = vsel %vm2700, %v6326, %v6489
        %v6554 = vsel %vm2697, %v6333, %v6490
        %v6555 = vsel %vm2698, %v6333, %v6491
        %v6556 = vsel %vm2699, %v6333, %v6492
        %v6557 = vsel %vm2700, %v6333, %v6493
        %v6590 = vunpack.c.l.b16 %v6115
        %v6591 = vunpack.c.h.b16 %v6115
        %v6592 = vunpack.c.l.b16 %v6116
        %v6593 = vunpack.c.h.b16 %v6116
        %v6594 = vunpack.c.l.b16 %v6117
        %v6595 = vunpack.c.h.b16 %v6117
        %v6596 = vunpack.c.l.b16 %v6118
        %v6597 = vunpack.c.h.b16 %v6118
        %v6598 = vunpack.c.l.b16 %v6119
        %v6599 = vunpack.c.h.b16 %v6119
        %v6600 = vunpack.c.l.b16 %v6120
        %v6601 = vunpack.c.h.b16 %v6120
        %v6602 = vunpack.c.l.b16 %v6121
        %v6603 = vunpack.c.h.b16 %v6121
        %v6604 = vunpack.c.l.b16 %v6122
        %v6605 = vunpack.c.h.b16 %v6122
        %v6606 = vunpack.c.l.b16 %v6123
        %v6607 = vunpack.c.h.b16 %v6123
        %v6608 = vunpack.c.l.b16 %v6124
        %v6609 = vunpack.c.h.b16 %v6124
        %v6610 = vunpack.c.l.b16 %v6125
        %v6611 = vunpack.c.h.b16 %v6125
        %v6612 = vunpack.c.l.b16 %v6126
        %v6613 = vunpack.c.h.b16 %v6126
        %v6614 = vunpack.c.l.b16 %v6127
        %v6615 = vunpack.c.h.b16 %v6127
        %v6616 = vunpack.c.l.b16 %v6128
        %v6617 = vunpack.c.h.b16 %v6128
        %v6618 = vunpack.c.l.b16 %v6129
        %v6619 = vunpack.c.h.b16 %v6129
        %v6620 = vunpack.c.l.b16 %v6130
        %v6621 = vunpack.c.h.b16 %v6130
        %v6622 = vunpack.c.l.b16 %v6131
        %v6623 = vunpack.c.h.b16 %v6131
        %v6624 = vunpack.c.l.b16 %v6132
        %v6625 = vunpack.c.h.b16 %v6132
        %v6626 = vunpack.c.l.b16 %v6133
        %v6627 = vunpack.c.h.b16 %v6133
        %v6628 = vunpack.c.l.b16 %v6134
        %v6629 = vunpack.c.h.b16 %v6134
        %v6630 = vunpack.c.l.b16 %v6135
        %v6631 = vunpack.c.h.b16 %v6135
        %v6632 = vunpack.c.l.b16 %v6136
        %v6633 = vunpack.c.h.b16 %v6136
        %v6634 = vunpack.c.l.b16 %v6137
        %v6635 = vunpack.c.h.b16 %v6137
        %v6636 = vunpack.c.l.b16 %v6138
        %v6637 = vunpack.c.h.b16 %v6138
        %v6638 = vunpack.c.l.b16 %v6139
        %v6639 = vunpack.c.h.b16 %v6139
        %v6640 = vunpack.c.l.b16 %v6140
        %v6641 = vunpack.c.h.b16 %v6140
        %v6642 = vunpack.c.l.b16 %v6141
        %v6643 = vunpack.c.h.b16 %v6141
        %v6644 = vunpack.c.l.b16 %v6142
        %v6645 = vunpack.c.h.b16 %v6142
        %v6646 = vunpack.c.l.b16 %v6143
        %v6647 = vunpack.c.h.b16 %v6143
        %v6648 = vunpack.c.l.b16 %v6144
        %v6649 = vunpack.c.h.b16 %v6144
        %v6650 = vunpack.c.l.b16 %v6145
        %v6651 = vunpack.c.h.b16 %v6145
        %v6652 = vunpack.c.l.b16 %v6146
        %v6653 = vunpack.c.h.b16 %v6146
        %v6654 = vpack.c.b16 %v6590, %v6590
        %v6655 = vpack.c.b16 %v6591, %v6591
        %v6656 = vpack.c.b16 %v6592, %v6592
        %v6657 = vpack.c.b16 %v6593, %v6593
        %v6658 = vpack.c.b16 %v6594, %v6594
        %v6659 = vpack.c.b16 %v6595, %v6595
        %v6660 = vpack.c.b16 %v6596, %v6596
        %v6661 = vpack.c.b16 %v6597, %v6597
        %v6662 = vpack.c.b16 %v6598, %v6598
        %v6663 = vpack.c.b16 %v6599, %v6599
        %v6664 = vpack.c.b16 %v6600, %v6600
        %v6665 = vpack.c.b16 %v6601, %v6601
        %v6666 = vpack.c.b16 %v6602, %v6602
        %v6667 = vpack.c.b16 %v6603, %v6603
        %v6668 = vpack.c.b16 %v6604, %v6604
        %v6669 = vpack.c.b16 %v6605, %v6605
        %v6670 = vpack.c.b16 %v6606, %v6606
        %v6671 = vpack.c.b16 %v6607, %v6607
        %v6672 = vpack.c.b16 %v6608, %v6608
        %v6673 = vpack.c.b16 %v6609, %v6609
        %v6674 = vpack.c.b16 %v6610, %v6610
        %v6675 = vpack.c.b16 %v6611, %v6611
        %v6676 = vpack.c.b16 %v6612, %v6612
        %v6677 = vpack.c.b16 %v6613, %v6613
        %v6678 = vpack.c.b16 %v6614, %v6614
        %v6679 = vpack.c.b16 %v6615, %v6615
        %v6680 = vpack.c.b16 %v6616, %v6616
        %v6681 = vpack.c.b16 %v6617, %v6617
        %v6682 = vpack.c.b16 %v6618, %v6618
        %v6683 = vpack.c.b16 %v6619, %v6619
        %v6684 = vpack.c.b16 %v6620, %v6620
        %v6685 = vpack.c.b16 %v6621, %v6621
        %v6686 = vpack.c.b16 %v6622, %v6622
        %v6687 = vpack.c.b16 %v6623, %v6623
        %v6688 = vpack.c.b16 %v6624, %v6624
        %v6689 = vpack.c.b16 %v6625, %v6625
        %v6690 = vpack.c.b16 %v6626, %v6626
        %v6691 = vpack.c.b16 %v6627, %v6627
        %v6692 = vpack.c.b16 %v6628, %v6628
        %v6693 = vpack.c.b16 %v6629, %v6629
        %v6694 = vpack.c.b16 %v6630, %v6630
        %v6695 = vpack.c.b16 %v6631, %v6631
        %v6696 = vpack.c.b16 %v6632, %v6632
        %v6697 = vpack.c.b16 %v6633, %v6633
        %v6698 = vpack.c.b16 %v6634, %v6634
        %v6699 = vpack.c.b16 %v6635, %v6635
        %v6700 = vpack.c.b16 %v6636, %v6636
        %v6701 = vpack.c.b16 %v6637, %v6637
        %v6702 = vpack.c.b16 %v6638, %v6638
        %v6703 = vpack.c.b16 %v6639, %v6639
        %v6704 = vpack.c.b16 %v6640, %v6640
        %v6705 = vpack.c.b16 %v6641, %v6641
        %v6706 = vpack.c.b16 %v6642, %v6642
        %v6707 = vpack.c.b16 %v6643, %v6643
        %v6708 = vpack.c.b16 %v6644, %v6644
        %v6709 = vpack.c.b16 %v6645, %v6645
        %v6710 = vpack.c.b16 %v6646, %v6646
        %v6711 = vpack.c.b16 %v6647, %v6647
        %v6712 = vpack.c.b16 %v6648, %v6648
        %v6713 = vpack.c.b16 %v6649, %v6649
        %v6714 = vpack.c.b16 %v6650, %v6650
        %v6715 = vpack.c.b16 %v6651, %v6651
        %v6716 = vpack.c.b16 %v6652, %v6652
        %v6717 = vpack.c.b16 %v6653, %v6653
        %s6782 = scalar_lea.vmem %s441, 32 [#allocation8]
        %6783 = vst [vmem:[%s6782] sm:$0xf] %v6654
        %6784 = vst [vmem:[%s6782 + $0x4] sm:$0xf] %v6655
        %6785 = vst [vmem:[%s6782 + $0x8] sm:$0xf] %v6656
        %6786 = vst [vmem:[%s6782 + $0xc] sm:$0xf] %v6657
        %6787 = vst [vmem:[%s6782 + $0x10] sm:$0xf] %v6658
        %6788 = vst [vmem:[%s6782 + $0x14] sm:$0xf] %v6659
        %6789 = vst [vmem:[%s6782 + $0x18] sm:$0xf] %v6660
        %6790 = vst [vmem:[%s6782 + $0x1c] sm:$0xf] %v6661
        %6791 = vst [vmem:[%s6782 + $0x40] sm:$0xf] %v6662
        %6792 = vst [vmem:[%s6782 + $0x44] sm:$0xf] %v6663
        %6793 = vst [vmem:[%s6782 + $0x48] sm:$0xf] %v6664
        %6794 = vst [vmem:[%s6782 + $0x4c] sm:$0xf] %v6665
        %6795 = vst [vmem:[%s6782 + $0x50] sm:$0xf] %v6666
        %6796 = vst [vmem:[%s6782 + $0x54] sm:$0xf] %v6667
        %6797 = vst [vmem:[%s6782 + $0x58] sm:$0xf] %v6668
        %6798 = vst [vmem:[%s6782 + $0x5c] sm:$0xf] %v6669
        %6799 = vst [vmem:[%s6782 + $0x80] sm:$0xf] %v6670
        %6800 = vst [vmem:[%s6782 + $0x84] sm:$0xf] %v6671
        %6801 = vst [vmem:[%s6782 + $0x88] sm:$0xf] %v6672
        %6802 = vst [vmem:[%s6782 + $0x8c] sm:$0xf] %v6673
        %6803 = vst [vmem:[%s6782 + $0x90] sm:$0xf] %v6674
        %6804 = vst [vmem:[%s6782 + $0x94] sm:$0xf] %v6675
        %6805 = vst [vmem:[%s6782 + $0x98] sm:$0xf] %v6676
        %6806 = vst [vmem:[%s6782 + $0x9c] sm:$0xf] %v6677
        %6807 = vst [vmem:[%s6782 + $0xc0] sm:$0xf] %v6678
        %6808 = vst [vmem:[%s6782 + $0xc4] sm:$0xf] %v6679
        %6809 = vst [vmem:[%s6782 + $0xc8] sm:$0xf] %v6680
        %6810 = vst [vmem:[%s6782 + $0xcc] sm:$0xf] %v6681
        %6811 = vst [vmem:[%s6782 + $0xd0] sm:$0xf] %v6682
        %6812 = vst [vmem:[%s6782 + $0xd4] sm:$0xf] %v6683
        %6813 = vst [vmem:[%s6782 + $0xd8] sm:$0xf] %v6684
        %6814 = vst [vmem:[%s6782 + $0xdc] sm:$0xf] %v6685
        %6815 = vst [vmem:[%s6782 + $0x100] sm:$0xf] %v6686
        %6816 = vst [vmem:[%s6782 + $0x104] sm:$0xf] %v6687
        %6817 = vst [vmem:[%s6782 + $0x108] sm:$0xf] %v6688
        %6818 = vst [vmem:[%s6782 + $0x10c] sm:$0xf] %v6689
        %6819 = vst [vmem:[%s6782 + $0x110] sm:$0xf] %v6690
        %6820 = vst [vmem:[%s6782 + $0x114] sm:$0xf] %v6691
        %6821 = vst [vmem:[%s6782 + $0x118] sm:$0xf] %v6692
        %6822 = vst [vmem:[%s6782 + $0x11c] sm:$0xf] %v6693
        %6823 = vst [vmem:[%s6782 + $0x140] sm:$0xf] %v6694
        %6824 = vst [vmem:[%s6782 + $0x144] sm:$0xf] %v6695
        %6825 = vst [vmem:[%s6782 + $0x148] sm:$0xf] %v6696
        %6826 = vst [vmem:[%s6782 + $0x14c] sm:$0xf] %v6697
        %6827 = vst [vmem:[%s6782 + $0x150] sm:$0xf] %v6698
        %6828 = vst [vmem:[%s6782 + $0x154] sm:$0xf] %v6699
        %6829 = vst [vmem:[%s6782 + $0x158] sm:$0xf] %v6700
        %6830 = vst [vmem:[%s6782 + $0x15c] sm:$0xf] %v6701
        %6831 = vst [vmem:[%s6782 + $0x180] sm:$0xf] %v6702
        %6832 = vst [vmem:[%s6782 + $0x184] sm:$0xf] %v6703
        %6833 = vst [vmem:[%s6782 + $0x188] sm:$0xf] %v6704
        %6834 = vst [vmem:[%s6782 + $0x18c] sm:$0xf] %v6705
        %6835 = vst [vmem:[%s6782 + $0x190] sm:$0xf] %v6706
        %6836 = vst [vmem:[%s6782 + $0x194] sm:$0xf] %v6707
        %6837 = vst [vmem:[%s6782 + $0x198] sm:$0xf] %v6708
        %6838 = vst [vmem:[%s6782 + $0x19c] sm:$0xf] %v6709
        %6839 = vst [vmem:[%s6782 + $0x1c0] sm:$0xf] %v6710
        %6840 = vst [vmem:[%s6782 + $0x1c4] sm:$0xf] %v6711
        %6841 = vst [vmem:[%s6782 + $0x1c8] sm:$0xf] %v6712
        %6842 = vst [vmem:[%s6782 + $0x1cc] sm:$0xf] %v6713
        %6843 = vst [vmem:[%s6782 + $0x1d0] sm:$0xf] %v6714
        %6844 = vst [vmem:[%s6782 + $0x1d4] sm:$0xf] %v6715
        %6845 = vst [vmem:[%s6782 + $0x1d8] sm:$0xf] %v6716
        %6846 = vst [vmem:[%s6782 + $0x1dc] sm:$0xf] %v6717
        %v6879 = vunpack.c.l.b16 %v6526
        %v6880 = vunpack.c.h.b16 %v6526
        %v6881 = vunpack.c.l.b16 %v6527
        %v6882 = vunpack.c.h.b16 %v6527
        %v6883 = vunpack.c.l.b16 %v6528
        %v6884 = vunpack.c.h.b16 %v6528
        %v6885 = vunpack.c.l.b16 %v6529
        %v6886 = vunpack.c.h.b16 %v6529
        %v6887 = vunpack.c.l.b16 %v6530
        %v6888 = vunpack.c.h.b16 %v6530
        %v6889 = vunpack.c.l.b16 %v6531
        %v6890 = vunpack.c.h.b16 %v6531
        %v6891 = vunpack.c.l.b16 %v6532
        %v6892 = vunpack.c.h.b16 %v6532
        %v6893 = vunpack.c.l.b16 %v6533
        %v6894 = vunpack.c.h.b16 %v6533
        %v6895 = vunpack.c.l.b16 %v6534
        %v6896 = vunpack.c.h.b16 %v6534
        %v6897 = vunpack.c.l.b16 %v6535
        %v6898 = vunpack.c.h.b16 %v6535
        %v6899 = vunpack.c.l.b16 %v6536
        %v6900 = vunpack.c.h.b16 %v6536
        %v6901 = vunpack.c.l.b16 %v6537
        %v6902 = vunpack.c.h.b16 %v6537
        %v6903 = vunpack.c.l.b16 %v6538
        %v6904 = vunpack.c.h.b16 %v6538
        %v6905 = vunpack.c.l.b16 %v6539
        %v6906 = vunpack.c.h.b16 %v6539
        %v6907 = vunpack.c.l.b16 %v6540
        %v6908 = vunpack.c.h.b16 %v6540
        %v6909 = vunpack.c.l.b16 %v6541
        %v6910 = vunpack.c.h.b16 %v6541
        %v6911 = vunpack.c.l.b16 %v6542
        %v6912 = vunpack.c.h.b16 %v6542
        %v6913 = vunpack.c.l.b16 %v6543
        %v6914 = vunpack.c.h.b16 %v6543
        %v6915 = vunpack.c.l.b16 %v6544
        %v6916 = vunpack.c.h.b16 %v6544
        %v6917 = vunpack.c.l.b16 %v6545
        %v6918 = vunpack.c.h.b16 %v6545
        %v6919 = vunpack.c.l.b16 %v6546
        %v6920 = vunpack.c.h.b16 %v6546
        %v6921 = vunpack.c.l.b16 %v6547
        %v6922 = vunpack.c.h.b16 %v6547
        %v6923 = vunpack.c.l.b16 %v6548
        %v6924 = vunpack.c.h.b16 %v6548
        %v6925 = vunpack.c.l.b16 %v6549
        %v6926 = vunpack.c.h.b16 %v6549
        %v6927 = vunpack.c.l.b16 %v6550
        %v6928 = vunpack.c.h.b16 %v6550
        %v6929 = vunpack.c.l.b16 %v6551
        %v6930 = vunpack.c.h.b16 %v6551
        %v6931 = vunpack.c.l.b16 %v6552
        %v6932 = vunpack.c.h.b16 %v6552
        %v6933 = vunpack.c.l.b16 %v6553
        %v6934 = vunpack.c.h.b16 %v6553
        %v6935 = vunpack.c.l.b16 %v6554
        %v6936 = vunpack.c.h.b16 %v6554
        %v6937 = vunpack.c.l.b16 %v6555
        %v6938 = vunpack.c.h.b16 %v6555
        %v6939 = vunpack.c.l.b16 %v6556
        %v6940 = vunpack.c.h.b16 %v6556
        %v6941 = vunpack.c.l.b16 %v6557
        %v6942 = vunpack.c.h.b16 %v6557
        %v6943 = vpack.c.b16 %v6879, %v6879
        %v6944 = vpack.c.b16 %v6880, %v6880
        %v6945 = vpack.c.b16 %v6881, %v6881
        %v6946 = vpack.c.b16 %v6882, %v6882
        %v6947 = vpack.c.b16 %v6883, %v6883
        %v6948 = vpack.c.b16 %v6884, %v6884
        %v6949 = vpack.c.b16 %v6885, %v6885
        %v6950 = vpack.c.b16 %v6886, %v6886
        %v6951 = vpack.c.b16 %v6887, %v6887
        %v6952 = vpack.c.b16 %v6888, %v6888
        %v6953 = vpack.c.b16 %v6889, %v6889
        %v6954 = vpack.c.b16 %v6890, %v6890
        %v6955 = vpack.c.b16 %v6891, %v6891
        %v6956 = vpack.c.b16 %v6892, %v6892
        %v6957 = vpack.c.b16 %v6893, %v6893
        %v6958 = vpack.c.b16 %v6894, %v6894
        %v6959 = vpack.c.b16 %v6895, %v6895
        %v6960 = vpack.c.b16 %v6896, %v6896
        %v6961 = vpack.c.b16 %v6897, %v6897
        %v6962 = vpack.c.b16 %v6898, %v6898
        %v6963 = vpack.c.b16 %v6899, %v6899
        %v6964 = vpack.c.b16 %v6900, %v6900
        %v6965 = vpack.c.b16 %v6901, %v6901
        %v6966 = vpack.c.b16 %v6902, %v6902
        %v6967 = vpack.c.b16 %v6903, %v6903
        %v6968 = vpack.c.b16 %v6904, %v6904
        %v6969 = vpack.c.b16 %v6905, %v6905
        %v6970 = vpack.c.b16 %v6906, %v6906
        %v6971 = vpack.c.b16 %v6907, %v6907
        %v6972 = vpack.c.b16 %v6908, %v6908
        %v6973 = vpack.c.b16 %v6909, %v6909
        %v6974 = vpack.c.b16 %v6910, %v6910
        %v6975 = vpack.c.b16 %v6911, %v6911
        %v6976 = vpack.c.b16 %v6912, %v6912
        %v6977 = vpack.c.b16 %v6913, %v6913
        %v6978 = vpack.c.b16 %v6914, %v6914
        %v6979 = vpack.c.b16 %v6915, %v6915
        %v6980 = vpack.c.b16 %v6916, %v6916
        %v6981 = vpack.c.b16 %v6917, %v6917
        %v6982 = vpack.c.b16 %v6918, %v6918
        %v6983 = vpack.c.b16 %v6919, %v6919
        %v6984 = vpack.c.b16 %v6920, %v6920
        %v6985 = vpack.c.b16 %v6921, %v6921
        %v6986 = vpack.c.b16 %v6922, %v6922
        %v6987 = vpack.c.b16 %v6923, %v6923
        %v6988 = vpack.c.b16 %v6924, %v6924
        %v6989 = vpack.c.b16 %v6925, %v6925
        %v6990 = vpack.c.b16 %v6926, %v6926
        %v6991 = vpack.c.b16 %v6927, %v6927
        %v6992 = vpack.c.b16 %v6928, %v6928
        %v6993 = vpack.c.b16 %v6929, %v6929
        %v6994 = vpack.c.b16 %v6930, %v6930
        %v6995 = vpack.c.b16 %v6931, %v6931
        %v6996 = vpack.c.b16 %v6932, %v6932
        %v6997 = vpack.c.b16 %v6933, %v6933
        %v6998 = vpack.c.b16 %v6934, %v6934
        %v6999 = vpack.c.b16 %v6935, %v6935
        %v7000 = vpack.c.b16 %v6936, %v6936
        %v7001 = vpack.c.b16 %v6937, %v6937
        %v7002 = vpack.c.b16 %v6938, %v6938
        %v7003 = vpack.c.b16 %v6939, %v6939
        %v7004 = vpack.c.b16 %v6940, %v6940
        %v7005 = vpack.c.b16 %v6941, %v6941
        %v7006 = vpack.c.b16 %v6942, %v6942
        %s7071 = scalar_lea.vmem %s448, 32 [#allocation10]
        %7072 = vst [vmem:[%s7071] sm:$0xf] %v6943
        %7073 = vst [vmem:[%s7071 + $0x4] sm:$0xf] %v6944
        %7074 = vst [vmem:[%s7071 + $0x8] sm:$0xf] %v6945
        %7075 = vst [vmem:[%s7071 + $0xc] sm:$0xf] %v6946
        %7076 = vst [vmem:[%s7071 + $0x10] sm:$0xf] %v6947
        %7077 = vst [vmem:[%s7071 + $0x14] sm:$0xf] %v6948
        %7078 = vst [vmem:[%s7071 + $0x18] sm:$0xf] %v6949
        %7079 = vst [vmem:[%s7071 + $0x1c] sm:$0xf] %v6950
        %7080 = vst [vmem:[%s7071 + $0x40] sm:$0xf] %v6951
        %7081 = vst [vmem:[%s7071 + $0x44] sm:$0xf] %v6952
        %7082 = vst [vmem:[%s7071 + $0x48] sm:$0xf] %v6953
        %7083 = vst [vmem:[%s7071 + $0x4c] sm:$0xf] %v6954
        %7084 = vst [vmem:[%s7071 + $0x50] sm:$0xf] %v6955
        %7085 = vst [vmem:[%s7071 + $0x54] sm:$0xf] %v6956
        %7086 = vst [vmem:[%s7071 + $0x58] sm:$0xf] %v6957
        %7087 = vst [vmem:[%s7071 + $0x5c] sm:$0xf] %v6958
        %7088 = vst [vmem:[%s7071 + $0x80] sm:$0xf] %v6959
        %7089 = vst [vmem:[%s7071 + $0x84] sm:$0xf] %v6960
        %7090 = vst [vmem:[%s7071 + $0x88] sm:$0xf] %v6961
        %7091 = vst [vmem:[%s7071 + $0x8c] sm:$0xf] %v6962
        %7092 = vst [vmem:[%s7071 + $0x90] sm:$0xf] %v6963
        %7093 = vst [vmem:[%s7071 + $0x94] sm:$0xf] %v6964
        %7094 = vst [vmem:[%s7071 + $0x98] sm:$0xf] %v6965
        %7095 = vst [vmem:[%s7071 + $0x9c] sm:$0xf] %v6966
        %7096 = vst [vmem:[%s7071 + $0xc0] sm:$0xf] %v6967
        %7097 = vst [vmem:[%s7071 + $0xc4] sm:$0xf] %v6968
        %7098 = vst [vmem:[%s7071 + $0xc8] sm:$0xf] %v6969
        %7099 = vst [vmem:[%s7071 + $0xcc] sm:$0xf] %v6970
        %7100 = vst [vmem:[%s7071 + $0xd0] sm:$0xf] %v6971
        %7101 = vst [vmem:[%s7071 + $0xd4] sm:$0xf] %v6972
        %7102 = vst [vmem:[%s7071 + $0xd8] sm:$0xf] %v6973
        %7103 = vst [vmem:[%s7071 + $0xdc] sm:$0xf] %v6974
        %7104 = vst [vmem:[%s7071 + $0x100] sm:$0xf] %v6975
        %7105 = vst [vmem:[%s7071 + $0x104] sm:$0xf] %v6976
        %7106 = vst [vmem:[%s7071 + $0x108] sm:$0xf] %v6977
        %7107 = vst [vmem:[%s7071 + $0x10c] sm:$0xf] %v6978
        %7108 = vst [vmem:[%s7071 + $0x110] sm:$0xf] %v6979
        %7109 = vst [vmem:[%s7071 + $0x114] sm:$0xf] %v6980
        %7110 = vst [vmem:[%s7071 + $0x118] sm:$0xf] %v6981
        %7111 = vst [vmem:[%s7071 + $0x11c] sm:$0xf] %v6982
        %7112 = vst [vmem:[%s7071 + $0x140] sm:$0xf] %v6983
        %7113 = vst [vmem:[%s7071 + $0x144] sm:$0xf] %v6984
        %7114 = vst [vmem:[%s7071 + $0x148] sm:$0xf] %v6985
        %7115 = vst [vmem:[%s7071 + $0x14c] sm:$0xf] %v6986
        %7116 = vst [vmem:[%s7071 + $0x150] sm:$0xf] %v6987
        %7117 = vst [vmem:[%s7071 + $0x154] sm:$0xf] %v6988
        %7118 = vst [vmem:[%s7071 + $0x158] sm:$0xf] %v6989
        %7119 = vst [vmem:[%s7071 + $0x15c] sm:$0xf] %v6990
        %7120 = vst [vmem:[%s7071 + $0x180] sm:$0xf] %v6991
        %7121 = vst [vmem:[%s7071 + $0x184] sm:$0xf] %v6992
        %7122 = vst [vmem:[%s7071 + $0x188] sm:$0xf] %v6993
        %7123 = vst [vmem:[%s7071 + $0x18c] sm:$0xf] %v6994
        %7124 = vst [vmem:[%s7071 + $0x190] sm:$0xf] %v6995
        %7125 = vst [vmem:[%s7071 + $0x194] sm:$0xf] %v6996
        %7126 = vst [vmem:[%s7071 + $0x198] sm:$0xf] %v6997
        %7127 = vst [vmem:[%s7071 + $0x19c] sm:$0xf] %v6998
        %7128 = vst [vmem:[%s7071 + $0x1c0] sm:$0xf] %v6999
        %7129 = vst [vmem:[%s7071 + $0x1c4] sm:$0xf] %v7000
        %7130 = vst [vmem:[%s7071 + $0x1c8] sm:$0xf] %v7001
        %7131 = vst [vmem:[%s7071 + $0x1cc] sm:$0xf] %v7002
        %7132 = vst [vmem:[%s7071 + $0x1d0] sm:$0xf] %v7003
        %7133 = vst [vmem:[%s7071 + $0x1d4] sm:$0xf] %v7004
        %7134 = vst [vmem:[%s7071 + $0x1d8] sm:$0xf] %v7005
        %7135 = vst [vmem:[%s7071 + $0x1dc] sm:$0xf] %v7006
        %v7136 = vpack.c.bf16 %v2171, %v2171
        %7137 = vmatprep.subr.bf16.mxu0 0
        %7138 = vmatpush1.bf16.msra.mxu0 %v2418
        %7139 = vmatprep.subr.bf16.mxu0 0
        %7140 = vmatpush1.bf16.msra.mxu0 %v2417
        %7141 = vmatprep.subr.bf16.mxu0 0
        %7142 = vmatpush1.bf16.msra.mxu0 %v2416
        %7143 = vmatprep.subr.bf16.mxu0 0
        %7144 = vmatpush1.bf16.msra.mxu0 %v2415
        %7145 = vmatprep.subr.bf16.mxu0 0
        %7146 = vmatpush1.bf16.msra.mxu0 %v2414
        %7147 = vmatprep.subr.bf16.mxu0 0
        %7148 = vmatpush1.bf16.msra.mxu0 %v2413
        %7149 = vmatprep.subr.bf16.mxu0 0
        %7150 = vmatpush1.bf16.msra.mxu0 %v2412
        %7151 = vmatprep.subr.bf16.mxu0 0
        %7152 = vmatpush1.bf16.msra.mxu0 %v2411
        %7153 = vmatprep.subr.bf16.mxu0 0
        %7154 = vmatpush2.bf16.msra.mxu0 0
        %7155 = vmatprep.subr.bf16.mxu0 0
        %7156 = vmatpush2.bf16.msra.mxu0 0
        %7157 = vmatprep.subr.bf16.mxu0 0
        %7158 = vmatpush2.bf16.msra.mxu0 0
        %7159 = vmatprep.subr.bf16.mxu0 0
        %7160 = vmatpush2.bf16.msra.mxu0 0
        %7161 = vmatprep.subr.bf16.mxu0 0
        %7162 = vmatpush2.bf16.msra.mxu0 0
        %7163 = vmatprep.subr.bf16.mxu0 0
        %7164 = vmatpush2.bf16.msra.mxu0 0
        %7165 = vmatprep.subr.bf16.mxu0 0
        %7166 = vmatpush2.bf16.msra.mxu0 0
        %7167 = vmatprep.subr.bf16.mxu0 0
        %7168 = vmatpush2.bf16.msra.mxu0 0
        %7169 = vmatprep.mubr.bf16.mxu0 0
        %7170 = vmatmul.mubr.bf16.gmra.mxu0 %v7136
        %v7171 = vpop.f32.mrf.mxu0
        %v7172 = vadd.f32 0.0, %v7171
        %v7173 = vpop.f32.mrf.mxu0
        %v7174 = vpop.f32.mrf.mxu0
        %v7175 = vpop.f32.mrf.mxu0
        %7176 = vdwg.mxu0
        %v7178 = vcombine.high %v7172, %v7172
        %v7180 = vunpack.c.l.s4 1966171168
        %v7181 = vunpack.c.0.s8 %v7180
        %v7182 = vlaneseq
        %v7183 = vshrl.u32 %v7182, 7
        %v7184 = vsub.s32 %v7181, %v7183
        %v7185 = vrot.slane %v7172, %v7184
        %v7187 = vunpack.c.l.s4 1966171168
        %v7188 = vunpack.c.0.s8 %v7187
        %v7189 = vlaneseq
        %v7190 = vshrl.u32 %v7189, 7
        %v7191 = vsub.s32 %v7188, %v7190
        %v7192 = vrot.slane %v7178, %v7191
        %v7193 = vcombine.high %v7185, %v7185
        %v7194 = vcombine.high %v7192, %v7192
        %v7196 = vunpack.c.l.s4 1966171168
        %v7197 = vunpack.c.0.s8 %v7196
        %v7198 = vlaneseq
        %v7199 = vshrl.u32 %v7198, 7
        %v7200 = vsub.s32 %v7197, %v7199
        %v7201 = vrot.slane %v7185, %v7200
        %v7203 = vunpack.c.l.s4 1966171168
        %v7204 = vunpack.c.0.s8 %v7203
        %v7205 = vlaneseq
        %v7206 = vshrl.u32 %v7205, 7
        %v7207 = vsub.s32 %v7204, %v7206
        %v7208 = vrot.slane %v7192, %v7207
        %v7210 = vunpack.c.l.s4 1966171168
        %v7211 = vunpack.c.0.s8 %v7210
        %v7212 = vlaneseq
        %v7213 = vshrl.u32 %v7212, 7
        %v7214 = vsub.s32 %v7211, %v7213
        %v7215 = vrot.slane %v7193, %v7214
        %v7217 = vunpack.c.l.s4 1966171168
        %v7218 = vunpack.c.0.s8 %v7217
        %v7219 = vlaneseq
        %v7220 = vshrl.u32 %v7219, 7
        %v7221 = vsub.s32 %v7218, %v7220
        %v7222 = vrot.slane %v7194, %v7221
        %v7223 = vcombine.high %v7201, %v7201
        %v7224 = vcombine.high %v7208, %v7208
        %v7225 = vcombine.high %v7215, %v7215
        %v7226 = vcombine.high %v7222, %v7222
        %v7235 = vpack.c.bf16 %v7201, %v7201
        %v7236 = vpack.c.bf16 %v7215, %v7215
        %v7237 = vpack.c.bf16 %v7223, %v7223
        %v7238 = vpack.c.bf16 %v7225, %v7225
        %v7239 = vpack.c.bf16 %v7208, %v7208
        %v7240 = vpack.c.bf16 %v7222, %v7222
        %v7241 = vpack.c.bf16 %v7224, %v7224
        %v7242 = vpack.c.bf16 %v7226, %v7226
        %7243 = vmatprep.subr.bf16.mxu0 0
        %7244 = vmatpush1.bf16.xpose.msra.mxu0 0
        %7245 = vmatprep.subr.bf16.mxu0 0
        %7246 = vmatpush1.bf16.xpose.msra.mxu0 0
        %7247 = vmatprep.subr.bf16.mxu0 0
        %7248 = vmatpush1.bf16.xpose.msra.mxu0 0
        %7249 = vmatprep.subr.bf16.mxu0 0
        %7250 = vmatpush1.bf16.xpose.msra.mxu0 0
        %7251 = vmatprep.subr.bf16.mxu0 0
        %7252 = vmatpush1.bf16.xpose.msra.mxu0 %v6118
        %7253 = vmatprep.subr.bf16.mxu0 0
        %7254 = vmatpush1.bf16.xpose.msra.mxu0 %v6117
        %7255 = vmatprep.subr.bf16.mxu0 0
        %7256 = vmatpush1.bf16.xpose.msra.mxu0 %v6116
        %7257 = vmatprep.subr.bf16.mxu0 0
        %7258 = vmatpush1.bf16.xpose.msra.mxu0 %v6115
        %7259 = vmatprep.subr.bf16.mxu0 0
        %7260 = vmatpush2.bf16.xpose.msra.mxu0 0
        %7261 = vmatprep.subr.bf16.mxu0 0
        %7262 = vmatpush2.bf16.xpose.msra.mxu0 0
        %7263 = vmatprep.subr.bf16.mxu0 0
        %7264 = vmatpush2.bf16.xpose.msra.mxu0 0
        %7265 = vmatprep.subr.bf16.mxu0 0
        %7266 = vmatpush2.bf16.xpose.msra.mxu0 0
        %7267 = vmatprep.subr.bf16.mxu0 0
        %7268 = vmatpush2.bf16.xpose.msra.mxu0 0
        %7269 = vmatprep.subr.bf16.mxu0 0
        %7270 = vmatpush2.bf16.xpose.msra.mxu0 0
        %7271 = vmatprep.subr.bf16.mxu0 0
        %7272 = vmatpush2.bf16.xpose.msra.mxu0 0
        %7273 = vmatprep.subr.bf16.mxu0 0
        %7274 = vmatpush2.bf16.xpose.msra.mxu0 0
        %7275 = vmatprep.mubr.bf16.mxu0 0
        %7276 = vmatmul.mubr.bf16.gmra.mxu0 %v7235
        %v7277 = vpop.f32.mrf.mxu0
        %v7278 = vadd.f32 0.0, %v7277
        %v7279 = vpop.f32.mrf.mxu0
        %v7280 = vpop.f32.mrf.mxu0
        %v7281 = vpop.f32.mrf.mxu0
        %7282 = vdwg.mxu0
        %7283 = vmatprep.subr.bf16.mxu0 0
        %7284 = vmatpush1.bf16.xpose.msra.mxu0 0
        %7285 = vmatprep.subr.bf16.mxu0 0
        %7286 = vmatpush1.bf16.xpose.msra.mxu0 0
        %7287 = vmatprep.subr.bf16.mxu0 0
        %7288 = vmatpush1.bf16.xpose.msra.mxu0 0
        %7289 = vmatprep.subr.bf16.mxu0 0
        %7290 = vmatpush1.bf16.xpose.msra.mxu0 0
        %7291 = vmatprep.subr.bf16.mxu0 0
        %7292 = vmatpush1.bf16.xpose.msra.mxu0 %v6122
        %7293 = vmatprep.subr.bf16.mxu0 0
        %7294 = vmatpush1.bf16.xpose.msra.mxu0 %v6121
        %7295 = vmatprep.subr.bf16.mxu0 0
        %7296 = vmatpush1.bf16.xpose.msra.mxu0 %v6120
        %7297 = vmatprep.subr.bf16.mxu0 0
        %7298 = vmatpush1.bf16.xpose.msra.mxu0 %v6119
        %7299 = vmatprep.subr.bf16.mxu0 0
        %7300 = vmatpush2.bf16.xpose.msra.mxu0 0
        %7301 = vmatprep.subr.bf16.mxu0 0
        %7302 = vmatpush2.bf16.xpose.msra.mxu0 0
        %7303 = vmatprep.subr.bf16.mxu0 0
        %7304 = vmatpush2.bf16.xpose.msra.mxu0 0
        %7305 = vmatprep.subr.bf16.mxu0 0
        %7306 = vmatpush2.bf16.xpose.msra.mxu0 0
        %7307 = vmatprep.subr.bf16.mxu0 0
        %7308 = vmatpush2.bf16.xpose.msra.mxu0 0
        %7309 = vmatprep.subr.bf16.mxu0 0
        %7310 = vmatpush2.bf16.xpose.msra.mxu0 0
        %7311 = vmatprep.subr.bf16.mxu0 0
        %7312 = vmatpush2.bf16.xpose.msra.mxu0 0
        %7313 = vmatprep.subr.bf16.mxu0 0
        %7314 = vmatpush2.bf16.xpose.msra.mxu0 0
        %7315 = vmatprep.mubr.bf16.mxu0 0
        %7316 = vmatmul.mubr.bf16.gmra.mxu0 %v7236
        %v7317 = vpop.f32.mrf.mxu0
        %v7318 = vadd.f32 0.0, %v7317
        %v7319 = vpop.f32.mrf.mxu0
        %v7320 = vpop.f32.mrf.mxu0
        %v7321 = vpop.f32.mrf.mxu0
        %7322 = vdwg.mxu0
        %7323 = vmatprep.subr.bf16.mxu0 0
        %7324 = vmatpush1.bf16.xpose.msra.mxu0 0
        %7325 = vmatprep.subr.bf16.mxu0 0
        %7326 = vmatpush1.bf16.xpose.msra.mxu0 0
        %7327 = vmatprep.subr.bf16.mxu0 0
        %7328 = vmatpush1.bf16.xpose.msra.mxu0 0
        %7329 = vmatprep.subr.bf16.mxu0 0
        %7330 = vmatpush1.bf16.xpose.msra.mxu0 0
        %7331 = vmatprep.subr.bf16.mxu0 0
        %7332 = vmatpush1.bf16.xpose.msra.mxu0 %v6126
        %7333 = vmatprep.subr.bf16.mxu0 0
        %7334 = vmatpush1.bf16.xpose.msra.mxu0 %v6125
        %7335 = vmatprep.subr.bf16.mxu0 0
        %7336 = vmatpush1.bf16.xpose.msra.mxu0 %v6124
        %7337 = vmatprep.subr.bf16.mxu0 0
        %7338 = vmatpush1.bf16.xpose.msra.mxu0 %v6123
        %7339 = vmatprep.subr.bf16.mxu0 0
        %7340 = vmatpush2.bf16.xpose.msra.mxu0 0
        %7341 = vmatprep.subr.bf16.mxu0 0
        %7342 = vmatpush2.bf16.xpose.msra.mxu0 0
        %7343 = vmatprep.subr.bf16.mxu0 0
        %7344 = vmatpush2.bf16.xpose.msra.mxu0 0
        %7345 = vmatprep.subr.bf16.mxu0 0
        %7346 = vmatpush2.bf16.xpose.msra.mxu0 0
        %7347 = vmatprep.subr.bf16.mxu0 0
        %7348 = vmatpush2.bf16.xpose.msra.mxu0 0
        %7349 = vmatprep.subr.bf16.mxu0 0
        %7350 = vmatpush2.bf16.xpose.msra.mxu0 0
        %7351 = vmatprep.subr.bf16.mxu0 0
        %7352 = vmatpush2.bf16.xpose.msra.mxu0 0
        %7353 = vmatprep.subr.bf16.mxu0 0
        %7354 = vmatpush2.bf16.xpose.msra.mxu0 0
        %7355 = vmatprep.mubr.bf16.mxu0 0
        %7356 = vmatmul.mubr.bf16.gmra.mxu0 %v7237
        %v7357 = vpop.f32.mrf.mxu0
        %v7358 = vadd.f32 0.0, %v7357
        %v7359 = vpop.f32.mrf.mxu0
        %v7360 = vpop.f32.mrf.mxu0
        %v7361 = vpop.f32.mrf.mxu0
        %7362 = vdwg.mxu0
        %7363 = vmatprep.subr.bf16.mxu0 0
        %7364 = vmatpush1.bf16.xpose.msra.mxu0 0
        %7365 = vmatprep.subr.bf16.mxu0 0
        %7366 = vmatpush1.bf16.xpose.msra.mxu0 0
        %7367 = vmatprep.subr.bf16.mxu0 0
        %7368 = vmatpush1.bf16.xpose.msra.mxu0 0
        %7369 = vmatprep.subr.bf16.mxu0 0
        %7370 = vmatpush1.bf16.xpose.msra.mxu0 0
        %7371 = vmatprep.subr.bf16.mxu0 0
        %7372 = vmatpush1.bf16.xpose.msra.mxu0 %v6130
        %7373 = vmatprep.subr.bf16.mxu0 0
        %7374 = vmatpush1.bf16.xpose.msra.mxu0 %v6129
        %7375 = vmatprep.subr.bf16.mxu0 0
        %7376 = vmatpush1.bf16.xpose.msra.mxu0 %v6128
        %7377 = vmatprep.subr.bf16.mxu0 0
        %7378 = vmatpush1.bf16.xpose.msra.mxu0 %v6127
        %7379 = vmatprep.subr.bf16.mxu0 0
        %7380 = vmatpush2.bf16.xpose.msra.mxu0 0
        %7381 = vmatprep.subr.bf16.mxu0 0
        %7382 = vmatpush2.bf16.xpose.msra.mxu0 0
        %7383 = vmatprep.subr.bf16.mxu0 0
        %7384 = vmatpush2.bf16.xpose.msra.mxu0 0
        %7385 = vmatprep.subr.bf16.mxu0 0
        %7386 = vmatpush2.bf16.xpose.msra.mxu0 0
        %7387 = vmatprep.subr.bf16.mxu0 0
        %7388 = vmatpush2.bf16.xpose.msra.mxu0 0
        %7389 = vmatprep.subr.bf16.mxu0 0
        %7390 = vmatpush2.bf16.xpose.msra.mxu0 0
        %7391 = vmatprep.subr.bf16.mxu0 0
        %7392 = vmatpush2.bf16.xpose.msra.mxu0 0
        %7393 = vmatprep.subr.bf16.mxu0 0
        %7394 = vmatpush2.bf16.xpose.msra.mxu0 0
        %7395 = vmatprep.mubr.bf16.mxu0 0
        %7396 = vmatmul.mubr.bf16.gmra.mxu0 %v7238
        %v7397 = vpop.f32.mrf.mxu0
        %v7398 = vadd.f32 0.0, %v7397
        %v7399 = vpop.f32.mrf.mxu0
        %v7400 = vpop.f32.mrf.mxu0
        %v7401 = vpop.f32.mrf.mxu0
        %7402 = vdwg.mxu0
        %7403 = vmatprep.subr.bf16.mxu0 0
        %7404 = vmatpush1.bf16.xpose.msra.mxu0 0
        %7405 = vmatprep.subr.bf16.mxu0 0
        %7406 = vmatpush1.bf16.xpose.msra.mxu0 0
        %7407 = vmatprep.subr.bf16.mxu0 0
        %7408 = vmatpush1.bf16.xpose.msra.mxu0 0
        %7409 = vmatprep.subr.bf16.mxu0 0
        %7410 = vmatpush1.bf16.xpose.msra.mxu0 0
        %7411 = vmatprep.subr.bf16.mxu0 0
        %7412 = vmatpush1.bf16.xpose.msra.mxu0 %v6134
        %7413 = vmatprep.subr.bf16.mxu0 0
        %7414 = vmatpush1.bf16.xpose.msra.mxu0 %v6133
        %7415 = vmatprep.subr.bf16.mxu0 0
        %7416 = vmatpush1.bf16.xpose.msra.mxu0 %v6132
        %7417 = vmatprep.subr.bf16.mxu0 0
        %7418 = vmatpush1.bf16.xpose.msra.mxu0 %v6131
        %7419 = vmatprep.subr.bf16.mxu0 0
        %7420 = vmatpush2.bf16.xpose.msra.mxu0 0
        %7421 = vmatprep.subr.bf16.mxu0 0
        %7422 = vmatpush2.bf16.xpose.msra.mxu0 0
        %7423 = vmatprep.subr.bf16.mxu0 0
        %7424 = vmatpush2.bf16.xpose.msra.mxu0 0
        %7425 = vmatprep.subr.bf16.mxu0 0
        %7426 = vmatpush2.bf16.xpose.msra.mxu0 0
        %7427 = vmatprep.subr.bf16.mxu0 0
        %7428 = vmatpush2.bf16.xpose.msra.mxu0 0
        %7429 = vmatprep.subr.bf16.mxu0 0
        %7430 = vmatpush2.bf16.xpose.msra.mxu0 0
        %7431 = vmatprep.subr.bf16.mxu0 0
        %7432 = vmatpush2.bf16.xpose.msra.mxu0 0
        %7433 = vmatprep.subr.bf16.mxu0 0
        %7434 = vmatpush2.bf16.xpose.msra.mxu0 0
        %7435 = vmatprep.mubr.bf16.mxu0 0
        %7436 = vmatmul.mubr.bf16.gmra.mxu0 %v7239
        %v7437 = vpop.f32.mrf.mxu0
        %v7438 = vadd.f32 0.0, %v7437
        %v7439 = vpop.f32.mrf.mxu0
        %v7440 = vpop.f32.mrf.mxu0
        %v7441 = vpop.f32.mrf.mxu0
        %7442 = vdwg.mxu0
        %7443 = vmatprep.subr.bf16.mxu0 0
        %7444 = vmatpush1.bf16.xpose.msra.mxu0 0
        %7445 = vmatprep.subr.bf16.mxu0 0
        %7446 = vmatpush1.bf16.xpose.msra.mxu0 0
        %7447 = vmatprep.subr.bf16.mxu0 0
        %7448 = vmatpush1.bf16.xpose.msra.mxu0 0
        %7449 = vmatprep.subr.bf16.mxu0 0
        %7450 = vmatpush1.bf16.xpose.msra.mxu0 0
        %7451 = vmatprep.subr.bf16.mxu0 0
        %7452 = vmatpush1.bf16.xpose.msra.mxu0 %v6138
        %7453 = vmatprep.subr.bf16.mxu0 0
        %7454 = vmatpush1.bf16.xpose.msra.mxu0 %v6137
        %7455 = vmatprep.subr.bf16.mxu0 0
        %7456 = vmatpush1.bf16.xpose.msra.mxu0 %v6136
        %7457 = vmatprep.subr.bf16.mxu0 0
        %7458 = vmatpush1.bf16.xpose.msra.mxu0 %v6135
        %7459 = vmatprep.subr.bf16.mxu0 0
        %7460 = vmatpush2.bf16.xpose.msra.mxu0 0
        %7461 = vmatprep.subr.bf16.mxu0 0
        %7462 = vmatpush2.bf16.xpose.msra.mxu0 0
        %7463 = vmatprep.subr.bf16.mxu0 0
        %7464 = vmatpush2.bf16.xpose.msra.mxu0 0
        %7465 = vmatprep.subr.bf16.mxu0 0
        %7466 = vmatpush2.bf16.xpose.msra.mxu0 0
        %7467 = vmatprep.subr.bf16.mxu0 0
        %7468 = vmatpush2.bf16.xpose.msra.mxu0 0
        %7469 = vmatprep.subr.bf16.mxu0 0
        %7470 = vmatpush2.bf16.xpose.msra.mxu0 0
        %7471 = vmatprep.subr.bf16.mxu0 0
        %7472 = vmatpush2.bf16.xpose.msra.mxu0 0
        %7473 = vmatprep.subr.bf16.mxu0 0
        %7474 = vmatpush2.bf16.xpose.msra.mxu0 0
        %7475 = vmatprep.mubr.bf16.mxu0 0
        %7476 = vmatmul.mubr.bf16.gmra.mxu0 %v7240
        %v7477 = vpop.f32.mrf.mxu0
        %v7478 = vadd.f32 0.0, %v7477
        %v7479 = vpop.f32.mrf.mxu0
        %v7480 = vpop.f32.mrf.mxu0
        %v7481 = vpop.f32.mrf.mxu0
        %7482 = vdwg.mxu0
        %7483 = vmatprep.subr.bf16.mxu0 0
        %7484 = vmatpush1.bf16.xpose.msra.mxu0 0
        %7485 = vmatprep.subr.bf16.mxu0 0
        %7486 = vmatpush1.bf16.xpose.msra.mxu0 0
        %7487 = vmatprep.subr.bf16.mxu0 0
        %7488 = vmatpush1.bf16.xpose.msra.mxu0 0
        %7489 = vmatprep.subr.bf16.mxu0 0
        %7490 = vmatpush1.bf16.xpose.msra.mxu0 0
        %7491 = vmatprep.subr.bf16.mxu0 0
        %7492 = vmatpush1.bf16.xpose.msra.mxu0 %v6142
        %7493 = vmatprep.subr.bf16.mxu0 0
        %7494 = vmatpush1.bf16.xpose.msra.mxu0 %v6141
        %7495 = vmatprep.subr.bf16.mxu0 0
        %7496 = vmatpush1.bf16.xpose.msra.mxu0 %v6140
        %7497 = vmatprep.subr.bf16.mxu0 0
        %7498 = vmatpush1.bf16.xpose.msra.mxu0 %v6139
        %7499 = vmatprep.subr.bf16.mxu0 0
        %7500 = vmatpush2.bf16.xpose.msra.mxu0 0
        %7501 = vmatprep.subr.bf16.mxu0 0
        %7502 = vmatpush2.bf16.xpose.msra.mxu0 0
        %7503 = vmatprep.subr.bf16.mxu0 0
        %7504 = vmatpush2.bf16.xpose.msra.mxu0 0
        %7505 = vmatprep.subr.bf16.mxu0 0
        %7506 = vmatpush2.bf16.xpose.msra.mxu0 0
        %7507 = vmatprep.subr.bf16.mxu0 0
        %7508 = vmatpush2.bf16.xpose.msra.mxu0 0
        %7509 = vmatprep.subr.bf16.mxu0 0
        %7510 = vmatpush2.bf16.xpose.msra.mxu0 0
        %7511 = vmatprep.subr.bf16.mxu0 0
        %7512 = vmatpush2.bf16.xpose.msra.mxu0 0
        %7513 = vmatprep.subr.bf16.mxu0 0
        %7514 = vmatpush2.bf16.xpose.msra.mxu0 0
        %7515 = vmatprep.mubr.bf16.mxu0 0
        %7516 = vmatmul.mubr.bf16.gmra.mxu0 %v7241
        %v7517 = vpop.f32.mrf.mxu0
        %v7518 = vadd.f32 0.0, %v7517
        %v7519 = vpop.f32.mrf.mxu0
        %v7520 = vpop.f32.mrf.mxu0
        %v7521 = vpop.f32.mrf.mxu0
        %7522 = vdwg.mxu0
        %7523 = vmatprep.subr.bf16.mxu0 0
        %7524 = vmatpush1.bf16.xpose.msra.mxu0 0
        %7525 = vmatprep.subr.bf16.mxu0 0
        %7526 = vmatpush1.bf16.xpose.msra.mxu0 0
        %7527 = vmatprep.subr.bf16.mxu0 0
        %7528 = vmatpush1.bf16.xpose.msra.mxu0 0
        %7529 = vmatprep.subr.bf16.mxu0 0
        %7530 = vmatpush1.bf16.xpose.msra.mxu0 0
        %7531 = vmatprep.subr.bf16.mxu0 0
        %7532 = vmatpush1.bf16.xpose.msra.mxu0 %v6146
        %7533 = vmatprep.subr.bf16.mxu0 0
        %7534 = vmatpush1.bf16.xpose.msra.mxu0 %v6145
        %7535 = vmatprep.subr.bf16.mxu0 0
        %7536 = vmatpush1.bf16.xpose.msra.mxu0 %v6144
        %7537 = vmatprep.subr.bf16.mxu0 0
        %7538 = vmatpush1.bf16.xpose.msra.mxu0 %v6143
        %7539 = vmatprep.subr.bf16.mxu0 0
        %7540 = vmatpush2.bf16.xpose.msra.mxu0 0
        %7541 = vmatprep.subr.bf16.mxu0 0
        %7542 = vmatpush2.bf16.xpose.msra.mxu0 0
        %7543 = vmatprep.subr.bf16.mxu0 0
        %7544 = vmatpush2.bf16.xpose.msra.mxu0 0
        %7545 = vmatprep.subr.bf16.mxu0 0
        %7546 = vmatpush2.bf16.xpose.msra.mxu0 0
        %7547 = vmatprep.subr.bf16.mxu0 0
        %7548 = vmatpush2.bf16.xpose.msra.mxu0 0
        %7549 = vmatprep.subr.bf16.mxu0 0
        %7550 = vmatpush2.bf16.xpose.msra.mxu0 0
        %7551 = vmatprep.subr.bf16.mxu0 0
        %7552 = vmatpush2.bf16.xpose.msra.mxu0 0
        %7553 = vmatprep.subr.bf16.mxu0 0
        %7554 = vmatpush2.bf16.xpose.msra.mxu0 0
        %7555 = vmatprep.mubr.bf16.mxu0 0
        %7556 = vmatmul.mubr.bf16.gmra.mxu0 %v7242
        %v7557 = vpop.f32.mrf.mxu0
        %v7558 = vadd.f32 0.0, %v7557
        %v7559 = vpop.f32.mrf.mxu0
        %v7560 = vpop.f32.mrf.mxu0
        %v7561 = vpop.f32.mrf.mxu0
        %7562 = vdwg.mxu0
        %v7563 = vmul.f32 %v7278, 0.088388346
        %v7564 = vmul.f32 %v7318, 0.088388346
        %v7565 = vmul.f32 %v7358, 0.088388346
        %v7566 = vmul.f32 %v7398, 0.088388346
        %v7567 = vmul.f32 %v7438, 0.088388346
        %v7568 = vmul.f32 %v7478, 0.088388346
        %v7569 = vmul.f32 %v7518, 0.088388346
        %v7570 = vmul.f32 %v7558, 0.088388346
        %v7571 = vadd.f32 %v7563, %v2360
        %v7572 = vadd.f32 %v7564, %v2360
        %v7573 = vadd.f32 %v7565, %v2360
        %v7574 = vadd.f32 %v7566, %v2360
        %v7575 = vadd.f32 %v7567, %v2360
        %v7576 = vadd.f32 %v7568, %v2360
        %v7577 = vadd.f32 %v7569, %v2360
        %v7578 = vadd.f32 %v7570, %v2360
        %v7579 = vsel %vm4354, %v7571, -inf
        %7580 = vmax.xlane.f32.xlu0 %v7579
        %v7581 = vpop.xlane.xlu0 %7580
        %v7582 = vsel %vm4354, %v7572, -inf
        %7583 = vmax.xlane.f32.xlu0 %v7582
        %v7584 = vpop.xlane.xlu0 %7583
        %v7585 = vsel %vm4354, %v7573, -inf
        %7586 = vmax.xlane.f32.xlu0 %v7585
        %v7587 = vpop.xlane.xlu0 %7586
        %v7588 = vsel %vm4354, %v7574, -inf
        %7589 = vmax.xlane.f32.xlu0 %v7588
        %v7590 = vpop.xlane.xlu0 %7589
        %v7591 = vsel %vm4354, %v7575, -inf
        %7592 = vmax.xlane.f32.xlu0 %v7591
        %v7593 = vpop.xlane.xlu0 %7592
        %v7594 = vsel %vm4354, %v7576, -inf
        %7595 = vmax.xlane.f32.xlu0 %v7594
        %v7596 = vpop.xlane.xlu0 %7595
        %v7597 = vsel %vm4354, %v7577, -inf
        %7598 = vmax.xlane.f32.xlu0 %v7597
        %v7599 = vpop.xlane.xlu0 %7598
        %v7600 = vsel %vm4354, %v7578, -inf
        %7601 = vmax.xlane.f32.xlu0 %v7600
        %v7602 = vpop.xlane.xlu0 %7601
        %v7603 = vsub.f32 %v7571, %v7581
        %v7604 = vsub.f32 %v7572, %v7584
        %v7605 = vsub.f32 %v7573, %v7587
        %v7606 = vsub.f32 %v7574, %v7590
        %v7607 = vsub.f32 %v7575, %v7593
        %v7608 = vsub.f32 %v7576, %v7596
        %v7609 = vsub.f32 %v7577, %v7599
        %v7610 = vsub.f32 %v7578, %v7602
        %v7611 = vmul.f32 %v7603, 1.442695
        %v7612 = vpow.pop %v7611
        %v7613 = vmul.f32 %v7604, 1.442695
        %v7614 = vpow.pop %v7613
        %v7615 = vmul.f32 %v7605, 1.442695
        %v7616 = vpow.pop %v7615
        %v7617 = vmul.f32 %v7606, 1.442695
        %v7618 = vpow.pop %v7617
        %v7619 = vmul.f32 %v7607, 1.442695
        %v7620 = vpow.pop %v7619
        %v7621 = vmul.f32 %v7608, 1.442695
        %v7622 = vpow.pop %v7621
        %v7623 = vmul.f32 %v7609, 1.442695
        %v7624 = vpow.pop %v7623
        %v7625 = vmul.f32 %v7610, 1.442695
        %v7626 = vpow.pop %v7625
        %v7627 = vsel %vm4354, %v7612, 0.0
        %7628 = vadd.xlane.f32.xlu0 %v7627
        %v7629 = vpop.xlane.xlu0 %7628
        %v7630 = vsel %vm4354, %v7614, 0.0
        %7631 = vadd.xlane.f32.xlu0 %v7630
        %v7632 = vpop.xlane.xlu0 %7631
        %v7633 = vsel %vm4354, %v7616, 0.0
        %7634 = vadd.xlane.f32.xlu0 %v7633
        %v7635 = vpop.xlane.xlu0 %7634
        %v7636 = vsel %vm4354, %v7618, 0.0
        %7637 = vadd.xlane.f32.xlu0 %v7636
        %v7638 = vpop.xlane.xlu0 %7637
        %v7639 = vsel %vm4354, %v7620, 0.0
        %7640 = vadd.xlane.f32.xlu0 %v7639
        %v7641 = vpop.xlane.xlu0 %7640
        %v7642 = vsel %vm4354, %v7622, 0.0
        %7643 = vadd.xlane.f32.xlu0 %v7642
        %v7644 = vpop.xlane.xlu0 %7643
        %v7645 = vsel %vm4354, %v7624, 0.0
        %7646 = vadd.xlane.f32.xlu0 %v7645
        %v7647 = vpop.xlane.xlu0 %7646
        %v7648 = vsel %vm4354, %v7626, 0.0
        %7649 = vadd.xlane.f32.xlu0 %v7648
        %v7650 = vpop.xlane.xlu0 %7649
        %v7651 = vrcp.pop %v7629
        %v7652 = vrcp.pop %v7632
        %v7653 = vrcp.pop %v7635
        %v7654 = vrcp.pop %v7638
        %v7655 = vrcp.pop %v7641
        %v7656 = vrcp.pop %v7644
        %v7657 = vrcp.pop %v7647
        %v7658 = vrcp.pop %v7650
        %v7659 = vmul.f32 %v7612, %v7651
        %v7660 = vmul.f32 %v7614, %v7652
        %v7661 = vmul.f32 %v7616, %v7653
        %v7662 = vmul.f32 %v7618, %v7654
        %v7663 = vmul.f32 %v7620, %v7655
        %v7664 = vmul.f32 %v7622, %v7656
        %v7665 = vmul.f32 %v7624, %v7657
        %v7666 = vmul.f32 %v7626, %v7658
        %v7667 = vpack.c.bf16 %v7659, %v7659
        %v7668 = vpack.c.bf16 %v7660, %v7660
        %v7669 = vpack.c.bf16 %v7661, %v7661
        %v7670 = vpack.c.bf16 %v7662, %v7662
        %v7671 = vpack.c.bf16 %v7663, %v7663
        %v7672 = vpack.c.bf16 %v7664, %v7664
        %v7673 = vpack.c.bf16 %v7665, %v7665
        %v7674 = vpack.c.bf16 %v7666, %v7666
        %v7676 = vsel %vm4451, %v7667, 0
        %7678 = vmatprep.subr.bf16.mxu0 0
        %7679 = vmatpush1.bf16.msra.mxu0 0
        %7680 = vmatprep.subr.bf16.mxu0 0
        %7681 = vmatpush1.bf16.msra.mxu0 0
        %7682 = vmatprep.subr.bf16.mxu0 0
        %7683 = vmatpush1.bf16.msra.mxu0 0
        %7684 = vmatprep.subr.bf16.mxu0 0
        %7685 = vmatpush1.bf16.msra.mxu0 0
        %7686 = vmatprep.subr.bf16.mxu0 0
        %7687 = vmatpush1.bf16.msra.mxu0 %v6529
        %7688 = vmatprep.subr.bf16.mxu0 0
        %7689 = vmatpush1.bf16.msra.mxu0 %v6528
        %7690 = vmatprep.subr.bf16.mxu0 0
        %7691 = vmatpush1.bf16.msra.mxu0 %v6527
        %7692 = vmatprep.subr.bf16.mxu0 0
        %7693 = vmatpush1.bf16.msra.mxu0 %v6526
        %7694 = vmatprep.subr.bf16.mxu0 0
        %7695 = vmatpush2.bf16.msra.mxu0 0
        %7696 = vmatprep.subr.bf16.mxu0 0
        %7697 = vmatpush2.bf16.msra.mxu0 0
        %7698 = vmatprep.subr.bf16.mxu0 0
        %7699 = vmatpush2.bf16.msra.mxu0 0
        %7700 = vmatprep.subr.bf16.mxu0 0
        %7701 = vmatpush2.bf16.msra.mxu0 0
        %7702 = vmatprep.subr.bf16.mxu0 0
        %7703 = vmatpush2.bf16.msra.mxu0 0
        %7704 = vmatprep.subr.bf16.mxu0 0
        %7705 = vmatpush2.bf16.msra.mxu0 0
        %7706 = vmatprep.subr.bf16.mxu0 0
        %7707 = vmatpush2.bf16.msra.mxu0 0
        %7708 = vmatprep.subr.bf16.mxu0 0
        %7709 = vmatpush2.bf16.msra.mxu0 0
        %7710 = vmatprep.mubr.bf16.mxu0 0
        %7711 = vmatmul.mubr.bf16.gmra.mxu0 %v7676
        %v7712 = vpop.f32.mrf.mxu0
        %v7713 = vadd.f32 0.0, %v7712
        %v7714 = vpop.f32.mrf.mxu0
        %v7715 = vpop.f32.mrf.mxu0
        %v7716 = vpop.f32.mrf.mxu0
        %7717 = vdwg.mxu0
        %v7719 = vsel %vm4451, %v7668, 0
        %7721 = vmatprep.subr.bf16.mxu0 0
        %7722 = vmatpush1.bf16.msra.mxu0 0
        %7723 = vmatprep.subr.bf16.mxu0 0
        %7724 = vmatpush1.bf16.msra.mxu0 0
        %7725 = vmatprep.subr.bf16.mxu0 0
        %7726 = vmatpush1.bf16.msra.mxu0 0
        %7727 = vmatprep.subr.bf16.mxu0 0
        %7728 = vmatpush1.bf16.msra.mxu0 0
        %7729 = vmatprep.subr.bf16.mxu0 0
        %7730 = vmatpush1.bf16.msra.mxu0 %v6533
        %7731 = vmatprep.subr.bf16.mxu0 0
        %7732 = vmatpush1.bf16.msra.mxu0 %v6532
        %7733 = vmatprep.subr.bf16.mxu0 0
        %7734 = vmatpush1.bf16.msra.mxu0 %v6531
        %7735 = vmatprep.subr.bf16.mxu0 0
        %7736 = vmatpush1.bf16.msra.mxu0 %v6530
        %7737 = vmatprep.subr.bf16.mxu0 0
        %7738 = vmatpush2.bf16.msra.mxu0 0
        %7739 = vmatprep.subr.bf16.mxu0 0
        %7740 = vmatpush2.bf16.msra.mxu0 0
        %7741 = vmatprep.subr.bf16.mxu0 0
        %7742 = vmatpush2.bf16.msra.mxu0 0
        %7743 = vmatprep.subr.bf16.mxu0 0
        %7744 = vmatpush2.bf16.msra.mxu0 0
        %7745 = vmatprep.subr.bf16.mxu0 0
        %7746 = vmatpush2.bf16.msra.mxu0 0
        %7747 = vmatprep.subr.bf16.mxu0 0
        %7748 = vmatpush2.bf16.msra.mxu0 0
        %7749 = vmatprep.subr.bf16.mxu0 0
        %7750 = vmatpush2.bf16.msra.mxu0 0
        %7751 = vmatprep.subr.bf16.mxu0 0
        %7752 = vmatpush2.bf16.msra.mxu0 0
        %7753 = vmatprep.mubr.bf16.mxu0 0
        %7754 = vmatmul.mubr.bf16.gmra.mxu0 %v7719
        %v7755 = vpop.f32.mrf.mxu0
        %v7756 = vadd.f32 0.0, %v7755
        %v7757 = vpop.f32.mrf.mxu0
        %v7758 = vpop.f32.mrf.mxu0
        %v7759 = vpop.f32.mrf.mxu0
        %7760 = vdwg.mxu0
        %v7762 = vsel %vm4451, %v7669, 0
        %7764 = vmatprep.subr.bf16.mxu0 0
        %7765 = vmatpush1.bf16.msra.mxu0 0
        %7766 = vmatprep.subr.bf16.mxu0 0
        %7767 = vmatpush1.bf16.msra.mxu0 0
        %7768 = vmatprep.subr.bf16.mxu0 0
        %7769 = vmatpush1.bf16.msra.mxu0 0
        %7770 = vmatprep.subr.bf16.mxu0 0
        %7771 = vmatpush1.bf16.msra.mxu0 0
        %7772 = vmatprep.subr.bf16.mxu0 0
        %7773 = vmatpush1.bf16.msra.mxu0 %v6537
        %7774 = vmatprep.subr.bf16.mxu0 0
        %7775 = vmatpush1.bf16.msra.mxu0 %v6536
        %7776 = vmatprep.subr.bf16.mxu0 0
        %7777 = vmatpush1.bf16.msra.mxu0 %v6535
        %7778 = vmatprep.subr.bf16.mxu0 0
        %7779 = vmatpush1.bf16.msra.mxu0 %v6534
        %7780 = vmatprep.subr.bf16.mxu0 0
        %7781 = vmatpush2.bf16.msra.mxu0 0
        %7782 = vmatprep.subr.bf16.mxu0 0
        %7783 = vmatpush2.bf16.msra.mxu0 0
        %7784 = vmatprep.subr.bf16.mxu0 0
        %7785 = vmatpush2.bf16.msra.mxu0 0
        %7786 = vmatprep.subr.bf16.mxu0 0
        %7787 = vmatpush2.bf16.msra.mxu0 0
        %7788 = vmatprep.subr.bf16.mxu0 0
        %7789 = vmatpush2.bf16.msra.mxu0 0
        %7790 = vmatprep.subr.bf16.mxu0 0
        %7791 = vmatpush2.bf16.msra.mxu0 0
        %7792 = vmatprep.subr.bf16.mxu0 0
        %7793 = vmatpush2.bf16.msra.mxu0 0
        %7794 = vmatprep.subr.bf16.mxu0 0
        %7795 = vmatpush2.bf16.msra.mxu0 0
        %7796 = vmatprep.mubr.bf16.mxu0 0
        %7797 = vmatmul.mubr.bf16.gmra.mxu0 %v7762
        %v7798 = vpop.f32.mrf.mxu0
        %v7799 = vadd.f32 0.0, %v7798
        %v7800 = vpop.f32.mrf.mxu0
        %v7801 = vpop.f32.mrf.mxu0
        %v7802 = vpop.f32.mrf.mxu0
        %7803 = vdwg.mxu0
        %v7805 = vsel %vm4451, %v7670, 0
        %7807 = vmatprep.subr.bf16.mxu0 0
        %7808 = vmatpush1.bf16.msra.mxu0 0
        %7809 = vmatprep.subr.bf16.mxu0 0
        %7810 = vmatpush1.bf16.msra.mxu0 0
        %7811 = vmatprep.subr.bf16.mxu0 0
        %7812 = vmatpush1.bf16.msra.mxu0 0
        %7813 = vmatprep.subr.bf16.mxu0 0
        %7814 = vmatpush1.bf16.msra.mxu0 0
        %7815 = vmatprep.subr.bf16.mxu0 0
        %7816 = vmatpush1.bf16.msra.mxu0 %v6541
        %7817 = vmatprep.subr.bf16.mxu0 0
        %7818 = vmatpush1.bf16.msra.mxu0 %v6540
        %7819 = vmatprep.subr.bf16.mxu0 0
        %7820 = vmatpush1.bf16.msra.mxu0 %v6539
        %7821 = vmatprep.subr.bf16.mxu0 0
        %7822 = vmatpush1.bf16.msra.mxu0 %v6538
        %7823 = vmatprep.subr.bf16.mxu0 0
        %7824 = vmatpush2.bf16.msra.mxu0 0
        %7825 = vmatprep.subr.bf16.mxu0 0
        %7826 = vmatpush2.bf16.msra.mxu0 0
        %7827 = vmatprep.subr.bf16.mxu0 0
        %7828 = vmatpush2.bf16.msra.mxu0 0
        %7829 = vmatprep.subr.bf16.mxu0 0
        %7830 = vmatpush2.bf16.msra.mxu0 0
        %7831 = vmatprep.subr.bf16.mxu0 0
        %7832 = vmatpush2.bf16.msra.mxu0 0
        %7833 = vmatprep.subr.bf16.mxu0 0
        %7834 = vmatpush2.bf16.msra.mxu0 0
        %7835 = vmatprep.subr.bf16.mxu0 0
        %7836 = vmatpush2.bf16.msra.mxu0 0
        %7837 = vmatprep.subr.bf16.mxu0 0
        %7838 = vmatpush2.bf16.msra.mxu0 0
        %7839 = vmatprep.mubr.bf16.mxu0 0
        %7840 = vmatmul.mubr.bf16.gmra.mxu0 %v7805
        %v7841 = vpop.f32.mrf.mxu0
        %v7842 = vadd.f32 0.0, %v7841
        %v7843 = vpop.f32.mrf.mxu0
        %v7844 = vpop.f32.mrf.mxu0
        %v7845 = vpop.f32.mrf.mxu0
        %7846 = vdwg.mxu0
        %v7848 = vsel %vm4451, %v7671, 0
        %7850 = vmatprep.subr.bf16.mxu0 0
        %7851 = vmatpush1.bf16.msra.mxu0 0
        %7852 = vmatprep.subr.bf16.mxu0 0
        %7853 = vmatpush1.bf16.msra.mxu0 0
        %7854 = vmatprep.subr.bf16.mxu0 0
        %7855 = vmatpush1.bf16.msra.mxu0 0
        %7856 = vmatprep.subr.bf16.mxu0 0
        %7857 = vmatpush1.bf16.msra.mxu0 0
        %7858 = vmatprep.subr.bf16.mxu0 0
        %7859 = vmatpush1.bf16.msra.mxu0 %v6545
        %7860 = vmatprep.subr.bf16.mxu0 0
        %7861 = vmatpush1.bf16.msra.mxu0 %v6544
        %7862 = vmatprep.subr.bf16.mxu0 0
        %7863 = vmatpush1.bf16.msra.mxu0 %v6543
        %7864 = vmatprep.subr.bf16.mxu0 0
        %7865 = vmatpush1.bf16.msra.mxu0 %v6542
        %7866 = vmatprep.subr.bf16.mxu0 0
        %7867 = vmatpush2.bf16.msra.mxu0 0
        %7868 = vmatprep.subr.bf16.mxu0 0
        %7869 = vmatpush2.bf16.msra.mxu0 0
        %7870 = vmatprep.subr.bf16.mxu0 0
        %7871 = vmatpush2.bf16.msra.mxu0 0
        %7872 = vmatprep.subr.bf16.mxu0 0
        %7873 = vmatpush2.bf16.msra.mxu0 0
        %7874 = vmatprep.subr.bf16.mxu0 0
        %7875 = vmatpush2.bf16.msra.mxu0 0
        %7876 = vmatprep.subr.bf16.mxu0 0
        %7877 = vmatpush2.bf16.msra.mxu0 0
        %7878 = vmatprep.subr.bf16.mxu0 0
        %7879 = vmatpush2.bf16.msra.mxu0 0
        %7880 = vmatprep.subr.bf16.mxu0 0
        %7881 = vmatpush2.bf16.msra.mxu0 0
        %7882 = vmatprep.mubr.bf16.mxu0 0
        %7883 = vmatmul.mubr.bf16.gmra.mxu0 %v7848
        %v7884 = vpop.f32.mrf.mxu0
        %v7885 = vadd.f32 0.0, %v7884
        %v7886 = vpop.f32.mrf.mxu0
        %v7887 = vpop.f32.mrf.mxu0
        %v7888 = vpop.f32.mrf.mxu0
        %7889 = vdwg.mxu0
        %v7891 = vsel %vm4451, %v7672, 0
        %7893 = vmatprep.subr.bf16.mxu0 0
        %7894 = vmatpush1.bf16.msra.mxu0 0
        %7895 = vmatprep.subr.bf16.mxu0 0
        %7896 = vmatpush1.bf16.msra.mxu0 0
        %7897 = vmatprep.subr.bf16.mxu0 0
        %7898 = vmatpush1.bf16.msra.mxu0 0
        %7899 = vmatprep.subr.bf16.mxu0 0
        %7900 = vmatpush1.bf16.msra.mxu0 0
        %7901 = vmatprep.subr.bf16.mxu0 0
        %7902 = vmatpush1.bf16.msra.mxu0 %v6549
        %7903 = vmatprep.subr.bf16.mxu0 0
        %7904 = vmatpush1.bf16.msra.mxu0 %v6548
        %7905 = vmatprep.subr.bf16.mxu0 0
        %7906 = vmatpush1.bf16.msra.mxu0 %v6547
        %7907 = vmatprep.subr.bf16.mxu0 0
        %7908 = vmatpush1.bf16.msra.mxu0 %v6546
        %7909 = vmatprep.subr.bf16.mxu0 0
        %7910 = vmatpush2.bf16.msra.mxu0 0
        %7911 = vmatprep.subr.bf16.mxu0 0
        %7912 = vmatpush2.bf16.msra.mxu0 0
        %7913 = vmatprep.subr.bf16.mxu0 0
        %7914 = vmatpush2.bf16.msra.mxu0 0
        %7915 = vmatprep.subr.bf16.mxu0 0
        %7916 = vmatpush2.bf16.msra.mxu0 0
        %7917 = vmatprep.subr.bf16.mxu0 0
        %7918 = vmatpush2.bf16.msra.mxu0 0
        %7919 = vmatprep.subr.bf16.mxu0 0
        %7920 = vmatpush2.bf16.msra.mxu0 0
        %7921 = vmatprep.subr.bf16.mxu0 0
        %7922 = vmatpush2.bf16.msra.mxu0 0
        %7923 = vmatprep.subr.bf16.mxu0 0
        %7924 = vmatpush2.bf16.msra.mxu0 0
        %7925 = vmatprep.mubr.bf16.mxu0 0
        %7926 = vmatmul.mubr.bf16.gmra.mxu0 %v7891
        %v7927 = vpop.f32.mrf.mxu0
        %v7928 = vadd.f32 0.0, %v7927
        %v7929 = vpop.f32.mrf.mxu0
        %v7930 = vpop.f32.mrf.mxu0
        %v7931 = vpop.f32.mrf.mxu0
        %7932 = vdwg.mxu0
        %v7934 = vsel %vm4451, %v7673, 0
        %7936 = vmatprep.subr.bf16.mxu0 0
        %7937 = vmatpush1.bf16.msra.mxu0 0
        %7938 = vmatprep.subr.bf16.mxu0 0
        %7939 = vmatpush1.bf16.msra.mxu0 0
        %7940 = vmatprep.subr.bf16.mxu0 0
        %7941 = vmatpush1.bf16.msra.mxu0 0
        %7942 = vmatprep.subr.bf16.mxu0 0
        %7943 = vmatpush1.bf16.msra.mxu0 0
        %7944 = vmatprep.subr.bf16.mxu0 0
        %7945 = vmatpush1.bf16.msra.mxu0 %v6553
        %7946 = vmatprep.subr.bf16.mxu0 0
        %7947 = vmatpush1.bf16.msra.mxu0 %v6552
        %7948 = vmatprep.subr.bf16.mxu0 0
        %7949 = vmatpush1.bf16.msra.mxu0 %v6551
        %7950 = vmatprep.subr.bf16.mxu0 0
        %7951 = vmatpush1.bf16.msra.mxu0 %v6550
        %7952 = vmatprep.subr.bf16.mxu0 0
        %7953 = vmatpush2.bf16.msra.mxu0 0
        %7954 = vmatprep.subr.bf16.mxu0 0
        %7955 = vmatpush2.bf16.msra.mxu0 0
        %7956 = vmatprep.subr.bf16.mxu0 0
        %7957 = vmatpush2.bf16.msra.mxu0 0
        %7958 = vmatprep.subr.bf16.mxu0 0
        %7959 = vmatpush2.bf16.msra.mxu0 0
        %7960 = vmatprep.subr.bf16.mxu0 0
        %7961 = vmatpush2.bf16.msra.mxu0 0
        %7962 = vmatprep.subr.bf16.mxu0 0
        %7963 = vmatpush2.bf16.msra.mxu0 0
        %7964 = vmatprep.subr.bf16.mxu0 0
        %7965 = vmatpush2.bf16.msra.mxu0 0
        %7966 = vmatprep.subr.bf16.mxu0 0
        %7967 = vmatpush2.bf16.msra.mxu0 0
        %7968 = vmatprep.mubr.bf16.mxu0 0
        %7969 = vmatmul.mubr.bf16.gmra.mxu0 %v7934
        %v7970 = vpop.f32.mrf.mxu0
        %v7971 = vadd.f32 0.0, %v7970
        %v7972 = vpop.f32.mrf.mxu0
        %v7973 = vpop.f32.mrf.mxu0
        %v7974 = vpop.f32.mrf.mxu0
        %7975 = vdwg.mxu0
        %v7977 = vsel %vm4451, %v7674, 0
        %7979 = vmatprep.subr.bf16.mxu0 0
        %7980 = vmatpush1.bf16.msra.mxu0 0
        %7981 = vmatprep.subr.bf16.mxu0 0
        %7982 = vmatpush1.bf16.msra.mxu0 0
        %7983 = vmatprep.subr.bf16.mxu0 0
        %7984 = vmatpush1.bf16.msra.mxu0 0
        %7985 = vmatprep.subr.bf16.mxu0 0
        %7986 = vmatpush1.bf16.msra.mxu0 0
        %7987 = vmatprep.subr.bf16.mxu0 0
        %7988 = vmatpush1.bf16.msra.mxu0 %v6557
        %7989 = vmatprep.subr.bf16.mxu0 0
        %7990 = vmatpush1.bf16.msra.mxu0 %v6556
        %7991 = vmatprep.subr.bf16.mxu0 0
        %7992 = vmatpush1.bf16.msra.mxu0 %v6555
        %7993 = vmatprep.subr.bf16.mxu0 0
        %7994 = vmatpush1.bf16.msra.mxu0 %v6554
        %7995 = vmatprep.subr.bf16.mxu0 0
        %7996 = vmatpush2.bf16.msra.mxu0 0
        %7997 = vmatprep.subr.bf16.mxu0 0
        %7998 = vmatpush2.bf16.msra.mxu0 0
        %7999 = vmatprep.subr.bf16.mxu0 0
        %8000 = vmatpush2.bf16.msra.mxu0 0
        %8001 = vmatprep.subr.bf16.mxu0 0
        %8002 = vmatpush2.bf16.msra.mxu0 0
        %8003 = vmatprep.subr.bf16.mxu0 0
        %8004 = vmatpush2.bf16.msra.mxu0 0
        %8005 = vmatprep.subr.bf16.mxu0 0
        %8006 = vmatpush2.bf16.msra.mxu0 0
        %8007 = vmatprep.subr.bf16.mxu0 0
        %8008 = vmatpush2.bf16.msra.mxu0 0
        %8009 = vmatprep.subr.bf16.mxu0 0
        %8010 = vmatpush2.bf16.msra.mxu0 0
        %8011 = vmatprep.mubr.bf16.mxu0 0
        %8012 = vmatmul.mubr.bf16.gmra.mxu0 %v7977
        %v8013 = vpop.f32.mrf.mxu0
        %v8014 = vadd.f32 0.0, %v8013
        %v8015 = vpop.f32.mrf.mxu0
        %v8016 = vpop.f32.mrf.mxu0
        %v8017 = vpop.f32.mrf.mxu0
        %8018 = vdwg.mxu0
        %v8019 = vpack.c.bf16 %v7713, %v7713
        %v8020 = vpack.c.bf16 %v7756, %v7756
        %v8021 = vpack.c.bf16 %v7799, %v7799
        %v8022 = vpack.c.bf16 %v7842, %v7842
        %v8023 = vpack.c.bf16 %v7885, %v7885
        %v8024 = vpack.c.bf16 %v7928, %v7928
        %v8025 = vpack.c.bf16 %v7971, %v7971
        %v8026 = vpack.c.bf16 %v8014, %v8014
        %v8027 = vpack.c.bf16 %v2173, %v2173
        %8028 = vmatprep.subr.bf16.mxu0 0
        %8029 = vmatpush1.bf16.msra.mxu0 %v2418
        %8030 = vmatprep.subr.bf16.mxu0 0
        %8031 = vmatpush1.bf16.msra.mxu0 %v2417
        %8032 = vmatprep.subr.bf16.mxu0 0
        %8033 = vmatpush1.bf16.msra.mxu0 %v2416
        %8034 = vmatprep.subr.bf16.mxu0 0
        %8035 = vmatpush1.bf16.msra.mxu0 %v2415
        %8036 = vmatprep.subr.bf16.mxu0 0
        %8037 = vmatpush1.bf16.msra.mxu0 %v2414
        %8038 = vmatprep.subr.bf16.mxu0 0
        %8039 = vmatpush1.bf16.msra.mxu0 %v2413
        %8040 = vmatprep.subr.bf16.mxu0 0
        %8041 = vmatpush1.bf16.msra.mxu0 %v2412
        %8042 = vmatprep.subr.bf16.mxu0 0
        %8043 = vmatpush1.bf16.msra.mxu0 %v2411
        %8044 = vmatprep.subr.bf16.mxu0 0
        %8045 = vmatpush2.bf16.msra.mxu0 0
        %8046 = vmatprep.subr.bf16.mxu0 0
        %8047 = vmatpush2.bf16.msra.mxu0 0
        %8048 = vmatprep.subr.bf16.mxu0 0
        %8049 = vmatpush2.bf16.msra.mxu0 0
        %8050 = vmatprep.subr.bf16.mxu0 0
        %8051 = vmatpush2.bf16.msra.mxu0 0
        %8052 = vmatprep.subr.bf16.mxu0 0
        %8053 = vmatpush2.bf16.msra.mxu0 0
        %8054 = vmatprep.subr.bf16.mxu0 0
        %8055 = vmatpush2.bf16.msra.mxu0 0
        %8056 = vmatprep.subr.bf16.mxu0 0
        %8057 = vmatpush2.bf16.msra.mxu0 0
        %8058 = vmatprep.subr.bf16.mxu0 0
        %8059 = vmatpush2.bf16.msra.mxu0 0
        %8060 = vmatprep.mubr.bf16.mxu0 0
        %8061 = vmatmul.mubr.bf16.gmra.mxu0 %v8027
        %v8062 = vpop.f32.mrf.mxu0
        %v8063 = vadd.f32 0.0, %v8062
        %v8064 = vpop.f32.mrf.mxu0
        %v8065 = vpop.f32.mrf.mxu0
        %v8066 = vpop.f32.mrf.mxu0
        %8067 = vdwg.mxu0
        %v8069 = vcombine.high %v8063, %v8063
        %v8071 = vunpack.c.l.s4 1966171168
        %v8072 = vunpack.c.0.s8 %v8071
        %v8073 = vlaneseq
        %v8074 = vshrl.u32 %v8073, 7
        %v8075 = vsub.s32 %v8072, %v8074
        %v8076 = vrot.slane %v8063, %v8075
        %v8078 = vunpack.c.l.s4 1966171168
        %v8079 = vunpack.c.0.s8 %v8078
        %v8080 = vlaneseq
        %v8081 = vshrl.u32 %v8080, 7
        %v8082 = vsub.s32 %v8079, %v8081
        %v8083 = vrot.slane %v8069, %v8082
        %v8084 = vcombine.high %v8076, %v8076
        %v8085 = vcombine.high %v8083, %v8083
        %v8087 = vunpack.c.l.s4 1966171168
        %v8088 = vunpack.c.0.s8 %v8087
        %v8089 = vlaneseq
        %v8090 = vshrl.u32 %v8089, 7
        %v8091 = vsub.s32 %v8088, %v8090
        %v8092 = vrot.slane %v8076, %v8091
        %v8094 = vunpack.c.l.s4 1966171168
        %v8095 = vunpack.c.0.s8 %v8094
        %v8096 = vlaneseq
        %v8097 = vshrl.u32 %v8096, 7
        %v8098 = vsub.s32 %v8095, %v8097
        %v8099 = vrot.slane %v8083, %v8098
        %v8101 = vunpack.c.l.s4 1966171168
        %v8102 = vunpack.c.0.s8 %v8101
        %v8103 = vlaneseq
        %v8104 = vshrl.u32 %v8103, 7
        %v8105 = vsub.s32 %v8102, %v8104
        %v8106 = vrot.slane %v8084, %v8105
        %v8108 = vunpack.c.l.s4 1966171168
        %v8109 = vunpack.c.0.s8 %v8108
        %v8110 = vlaneseq
        %v8111 = vshrl.u32 %v8110, 7
        %v8112 = vsub.s32 %v8109, %v8111
        %v8113 = vrot.slane %v8085, %v8112
        %v8114 = vcombine.high %v8092, %v8092
        %v8115 = vcombine.high %v8099, %v8099
        %v8116 = vcombine.high %v8106, %v8106
        %v8117 = vcombine.high %v8113, %v8113
        %v8126 = vpack.c.bf16 %v8092, %v8092
        %v8127 = vpack.c.bf16 %v8106, %v8106
        %v8128 = vpack.c.bf16 %v8114, %v8114
        %v8129 = vpack.c.bf16 %v8116, %v8116
        %v8130 = vpack.c.bf16 %v8099, %v8099
        %v8131 = vpack.c.bf16 %v8113, %v8113
        %v8132 = vpack.c.bf16 %v8115, %v8115
        %v8133 = vpack.c.bf16 %v8117, %v8117
        %8134 = vmatprep.subr.bf16.mxu0 0
        %8135 = vmatpush1.bf16.xpose.msra.mxu0 0
        %8136 = vmatprep.subr.bf16.mxu0 0
        %8137 = vmatpush1.bf16.xpose.msra.mxu0 0
        %8138 = vmatprep.subr.bf16.mxu0 0
        %8139 = vmatpush1.bf16.xpose.msra.mxu0 0
        %8140 = vmatprep.subr.bf16.mxu0 0
        %8141 = vmatpush1.bf16.xpose.msra.mxu0 0
        %8142 = vmatprep.subr.bf16.mxu0 0
        %8143 = vmatpush1.bf16.xpose.msra.mxu0 %v6118
        %8144 = vmatprep.subr.bf16.mxu0 0
        %8145 = vmatpush1.bf16.xpose.msra.mxu0 %v6117
        %8146 = vmatprep.subr.bf16.mxu0 0
        %8147 = vmatpush1.bf16.xpose.msra.mxu0 %v6116
        %8148 = vmatprep.subr.bf16.mxu0 0
        %8149 = vmatpush1.bf16.xpose.msra.mxu0 %v6115
        %8150 = vmatprep.subr.bf16.mxu0 0
        %8151 = vmatpush2.bf16.xpose.msra.mxu0 0
        %8152 = vmatprep.subr.bf16.mxu0 0
        %8153 = vmatpush2.bf16.xpose.msra.mxu0 0
        %8154 = vmatprep.subr.bf16.mxu0 0
        %8155 = vmatpush2.bf16.xpose.msra.mxu0 0
        %8156 = vmatprep.subr.bf16.mxu0 0
        %8157 = vmatpush2.bf16.xpose.msra.mxu0 0
        %8158 = vmatprep.subr.bf16.mxu0 0
        %8159 = vmatpush2.bf16.xpose.msra.mxu0 0
        %8160 = vmatprep.subr.bf16.mxu0 0
        %8161 = vmatpush2.bf16.xpose.msra.mxu0 0
        %8162 = vmatprep.subr.bf16.mxu0 0
        %8163 = vmatpush2.bf16.xpose.msra.mxu0 0
        %8164 = vmatprep.subr.bf16.mxu0 0
        %8165 = vmatpush2.bf16.xpose.msra.mxu0 0
        %8166 = vmatprep.mubr.bf16.mxu0 0
        %8167 = vmatmul.mubr.bf16.gmra.mxu0 %v8126
        %v8168 = vpop.f32.mrf.mxu0
        %v8169 = vadd.f32 0.0, %v8168
        %v8170 = vpop.f32.mrf.mxu0
        %v8171 = vpop.f32.mrf.mxu0
        %v8172 = vpop.f32.mrf.mxu0
        %8173 = vdwg.mxu0
        %8174 = vmatprep.subr.bf16.mxu0 0
        %8175 = vmatpush1.bf16.xpose.msra.mxu0 0
        %8176 = vmatprep.subr.bf16.mxu0 0
        %8177 = vmatpush1.bf16.xpose.msra.mxu0 0
        %8178 = vmatprep.subr.bf16.mxu0 0
        %8179 = vmatpush1.bf16.xpose.msra.mxu0 0
        %8180 = vmatprep.subr.bf16.mxu0 0
        %8181 = vmatpush1.bf16.xpose.msra.mxu0 0
        %8182 = vmatprep.subr.bf16.mxu0 0
        %8183 = vmatpush1.bf16.xpose.msra.mxu0 %v6122
        %8184 = vmatprep.subr.bf16.mxu0 0
        %8185 = vmatpush1.bf16.xpose.msra.mxu0 %v6121
        %8186 = vmatprep.subr.bf16.mxu0 0
        %8187 = vmatpush1.bf16.xpose.msra.mxu0 %v6120
        %8188 = vmatprep.subr.bf16.mxu0 0
        %8189 = vmatpush1.bf16.xpose.msra.mxu0 %v6119
        %8190 = vmatprep.subr.bf16.mxu0 0
        %8191 = vmatpush2.bf16.xpose.msra.mxu0 0
        %8192 = vmatprep.subr.bf16.mxu0 0
        %8193 = vmatpush2.bf16.xpose.msra.mxu0 0
        %8194 = vmatprep.subr.bf16.mxu0 0
        %8195 = vmatpush2.bf16.xpose.msra.mxu0 0
        %8196 = vmatprep.subr.bf16.mxu0 0
        %8197 = vmatpush2.bf16.xpose.msra.mxu0 0
        %8198 = vmatprep.subr.bf16.mxu0 0
        %8199 = vmatpush2.bf16.xpose.msra.mxu0 0
        %8200 = vmatprep.subr.bf16.mxu0 0
        %8201 = vmatpush2.bf16.xpose.msra.mxu0 0
        %8202 = vmatprep.subr.bf16.mxu0 0
        %8203 = vmatpush2.bf16.xpose.msra.mxu0 0
        %8204 = vmatprep.subr.bf16.mxu0 0
        %8205 = vmatpush2.bf16.xpose.msra.mxu0 0
        %8206 = vmatprep.mubr.bf16.mxu0 0
        %8207 = vmatmul.mubr.bf16.gmra.mxu0 %v8127
        %v8208 = vpop.f32.mrf.mxu0
        %v8209 = vadd.f32 0.0, %v8208
        %v8210 = vpop.f32.mrf.mxu0
        %v8211 = vpop.f32.mrf.mxu0
        %v8212 = vpop.f32.mrf.mxu0
        %8213 = vdwg.mxu0
        %8214 = vmatprep.subr.bf16.mxu0 0
        %8215 = vmatpush1.bf16.xpose.msra.mxu0 0
        %8216 = vmatprep.subr.bf16.mxu0 0
        %8217 = vmatpush1.bf16.xpose.msra.mxu0 0
        %8218 = vmatprep.subr.bf16.mxu0 0
        %8219 = vmatpush1.bf16.xpose.msra.mxu0 0
        %8220 = vmatprep.subr.bf16.mxu0 0
        %8221 = vmatpush1.bf16.xpose.msra.mxu0 0
        %8222 = vmatprep.subr.bf16.mxu0 0
        %8223 = vmatpush1.bf16.xpose.msra.mxu0 %v6126
        %8224 = vmatprep.subr.bf16.mxu0 0
        %8225 = vmatpush1.bf16.xpose.msra.mxu0 %v6125
        %8226 = vmatprep.subr.bf16.mxu0 0
        %8227 = vmatpush1.bf16.xpose.msra.mxu0 %v6124
        %8228 = vmatprep.subr.bf16.mxu0 0
        %8229 = vmatpush1.bf16.xpose.msra.mxu0 %v6123
        %8230 = vmatprep.subr.bf16.mxu0 0
        %8231 = vmatpush2.bf16.xpose.msra.mxu0 0
        %8232 = vmatprep.subr.bf16.mxu0 0
        %8233 = vmatpush2.bf16.xpose.msra.mxu0 0
        %8234 = vmatprep.subr.bf16.mxu0 0
        %8235 = vmatpush2.bf16.xpose.msra.mxu0 0
        %8236 = vmatprep.subr.bf16.mxu0 0
        %8237 = vmatpush2.bf16.xpose.msra.mxu0 0
        %8238 = vmatprep.subr.bf16.mxu0 0
        %8239 = vmatpush2.bf16.xpose.msra.mxu0 0
        %8240 = vmatprep.subr.bf16.mxu0 0
        %8241 = vmatpush2.bf16.xpose.msra.mxu0 0
        %8242 = vmatprep.subr.bf16.mxu0 0
        %8243 = vmatpush2.bf16.xpose.msra.mxu0 0
        %8244 = vmatprep.subr.bf16.mxu0 0
        %8245 = vmatpush2.bf16.xpose.msra.mxu0 0
        %8246 = vmatprep.mubr.bf16.mxu0 0
        %8247 = vmatmul.mubr.bf16.gmra.mxu0 %v8128
        %v8248 = vpop.f32.mrf.mxu0
        %v8249 = vadd.f32 0.0, %v8248
        %v8250 = vpop.f32.mrf.mxu0
        %v8251 = vpop.f32.mrf.mxu0
        %v8252 = vpop.f32.mrf.mxu0
        %8253 = vdwg.mxu0
        %8254 = vmatprep.subr.bf16.mxu0 0
        %8255 = vmatpush1.bf16.xpose.msra.mxu0 0
        %8256 = vmatprep.subr.bf16.mxu0 0
        %8257 = vmatpush1.bf16.xpose.msra.mxu0 0
        %8258 = vmatprep.subr.bf16.mxu0 0
        %8259 = vmatpush1.bf16.xpose.msra.mxu0 0
        %8260 = vmatprep.subr.bf16.mxu0 0
        %8261 = vmatpush1.bf16.xpose.msra.mxu0 0
        %8262 = vmatprep.subr.bf16.mxu0 0
        %8263 = vmatpush1.bf16.xpose.msra.mxu0 %v6130
        %8264 = vmatprep.subr.bf16.mxu0 0
        %8265 = vmatpush1.bf16.xpose.msra.mxu0 %v6129
        %8266 = vmatprep.subr.bf16.mxu0 0
        %8267 = vmatpush1.bf16.xpose.msra.mxu0 %v6128
        %8268 = vmatprep.subr.bf16.mxu0 0
        %8269 = vmatpush1.bf16.xpose.msra.mxu0 %v6127
        %8270 = vmatprep.subr.bf16.mxu0 0
        %8271 = vmatpush2.bf16.xpose.msra.mxu0 0
        %8272 = vmatprep.subr.bf16.mxu0 0
        %8273 = vmatpush2.bf16.xpose.msra.mxu0 0
        %8274 = vmatprep.subr.bf16.mxu0 0
        %8275 = vmatpush2.bf16.xpose.msra.mxu0 0
        %8276 = vmatprep.subr.bf16.mxu0 0
        %8277 = vmatpush2.bf16.xpose.msra.mxu0 0
        %8278 = vmatprep.subr.bf16.mxu0 0
        %8279 = vmatpush2.bf16.xpose.msra.mxu0 0
        %8280 = vmatprep.subr.bf16.mxu0 0
        %8281 = vmatpush2.bf16.xpose.msra.mxu0 0
        %8282 = vmatprep.subr.bf16.mxu0 0
        %8283 = vmatpush2.bf16.xpose.msra.mxu0 0
        %8284 = vmatprep.subr.bf16.mxu0 0
        %8285 = vmatpush2.bf16.xpose.msra.mxu0 0
        %8286 = vmatprep.mubr.bf16.mxu0 0
        %8287 = vmatmul.mubr.bf16.gmra.mxu0 %v8129
        %v8288 = vpop.f32.mrf.mxu0
        %v8289 = vadd.f32 0.0, %v8288
        %v8290 = vpop.f32.mrf.mxu0
        %v8291 = vpop.f32.mrf.mxu0
        %v8292 = vpop.f32.mrf.mxu0
        %8293 = vdwg.mxu0
        %8294 = vmatprep.subr.bf16.mxu0 0
        %8295 = vmatpush1.bf16.xpose.msra.mxu0 0
        %8296 = vmatprep.subr.bf16.mxu0 0
        %8297 = vmatpush1.bf16.xpose.msra.mxu0 0
        %8298 = vmatprep.subr.bf16.mxu0 0
        %8299 = vmatpush1.bf16.xpose.msra.mxu0 0
        %8300 = vmatprep.subr.bf16.mxu0 0
        %8301 = vmatpush1.bf16.xpose.msra.mxu0 0
        %8302 = vmatprep.subr.bf16.mxu0 0
        %8303 = vmatpush1.bf16.xpose.msra.mxu0 %v6134
        %8304 = vmatprep.subr.bf16.mxu0 0
        %8305 = vmatpush1.bf16.xpose.msra.mxu0 %v6133
        %8306 = vmatprep.subr.bf16.mxu0 0
        %8307 = vmatpush1.bf16.xpose.msra.mxu0 %v6132
        %8308 = vmatprep.subr.bf16.mxu0 0
        %8309 = vmatpush1.bf16.xpose.msra.mxu0 %v6131
        %8310 = vmatprep.subr.bf16.mxu0 0
        %8311 = vmatpush2.bf16.xpose.msra.mxu0 0
        %8312 = vmatprep.subr.bf16.mxu0 0
        %8313 = vmatpush2.bf16.xpose.msra.mxu0 0
        %8314 = vmatprep.subr.bf16.mxu0 0
        %8315 = vmatpush2.bf16.xpose.msra.mxu0 0
        %8316 = vmatprep.subr.bf16.mxu0 0
        %8317 = vmatpush2.bf16.xpose.msra.mxu0 0
        %8318 = vmatprep.subr.bf16.mxu0 0
        %8319 = vmatpush2.bf16.xpose.msra.mxu0 0
        %8320 = vmatprep.subr.bf16.mxu0 0
        %8321 = vmatpush2.bf16.xpose.msra.mxu0 0
        %8322 = vmatprep.subr.bf16.mxu0 0
        %8323 = vmatpush2.bf16.xpose.msra.mxu0 0
        %8324 = vmatprep.subr.bf16.mxu0 0
        %8325 = vmatpush2.bf16.xpose.msra.mxu0 0
        %8326 = vmatprep.mubr.bf16.mxu0 0
        %8327 = vmatmul.mubr.bf16.gmra.mxu0 %v8130
        %v8328 = vpop.f32.mrf.mxu0
        %v8329 = vadd.f32 0.0, %v8328
        %v8330 = vpop.f32.mrf.mxu0
        %v8331 = vpop.f32.mrf.mxu0
        %v8332 = vpop.f32.mrf.mxu0
        %8333 = vdwg.mxu0
        %8334 = vmatprep.subr.bf16.mxu0 0
        %8335 = vmatpush1.bf16.xpose.msra.mxu0 0
        %8336 = vmatprep.subr.bf16.mxu0 0
        %8337 = vmatpush1.bf16.xpose.msra.mxu0 0
        %8338 = vmatprep.subr.bf16.mxu0 0
        %8339 = vmatpush1.bf16.xpose.msra.mxu0 0
        %8340 = vmatprep.subr.bf16.mxu0 0
        %8341 = vmatpush1.bf16.xpose.msra.mxu0 0
        %8342 = vmatprep.subr.bf16.mxu0 0
        %8343 = vmatpush1.bf16.xpose.msra.mxu0 %v6138
        %8344 = vmatprep.subr.bf16.mxu0 0
        %8345 = vmatpush1.bf16.xpose.msra.mxu0 %v6137
        %8346 = vmatprep.subr.bf16.mxu0 0
        %8347 = vmatpush1.bf16.xpose.msra.mxu0 %v6136
        %8348 = vmatprep.subr.bf16.mxu0 0
        %8349 = vmatpush1.bf16.xpose.msra.mxu0 %v6135
        %8350 = vmatprep.subr.bf16.mxu0 0
        %8351 = vmatpush2.bf16.xpose.msra.mxu0 0
        %8352 = vmatprep.subr.bf16.mxu0 0
        %8353 = vmatpush2.bf16.xpose.msra.mxu0 0
        %8354 = vmatprep.subr.bf16.mxu0 0
        %8355 = vmatpush2.bf16.xpose.msra.mxu0 0
        %8356 = vmatprep.subr.bf16.mxu0 0
        %8357 = vmatpush2.bf16.xpose.msra.mxu0 0
        %8358 = vmatprep.subr.bf16.mxu0 0
        %8359 = vmatpush2.bf16.xpose.msra.mxu0 0
        %8360 = vmatprep.subr.bf16.mxu0 0
        %8361 = vmatpush2.bf16.xpose.msra.mxu0 0
        %8362 = vmatprep.subr.bf16.mxu0 0
        %8363 = vmatpush2.bf16.xpose.msra.mxu0 0
        %8364 = vmatprep.subr.bf16.mxu0 0
        %8365 = vmatpush2.bf16.xpose.msra.mxu0 0
        %8366 = vmatprep.mubr.bf16.mxu0 0
        %8367 = vmatmul.mubr.bf16.gmra.mxu0 %v8131
        %v8368 = vpop.f32.mrf.mxu0
        %v8369 = vadd.f32 0.0, %v8368
        %v8370 = vpop.f32.mrf.mxu0
        %v8371 = vpop.f32.mrf.mxu0
        %v8372 = vpop.f32.mrf.mxu0
        %8373 = vdwg.mxu0
        %8374 = vmatprep.subr.bf16.mxu0 0
        %8375 = vmatpush1.bf16.xpose.msra.mxu0 0
        %8376 = vmatprep.subr.bf16.mxu0 0
        %8377 = vmatpush1.bf16.xpose.msra.mxu0 0
        %8378 = vmatprep.subr.bf16.mxu0 0
        %8379 = vmatpush1.bf16.xpose.msra.mxu0 0
        %8380 = vmatprep.subr.bf16.mxu0 0
        %8381 = vmatpush1.bf16.xpose.msra.mxu0 0
        %8382 = vmatprep.subr.bf16.mxu0 0
        %8383 = vmatpush1.bf16.xpose.msra.mxu0 %v6142
        %8384 = vmatprep.subr.bf16.mxu0 0
        %8385 = vmatpush1.bf16.xpose.msra.mxu0 %v6141
        %8386 = vmatprep.subr.bf16.mxu0 0
        %8387 = vmatpush1.bf16.xpose.msra.mxu0 %v6140
        %8388 = vmatprep.subr.bf16.mxu0 0
        %8389 = vmatpush1.bf16.xpose.msra.mxu0 %v6139
        %8390 = vmatprep.subr.bf16.mxu0 0
        %8391 = vmatpush2.bf16.xpose.msra.mxu0 0
        %8392 = vmatprep.subr.bf16.mxu0 0
        %8393 = vmatpush2.bf16.xpose.msra.mxu0 0
        %8394 = vmatprep.subr.bf16.mxu0 0
        %8395 = vmatpush2.bf16.xpose.msra.mxu0 0
        %8396 = vmatprep.subr.bf16.mxu0 0
        %8397 = vmatpush2.bf16.xpose.msra.mxu0 0
        %8398 = vmatprep.subr.bf16.mxu0 0
        %8399 = vmatpush2.bf16.xpose.msra.mxu0 0
        %8400 = vmatprep.subr.bf16.mxu0 0
        %8401 = vmatpush2.bf16.xpose.msra.mxu0 0
        %8402 = vmatprep.subr.bf16.mxu0 0
        %8403 = vmatpush2.bf16.xpose.msra.mxu0 0
        %8404 = vmatprep.subr.bf16.mxu0 0
        %8405 = vmatpush2.bf16.xpose.msra.mxu0 0
        %8406 = vmatprep.mubr.bf16.mxu0 0
        %8407 = vmatmul.mubr.bf16.gmra.mxu0 %v8132
        %v8408 = vpop.f32.mrf.mxu0
        %v8409 = vadd.f32 0.0, %v8408
        %v8410 = vpop.f32.mrf.mxu0
        %v8411 = vpop.f32.mrf.mxu0
        %v8412 = vpop.f32.mrf.mxu0
        %8413 = vdwg.mxu0
        %8414 = vmatprep.subr.bf16.mxu0 0
        %8415 = vmatpush1.bf16.xpose.msra.mxu0 0
        %8416 = vmatprep.subr.bf16.mxu0 0
        %8417 = vmatpush1.bf16.xpose.msra.mxu0 0
        %8418 = vmatprep.subr.bf16.mxu0 0
        %8419 = vmatpush1.bf16.xpose.msra.mxu0 0
        %8420 = vmatprep.subr.bf16.mxu0 0
        %8421 = vmatpush1.bf16.xpose.msra.mxu0 0
        %8422 = vmatprep.subr.bf16.mxu0 0
        %8423 = vmatpush1.bf16.xpose.msra.mxu0 %v6146
        %8424 = vmatprep.subr.bf16.mxu0 0
        %8425 = vmatpush1.bf16.xpose.msra.mxu0 %v6145
        %8426 = vmatprep.subr.bf16.mxu0 0
        %8427 = vmatpush1.bf16.xpose.msra.mxu0 %v6144
        %8428 = vmatprep.subr.bf16.mxu0 0
        %8429 = vmatpush1.bf16.xpose.msra.mxu0 %v6143
        %8430 = vmatprep.subr.bf16.mxu0 0
        %8431 = vmatpush2.bf16.xpose.msra.mxu0 0
        %8432 = vmatprep.subr.bf16.mxu0 0
        %8433 = vmatpush2.bf16.xpose.msra.mxu0 0
        %8434 = vmatprep.subr.bf16.mxu0 0
        %8435 = vmatpush2.bf16.xpose.msra.mxu0 0
        %8436 = vmatprep.subr.bf16.mxu0 0
        %8437 = vmatpush2.bf16.xpose.msra.mxu0 0
        %8438 = vmatprep.subr.bf16.mxu0 0
        %8439 = vmatpush2.bf16.xpose.msra.mxu0 0
        %8440 = vmatprep.subr.bf16.mxu0 0
        %8441 = vmatpush2.bf16.xpose.msra.mxu0 0
        %8442 = vmatprep.subr.bf16.mxu0 0
        %8443 = vmatpush2.bf16.xpose.msra.mxu0 0
        %8444 = vmatprep.subr.bf16.mxu0 0
        %8445 = vmatpush2.bf16.xpose.msra.mxu0 0
        %8446 = vmatprep.mubr.bf16.mxu0 0
        %8447 = vmatmul.mubr.bf16.gmra.mxu0 %v8133
        %v8448 = vpop.f32.mrf.mxu0
        %v8449 = vadd.f32 0.0, %v8448
        %v8450 = vpop.f32.mrf.mxu0
        %v8451 = vpop.f32.mrf.mxu0
        %v8452 = vpop.f32.mrf.mxu0
        %8453 = vdwg.mxu0
        %v8454 = vmul.f32 %v8169, 0.088388346
        %v8455 = vmul.f32 %v8209, 0.088388346
        %v8456 = vmul.f32 %v8249, 0.088388346
        %v8457 = vmul.f32 %v8289, 0.088388346
        %v8458 = vmul.f32 %v8329, 0.088388346
        %v8459 = vmul.f32 %v8369, 0.088388346
        %v8460 = vmul.f32 %v8409, 0.088388346
        %v8461 = vmul.f32 %v8449, 0.088388346
        %v8462 = vadd.f32 %v8454, %v2360
        %v8463 = vadd.f32 %v8455, %v2360
        %v8464 = vadd.f32 %v8456, %v2360
        %v8465 = vadd.f32 %v8457, %v2360
        %v8466 = vadd.f32 %v8458, %v2360
        %v8467 = vadd.f32 %v8459, %v2360
        %v8468 = vadd.f32 %v8460, %v2360
        %v8469 = vadd.f32 %v8461, %v2360
        %v8470 = vsel %vm4354, %v8462, -inf
        %8471 = vmax.xlane.f32.xlu0 %v8470
        %v8472 = vpop.xlane.xlu0 %8471
        %v8473 = vsel %vm4354, %v8463, -inf
        %8474 = vmax.xlane.f32.xlu0 %v8473
        %v8475 = vpop.xlane.xlu0 %8474
        %v8476 = vsel %vm4354, %v8464, -inf
        %8477 = vmax.xlane.f32.xlu0 %v8476
        %v8478 = vpop.xlane.xlu0 %8477
        %v8479 = vsel %vm4354, %v8465, -inf
        %8480 = vmax.xlane.f32.xlu0 %v8479
        %v8481 = vpop.xlane.xlu0 %8480
        %v8482 = vsel %vm4354, %v8466, -inf
        %8483 = vmax.xlane.f32.xlu0 %v8482
        %v8484 = vpop.xlane.xlu0 %8483
        %v8485 = vsel %vm4354, %v8467, -inf
        %8486 = vmax.xlane.f32.xlu0 %v8485
        %v8487 = vpop.xlane.xlu0 %8486
        %v8488 = vsel %vm4354, %v8468, -inf
        %8489 = vmax.xlane.f32.xlu0 %v8488
        %v8490 = vpop.xlane.xlu0 %8489
        %v8491 = vsel %vm4354, %v8469, -inf
        %8492 = vmax.xlane.f32.xlu0 %v8491
        %v8493 = vpop.xlane.xlu0 %8492
        %v8494 = vsub.f32 %v8462, %v8472
        %v8495 = vsub.f32 %v8463, %v8475
        %v8496 = vsub.f32 %v8464, %v8478
        %v8497 = vsub.f32 %v8465, %v8481
        %v8498 = vsub.f32 %v8466, %v8484
        %v8499 = vsub.f32 %v8467, %v8487
        %v8500 = vsub.f32 %v8468, %v8490
        %v8501 = vsub.f32 %v8469, %v8493
        %v8502 = vmul.f32 %v8494, 1.442695
        %v8503 = vpow.pop %v8502
        %v8504 = vmul.f32 %v8495, 1.442695
        %v8505 = vpow.pop %v8504
        %v8506 = vmul.f32 %v8496, 1.442695
        %v8507 = vpow.pop %v8506
        %v8508 = vmul.f32 %v8497, 1.442695
        %v8509 = vpow.pop %v8508
        %v8510 = vmul.f32 %v8498, 1.442695
        %v8511 = vpow.pop %v8510
        %v8512 = vmul.f32 %v8499, 1.442695
        %v8513 = vpow.pop %v8512
        %v8514 = vmul.f32 %v8500, 1.442695
        %v8515 = vpow.pop %v8514
        %v8516 = vmul.f32 %v8501, 1.442695
        %v8517 = vpow.pop %v8516
        %v8518 = vsel %vm4354, %v8503, 0.0
        %8519 = vadd.xlane.f32.xlu0 %v8518
        %v8520 = vpop.xlane.xlu0 %8519
        %v8521 = vsel %vm4354, %v8505, 0.0
        %8522 = vadd.xlane.f32.xlu0 %v8521
        %v8523 = vpop.xlane.xlu0 %8522
        %v8524 = vsel %vm4354, %v8507, 0.0
        %8525 = vadd.xlane.f32.xlu0 %v8524
        %v8526 = vpop.xlane.xlu0 %8525
        %v8527 = vsel %vm4354, %v8509, 0.0
        %8528 = vadd.xlane.f32.xlu0 %v8527
        %v8529 = vpop.xlane.xlu0 %8528
        %v8530 = vsel %vm4354, %v8511, 0.0
        %8531 = vadd.xlane.f32.xlu0 %v8530
        %v8532 = vpop.xlane.xlu0 %8531
        %v8533 = vsel %vm4354, %v8513, 0.0
        %8534 = vadd.xlane.f32.xlu0 %v8533
        %v8535 = vpop.xlane.xlu0 %8534
        %v8536 = vsel %vm4354, %v8515, 0.0
        %8537 = vadd.xlane.f32.xlu0 %v8536
        %v8538 = vpop.xlane.xlu0 %8537
        %v8539 = vsel %vm4354, %v8517, 0.0
        %8540 = vadd.xlane.f32.xlu0 %v8539
        %v8541 = vpop.xlane.xlu0 %8540
        %v8542 = vrcp.pop %v8520
        %v8543 = vrcp.pop %v8523
        %v8544 = vrcp.pop %v8526
        %v8545 = vrcp.pop %v8529
        %v8546 = vrcp.pop %v8532
        %v8547 = vrcp.pop %v8535
        %v8548 = vrcp.pop %v8538
        %v8549 = vrcp.pop %v8541
        %v8550 = vmul.f32 %v8503, %v8542
        %v8551 = vmul.f32 %v8505, %v8543
        %v8552 = vmul.f32 %v8507, %v8544
        %v8553 = vmul.f32 %v8509, %v8545
        %v8554 = vmul.f32 %v8511, %v8546
        %v8555 = vmul.f32 %v8513, %v8547
        %v8556 = vmul.f32 %v8515, %v8548
        %v8557 = vmul.f32 %v8517, %v8549
        %v8558 = vpack.c.bf16 %v8550, %v8550
        %v8559 = vpack.c.bf16 %v8551, %v8551
        %v8560 = vpack.c.bf16 %v8552, %v8552
        %v8561 = vpack.c.bf16 %v8553, %v8553
        %v8562 = vpack.c.bf16 %v8554, %v8554
        %v8563 = vpack.c.bf16 %v8555, %v8555
        %v8564 = vpack.c.bf16 %v8556, %v8556
        %v8565 = vpack.c.bf16 %v8557, %v8557
        %v8567 = vsel %vm4451, %v8558, 0
        %8569 = vmatprep.subr.bf16.mxu0 0
        %8570 = vmatpush1.bf16.msra.mxu0 0
        %8571 = vmatprep.subr.bf16.mxu0 0
        %8572 = vmatpush1.bf16.msra.mxu0 0
        %8573 = vmatprep.subr.bf16.mxu0 0
        %8574 = vmatpush1.bf16.msra.mxu0 0
        %8575 = vmatprep.subr.bf16.mxu0 0
        %8576 = vmatpush1.bf16.msra.mxu0 0
        %8577 = vmatprep.subr.bf16.mxu0 0
        %8578 = vmatpush1.bf16.msra.mxu0 %v6529
        %8579 = vmatprep.subr.bf16.mxu0 0
        %8580 = vmatpush1.bf16.msra.mxu0 %v6528
        %8581 = vmatprep.subr.bf16.mxu0 0
        %8582 = vmatpush1.bf16.msra.mxu0 %v6527
        %8583 = vmatprep.subr.bf16.mxu0 0
        %8584 = vmatpush1.bf16.msra.mxu0 %v6526
        %8585 = vmatprep.subr.bf16.mxu0 0
        %8586 = vmatpush2.bf16.msra.mxu0 0
        %8587 = vmatprep.subr.bf16.mxu0 0
        %8588 = vmatpush2.bf16.msra.mxu0 0
        %8589 = vmatprep.subr.bf16.mxu0 0
        %8590 = vmatpush2.bf16.msra.mxu0 0
        %8591 = vmatprep.subr.bf16.mxu0 0
        %8592 = vmatpush2.bf16.msra.mxu0 0
        %8593 = vmatprep.subr.bf16.mxu0 0
        %8594 = vmatpush2.bf16.msra.mxu0 0
        %8595 = vmatprep.subr.bf16.mxu0 0
        %8596 = vmatpush2.bf16.msra.mxu0 0
        %8597 = vmatprep.subr.bf16.mxu0 0
        %8598 = vmatpush2.bf16.msra.mxu0 0
        %8599 = vmatprep.subr.bf16.mxu0 0
        %8600 = vmatpush2.bf16.msra.mxu0 0
        %8601 = vmatprep.mubr.bf16.mxu0 0
        %8602 = vmatmul.mubr.bf16.gmra.mxu0 %v8567
        %v8603 = vpop.f32.mrf.mxu0
        %v8604 = vadd.f32 0.0, %v8603
        %v8605 = vpop.f32.mrf.mxu0
        %v8606 = vpop.f32.mrf.mxu0
        %v8607 = vpop.f32.mrf.mxu0
        %8608 = vdwg.mxu0
        %v8610 = vsel %vm4451, %v8559, 0
        %8612 = vmatprep.subr.bf16.mxu0 0
        %8613 = vmatpush1.bf16.msra.mxu0 0
        %8614 = vmatprep.subr.bf16.mxu0 0
        %8615 = vmatpush1.bf16.msra.mxu0 0
        %8616 = vmatprep.subr.bf16.mxu0 0
        %8617 = vmatpush1.bf16.msra.mxu0 0
        %8618 = vmatprep.subr.bf16.mxu0 0
        %8619 = vmatpush1.bf16.msra.mxu0 0
        %8620 = vmatprep.subr.bf16.mxu0 0
        %8621 = vmatpush1.bf16.msra.mxu0 %v6533
        %8622 = vmatprep.subr.bf16.mxu0 0
        %8623 = vmatpush1.bf16.msra.mxu0 %v6532
        %8624 = vmatprep.subr.bf16.mxu0 0
        %8625 = vmatpush1.bf16.msra.mxu0 %v6531
        %8626 = vmatprep.subr.bf16.mxu0 0
        %8627 = vmatpush1.bf16.msra.mxu0 %v6530
        %8628 = vmatprep.subr.bf16.mxu0 0
        %8629 = vmatpush2.bf16.msra.mxu0 0
        %8630 = vmatprep.subr.bf16.mxu0 0
        %8631 = vmatpush2.bf16.msra.mxu0 0
        %8632 = vmatprep.subr.bf16.mxu0 0
        %8633 = vmatpush2.bf16.msra.mxu0 0
        %8634 = vmatprep.subr.bf16.mxu0 0
        %8635 = vmatpush2.bf16.msra.mxu0 0
        %8636 = vmatprep.subr.bf16.mxu0 0
        %8637 = vmatpush2.bf16.msra.mxu0 0
        %8638 = vmatprep.subr.bf16.mxu0 0
        %8639 = vmatpush2.bf16.msra.mxu0 0
        %8640 = vmatprep.subr.bf16.mxu0 0
        %8641 = vmatpush2.bf16.msra.mxu0 0
        %8642 = vmatprep.subr.bf16.mxu0 0
        %8643 = vmatpush2.bf16.msra.mxu0 0
        %8644 = vmatprep.mubr.bf16.mxu0 0
        %8645 = vmatmul.mubr.bf16.gmra.mxu0 %v8610
        %v8646 = vpop.f32.mrf.mxu0
        %v8647 = vadd.f32 0.0, %v8646
        %v8648 = vpop.f32.mrf.mxu0
        %v8649 = vpop.f32.mrf.mxu0
        %v8650 = vpop.f32.mrf.mxu0
        %8651 = vdwg.mxu0
        %v8653 = vsel %vm4451, %v8560, 0
        %8655 = vmatprep.subr.bf16.mxu0 0
        %8656 = vmatpush1.bf16.msra.mxu0 0
        %8657 = vmatprep.subr.bf16.mxu0 0
        %8658 = vmatpush1.bf16.msra.mxu0 0
        %8659 = vmatprep.subr.bf16.mxu0 0
        %8660 = vmatpush1.bf16.msra.mxu0 0
        %8661 = vmatprep.subr.bf16.mxu0 0
        %8662 = vmatpush1.bf16.msra.mxu0 0
        %8663 = vmatprep.subr.bf16.mxu0 0
        %8664 = vmatpush1.bf16.msra.mxu0 %v6537
        %8665 = vmatprep.subr.bf16.mxu0 0
        %8666 = vmatpush1.bf16.msra.mxu0 %v6536
        %8667 = vmatprep.subr.bf16.mxu0 0
        %8668 = vmatpush1.bf16.msra.mxu0 %v6535
        %8669 = vmatprep.subr.bf16.mxu0 0
        %8670 = vmatpush1.bf16.msra.mxu0 %v6534
        %8671 = vmatprep.subr.bf16.mxu0 0
        %8672 = vmatpush2.bf16.msra.mxu0 0
        %8673 = vmatprep.subr.bf16.mxu0 0
        %8674 = vmatpush2.bf16.msra.mxu0 0
        %8675 = vmatprep.subr.bf16.mxu0 0
        %8676 = vmatpush2.bf16.msra.mxu0 0
        %8677 = vmatprep.subr.bf16.mxu0 0
        %8678 = vmatpush2.bf16.msra.mxu0 0
        %8679 = vmatprep.subr.bf16.mxu0 0
        %8680 = vmatpush2.bf16.msra.mxu0 0
        %8681 = vmatprep.subr.bf16.mxu0 0
        %8682 = vmatpush2.bf16.msra.mxu0 0
        %8683 = vmatprep.subr.bf16.mxu0 0
        %8684 = vmatpush2.bf16.msra.mxu0 0
        %8685 = vmatprep.subr.bf16.mxu0 0
        %8686 = vmatpush2.bf16.msra.mxu0 0
        %8687 = vmatprep.mubr.bf16.mxu0 0
        %8688 = vmatmul.mubr.bf16.gmra.mxu0 %v8653
        %v8689 = vpop.f32.mrf.mxu0
        %v8690 = vadd.f32 0.0, %v8689
        %v8691 = vpop.f32.mrf.mxu0
        %v8692 = vpop.f32.mrf.mxu0
        %v8693 = vpop.f32.mrf.mxu0
        %8694 = vdwg.mxu0
        %v8696 = vsel %vm4451, %v8561, 0
        %8698 = vmatprep.subr.bf16.mxu0 0
        %8699 = vmatpush1.bf16.msra.mxu0 0
        %8700 = vmatprep.subr.bf16.mxu0 0
        %8701 = vmatpush1.bf16.msra.mxu0 0
        %8702 = vmatprep.subr.bf16.mxu0 0
        %8703 = vmatpush1.bf16.msra.mxu0 0
        %8704 = vmatprep.subr.bf16.mxu0 0
        %8705 = vmatpush1.bf16.msra.mxu0 0
        %8706 = vmatprep.subr.bf16.mxu0 0
        %8707 = vmatpush1.bf16.msra.mxu0 %v6541
        %8708 = vmatprep.subr.bf16.mxu0 0
        %8709 = vmatpush1.bf16.msra.mxu0 %v6540
        %8710 = vmatprep.subr.bf16.mxu0 0
        %8711 = vmatpush1.bf16.msra.mxu0 %v6539
        %8712 = vmatprep.subr.bf16.mxu0 0
        %8713 = vmatpush1.bf16.msra.mxu0 %v6538
        %8714 = vmatprep.subr.bf16.mxu0 0
        %8715 = vmatpush2.bf16.msra.mxu0 0
        %8716 = vmatprep.subr.bf16.mxu0 0
        %8717 = vmatpush2.bf16.msra.mxu0 0
        %8718 = vmatprep.subr.bf16.mxu0 0
        %8719 = vmatpush2.bf16.msra.mxu0 0
        %8720 = vmatprep.subr.bf16.mxu0 0
        %8721 = vmatpush2.bf16.msra.mxu0 0
        %8722 = vmatprep.subr.bf16.mxu0 0
        %8723 = vmatpush2.bf16.msra.mxu0 0
        %8724 = vmatprep.subr.bf16.mxu0 0
        %8725 = vmatpush2.bf16.msra.mxu0 0
        %8726 = vmatprep.subr.bf16.mxu0 0
        %8727 = vmatpush2.bf16.msra.mxu0 0
        %8728 = vmatprep.subr.bf16.mxu0 0
        %8729 = vmatpush2.bf16.msra.mxu0 0
        %8730 = vmatprep.mubr.bf16.mxu0 0
        %8731 = vmatmul.mubr.bf16.gmra.mxu0 %v8696
        %v8732 = vpop.f32.mrf.mxu0
        %v8733 = vadd.f32 0.0, %v8732
        %v8734 = vpop.f32.mrf.mxu0
        %v8735 = vpop.f32.mrf.mxu0
        %v8736 = vpop.f32.mrf.mxu0
        %8737 = vdwg.mxu0
        %v8739 = vsel %vm4451, %v8562, 0
        %8741 = vmatprep.subr.bf16.mxu0 0
        %8742 = vmatpush1.bf16.msra.mxu0 0
        %8743 = vmatprep.subr.bf16.mxu0 0
        %8744 = vmatpush1.bf16.msra.mxu0 0
        %8745 = vmatprep.subr.bf16.mxu0 0
        %8746 = vmatpush1.bf16.msra.mxu0 0
        %8747 = vmatprep.subr.bf16.mxu0 0
        %8748 = vmatpush1.bf16.msra.mxu0 0
        %8749 = vmatprep.subr.bf16.mxu0 0
        %8750 = vmatpush1.bf16.msra.mxu0 %v6545
        %8751 = vmatprep.subr.bf16.mxu0 0
        %8752 = vmatpush1.bf16.msra.mxu0 %v6544
        %8753 = vmatprep.subr.bf16.mxu0 0
        %8754 = vmatpush1.bf16.msra.mxu0 %v6543
        %8755 = vmatprep.subr.bf16.mxu0 0
        %8756 = vmatpush1.bf16.msra.mxu0 %v6542
        %8757 = vmatprep.subr.bf16.mxu0 0
        %8758 = vmatpush2.bf16.msra.mxu0 0
        %8759 = vmatprep.subr.bf16.mxu0 0
        %8760 = vmatpush2.bf16.msra.mxu0 0
        %8761 = vmatprep.subr.bf16.mxu0 0
        %8762 = vmatpush2.bf16.msra.mxu0 0
        %8763 = vmatprep.subr.bf16.mxu0 0
        %8764 = vmatpush2.bf16.msra.mxu0 0
        %8765 = vmatprep.subr.bf16.mxu0 0
        %8766 = vmatpush2.bf16.msra.mxu0 0
        %8767 = vmatprep.subr.bf16.mxu0 0
        %8768 = vmatpush2.bf16.msra.mxu0 0
        %8769 = vmatprep.subr.bf16.mxu0 0
        %8770 = vmatpush2.bf16.msra.mxu0 0
        %8771 = vmatprep.subr.bf16.mxu0 0
        %8772 = vmatpush2.bf16.msra.mxu0 0
        %8773 = vmatprep.mubr.bf16.mxu0 0
        %8774 = vmatmul.mubr.bf16.gmra.mxu0 %v8739
        %v8775 = vpop.f32.mrf.mxu0
        %v8776 = vadd.f32 0.0, %v8775
        %v8777 = vpop.f32.mrf.mxu0
        %v8778 = vpop.f32.mrf.mxu0
        %v8779 = vpop.f32.mrf.mxu0
        %8780 = vdwg.mxu0
        %v8782 = vsel %vm4451, %v8563, 0
        %8784 = vmatprep.subr.bf16.mxu0 0
        %8785 = vmatpush1.bf16.msra.mxu0 0
        %8786 = vmatprep.subr.bf16.mxu0 0
        %8787 = vmatpush1.bf16.msra.mxu0 0
        %8788 = vmatprep.subr.bf16.mxu0 0
        %8789 = vmatpush1.bf16.msra.mxu0 0
        %8790 = vmatprep.subr.bf16.mxu0 0
        %8791 = vmatpush1.bf16.msra.mxu0 0
        %8792 = vmatprep.subr.bf16.mxu0 0
        %8793 = vmatpush1.bf16.msra.mxu0 %v6549
        %8794 = vmatprep.subr.bf16.mxu0 0
        %8795 = vmatpush1.bf16.msra.mxu0 %v6548
        %8796 = vmatprep.subr.bf16.mxu0 0
        %8797 = vmatpush1.bf16.msra.mxu0 %v6547
        %8798 = vmatprep.subr.bf16.mxu0 0
        %8799 = vmatpush1.bf16.msra.mxu0 %v6546
        %8800 = vmatprep.subr.bf16.mxu0 0
        %8801 = vmatpush2.bf16.msra.mxu0 0
        %8802 = vmatprep.subr.bf16.mxu0 0
        %8803 = vmatpush2.bf16.msra.mxu0 0
        %8804 = vmatprep.subr.bf16.mxu0 0
        %8805 = vmatpush2.bf16.msra.mxu0 0
        %8806 = vmatprep.subr.bf16.mxu0 0
        %8807 = vmatpush2.bf16.msra.mxu0 0
        %8808 = vmatprep.subr.bf16.mxu0 0
        %8809 = vmatpush2.bf16.msra.mxu0 0
        %8810 = vmatprep.subr.bf16.mxu0 0
        %8811 = vmatpush2.bf16.msra.mxu0 0
        %8812 = vmatprep.subr.bf16.mxu0 0
        %8813 = vmatpush2.bf16.msra.mxu0 0
        %8814 = vmatprep.subr.bf16.mxu0 0
        %8815 = vmatpush2.bf16.msra.mxu0 0
        %8816 = vmatprep.mubr.bf16.mxu0 0
        %8817 = vmatmul.mubr.bf16.gmra.mxu0 %v8782
        %v8818 = vpop.f32.mrf.mxu0
        %v8819 = vadd.f32 0.0, %v8818
        %v8820 = vpop.f32.mrf.mxu0
        %v8821 = vpop.f32.mrf.mxu0
        %v8822 = vpop.f32.mrf.mxu0
        %8823 = vdwg.mxu0
        %v8825 = vsel %vm4451, %v8564, 0
        %8827 = vmatprep.subr.bf16.mxu0 0
        %8828 = vmatpush1.bf16.msra.mxu0 0
        %8829 = vmatprep.subr.bf16.mxu0 0
        %8830 = vmatpush1.bf16.msra.mxu0 0
        %8831 = vmatprep.subr.bf16.mxu0 0
        %8832 = vmatpush1.bf16.msra.mxu0 0
        %8833 = vmatprep.subr.bf16.mxu0 0
        %8834 = vmatpush1.bf16.msra.mxu0 0
        %8835 = vmatprep.subr.bf16.mxu0 0
        %8836 = vmatpush1.bf16.msra.mxu0 %v6553
        %8837 = vmatprep.subr.bf16.mxu0 0
        %8838 = vmatpush1.bf16.msra.mxu0 %v6552
        %8839 = vmatprep.subr.bf16.mxu0 0
        %8840 = vmatpush1.bf16.msra.mxu0 %v6551
        %8841 = vmatprep.subr.bf16.mxu0 0
        %8842 = vmatpush1.bf16.msra.mxu0 %v6550
        %8843 = vmatprep.subr.bf16.mxu0 0
        %8844 = vmatpush2.bf16.msra.mxu0 0
        %8845 = vmatprep.subr.bf16.mxu0 0
        %8846 = vmatpush2.bf16.msra.mxu0 0
        %8847 = vmatprep.subr.bf16.mxu0 0
        %8848 = vmatpush2.bf16.msra.mxu0 0
        %8849 = vmatprep.subr.bf16.mxu0 0
        %8850 = vmatpush2.bf16.msra.mxu0 0
        %8851 = vmatprep.subr.bf16.mxu0 0
        %8852 = vmatpush2.bf16.msra.mxu0 0
        %8853 = vmatprep.subr.bf16.mxu0 0
        %8854 = vmatpush2.bf16.msra.mxu0 0
        %8855 = vmatprep.subr.bf16.mxu0 0
        %8856 = vmatpush2.bf16.msra.mxu0 0
        %8857 = vmatprep.subr.bf16.mxu0 0
        %8858 = vmatpush2.bf16.msra.mxu0 0
        %8859 = vmatprep.mubr.bf16.mxu0 0
        %8860 = vmatmul.mubr.bf16.gmra.mxu0 %v8825
        %v8861 = vpop.f32.mrf.mxu0
        %v8862 = vadd.f32 0.0, %v8861
        %v8863 = vpop.f32.mrf.mxu0
        %v8864 = vpop.f32.mrf.mxu0
        %v8865 = vpop.f32.mrf.mxu0
        %8866 = vdwg.mxu0
        %v8868 = vsel %vm4451, %v8565, 0
        %8870 = vmatprep.subr.bf16.mxu0 0
        %8871 = vmatpush1.bf16.msra.mxu0 0
        %8872 = vmatprep.subr.bf16.mxu0 0
        %8873 = vmatpush1.bf16.msra.mxu0 0
        %8874 = vmatprep.subr.bf16.mxu0 0
        %8875 = vmatpush1.bf16.msra.mxu0 0
        %8876 = vmatprep.subr.bf16.mxu0 0
        %8877 = vmatpush1.bf16.msra.mxu0 0
        %8878 = vmatprep.subr.bf16.mxu0 0
        %8879 = vmatpush1.bf16.msra.mxu0 %v6557
        %8880 = vmatprep.subr.bf16.mxu0 0
        %8881 = vmatpush1.bf16.msra.mxu0 %v6556
        %8882 = vmatprep.subr.bf16.mxu0 0
        %8883 = vmatpush1.bf16.msra.mxu0 %v6555
        %8884 = vmatprep.subr.bf16.mxu0 0
        %8885 = vmatpush1.bf16.msra.mxu0 %v6554
        %8886 = vmatprep.subr.bf16.mxu0 0
        %8887 = vmatpush2.bf16.msra.mxu0 0
        %8888 = vmatprep.subr.bf16.mxu0 0
        %8889 = vmatpush2.bf16.msra.mxu0 0
        %8890 = vmatprep.subr.bf16.mxu0 0
        %8891 = vmatpush2.bf16.msra.mxu0 0
        %8892 = vmatprep.subr.bf16.mxu0 0
        %8893 = vmatpush2.bf16.msra.mxu0 0
        %8894 = vmatprep.subr.bf16.mxu0 0
        %8895 = vmatpush2.bf16.msra.mxu0 0
        %8896 = vmatprep.subr.bf16.mxu0 0
        %8897 = vmatpush2.bf16.msra.mxu0 0
        %8898 = vmatprep.subr.bf16.mxu0 0
        %8899 = vmatpush2.bf16.msra.mxu0 0
        %8900 = vmatprep.subr.bf16.mxu0 0
        %8901 = vmatpush2.bf16.msra.mxu0 0
        %8902 = vmatprep.mubr.bf16.mxu0 0
        %8903 = vmatmul.mubr.bf16.gmra.mxu0 %v8868
        %v8904 = vpop.f32.mrf.mxu0
        %v8905 = vadd.f32 0.0, %v8904
        %v8906 = vpop.f32.mrf.mxu0
        %v8907 = vpop.f32.mrf.mxu0
        %v8908 = vpop.f32.mrf.mxu0
        %8909 = vdwg.mxu0
        %v8910 = vpack.c.bf16 %v8604, %v8604
        %v8911 = vpack.c.bf16 %v8647, %v8647
        %v8912 = vpack.c.bf16 %v8690, %v8690
        %v8913 = vpack.c.bf16 %v8733, %v8733
        %v8914 = vpack.c.bf16 %v8776, %v8776
        %v8915 = vpack.c.bf16 %v8819, %v8819
        %v8916 = vpack.c.bf16 %v8862, %v8862
        %v8917 = vpack.c.bf16 %v8905, %v8905
        %v8926 = vunpack.c.l.b16 %v4796
        %v8927 = vunpack.c.l.b16 %v4797
        %v8928 = vunpack.c.l.b16 %v4798
        %v8929 = vunpack.c.l.b16 %v4799
        %v8930 = vunpack.c.l.b16 %v4800
        %v8931 = vunpack.c.l.b16 %v4801
        %v8932 = vunpack.c.l.b16 %v4802
        %v8933 = vunpack.c.l.b16 %v4803
        %v8934 = vrot.slane %v8927, 7
        %vm8935 = vcmask 1041409
        %v8936 = vsel %vm8935, %v8934, %v8926
        %v8937 = vrot.slane %v8928, 6
        %vm8938 = vcmask 1042434
        %v8939 = vsel %vm8938, %v8937, %v8936
        %v8940 = vrot.slane %v8929, 5
        %vm8941 = vcmask 1043459
        %v8942 = vsel %vm8941, %v8940, %v8939
        %v8943 = vrot.slane %v8930, 4
        %vm8944 = vcmask 1044484
        %v8945 = vsel %vm8944, %v8943, %v8942
        %v8946 = vrot.slane %v8931, 3
        %vm8947 = vcmask 1045509
        %v8948 = vsel %vm8947, %v8946, %v8945
        %v8949 = vrot.slane %v8932, 2
        %vm8950 = vcmask 1046534
        %v8951 = vsel %vm8950, %v8949, %v8948
        %v8952 = vrot.slane %v8933, 1
        %vm8953 = vcmask 1047559
        %v8954 = vsel %vm8953, %v8952, %v8951
        %v8955 = vpack.c.b16 %v8954, %v8954
        %v8965 = vunpack.c.l.b16 %v5687
        %v8966 = vunpack.c.l.b16 %v5688
        %v8967 = vunpack.c.l.b16 %v5689
        %v8968 = vunpack.c.l.b16 %v5690
        %v8969 = vunpack.c.l.b16 %v5691
        %v8970 = vunpack.c.l.b16 %v5692
        %v8971 = vunpack.c.l.b16 %v5693
        %v8972 = vunpack.c.l.b16 %v5694
        %v8973 = vrot.slane %v8966, 7
        %v8974 = vsel %vm8935, %v8973, %v8965
        %v8975 = vrot.slane %v8967, 6
        %v8976 = vsel %vm8938, %v8975, %v8974
        %v8977 = vrot.slane %v8968, 5
        %v8978 = vsel %vm8941, %v8977, %v8976
        %v8979 = vrot.slane %v8969, 4
        %v8980 = vsel %vm8944, %v8979, %v8978
        %v8981 = vrot.slane %v8970, 3
        %v8982 = vsel %vm8947, %v8981, %v8980
        %v8983 = vrot.slane %v8971, 2
        %v8984 = vsel %vm8950, %v8983, %v8982
        %v8985 = vrot.slane %v8972, 1
        %v8986 = vsel %vm8953, %v8985, %v8984
        %v8987 = vpack.c.b16 %v8986, %v8986
        %v8997 = vunpack.c.l.b16 %v8019
        %v8998 = vunpack.c.l.b16 %v8020
        %v8999 = vunpack.c.l.b16 %v8021
        %v9000 = vunpack.c.l.b16 %v8022
        %v9001 = vunpack.c.l.b16 %v8023
        %v9002 = vunpack.c.l.b16 %v8024
        %v9003 = vunpack.c.l.b16 %v8025
        %v9004 = vunpack.c.l.b16 %v8026
        %v9005 = vrot.slane %v8998, 7
        %v9006 = vsel %vm8935, %v9005, %v8997
        %v9007 = vrot.slane %v8999, 6
        %v9008 = vsel %vm8938, %v9007, %v9006
        %v9009 = vrot.slane %v9000, 5
        %v9010 = vsel %vm8941, %v9009, %v9008
        %v9011 = vrot.slane %v9001, 4
        %v9012 = vsel %vm8944, %v9011, %v9010
        %v9013 = vrot.slane %v9002, 3
        %v9014 = vsel %vm8947, %v9013, %v9012
        %v9015 = vrot.slane %v9003, 2
        %v9016 = vsel %vm8950, %v9015, %v9014
        %v9017 = vrot.slane %v9004, 1
        %v9018 = vsel %vm8953, %v9017, %v9016
        %v9019 = vpack.c.b16 %v9018, %v9018
        %v9029 = vunpack.c.l.b16 %v8910
        %v9030 = vunpack.c.l.b16 %v8911
        %v9031 = vunpack.c.l.b16 %v8912
        %v9032 = vunpack.c.l.b16 %v8913
        %v9033 = vunpack.c.l.b16 %v8914
        %v9034 = vunpack.c.l.b16 %v8915
        %v9035 = vunpack.c.l.b16 %v8916
        %v9036 = vunpack.c.l.b16 %v8917
        %v9037 = vrot.slane %v9030, 7
        %v9038 = vsel %vm8935, %v9037, %v9029
        %v9039 = vrot.slane %v9031, 6
        %v9040 = vsel %vm8938, %v9039, %v9038
        %v9041 = vrot.slane %v9032, 5
        %v9042 = vsel %vm8941, %v9041, %v9040
        %v9043 = vrot.slane %v9033, 4
        %v9044 = vsel %vm8944, %v9043, %v9042
        %v9045 = vrot.slane %v9034, 3
        %v9046 = vsel %vm8947, %v9045, %v9044
        %v9047 = vrot.slane %v9035, 2
        %v9048 = vsel %vm8950, %v9047, %v9046
        %v9049 = vrot.slane %v9036, 1
        %v9050 = vsel %vm8953, %v9049, %v9048
        %v9051 = vpack.c.b16 %v9050, %v9050
        %v9053 = vld [vmem:[%s2] sm:$0xff]
        %v9054 = vld [vmem:[%s2 + $0x8] sm:$0xff]
        %v9055 = vld [vmem:[%s2 + $0x10] sm:$0xff]
        %v9056 = vld [vmem:[%s2 + $0x18] sm:$0xff]
        %v9057 = vld [vmem:[%s2 + $0x20] sm:$0xff]
        %v9058 = vld [vmem:[%s2 + $0x28] sm:$0xff]
        %v9059 = vld [vmem:[%s2 + $0x30] sm:$0xff]
        %v9060 = vld [vmem:[%s2 + $0x38] sm:$0xff]
        %v9061 = vld [vmem:[%s2 + $0x40] sm:$0xff]
        %v9062 = vld [vmem:[%s2 + $0x48] sm:$0xff]
        %v9063 = vld [vmem:[%s2 + $0x50] sm:$0xff]
        %v9064 = vld [vmem:[%s2 + $0x58] sm:$0xff]
        %v9065 = vld [vmem:[%s2 + $0x60] sm:$0xff]
        %v9066 = vld [vmem:[%s2 + $0x68] sm:$0xff]
        %v9067 = vld [vmem:[%s2 + $0x70] sm:$0xff]
        %v9068 = vld [vmem:[%s2 + $0x78] sm:$0xff]
        %v9069 = vld [vmem:[%s2 + $0x80] sm:$0xff]
        %v9070 = vld [vmem:[%s2 + $0x88] sm:$0xff]
        %v9071 = vld [vmem:[%s2 + $0x90] sm:$0xff]
        %v9072 = vld [vmem:[%s2 + $0x98] sm:$0xff]
        %v9073 = vld [vmem:[%s2 + $0xa0] sm:$0xff]
        %v9074 = vld [vmem:[%s2 + $0xa8] sm:$0xff]
        %v9075 = vld [vmem:[%s2 + $0xb0] sm:$0xff]
        %v9076 = vld [vmem:[%s2 + $0xb8] sm:$0xff]
        %v9077 = vld [vmem:[%s2 + $0xc0] sm:$0xff]
        %v9078 = vld [vmem:[%s2 + $0xc8] sm:$0xff]
        %v9079 = vld [vmem:[%s2 + $0xd0] sm:$0xff]
        %v9080 = vld [vmem:[%s2 + $0xd8] sm:$0xff]
        %v9081 = vld [vmem:[%s2 + $0xe0] sm:$0xff]
        %v9082 = vld [vmem:[%s2 + $0xe8] sm:$0xff]
        %v9083 = vld [vmem:[%s2 + $0xf0] sm:$0xff]
        %v9084 = vld [vmem:[%s2 + $0xf8] sm:$0xff]
        %v9085 = vld [vmem:[%s2 + $0x100] sm:$0xff]
        %v9086 = vld [vmem:[%s2 + $0x108] sm:$0xff]
        %v9087 = vld [vmem:[%s2 + $0x110] sm:$0xff]
        %v9088 = vld [vmem:[%s2 + $0x118] sm:$0xff]
        %v9089 = vld [vmem:[%s2 + $0x120] sm:$0xff]
        %v9090 = vld [vmem:[%s2 + $0x128] sm:$0xff]
        %v9091 = vld [vmem:[%s2 + $0x130] sm:$0xff]
        %v9092 = vld [vmem:[%s2 + $0x138] sm:$0xff]
        %v9093 = vld [vmem:[%s2 + $0x140] sm:$0xff]
        %v9094 = vld [vmem:[%s2 + $0x148] sm:$0xff]
        %v9095 = vld [vmem:[%s2 + $0x150] sm:$0xff]
        %v9096 = vld [vmem:[%s2 + $0x158] sm:$0xff]
        %v9097 = vld [vmem:[%s2 + $0x160] sm:$0xff]
        %v9098 = vld [vmem:[%s2 + $0x168] sm:$0xff]
        %v9099 = vld [vmem:[%s2 + $0x170] sm:$0xff]
        %v9100 = vld [vmem:[%s2 + $0x178] sm:$0xff]
        %v9101 = vld [vmem:[%s2 + $0x180] sm:$0xff]
        %v9102 = vld [vmem:[%s2 + $0x188] sm:$0xff]
        %v9103 = vld [vmem:[%s2 + $0x190] sm:$0xff]
        %v9104 = vld [vmem:[%s2 + $0x198] sm:$0xff]
        %v9105 = vld [vmem:[%s2 + $0x1a0] sm:$0xff]
        %v9106 = vld [vmem:[%s2 + $0x1a8] sm:$0xff]
        %v9107 = vld [vmem:[%s2 + $0x1b0] sm:$0xff]
        %v9108 = vld [vmem:[%s2 + $0x1b8] sm:$0xff]
        %v9109 = vld [vmem:[%s2 + $0x1c0] sm:$0xff]
        %v9110 = vld [vmem:[%s2 + $0x1c8] sm:$0xff]
        %v9111 = vld [vmem:[%s2 + $0x1d0] sm:$0xff]
        %v9112 = vld [vmem:[%s2 + $0x1d8] sm:$0xff]
        %v9113 = vld [vmem:[%s2 + $0x1e0] sm:$0xff]
        %v9114 = vld [vmem:[%s2 + $0x1e8] sm:$0xff]
        %v9115 = vld [vmem:[%s2 + $0x1f0] sm:$0xff]
        %v9116 = vld [vmem:[%s2 + $0x1f8] sm:$0xff]
        %v9117 = vld [vmem:[%s2 + $0x200] sm:$0xff]
        %v9118 = vld [vmem:[%s2 + $0x208] sm:$0xff]
        %v9119 = vld [vmem:[%s2 + $0x210] sm:$0xff]
        %v9120 = vld [vmem:[%s2 + $0x218] sm:$0xff]
        %v9121 = vld [vmem:[%s2 + $0x220] sm:$0xff]
        %v9122 = vld [vmem:[%s2 + $0x228] sm:$0xff]
        %v9123 = vld [vmem:[%s2 + $0x230] sm:$0xff]
        %v9124 = vld [vmem:[%s2 + $0x238] sm:$0xff]
        %v9125 = vld [vmem:[%s2 + $0x240] sm:$0xff]
        %v9126 = vld [vmem:[%s2 + $0x248] sm:$0xff]
        %v9127 = vld [vmem:[%s2 + $0x250] sm:$0xff]
        %v9128 = vld [vmem:[%s2 + $0x258] sm:$0xff]
        %v9129 = vld [vmem:[%s2 + $0x260] sm:$0xff]
        %v9130 = vld [vmem:[%s2 + $0x268] sm:$0xff]
        %v9131 = vld [vmem:[%s2 + $0x270] sm:$0xff]
        %v9132 = vld [vmem:[%s2 + $0x278] sm:$0xff]
        %v9133 = vld [vmem:[%s2 + $0x280] sm:$0xff]
        %v9134 = vld [vmem:[%s2 + $0x288] sm:$0xff]
        %v9135 = vld [vmem:[%s2 + $0x290] sm:$0xff]
        %v9136 = vld [vmem:[%s2 + $0x298] sm:$0xff]
        %v9137 = vld [vmem:[%s2 + $0x2a0] sm:$0xff]
        %v9138 = vld [vmem:[%s2 + $0x2a8] sm:$0xff]
        %v9139 = vld [vmem:[%s2 + $0x2b0] sm:$0xff]
        %v9140 = vld [vmem:[%s2 + $0x2b8] sm:$0xff]
        %v9141 = vld [vmem:[%s2 + $0x2c0] sm:$0xff]
        %v9142 = vld [vmem:[%s2 + $0x2c8] sm:$0xff]
        %v9143 = vld [vmem:[%s2 + $0x2d0] sm:$0xff]
        %v9144 = vld [vmem:[%s2 + $0x2d8] sm:$0xff]
        %v9145 = vld [vmem:[%s2 + $0x2e0] sm:$0xff]
        %v9146 = vld [vmem:[%s2 + $0x2e8] sm:$0xff]
        %v9147 = vld [vmem:[%s2 + $0x2f0] sm:$0xff]
        %v9148 = vld [vmem:[%s2 + $0x2f8] sm:$0xff]
        %v9149 = vld [vmem:[%s2 + $0x300] sm:$0xff]
        %v9150 = vld [vmem:[%s2 + $0x308] sm:$0xff]
        %v9151 = vld [vmem:[%s2 + $0x310] sm:$0xff]
        %v9152 = vld [vmem:[%s2 + $0x318] sm:$0xff]
        %v9153 = vld [vmem:[%s2 + $0x320] sm:$0xff]
        %v9154 = vld [vmem:[%s2 + $0x328] sm:$0xff]
        %v9155 = vld [vmem:[%s2 + $0x330] sm:$0xff]
        %v9156 = vld [vmem:[%s2 + $0x338] sm:$0xff]
        %v9157 = vld [vmem:[%s2 + $0x340] sm:$0xff]
        %v9158 = vld [vmem:[%s2 + $0x348] sm:$0xff]
        %v9159 = vld [vmem:[%s2 + $0x350] sm:$0xff]
        %v9160 = vld [vmem:[%s2 + $0x358] sm:$0xff]
        %v9161 = vld [vmem:[%s2 + $0x360] sm:$0xff]
        %v9162 = vld [vmem:[%s2 + $0x368] sm:$0xff]
        %v9163 = vld [vmem:[%s2 + $0x370] sm:$0xff]
        %v9164 = vld [vmem:[%s2 + $0x378] sm:$0xff]
        %v9165 = vld [vmem:[%s2 + $0x380] sm:$0xff]
        %v9166 = vld [vmem:[%s2 + $0x388] sm:$0xff]
        %v9167 = vld [vmem:[%s2 + $0x390] sm:$0xff]
        %v9168 = vld [vmem:[%s2 + $0x398] sm:$0xff]
        %v9169 = vld [vmem:[%s2 + $0x3a0] sm:$0xff]
        %v9170 = vld [vmem:[%s2 + $0x3a8] sm:$0xff]
        %v9171 = vld [vmem:[%s2 + $0x3b0] sm:$0xff]
        %v9172 = vld [vmem:[%s2 + $0x3b8] sm:$0xff]
        %v9173 = vld [vmem:[%s2 + $0x3c0] sm:$0xff]
        %v9174 = vld [vmem:[%s2 + $0x3c8] sm:$0xff]
        %v9175 = vld [vmem:[%s2 + $0x3d0] sm:$0xff]
        %v9176 = vld [vmem:[%s2 + $0x3d8] sm:$0xff]
        %v9177 = vld [vmem:[%s2 + $0x3e0] sm:$0xff]
        %v9178 = vld [vmem:[%s2 + $0x3e8] sm:$0xff]
        %v9179 = vld [vmem:[%s2 + $0x3f0] sm:$0xff]
        %v9180 = vld [vmem:[%s2 + $0x3f8] sm:$0xff]
        %v9309 = vunpack.c.l.b16 %v9053
        %v9310 = vunpack.c.h.b16 %v9053
        %v9311 = vunpack.c.l.b16 %v9054
        %v9312 = vunpack.c.h.b16 %v9054
        %v9313 = vunpack.c.l.b16 %v9055
        %v9314 = vunpack.c.h.b16 %v9055
        %v9315 = vunpack.c.l.b16 %v9056
        %v9316 = vunpack.c.h.b16 %v9056
        %v9317 = vunpack.c.l.b16 %v9057
        %v9318 = vunpack.c.h.b16 %v9057
        %v9319 = vunpack.c.l.b16 %v9058
        %v9320 = vunpack.c.h.b16 %v9058
        %v9321 = vunpack.c.l.b16 %v9059
        %v9322 = vunpack.c.h.b16 %v9059
        %v9323 = vunpack.c.l.b16 %v9060
        %v9324 = vunpack.c.h.b16 %v9060
        %v9325 = vunpack.c.l.b16 %v9061
        %v9326 = vunpack.c.h.b16 %v9061
        %v9327 = vunpack.c.l.b16 %v9062
        %v9328 = vunpack.c.h.b16 %v9062
        %v9329 = vunpack.c.l.b16 %v9063
        %v9330 = vunpack.c.h.b16 %v9063
        %v9331 = vunpack.c.l.b16 %v9064
        %v9332 = vunpack.c.h.b16 %v9064
        %v9333 = vunpack.c.l.b16 %v9065
        %v9334 = vunpack.c.h.b16 %v9065
        %v9335 = vunpack.c.l.b16 %v9066
        %v9336 = vunpack.c.h.b16 %v9066
        %v9337 = vunpack.c.l.b16 %v9067
        %v9338 = vunpack.c.h.b16 %v9067
        %v9339 = vunpack.c.l.b16 %v9068
        %v9340 = vunpack.c.h.b16 %v9068
        %v9341 = vunpack.c.l.b16 %v9069
        %v9342 = vunpack.c.h.b16 %v9069
        %v9343 = vunpack.c.l.b16 %v9070
        %v9344 = vunpack.c.h.b16 %v9070
        %v9345 = vunpack.c.l.b16 %v9071
        %v9346 = vunpack.c.h.b16 %v9071
        %v9347 = vunpack.c.l.b16 %v9072
        %v9348 = vunpack.c.h.b16 %v9072
        %v9349 = vunpack.c.l.b16 %v9073
        %v9350 = vunpack.c.h.b16 %v9073
        %v9351 = vunpack.c.l.b16 %v9074
        %v9352 = vunpack.c.h.b16 %v9074
        %v9353 = vunpack.c.l.b16 %v9075
        %v9354 = vunpack.c.h.b16 %v9075
        %v9355 = vunpack.c.l.b16 %v9076
        %v9356 = vunpack.c.h.b16 %v9076
        %v9357 = vunpack.c.l.b16 %v9077
        %v9358 = vunpack.c.h.b16 %v9077
        %v9359 = vunpack.c.l.b16 %v9078
        %v9360 = vunpack.c.h.b16 %v9078
        %v9361 = vunpack.c.l.b16 %v9079
        %v9362 = vunpack.c.h.b16 %v9079
        %v9363 = vunpack.c.l.b16 %v9080
        %v9364 = vunpack.c.h.b16 %v9080
        %v9365 = vunpack.c.l.b16 %v9081
        %v9366 = vunpack.c.h.b16 %v9081
        %v9367 = vunpack.c.l.b16 %v9082
        %v9368 = vunpack.c.h.b16 %v9082
        %v9369 = vunpack.c.l.b16 %v9083
        %v9370 = vunpack.c.h.b16 %v9083
        %v9371 = vunpack.c.l.b16 %v9084
        %v9372 = vunpack.c.h.b16 %v9084
        %v9373 = vunpack.c.l.b16 %v9085
        %v9374 = vunpack.c.h.b16 %v9085
        %v9375 = vunpack.c.l.b16 %v9086
        %v9376 = vunpack.c.h.b16 %v9086
        %v9377 = vunpack.c.l.b16 %v9087
        %v9378 = vunpack.c.h.b16 %v9087
        %v9379 = vunpack.c.l.b16 %v9088
        %v9380 = vunpack.c.h.b16 %v9088
        %v9381 = vunpack.c.l.b16 %v9089
        %v9382 = vunpack.c.h.b16 %v9089
        %v9383 = vunpack.c.l.b16 %v9090
        %v9384 = vunpack.c.h.b16 %v9090
        %v9385 = vunpack.c.l.b16 %v9091
        %v9386 = vunpack.c.h.b16 %v9091
        %v9387 = vunpack.c.l.b16 %v9092
        %v9388 = vunpack.c.h.b16 %v9092
        %v9389 = vunpack.c.l.b16 %v9093
        %v9390 = vunpack.c.h.b16 %v9093
        %v9391 = vunpack.c.l.b16 %v9094
        %v9392 = vunpack.c.h.b16 %v9094
        %v9393 = vunpack.c.l.b16 %v9095
        %v9394 = vunpack.c.h.b16 %v9095
        %v9395 = vunpack.c.l.b16 %v9096
        %v9396 = vunpack.c.h.b16 %v9096
        %v9397 = vunpack.c.l.b16 %v9097
        %v9398 = vunpack.c.h.b16 %v9097
        %v9399 = vunpack.c.l.b16 %v9098
        %v9400 = vunpack.c.h.b16 %v9098
        %v9401 = vunpack.c.l.b16 %v9099
        %v9402 = vunpack.c.h.b16 %v9099
        %v9403 = vunpack.c.l.b16 %v9100
        %v9404 = vunpack.c.h.b16 %v9100
        %v9405 = vunpack.c.l.b16 %v9101
        %v9406 = vunpack.c.h.b16 %v9101
        %v9407 = vunpack.c.l.b16 %v9102
        %v9408 = vunpack.c.h.b16 %v9102
        %v9409 = vunpack.c.l.b16 %v9103
        %v9410 = vunpack.c.h.b16 %v9103
        %v9411 = vunpack.c.l.b16 %v9104
        %v9412 = vunpack.c.h.b16 %v9104
        %v9413 = vunpack.c.l.b16 %v9105
        %v9414 = vunpack.c.h.b16 %v9105
        %v9415 = vunpack.c.l.b16 %v9106
        %v9416 = vunpack.c.h.b16 %v9106
        %v9417 = vunpack.c.l.b16 %v9107
        %v9418 = vunpack.c.h.b16 %v9107
        %v9419 = vunpack.c.l.b16 %v9108
        %v9420 = vunpack.c.h.b16 %v9108
        %v9421 = vunpack.c.l.b16 %v9109
        %v9422 = vunpack.c.h.b16 %v9109
        %v9423 = vunpack.c.l.b16 %v9110
        %v9424 = vunpack.c.h.b16 %v9110
        %v9425 = vunpack.c.l.b16 %v9111
        %v9426 = vunpack.c.h.b16 %v9111
        %v9427 = vunpack.c.l.b16 %v9112
        %v9428 = vunpack.c.h.b16 %v9112
        %v9429 = vunpack.c.l.b16 %v9113
        %v9430 = vunpack.c.h.b16 %v9113
        %v9431 = vunpack.c.l.b16 %v9114
        %v9432 = vunpack.c.h.b16 %v9114
        %v9433 = vunpack.c.l.b16 %v9115
        %v9434 = vunpack.c.h.b16 %v9115
        %v9435 = vunpack.c.l.b16 %v9116
        %v9436 = vunpack.c.h.b16 %v9116
        %v9437 = vunpack.c.l.b16 %v9117
        %v9438 = vunpack.c.h.b16 %v9117
        %v9439 = vunpack.c.l.b16 %v9118
        %v9440 = vunpack.c.h.b16 %v9118
        %v9441 = vunpack.c.l.b16 %v9119
        %v9442 = vunpack.c.h.b16 %v9119
        %v9443 = vunpack.c.l.b16 %v9120
        %v9444 = vunpack.c.h.b16 %v9120
        %v9445 = vunpack.c.l.b16 %v9121
        %v9446 = vunpack.c.h.b16 %v9121
        %v9447 = vunpack.c.l.b16 %v9122
        %v9448 = vunpack.c.h.b16 %v9122
        %v9449 = vunpack.c.l.b16 %v9123
        %v9450 = vunpack.c.h.b16 %v9123
        %v9451 = vunpack.c.l.b16 %v9124
        %v9452 = vunpack.c.h.b16 %v9124
        %v9453 = vunpack.c.l.b16 %v9125
        %v9454 = vunpack.c.h.b16 %v9125
        %v9455 = vunpack.c.l.b16 %v9126
        %v9456 = vunpack.c.h.b16 %v9126
        %v9457 = vunpack.c.l.b16 %v9127
        %v9458 = vunpack.c.h.b16 %v9127
        %v9459 = vunpack.c.l.b16 %v9128
        %v9460 = vunpack.c.h.b16 %v9128
        %v9461 = vunpack.c.l.b16 %v9129
        %v9462 = vunpack.c.h.b16 %v9129
        %v9463 = vunpack.c.l.b16 %v9130
        %v9464 = vunpack.c.h.b16 %v9130
        %v9465 = vunpack.c.l.b16 %v9131
        %v9466 = vunpack.c.h.b16 %v9131
        %v9467 = vunpack.c.l.b16 %v9132
        %v9468 = vunpack.c.h.b16 %v9132
        %v9469 = vunpack.c.l.b16 %v9133
        %v9470 = vunpack.c.h.b16 %v9133
        %v9471 = vunpack.c.l.b16 %v9134
        %v9472 = vunpack.c.h.b16 %v9134
        %v9473 = vunpack.c.l.b16 %v9135
        %v9474 = vunpack.c.h.b16 %v9135
        %v9475 = vunpack.c.l.b16 %v9136
        %v9476 = vunpack.c.h.b16 %v9136
        %v9477 = vunpack.c.l.b16 %v9137
        %v9478 = vunpack.c.h.b16 %v9137
        %v9479 = vunpack.c.l.b16 %v9138
        %v9480 = vunpack.c.h.b16 %v9138
        %v9481 = vunpack.c.l.b16 %v9139
        %v9482 = vunpack.c.h.b16 %v9139
        %v9483 = vunpack.c.l.b16 %v9140
        %v9484 = vunpack.c.h.b16 %v9140
        %v9485 = vunpack.c.l.b16 %v9141
        %v9486 = vunpack.c.h.b16 %v9141
        %v9487 = vunpack.c.l.b16 %v9142
        %v9488 = vunpack.c.h.b16 %v9142
        %v9489 = vunpack.c.l.b16 %v9143
        %v9490 = vunpack.c.h.b16 %v9143
        %v9491 = vunpack.c.l.b16 %v9144
        %v9492 = vunpack.c.h.b16 %v9144
        %v9493 = vunpack.c.l.b16 %v9145
        %v9494 = vunpack.c.h.b16 %v9145
        %v9495 = vunpack.c.l.b16 %v9146
        %v9496 = vunpack.c.h.b16 %v9146
        %v9497 = vunpack.c.l.b16 %v9147
        %v9498 = vunpack.c.h.b16 %v9147
        %v9499 = vunpack.c.l.b16 %v9148
        %v9500 = vunpack.c.h.b16 %v9148
        %v9501 = vunpack.c.l.b16 %v9149
        %v9502 = vunpack.c.h.b16 %v9149
        %v9503 = vunpack.c.l.b16 %v9150
        %v9504 = vunpack.c.h.b16 %v9150
        %v9505 = vunpack.c.l.b16 %v9151
        %v9506 = vunpack.c.h.b16 %v9151
        %v9507 = vunpack.c.l.b16 %v9152
        %v9508 = vunpack.c.h.b16 %v9152
        %v9509 = vunpack.c.l.b16 %v9153
        %v9510 = vunpack.c.h.b16 %v9153
        %v9511 = vunpack.c.l.b16 %v9154
        %v9512 = vunpack.c.h.b16 %v9154
        %v9513 = vunpack.c.l.b16 %v9155
        %v9514 = vunpack.c.h.b16 %v9155
        %v9515 = vunpack.c.l.b16 %v9156
        %v9516 = vunpack.c.h.b16 %v9156
        %v9517 = vunpack.c.l.b16 %v9157
        %v9518 = vunpack.c.h.b16 %v9157
        %v9519 = vunpack.c.l.b16 %v9158
        %v9520 = vunpack.c.h.b16 %v9158
        %v9521 = vunpack.c.l.b16 %v9159
        %v9522 = vunpack.c.h.b16 %v9159
        %v9523 = vunpack.c.l.b16 %v9160
        %v9524 = vunpack.c.h.b16 %v9160
        %v9525 = vunpack.c.l.b16 %v9161
        %v9526 = vunpack.c.h.b16 %v9161
        %v9527 = vunpack.c.l.b16 %v9162
        %v9528 = vunpack.c.h.b16 %v9162
        %v9529 = vunpack.c.l.b16 %v9163
        %v9530 = vunpack.c.h.b16 %v9163
        %v9531 = vunpack.c.l.b16 %v9164
        %v9532 = vunpack.c.h.b16 %v9164
        %v9533 = vunpack.c.l.b16 %v9165
        %v9534 = vunpack.c.h.b16 %v9165
        %v9535 = vunpack.c.l.b16 %v9166
        %v9536 = vunpack.c.h.b16 %v9166
        %v9537 = vunpack.c.l.b16 %v9167
        %v9538 = vunpack.c.h.b16 %v9167
        %v9539 = vunpack.c.l.b16 %v9168
        %v9540 = vunpack.c.h.b16 %v9168
        %v9541 = vunpack.c.l.b16 %v9169
        %v9542 = vunpack.c.h.b16 %v9169
        %v9543 = vunpack.c.l.b16 %v9170
        %v9544 = vunpack.c.h.b16 %v9170
        %v9545 = vunpack.c.l.b16 %v9171
        %v9546 = vunpack.c.h.b16 %v9171
        %v9547 = vunpack.c.l.b16 %v9172
        %v9548 = vunpack.c.h.b16 %v9172
        %v9549 = vunpack.c.l.b16 %v9173
        %v9550 = vunpack.c.h.b16 %v9173
        %v9551 = vunpack.c.l.b16 %v9174
        %v9552 = vunpack.c.h.b16 %v9174
        %v9553 = vunpack.c.l.b16 %v9175
        %v9554 = vunpack.c.h.b16 %v9175
        %v9555 = vunpack.c.l.b16 %v9176
        %v9556 = vunpack.c.h.b16 %v9176
        %v9557 = vunpack.c.l.b16 %v9177
        %v9558 = vunpack.c.h.b16 %v9177
        %v9559 = vunpack.c.l.b16 %v9178
        %v9560 = vunpack.c.h.b16 %v9178
        %v9561 = vunpack.c.l.b16 %v9179
        %v9562 = vunpack.c.h.b16 %v9179
        %v9563 = vunpack.c.l.b16 %v9180
        %v9564 = vunpack.c.h.b16 %v9180
        %v9565 = vpack.c.b16 %v9313, %v9309
        %v9566 = vpack.c.b16 %v9314, %v9310
        %v9567 = vpack.c.b16 %v9315, %v9311
        %v9568 = vpack.c.b16 %v9316, %v9312
        %v9569 = vpack.c.b16 %v9321, %v9317
        %v9570 = vpack.c.b16 %v9322, %v9318
        %v9571 = vpack.c.b16 %v9323, %v9319
        %v9572 = vpack.c.b16 %v9324, %v9320
        %v9573 = vpack.c.b16 %v9329, %v9325
        %v9574 = vpack.c.b16 %v9330, %v9326
        %v9575 = vpack.c.b16 %v9331, %v9327
        %v9576 = vpack.c.b16 %v9332, %v9328
        %v9577 = vpack.c.b16 %v9337, %v9333
        %v9578 = vpack.c.b16 %v9338, %v9334
        %v9579 = vpack.c.b16 %v9339, %v9335
        %v9580 = vpack.c.b16 %v9340, %v9336
        %v9581 = vpack.c.b16 %v9345, %v9341
        %v9582 = vpack.c.b16 %v9346, %v9342
        %v9583 = vpack.c.b16 %v9347, %v9343
        %v9584 = vpack.c.b16 %v9348, %v9344
        %v9585 = vpack.c.b16 %v9353, %v9349
        %v9586 = vpack.c.b16 %v9354, %v9350
        %v9587 = vpack.c.b16 %v9355, %v9351
        %v9588 = vpack.c.b16 %v9356, %v9352
        %v9589 = vpack.c.b16 %v9361, %v9357
        %v9590 = vpack.c.b16 %v9362, %v9358
        %v9591 = vpack.c.b16 %v9363, %v9359
        %v9592 = vpack.c.b16 %v9364, %v9360
        %v9593 = vpack.c.b16 %v9369, %v9365
        %v9594 = vpack.c.b16 %v9370, %v9366
        %v9595 = vpack.c.b16 %v9371, %v9367
        %v9596 = vpack.c.b16 %v9372, %v9368
        %v9597 = vpack.c.b16 %v9377, %v9373
        %v9598 = vpack.c.b16 %v9378, %v9374
        %v9599 = vpack.c.b16 %v9379, %v9375
        %v9600 = vpack.c.b16 %v9380, %v9376
        %v9601 = vpack.c.b16 %v9385, %v9381
        %v9602 = vpack.c.b16 %v9386, %v9382
        %v9603 = vpack.c.b16 %v9387, %v9383
        %v9604 = vpack.c.b16 %v9388, %v9384
        %v9605 = vpack.c.b16 %v9393, %v9389
        %v9606 = vpack.c.b16 %v9394, %v9390
        %v9607 = vpack.c.b16 %v9395, %v9391
        %v9608 = vpack.c.b16 %v9396, %v9392
        %v9609 = vpack.c.b16 %v9401, %v9397
        %v9610 = vpack.c.b16 %v9402, %v9398
        %v9611 = vpack.c.b16 %v9403, %v9399
        %v9612 = vpack.c.b16 %v9404, %v9400
        %v9613 = vpack.c.b16 %v9409, %v9405
        %v9614 = vpack.c.b16 %v9410, %v9406
        %v9615 = vpack.c.b16 %v9411, %v9407
        %v9616 = vpack.c.b16 %v9412, %v9408
        %v9617 = vpack.c.b16 %v9417, %v9413
        %v9618 = vpack.c.b16 %v9418, %v9414
        %v9619 = vpack.c.b16 %v9419, %v9415
        %v9620 = vpack.c.b16 %v9420, %v9416
        %v9621 = vpack.c.b16 %v9425, %v9421
        %v9622 = vpack.c.b16 %v9426, %v9422
        %v9623 = vpack.c.b16 %v9427, %v9423
        %v9624 = vpack.c.b16 %v9428, %v9424
        %v9625 = vpack.c.b16 %v9433, %v9429
        %v9626 = vpack.c.b16 %v9434, %v9430
        %v9627 = vpack.c.b16 %v9435, %v9431
        %v9628 = vpack.c.b16 %v9436, %v9432
        %v9629 = vpack.c.b16 %v9441, %v9437
        %v9630 = vpack.c.b16 %v9442, %v9438
        %v9631 = vpack.c.b16 %v9443, %v9439
        %v9632 = vpack.c.b16 %v9444, %v9440
        %v9633 = vpack.c.b16 %v9449, %v9445
        %v9634 = vpack.c.b16 %v9450, %v9446
        %v9635 = vpack.c.b16 %v9451, %v9447
        %v9636 = vpack.c.b16 %v9452, %v9448
        %v9637 = vpack.c.b16 %v9457, %v9453
        %v9638 = vpack.c.b16 %v9458, %v9454
        %v9639 = vpack.c.b16 %v9459, %v9455
        %v9640 = vpack.c.b16 %v9460, %v9456
        %v9641 = vpack.c.b16 %v9465, %v9461
        %v9642 = vpack.c.b16 %v9466, %v9462
        %v9643 = vpack.c.b16 %v9467, %v9463
        %v9644 = vpack.c.b16 %v9468, %v9464
        %v9645 = vpack.c.b16 %v9473, %v9469
        %v9646 = vpack.c.b16 %v9474, %v9470
        %v9647 = vpack.c.b16 %v9475, %v9471
        %v9648 = vpack.c.b16 %v9476, %v9472
        %v9649 = vpack.c.b16 %v9481, %v9477
        %v9650 = vpack.c.b16 %v9482, %v9478
        %v9651 = vpack.c.b16 %v9483, %v9479
        %v9652 = vpack.c.b16 %v9484, %v9480
        %v9653 = vpack.c.b16 %v9489, %v9485
        %v9654 = vpack.c.b16 %v9490, %v9486
        %v9655 = vpack.c.b16 %v9491, %v9487
        %v9656 = vpack.c.b16 %v9492, %v9488
        %v9657 = vpack.c.b16 %v9497, %v9493
        %v9658 = vpack.c.b16 %v9498, %v9494
        %v9659 = vpack.c.b16 %v9499, %v9495
        %v9660 = vpack.c.b16 %v9500, %v9496
        %v9661 = vpack.c.b16 %v9505, %v9501
        %v9662 = vpack.c.b16 %v9506, %v9502
        %v9663 = vpack.c.b16 %v9507, %v9503
        %v9664 = vpack.c.b16 %v9508, %v9504
        %v9665 = vpack.c.b16 %v9513, %v9509
        %v9666 = vpack.c.b16 %v9514, %v9510
        %v9667 = vpack.c.b16 %v9515, %v9511
        %v9668 = vpack.c.b16 %v9516, %v9512
        %v9669 = vpack.c.b16 %v9521, %v9517
        %v9670 = vpack.c.b16 %v9522, %v9518
        %v9671 = vpack.c.b16 %v9523, %v9519
        %v9672 = vpack.c.b16 %v9524, %v9520
        %v9673 = vpack.c.b16 %v9529, %v9525
        %v9674 = vpack.c.b16 %v9530, %v9526
        %v9675 = vpack.c.b16 %v9531, %v9527
        %v9676 = vpack.c.b16 %v9532, %v9528
        %v9677 = vpack.c.b16 %v9537, %v9533
        %v9678 = vpack.c.b16 %v9538, %v9534
        %v9679 = vpack.c.b16 %v9539, %v9535
        %v9680 = vpack.c.b16 %v9540, %v9536
        %v9681 = vpack.c.b16 %v9545, %v9541
        %v9682 = vpack.c.b16 %v9546, %v9542
        %v9683 = vpack.c.b16 %v9547, %v9543
        %v9684 = vpack.c.b16 %v9548, %v9544
        %v9685 = vpack.c.b16 %v9553, %v9549
        %v9686 = vpack.c.b16 %v9554, %v9550
        %v9687 = vpack.c.b16 %v9555, %v9551
        %v9688 = vpack.c.b16 %v9556, %v9552
        %v9689 = vpack.c.b16 %v9561, %v9557
        %v9690 = vpack.c.b16 %v9562, %v9558
        %v9691 = vpack.c.b16 %v9563, %v9559
        %v9692 = vpack.c.b16 %v9564, %v9560
        %9821 = vmatprep.subr.bf16.mxu0 %v9594
        %9822 = vmatpush1.bf16.msra.mxu0 %v9593
        %9823 = vmatprep.subr.bf16.mxu0 %v9590
        %9824 = vmatpush1.bf16.msra.mxu0 %v9589
        %9825 = vmatprep.subr.bf16.mxu0 %v9586
        %9826 = vmatpush1.bf16.msra.mxu0 %v9585
        %9827 = vmatprep.subr.bf16.mxu0 %v9582
        %9828 = vmatpush1.bf16.msra.mxu0 %v9581
        %9829 = vmatprep.subr.bf16.mxu0 %v9578
        %9830 = vmatpush1.bf16.msra.mxu0 %v9577
        %9831 = vmatprep.subr.bf16.mxu0 %v9574
        %9832 = vmatpush1.bf16.msra.mxu0 %v9573
        %9833 = vmatprep.subr.bf16.mxu0 %v9570
        %9834 = vmatpush1.bf16.msra.mxu0 %v9569
        %9835 = vmatprep.subr.bf16.mxu0 %v9566
        %9836 = vmatpush1.bf16.msra.mxu0 %v9565
        %9837 = vmatprep.subr.bf16.mxu0 %v9626
        %9838 = vmatpush2.bf16.msra.mxu0 %v9625
        %9839 = vmatprep.subr.bf16.mxu0 %v9622
        %9840 = vmatpush2.bf16.msra.mxu0 %v9621
        %9841 = vmatprep.subr.bf16.mxu0 %v9618
        %9842 = vmatpush2.bf16.msra.mxu0 %v9617
        %9843 = vmatprep.subr.bf16.mxu0 %v9614
        %9844 = vmatpush2.bf16.msra.mxu0 %v9613
        %9845 = vmatprep.subr.bf16.mxu0 %v9610
        %9846 = vmatpush2.bf16.msra.mxu0 %v9609
        %9847 = vmatprep.subr.bf16.mxu0 %v9606
        %9848 = vmatpush2.bf16.msra.mxu0 %v9605
        %9849 = vmatprep.subr.bf16.mxu0 %v9602
        %9850 = vmatpush2.bf16.msra.mxu0 %v9601
        %9851 = vmatprep.subr.bf16.mxu0 %v9598
        %9852 = vmatpush2.bf16.msra.mxu0 %v9597
        %9853 = vmatprep.mubr.bf16.mxu0 %v8987
        %9854 = vmatmul.mubr.bf16.gmra.mxu0 %v8955
        %v9855 = vpop.f32.mrf.mxu0
        %v9856 = vadd.f32 0.0, %v9855
        %v9857 = vpop.f32.mrf.mxu0
        %v9858 = vadd.f32 0.0, %v9857
        %v9859 = vpop.f32.mrf.mxu0
        %v9860 = vpop.f32.mrf.mxu0
        %9861 = vdwg.mxu0
        %9862 = vmatprep.subr.bf16.mxu0 %v9658
        %9863 = vmatpush1.bf16.msra.mxu0 %v9657
        %9864 = vmatprep.subr.bf16.mxu0 %v9654
        %9865 = vmatpush1.bf16.msra.mxu0 %v9653
        %9866 = vmatprep.subr.bf16.mxu0 %v9650
        %9867 = vmatpush1.bf16.msra.mxu0 %v9649
        %9868 = vmatprep.subr.bf16.mxu0 %v9646
        %9869 = vmatpush1.bf16.msra.mxu0 %v9645
        %9870 = vmatprep.subr.bf16.mxu0 %v9642
        %9871 = vmatpush1.bf16.msra.mxu0 %v9641
        %9872 = vmatprep.subr.bf16.mxu0 %v9638
        %9873 = vmatpush1.bf16.msra.mxu0 %v9637
        %9874 = vmatprep.subr.bf16.mxu0 %v9634
        %9875 = vmatpush1.bf16.msra.mxu0 %v9633
        %9876 = vmatprep.subr.bf16.mxu0 %v9630
        %9877 = vmatpush1.bf16.msra.mxu0 %v9629
        %9878 = vmatprep.subr.bf16.mxu0 %v9690
        %9879 = vmatpush2.bf16.msra.mxu0 %v9689
        %9880 = vmatprep.subr.bf16.mxu0 %v9686
        %9881 = vmatpush2.bf16.msra.mxu0 %v9685
        %9882 = vmatprep.subr.bf16.mxu0 %v9682
        %9883 = vmatpush2.bf16.msra.mxu0 %v9681
        %9884 = vmatprep.subr.bf16.mxu0 %v9678
        %9885 = vmatpush2.bf16.msra.mxu0 %v9677
        %9886 = vmatprep.subr.bf16.mxu0 %v9674
        %9887 = vmatpush2.bf16.msra.mxu0 %v9673
        %9888 = vmatprep.subr.bf16.mxu0 %v9670
        %9889 = vmatpush2.bf16.msra.mxu0 %v9669
        %9890 = vmatprep.subr.bf16.mxu0 %v9666
        %9891 = vmatpush2.bf16.msra.mxu0 %v9665
        %9892 = vmatprep.subr.bf16.mxu0 %v9662
        %9893 = vmatpush2.bf16.msra.mxu0 %v9661
        %9894 = vmatprep.mubr.bf16.mxu0 %v9051
        %9895 = vmatmul.mubr.bf16.gmra.mxu0 %v9019
        %v9896 = vpop.f32.mrf.mxu0
        %v9897 = vadd.f32 %v9856, %v9896
        %v9898 = vpop.f32.mrf.mxu0
        %v9899 = vadd.f32 %v9858, %v9898
        %v9900 = vpop.f32.mrf.mxu0
        %v9901 = vpop.f32.mrf.mxu0
        %9902 = vdwg.mxu0
        %9903 = vmatprep.subr.bf16.mxu0 %v9596
        %9904 = vmatpush1.bf16.msra.mxu0 %v9595
        %9905 = vmatprep.subr.bf16.mxu0 %v9592
        %9906 = vmatpush1.bf16.msra.mxu0 %v9591
        %9907 = vmatprep.subr.bf16.mxu0 %v9588
        %9908 = vmatpush1.bf16.msra.mxu0 %v9587
        %9909 = vmatprep.subr.bf16.mxu0 %v9584
        %9910 = vmatpush1.bf16.msra.mxu0 %v9583
        %9911 = vmatprep.subr.bf16.mxu0 %v9580
        %9912 = vmatpush1.bf16.msra.mxu0 %v9579
        %9913 = vmatprep.subr.bf16.mxu0 %v9576
        %9914 = vmatpush1.bf16.msra.mxu0 %v9575
        %9915 = vmatprep.subr.bf16.mxu0 %v9572
        %9916 = vmatpush1.bf16.msra.mxu0 %v9571
        %9917 = vmatprep.subr.bf16.mxu0 %v9568
        %9918 = vmatpush1.bf16.msra.mxu0 %v9567
        %9919 = vmatprep.subr.bf16.mxu0 %v9628
        %9920 = vmatpush2.bf16.msra.mxu0 %v9627
        %9921 = vmatprep.subr.bf16.mxu0 %v9624
        %9922 = vmatpush2.bf16.msra.mxu0 %v9623
        %9923 = vmatprep.subr.bf16.mxu0 %v9620
        %9924 = vmatpush2.bf16.msra.mxu0 %v9619
        %9925 = vmatprep.subr.bf16.mxu0 %v9616
        %9926 = vmatpush2.bf16.msra.mxu0 %v9615
        %9927 = vmatprep.subr.bf16.mxu0 %v9612
        %9928 = vmatpush2.bf16.msra.mxu0 %v9611
        %9929 = vmatprep.subr.bf16.mxu0 %v9608
        %9930 = vmatpush2.bf16.msra.mxu0 %v9607
        %9931 = vmatprep.subr.bf16.mxu0 %v9604
        %9932 = vmatpush2.bf16.msra.mxu0 %v9603
        %9933 = vmatprep.subr.bf16.mxu0 %v9600
        %9934 = vmatpush2.bf16.msra.mxu0 %v9599
        %9935 = vmatprep.mubr.bf16.mxu0 %v8987
        %9936 = vmatmul.mubr.bf16.gmra.mxu0 %v8955
        %v9937 = vpop.f32.mrf.mxu0
        %v9938 = vadd.f32 0.0, %v9937
        %v9939 = vpop.f32.mrf.mxu0
        %v9940 = vadd.f32 0.0, %v9939
        %v9941 = vpop.f32.mrf.mxu0
        %v9942 = vpop.f32.mrf.mxu0
        %9943 = vdwg.mxu0
        %9944 = vmatprep.subr.bf16.mxu0 %v9660
        %9945 = vmatpush1.bf16.msra.mxu0 %v9659
        %9946 = vmatprep.subr.bf16.mxu0 %v9656
        %9947 = vmatpush1.bf16.msra.mxu0 %v9655
        %9948 = vmatprep.subr.bf16.mxu0 %v9652
        %9949 = vmatpush1.bf16.msra.mxu0 %v9651
        %9950 = vmatprep.subr.bf16.mxu0 %v9648
        %9951 = vmatpush1.bf16.msra.mxu0 %v9647
        %9952 = vmatprep.subr.bf16.mxu0 %v9644
        %9953 = vmatpush1.bf16.msra.mxu0 %v9643
        %9954 = vmatprep.subr.bf16.mxu0 %v9640
        %9955 = vmatpush1.bf16.msra.mxu0 %v9639
        %9956 = vmatprep.subr.bf16.mxu0 %v9636
        %9957 = vmatpush1.bf16.msra.mxu0 %v9635
        %9958 = vmatprep.subr.bf16.mxu0 %v9632
        %9959 = vmatpush1.bf16.msra.mxu0 %v9631
        %9960 = vmatprep.subr.bf16.mxu0 %v9692
        %9961 = vmatpush2.bf16.msra.mxu0 %v9691
        %9962 = vmatprep.subr.bf16.mxu0 %v9688
        %9963 = vmatpush2.bf16.msra.mxu0 %v9687
        %9964 = vmatprep.subr.bf16.mxu0 %v9684
        %9965 = vmatpush2.bf16.msra.mxu0 %v9683
        %9966 = vmatprep.subr.bf16.mxu0 %v9680
        %9967 = vmatpush2.bf16.msra.mxu0 %v9679
        %9968 = vmatprep.subr.bf16.mxu0 %v9676
        %9969 = vmatpush2.bf16.msra.mxu0 %v9675
        %9970 = vmatprep.subr.bf16.mxu0 %v9672
        %9971 = vmatpush2.bf16.msra.mxu0 %v9671
        %9972 = vmatprep.subr.bf16.mxu0 %v9668
        %9973 = vmatpush2.bf16.msra.mxu0 %v9667
        %9974 = vmatprep.subr.bf16.mxu0 %v9664
        %9975 = vmatpush2.bf16.msra.mxu0 %v9663
        %9976 = vmatprep.mubr.bf16.mxu0 %v9051
        %9977 = vmatmul.mubr.bf16.gmra.mxu0 %v9019
        %v9978 = vpop.f32.mrf.mxu0
        %v9979 = vadd.f32 %v9938, %v9978
        %v9980 = vpop.f32.mrf.mxu0
        %v9981 = vadd.f32 %v9940, %v9980
        %v9982 = vpop.f32.mrf.mxu0
        %v9983 = vpop.f32.mrf.mxu0
        %9984 = vdwg.mxu0
        %9985 = vst [vmem:[%s434] sm:$0xff] %v9897
        %9986 = vst [vmem:[%s434 + $0x8] sm:$0xff] %v9899
        %9987 = vst [vmem:[%s434 + $0x10] sm:$0xff] %v9979
        %9988 = vst [vmem:[%s434 + $0x18] sm:$0xff] %v9981
        %s9989 = sand.u32 %s181, 1
        %s9990 = scalar_lea.sflag [#allocation4], %s9989
        %s9991 = sand.u32 %s181, 1
        %s9992 = smul.addr %s9991, 32
        %s9993 = scalar_lea.vmem [#allocation7], %s9992
        %s9994 = sand.u32 %s32, 1
        %s9995 = scalar_lea.sflag [#allocation9], %s9994
        %s9996 = sand.u32 %s207, 1
        %s9997 = smul.addr %s9996, 512
        %s9998 = scalar_lea.vmem [#allocation8], %s9997
        %s9999 = sand.u32 %s32, 1
        %s10000 = scalar_lea.sflag [#allocation9], %s9999
        %s10001 = sand.u32 %s233, 1
        %s10002 = smul.addr %s10001, 512
        %s10003 = scalar_lea.vmem [#allocation10], %s10002
        // Predicated region
        $region53: #{tpu_custom_call.1} parent=43 // pred_check
          %p10004 = pneg %p191
        $region54: #{tpu_custom_call.1} parent=43 // pred_check_branch
          %10006 = sbr.rel (%p10004) target = $region56
        $region55: #{tpu_custom_call.1} parent=43 // pred_region
          %s10008 = ssub.s32 512, 512
          %10009 = vsyncadd %s9990, %s10008
          %s10010 = smul.addr %s32, 4
          %s10011 = smul.addr %s10010, 128
          %s10012 = scalar_lea.hbm %s6, %s10011
          %s10014 = sshll.u32 %s9993, 4
          %s10015 = int_to_ptr.vmem [resolvable:$true] %s10014
          %10017 = dma.vmem_to_hbm [thread:$0]  %s10015, 512, %s10012, %s9990
        $region56: #{tpu_custom_call.1} parent=43 // pred_fallthru
          _
        // Predicated region
        $region57: #{tpu_custom_call.1} parent=43 // pred_check
          %p10018 = pneg %p217
        $region58: #{tpu_custom_call.1} parent=43 // pred_check_branch
          %10020 = sbr.rel (%p10018) target = $region60
        $region59: #{tpu_custom_call.1} parent=43 // pred_region
          #allocation16 [shape = 'u32[6]{0}', space=smem, size = 0x18, scoped, tag = 'DMA stride descriptor']
          %s10021 = smul.u32 8, %s32
          %s10023 = ssub.s32 8192, 8192
          %10024 = vsyncadd %s9995, %s10023
          %s10025 = smul.addr %s10021, 32
          %s10026 = smul.addr %s10025, 64
          %s10027 = scalar_lea.hbm %s7, %s10026
          %s10029 = sshll.u32 1, 14
          %s10030 = sxor.u32 4294967295, %s10029
          %s10033 = sshll.u32 7, 18
          %s10034 = sxor.u32 4294967295, %s10033
          %s10035 = sand.u32 0, %s10034
          %s10037 = sor.u32 %s10035, 0
          %s10038 = sshll.u32 %s9998, 4
          %s10039 = int_to_ptr.vmem [resolvable:$true] %s10038
          %10045 = sst [smem:[#allocation16]] 512
          %s10046 = scalar_lea.smem [#allocation16], 1
          %10047 = sst [smem:[%s10046]] 1024
          %s10048 = scalar_lea.smem [#allocation16], 2
          %10049 = sst [smem:[%s10048]] 8
          %s10050 = scalar_lea.smem [#allocation16], 3
          %10051 = sst [smem:[%s10050]] 64
          %s10052 = scalar_lea.smem [#allocation16], 4
          %10053 = sst [smem:[%s10052]] 64
          %s10054 = scalar_lea.smem [#allocation16], 5
          %10055 = sst [smem:[%s10054]] 4
          %10057 = dma.general %s10039, 8192, %s10027, %s9995, 131072, [#allocation16], %s10037, 0
        $region60: #{tpu_custom_call.1} parent=43 // pred_fallthru
          _
        // Predicated region
        $region61: #{tpu_custom_call.1} parent=43 // pred_check
          %p10058 = pneg %p243
        $region62: #{tpu_custom_call.1} parent=43 // pred_check_branch
          %10060 = sbr.rel (%p10058) target = $region64
        $region63: #{tpu_custom_call.1} parent=43 // pred_region
          #allocation18 [shape = 'u32[6]{0}', space=smem, size = 0x18, scoped, tag = 'DMA stride descriptor']
          %s10061 = smul.u32 8, %s32
          %s10063 = ssub.s32 8192, 8192
          %10064 = vsyncadd %s10000, %s10063
          %s10065 = smul.addr %s10061, 32
          %s10066 = smul.addr %s10065, 64
          %s10067 = scalar_lea.hbm %s8, %s10066
          %s10069 = sshll.u32 1, 14
          %s10070 = sxor.u32 4294967295, %s10069
          %s10073 = sshll.u32 7, 18
          %s10074 = sxor.u32 4294967295, %s10073
          %s10075 = sand.u32 0, %s10074
          %s10077 = sor.u32 %s10075, 0
          %s10078 = sshll.u32 %s10003, 4
          %s10079 = int_to_ptr.vmem [resolvable:$true] %s10078
          %10085 = sst [smem:[#allocation18]] 512
          %s10086 = scalar_lea.smem [#allocation18], 1
          %10087 = sst [smem:[%s10086]] 1024
          %s10088 = scalar_lea.smem [#allocation18], 2
          %10089 = sst [smem:[%s10088]] 8
          %s10090 = scalar_lea.smem [#allocation18], 3
          %10091 = sst [smem:[%s10090]] 64
          %s10092 = scalar_lea.smem [#allocation18], 4
          %10093 = sst [smem:[%s10092]] 64
          %s10094 = scalar_lea.smem [#allocation18], 5
          %10095 = sst [smem:[%s10094]] 4
          %10097 = dma.general %s10079, 8192, %s10067, %s10000, 131072, [#allocation18], %s10077, 0
        $region64: #{tpu_custom_call.1} parent=43 // pred_fallthru
          _
      $region44: #{tpu_custom_call.1} parent=5 // pred_fallthru
        _
      %p10098 = scmp.le.s32.totalorder 2, %s27
      // Predicated region
      $region65: #{tpu_custom_call.1} parent=5 // pred_check
        %p10099 = pneg %p10098
      $region66: #{tpu_custom_call.1} parent=5 // pred_check_branch
        %10101 = sbr.rel (%p10099) target = $region68
      $region67: #{tpu_custom_call.1} parent=5 // pred_region
        %s10102 = ssub.s32 %s27, 2
        // Predicated region
        $region69: #{tpu_custom_call.1} parent=67 // pred_check
          %p10103 = pneg %p197
        $region70: #{tpu_custom_call.1} parent=67 // pred_check_branch
          %10105 = sbr.rel (%p10103) target = $region72
        $region71: #{tpu_custom_call.1} parent=67 // pred_region
          %s10106 = sand.u32 %s182, 1
          %s10107 = scalar_lea.sflag [#allocation4], %s10106
          %s10108 = sand.u32 %s182, 1
          %s10109 = smul.addr %s10108, 32
          %s10110 = scalar_lea.vmem [#allocation7], %s10109
          %10111 = dma.done %s10107, 512
        $region72: #{tpu_custom_call.1} parent=67 // pred_fallthru
          _
        // Predicated region
        $region73: #{tpu_custom_call.1} parent=67 // pred_check
          %p10112 = pneg %p223
        $region74: #{tpu_custom_call.1} parent=67 // pred_check_branch
          %10114 = sbr.rel (%p10112) target = $region76
        $region75: #{tpu_custom_call.1} parent=67 // pred_region
          %s10115 = sand.u32 %s33, 1
          %s10116 = scalar_lea.sflag [#allocation9], %s10115
          %s10117 = sand.u32 %s208, 1
          %s10118 = smul.addr %s10117, 512
          %s10119 = scalar_lea.vmem [#allocation8], %s10118
          %10120 = dma.done %s10116, 8192
        $region76: #{tpu_custom_call.1} parent=67 // pred_fallthru
          _
        // Predicated region
        $region77: #{tpu_custom_call.1} parent=67 // pred_check
          %p10121 = pneg %p249
        $region78: #{tpu_custom_call.1} parent=67 // pred_check_branch
          %10123 = sbr.rel (%p10121) target = $region80
        $region79: #{tpu_custom_call.1} parent=67 // pred_region
          %s10124 = sand.u32 %s33, 1
          %s10125 = scalar_lea.sflag [#allocation9], %s10124
          %s10126 = sand.u32 %s234, 1
          %s10127 = smul.addr %s10126, 512
          %s10128 = scalar_lea.vmem [#allocation10], %s10127
          %10129 = dma.done %s10125, 8192
        $region80: #{tpu_custom_call.1} parent=67 // pred_fallthru
          _
      $region68: #{tpu_custom_call.1} parent=5 // pred_fallthru
        _
    $region6: #{tpu_custom_call.1} parent=1 // loop_footer
      %s31 = sadd.s32 1, %s27
    $region7: #{tpu_custom_call.1} parent=1 // loop_footer_branch
      %26 = sbr.rel target = $region3
    $region8: #{tpu_custom_call.1} parent=1 // loop_exit
      _
    %10130 = vsyncpa [#allocation3], 1
    %s10131 = scalar_lea.sflag [#allocation3], 1
    %10132 = vsyncpa %s10131, 1
    %10133 = vsyncpa [#allocation6], 1
    %s10134 = scalar_lea.sflag [#allocation6], 1
    %10135 = vsyncpa %s10134, 1
    %10136 = vsyncpa [#allocation4], 1
    %s10137 = scalar_lea.sflag [#allocation4], 1
    %10138 = vsyncpa %s10137, 1
    %10139 = vsyncpa [#allocation9], 1
    %s10140 = scalar_lea.sflag [#allocation9], 1
    %10141 = vsyncpa %s10140, 1

</llo_original>
